<compile_context>
chip_gen: v7x
topology: tpu7x:2x2x1
jax: 0.10.0
libtpu: 0.0.40
codegen_flags: <defaults>
</compile_context>

<pallas_src>
import jax
import jax.numpy as jnp
import numpy as np
from jax.experimental import pallas as pl
from jax.experimental.pallas import tpu as pltpu

N_EMBED = 32
BLOCK_SIZE = 8
NUM_HEADS = 4
HEAD_SIZE = N_EMBED // NUM_HEADS
N_LAYERS = 3
VOCAB_SIZE = 65            # stand-in for len(set(text))
HIDDEN = 4 * N_EMBED       # = 128
VOCAB_PAD = 128            # lane-dense padded vocab width


def _layernorm(x, g, b, eps=1e-5):
    mu = jnp.mean(x, axis=-1, keepdims=True)
    var = jnp.mean((x - mu) ** 2, axis=-1, keepdims=True)
    return (x - mu) * jax.lax.rsqrt(var + eps) * g + b


def model_kernel(x_ref, wmat_ref, w2_ref, wvec_ref, fmat_ref, fw2_ref, fvec_ref,
                 out_ref):
    BT, T, C = x_ref.shape
    M = BT * T
    x = x_ref[...].reshape(M, C)

    # causal mask (1, T, T), broadcast over the batch tile
    row = jax.lax.broadcasted_iota(jnp.int32, (1, T, T), 1)
    col = jax.lax.broadcasted_iota(jnp.int32, (1, T, T), 2)
    causal = col <= row                 # tril(ones) != 0

    for l in range(N_LAYERS):
        wm = wmat_ref[l]                # (C, 256) = [Wk | Wq*scale | Wv | Wproj | W1]
        wqkv = wm[:, 0:3 * C]
        wpr = wm[:, 3 * C:4 * C]
        w1 = wm[:, 4 * C:4 * C + HIDDEN]
        w2 = w2_ref[l]                  # (HIDDEN, C)
        vec = wvec_ref[l]               # (8, 128)
        ln1g = vec[0:1, 0:C]; ln1b = vec[1:2, 0:C]
        ln2g = vec[2:3, 0:C]; ln2b = vec[3:4, 0:C]
        bpr = vec[4:5, 0:C]; b2 = vec[5:6, 0:C]
        b1 = vec[6:7, :]                # (1, HIDDEN)

        # --- multi-head self-attention on ln1(x) ---
        h = _layernorm(x, ln1g, ln1b)
        qkv = jnp.dot(h, wqkv, preferred_element_type=jnp.float32)   # (M, 3C)
        k3 = qkv[:, 0:C].reshape(BT, T, C)
        q3 = qkv[:, C:2 * C].reshape(BT, T, C)    # already scaled by n_embed**-0.5
        v3 = qkv[:, 2 * C:3 * C].reshape(BT, T, C)

        sa = None
        for hh in range(NUM_HEADS):
            sl = slice(hh * HEAD_SIZE, (hh + 1) * HEAD_SIZE)
            wei = jnp.einsum('bqd,bkd->bqk', q3[:, :, sl], k3[:, :, sl],
                             preferred_element_type=jnp.float32)
            wei = jnp.where(causal, wei, -jnp.inf)
            # NOTE: reference uses F.softmax(wei, dim=1) i.e. over the *query*
            # axis -- reproduced exactly.
            m = jnp.max(wei, axis=1, keepdims=True)
            e = jnp.exp(wei - m)
            denom = jnp.sum(e, axis=1, keepdims=True)
            p = e * pl.reciprocal(denom, approx=True)
            oh = jnp.einsum('bqk,bkd->bqd', p, v3[:, :, sl],
                            preferred_element_type=jnp.float32)
            # concat-free output projection: sum per-head row-slices of Wproj
            contrib = jnp.dot(oh.reshape(M, HEAD_SIZE), wpr[sl, :],
                              preferred_element_type=jnp.float32)
            sa = contrib if sa is None else sa + contrib
        x = x + sa + bpr

        # --- feedforward on ln2(x) ---
        h = _layernorm(x, ln2g, ln2b)
        hid = jnp.maximum(
            jnp.dot(h, w1, preferred_element_type=jnp.float32) + b1, 0.0)
        x = x + jnp.dot(hid, w2, preferred_element_type=jnp.float32) + b2

    # final LayerNorm of the Sequential, model-level FeedForward, lm_head
    fvec = fvec_ref[...]                # (8, 128)
    lnfg = fvec[0:1, 0:C]; lnfb = fvec[1:2, 0:C]; fb2 = fvec[2:3, 0:C]
    fb1 = fvec[3:4, :]; blm = fvec[4:5, :]
    fm = fmat_ref[...]                  # (C, 256) = [fw1 | wlm_pad]
    fw1 = fm[:, 0:HIDDEN]
    wlm = fm[:, HIDDEN:HIDDEN + VOCAB_PAD]
    fw2 = fw2_ref[...]                  # (HIDDEN, C)

    x = _layernorm(x, lnfg, lnfb)
    hid = jnp.maximum(
        jnp.dot(x, fw1, preferred_element_type=jnp.float32) + fb1, 0.0)
    x = jnp.dot(hid, fw2, preferred_element_type=jnp.float32) + fb2
    logits = jnp.dot(x, wlm, preferred_element_type=jnp.float32) + blm   # (M, 128)
    out_ref[...] = logits.reshape(BT, T, VOCAB_PAD)


def _pad_last(a, width):
    return jnp.pad(a, [(0, 0)] * (a.ndim - 1) + [(0, width - a.shape[-1])])


def _pack_params(p):
    """Pack the 21 parameter tensors into 6 lane-aligned slabs."""
    scale = N_EMBED ** -0.5
    wqkv = jnp.concatenate([p["wk"], p["wq"] * scale, p["wv"]], axis=-1)   # (L, C, 3C)
    wmat = jnp.concatenate([wqkv, p["wpr"], p["w1"]], axis=-1)             # (L, C, 256)
    w2s = p["w2"]                                                          # (L, H, C)
    wvec = jnp.stack([
        _pad_last(p["ln1g"][:, 0, :], 128), _pad_last(p["ln1b"][:, 0, :], 128),
        _pad_last(p["ln2g"][:, 0, :], 128), _pad_last(p["ln2b"][:, 0, :], 128),
        _pad_last(p["bpr"][:, 0, :], 128), _pad_last(p["b2"][:, 0, :], 128),
        p["b1"][:, 0, :],
        jnp.zeros((N_LAYERS, 128), jnp.float32),
    ], axis=1)                                                             # (L, 8, 128)
    fmat = jnp.concatenate([p["fw1"], _pad_last(p["wlm"], VOCAB_PAD)], axis=-1)  # (C, 256)
    fw2 = p["fw2"]                                                         # (H, C)
    zero = jnp.zeros((128,), jnp.float32)
    fvec = jnp.stack([
        _pad_last(p["lnfg"][0], 128), _pad_last(p["lnfb"][0], 128),
        _pad_last(p["fb2"][0], 128), p["fb1"][0],
        _pad_last(p["blm"][0], VOCAB_PAD),
        zero, zero, zero,
    ], axis=0)                                                             # (8, 128)
    return wmat, w2s, wvec, fmat, fw2, fvec


def bigram_forward(idx, params, batch_tile=None):
    """Forward pass; returns logits (B, T, VOCAB_SIZE).  (targets=None path)."""
    # TODO(synk): cross_entropy loss path (targets != None) and generate()'s
    # multinomial sampling are not implemented in-kernel.
    B, T = idx.shape
    tok_emb = params["tok_table"][idx]            # (B, T, C) -- JAX glue gather
    pos_emb = params["pos_table"][:T]             # (T, C)
    x = (tok_emb + pos_emb).astype(jnp.float32)   # (B, T, C)

    # Batch tile: big enough to amortize per-step overhead / fill MXU rows,
    # small enough that large B still yields >=2 parallel grid steps (v7x has
    # 2 TensorCores).  VMEM use per step is tiny (<0.5 MiB) on all chips.
    BT = batch_tile if batch_tile is not None else max(1, min(B, 32))
    B_pad = ((B + BT - 1) // BT) * BT
    if B_pad != B:
        x = jnp.pad(x, ((0, B_pad - B), (0, 0), (0, 0)))

    weights = _pack_params(params)

    def full_spec(a):
        zeros = (0,) * a.ndim
        return pl.BlockSpec(a.shape, lambda b, _z=zeros: _z)

    in_specs = [pl.BlockSpec((BT, T, N_EMBED), lambda b: (b, 0, 0))]
    in_specs += [full_spec(w) for w in weights]
    out_spec = pl.BlockSpec((BT, T, VOCAB_PAD), lambda b: (b, 0, 0))

    logits_pad = pl.pallas_call(
        model_kernel,
        out_shape=jax.ShapeDtypeStruct((B_pad, T, VOCAB_PAD), jnp.float32),
        grid=(B_pad // BT,),
        in_specs=in_specs,
        out_specs=out_spec,
        compiler_params=pltpu.CompilerParams(dimension_semantics=("parallel",)),
    )(x, *weights)
    return logits_pad[:B, :, :VOCAB_SIZE]


def ref_forward(idx, p):
    """Pure-JAX reference mirroring the PyTorch forward (targets=None)."""
    T = idx.shape[1]
    x = p["tok_table"][idx] + p["pos_table"][:T]
    tril = jnp.tril(jnp.ones((T, T), jnp.float32))
    for l in range(N_LAYERS):
        h = _layernorm(x, p["ln1g"][l], p["ln1b"][l])
        k = h @ p["wk"][l]
        q = h @ p["wq"][l]
        v = h @ p["wv"][l]
        outs = []
        for hh in range(NUM_HEADS):
            s = slice(hh * HEAD_SIZE, (hh + 1) * HEAD_SIZE)
            wei = jnp.einsum("btd,bsd->bts", q[..., s], k[..., s]) * (N_EMBED ** -0.5)
            wei = jnp.where(tril == 0, -jnp.inf, wei)
            wei = jax.nn.softmax(wei, axis=1)     # dim=1, as in reference
            outs.append(jnp.einsum("bts,bsd->btd", wei, v[..., s]))
        sa = jnp.concatenate(outs, axis=-1) @ p["wpr"][l] + p["bpr"][l]
        x = x + sa
        h = _layernorm(x, p["ln2g"][l], p["ln2b"][l])
        x = x + (jnp.maximum(h @ p["w1"][l] + p["b1"][l], 0.0) @ p["w2"][l] + p["b2"][l])
    x = _layernorm(x, p["lnfg"], p["lnfb"])
    x = jnp.maximum(x @ p["fw1"] + p["fb1"], 0.0) @ p["fw2"] + p["fb2"]
    return x @ p["wlm"] + p["blm"]


def init_params(key):
    ks = iter(jax.random.split(key, 64))

    def uni(shape, bound):
        return jax.random.uniform(next(ks), shape, jnp.float32, -bound, bound)

    bC = 1.0 / (N_EMBED ** 0.5)
    bH = 1.0 / (HIDDEN ** 0.5)
    p = {}
    p["tok_table"] = jax.random.normal(next(ks), (VOCAB_SIZE, N_EMBED), jnp.float32)
    p["pos_table"] = jax.random.normal(next(ks), (BLOCK_SIZE, N_EMBED), jnp.float32)
    p["ln1g"] = jnp.ones((N_LAYERS, 1, N_EMBED), jnp.float32)
    p["ln1b"] = jnp.zeros((N_LAYERS, 1, N_EMBED), jnp.float32)
    p["ln2g"] = jnp.ones((N_LAYERS, 1, N_EMBED), jnp.float32)
    p["ln2b"] = jnp.zeros((N_LAYERS, 1, N_EMBED), jnp.float32)
    p["wk"] = uni((N_LAYERS, N_EMBED, N_EMBED), bC)
    p["wq"] = uni((N_LAYERS, N_EMBED, N_EMBED), bC)
    p["wv"] = uni((N_LAYERS, N_EMBED, N_EMBED), bC)
    p["wpr"] = uni((N_LAYERS, N_EMBED, N_EMBED), bC)
    p["bpr"] = uni((N_LAYERS, 1, N_EMBED), bC)
    p["w1"] = uni((N_LAYERS, N_EMBED, HIDDEN), bC)
    p["b1"] = uni((N_LAYERS, 1, HIDDEN), bC)
    p["w2"] = uni((N_LAYERS, HIDDEN, N_EMBED), bH)
    p["b2"] = uni((N_LAYERS, 1, N_EMBED), bH)
    p["lnfg"] = jnp.ones((1, N_EMBED), jnp.float32)
    p["lnfb"] = jnp.zeros((1, N_EMBED), jnp.float32)
    p["fw1"] = uni((N_EMBED, HIDDEN), bC)
    p["fb1"] = uni((1, HIDDEN), bC)
    p["fw2"] = uni((HIDDEN, N_EMBED), bH)
    p["fb2"] = uni((1, N_EMBED), bH)
    p["wlm"] = uni((N_EMBED, VOCAB_SIZE), bC)
    p["blm"] = uni((1, VOCAB_SIZE), bC)
    return p


if __name__ == "__main__":
    key = jax.random.PRNGKey(0)
    pkey, ikey = jax.random.split(key)
    params = init_params(pkey)

    B, T = 2, BLOCK_SIZE
    idx = jax.random.randint(ikey, (B, T), 0, VOCAB_SIZE, dtype=jnp.int32)

    logits = bigram_forward(idx, params)
    jax.block_until_ready(logits)

    ref = ref_forward(idx, params)
    assert logits.shape == (B, T, VOCAB_SIZE)
    # tolerance accounts for the EUP approximate reciprocal in the softmax
    np.testing.assert_allclose(np.asarray(logits), np.asarray(ref),
                               rtol=2e-3, atol=2e-3)
    print("KERNEL_OK")
</pallas_src>

<mosaic_0001>
module attributes {stable_mosaic.version = 11 : i64} {
  func.func @model_kernel(%arg0: i32, %arg1: memref<2x8x32xf32, #tpu.memory_space<vmem>>, %arg2: memref<3x32x256xf32, #tpu.memory_space<vmem>>, %arg3: memref<3x128x32xf32, #tpu.memory_space<vmem>>, %arg4: memref<3x8x128xf32, #tpu.memory_space<vmem>>, %arg5: memref<32x256xf32, #tpu.memory_space<vmem>>, %arg6: memref<128x32xf32, #tpu.memory_space<vmem>>, %arg7: memref<8x128xf32, #tpu.memory_space<vmem>>, %arg8: memref<2x8x128xf32, #tpu.memory_space<vmem>>) attributes {dimension_semantics = [#tpu.dimension_semantics<parallel>], iteration_bounds = array<i64: 1>, scalar_prefetch = 0 : i64, scratch_operands = 0 : i64, tpu.core_type = #tpu.core_type<tc>, window_params = [{transform_indices = @transform_0, window_bounds = array<i64: 2, 8, 32>}, {pipeline_mode = #tpu.pipeline_mode<synchronous>, transform_indices = @transform_1, window_bounds = array<i64: 3, 32, 256>}, {pipeline_mode = #tpu.pipeline_mode<synchronous>, transform_indices = @transform_2, window_bounds = array<i64: 3, 128, 32>}, {pipeline_mode = #tpu.pipeline_mode<synchronous>, transform_indices = @transform_3, window_bounds = array<i64: 3, 8, 128>}, {pipeline_mode = #tpu.pipeline_mode<synchronous>, transform_indices = @transform_4, window_bounds = array<i64: 32, 256>}, {pipeline_mode = #tpu.pipeline_mode<synchronous>, transform_indices = @transform_5, window_bounds = array<i64: 128, 32>}, {pipeline_mode = #tpu.pipeline_mode<synchronous>, transform_indices = @transform_6, window_bounds = array<i64: 8, 128>}, {transform_indices = @transform_7, window_bounds = array<i64: 2, 8, 128>}]} {
    %c0 = arith.constant 0 : index
    %c0_0 = arith.constant 0 : index
    %c0_1 = arith.constant 0 : index
    %0 = vector.load %arg1[%c0, %c0_0, %c0_1] : memref<2x8x32xf32, #tpu.memory_space<vmem>>, vector<2x8x32xf32>
    %1 = vector.shape_cast %0 : vector<2x8x32xf32> to vector<16x32xf32>
    %2 = tpu.iota {dimensions = array<i32: 1>} : vector<1x8x8xi32>
    %3 = tpu.iota {dimensions = array<i32: 2>} : vector<1x8x8xi32>
    %4 = arith.cmpi sle, %3, %2 : vector<1x8x8xi32>
    %c0_2 = arith.constant 0 : index
    %c0_3 = arith.constant 0 : index
    %c0_4 = arith.constant 0 : index
    %5 = vector.load %arg2[%c0_2, %c0_3, %c0_4] : memref<3x32x256xf32, #tpu.memory_space<vmem>>, vector<1x32x256xf32>
    %6 = vector.shape_cast %5 : vector<1x32x256xf32> to vector<32x256xf32>
    %7 = vector.extract_strided_slice %6 {offsets = [0, 0], sizes = [32, 96], strides = [1, 1]} : vector<32x256xf32> to vector<32x96xf32>
    %8 = vector.extract_strided_slice %6 {offsets = [0, 96], sizes = [32, 32], strides = [1, 1]} : vector<32x256xf32> to vector<32x32xf32>
    %9 = vector.extract_strided_slice %6 {offsets = [0, 128], sizes = [32, 128], strides = [1, 1]} : vector<32x256xf32> to vector<32x128xf32>
    %c0_5 = arith.constant 0 : index
    %c0_6 = arith.constant 0 : index
    %c0_7 = arith.constant 0 : index
    %10 = vector.load %arg3[%c0_5, %c0_6, %c0_7] : memref<3x128x32xf32, #tpu.memory_space<vmem>>, vector<1x128x32xf32>
    %11 = vector.shape_cast %10 : vector<1x128x32xf32> to vector<128x32xf32>
    %c0_8 = arith.constant 0 : index
    %c0_9 = arith.constant 0 : index
    %c0_10 = arith.constant 0 : index
    %12 = vector.load %arg4[%c0_8, %c0_9, %c0_10] : memref<3x8x128xf32, #tpu.memory_space<vmem>>, vector<1x8x128xf32>
    %13 = vector.shape_cast %12 : vector<1x8x128xf32> to vector<8x128xf32>
    %14 = vector.extract_strided_slice %13 {offsets = [0, 0], sizes = [1, 32], strides = [1, 1]} : vector<8x128xf32> to vector<1x32xf32>
    %15 = vector.extract_strided_slice %13 {offsets = [1, 0], sizes = [1, 32], strides = [1, 1]} : vector<8x128xf32> to vector<1x32xf32>
    %16 = vector.extract_strided_slice %13 {offsets = [2, 0], sizes = [1, 32], strides = [1, 1]} : vector<8x128xf32> to vector<1x32xf32>
    %17 = vector.extract_strided_slice %13 {offsets = [3, 0], sizes = [1, 32], strides = [1, 1]} : vector<8x128xf32> to vector<1x32xf32>
    %18 = vector.extract_strided_slice %13 {offsets = [4, 0], sizes = [1, 32], strides = [1, 1]} : vector<8x128xf32> to vector<1x32xf32>
    %19 = vector.extract_strided_slice %13 {offsets = [5, 0], sizes = [1, 32], strides = [1, 1]} : vector<8x128xf32> to vector<1x32xf32>
    %20 = vector.extract_strided_slice %13 {offsets = [6, 0], sizes = [1, 128], strides = [1, 1]} : vector<8x128xf32> to vector<1x128xf32>
    %cst = arith.constant dense<0.000000e+00> : vector<16xf32>
    %21 = vector.multi_reduction <add>, %1, %cst [1] : vector<16x32xf32> to vector<16xf32>
    %22 = vector.shape_cast %21 : vector<16xf32> to vector<16x1xf32>
    %cst_11 = arith.constant 3.200000e+01 : f32
    %23 = vector.broadcast %cst_11 : f32 to vector<16x1xf32>
    %24 = arith.divf %22, %23 : vector<16x1xf32>
    %25 = vector.broadcast %24 : vector<16x1xf32> to vector<16x32xf32>
    %26 = arith.subf %1, %25 : vector<16x32xf32>
    %27 = arith.mulf %26, %26 : vector<16x32xf32>
    %cst_12 = arith.constant dense<0.000000e+00> : vector<16xf32>
    %28 = vector.multi_reduction <add>, %27, %cst_12 [1] : vector<16x32xf32> to vector<16xf32>
    %29 = vector.shape_cast %28 : vector<16xf32> to vector<16x1xf32>
    %cst_13 = arith.constant 3.200000e+01 : f32
    %30 = vector.broadcast %cst_13 : f32 to vector<16x1xf32>
    %31 = arith.divf %29, %30 : vector<16x1xf32>
    %32 = vector.broadcast %24 : vector<16x1xf32> to vector<16x32xf32>
    %33 = arith.subf %1, %32 : vector<16x32xf32>
    %cst_14 = arith.constant 9.99999974E-6 : f32
    %34 = vector.broadcast %cst_14 : f32 to vector<16x1xf32>
    %35 = arith.addf %31, %34 : vector<16x1xf32>
    %36 = math.rsqrt %35 : vector<16x1xf32>
    %37 = vector.broadcast %36 : vector<16x1xf32> to vector<16x32xf32>
    %38 = arith.mulf %33, %37 : vector<16x32xf32>
    %39 = vector.broadcast %14 : vector<1x32xf32> to vector<16x32xf32>
    %40 = arith.mulf %38, %39 : vector<16x32xf32>
    %41 = vector.broadcast %15 : vector<1x32xf32> to vector<16x32xf32>
    %42 = arith.addf %40, %41 : vector<16x32xf32>
    %cst_15 = arith.constant dense<0.000000e+00> : vector<16x96xf32>
    %43 = tpu.matmul %42, %7, %cst_15 {dimension_numbers = #tpu.dot_dimension_numbers<[1], [0], [0], [1], [0, 0, 1, 1], [], []>} : vector<16x32xf32>, vector<32x96xf32>, vector<16x96xf32> -> vector<16x96xf32>
    %44 = vector.extract_strided_slice %43 {offsets = [0, 0], sizes = [16, 32], strides = [1, 1]} : vector<16x96xf32> to vector<16x32xf32>
    %45 = vector.shape_cast %44 : vector<16x32xf32> to vector<2x8x32xf32>
    %46 = vector.extract_strided_slice %43 {offsets = [0, 32], sizes = [16, 32], strides = [1, 1]} : vector<16x96xf32> to vector<16x32xf32>
    %47 = vector.shape_cast %46 : vector<16x32xf32> to vector<2x8x32xf32>
    %48 = vector.extract_strided_slice %43 {offsets = [0, 64], sizes = [16, 32], strides = [1, 1]} : vector<16x96xf32> to vector<16x32xf32>
    %49 = vector.shape_cast %48 : vector<16x32xf32> to vector<2x8x32xf32>
    %50 = vector.extract_strided_slice %47 {offsets = [0, 0, 0], sizes = [2, 8, 8], strides = [1, 1, 1]} : vector<2x8x32xf32> to vector<2x8x8xf32>
    %51 = vector.extract_strided_slice %45 {offsets = [0, 0, 0], sizes = [2, 8, 8], strides = [1, 1, 1]} : vector<2x8x32xf32> to vector<2x8x8xf32>
    "tpu.trace_start"() <{level = 10 : i32, message = "bqd,bkd->bqk"}> : () -> ()
    %cst_16 = arith.constant dense<0.000000e+00> : vector<2x8x8xf32>
    %52 = tpu.matmul %50, %51, %cst_16 {dimension_numbers = #tpu.dot_dimension_numbers<[2], [2], [1], [1], [0, 0, 0, 1, 1, 1], [0], [0]>} : vector<2x8x8xf32>, vector<2x8x8xf32>, vector<2x8x8xf32> -> vector<2x8x8xf32>
    %cst_17 = arith.constant 0xFF800000 : f32
    "tpu.trace_stop"() : () -> ()
    %53 = vector.shape_cast %4 : vector<1x8x8xi1> to vector<1x8x8xi1>
    %54 = vector.broadcast %53 : vector<1x8x8xi1> to vector<2x8x8xi1>
    %55 = vector.broadcast %cst_17 : f32 to vector<2x8x8xf32>
    %56 = arith.select %54, %52, %55 : vector<2x8x8xi1>, vector<2x8x8xf32>
    %cst_18 = arith.constant dense<0xFF800000> : vector<2x8xf32>
    %57 = vector.multi_reduction <maximumf>, %56, %cst_18 [1] : vector<2x8x8xf32> to vector<2x8xf32>
    %58 = vector.shape_cast %57 : vector<2x8xf32> to vector<2x1x8xf32>
    %59 = vector.broadcast %58 : vector<2x1x8xf32> to vector<2x8x8xf32>
    %60 = arith.subf %56, %59 : vector<2x8x8xf32>
    %61 = math.exp %60 : vector<2x8x8xf32>
    %cst_19 = arith.constant dense<0.000000e+00> : vector<2x8xf32>
    %62 = vector.multi_reduction <add>, %61, %cst_19 [1] : vector<2x8x8xf32> to vector<2x8xf32>
    %63 = vector.shape_cast %62 : vector<2x8xf32> to vector<2x1x8xf32>
    %64 = tpu.reciprocal %63 {approx = true} : vector<2x1x8xf32> -> vector<2x1x8xf32>
    %65 = vector.broadcast %64 : vector<2x1x8xf32> to vector<2x8x8xf32>
    %66 = arith.mulf %61, %65 : vector<2x8x8xf32>
    %67 = vector.extract_strided_slice %49 {offsets = [0, 0, 0], sizes = [2, 8, 8], strides = [1, 1, 1]} : vector<2x8x32xf32> to vector<2x8x8xf32>
    "tpu.trace_start"() <{level = 10 : i32, message = "bqk,bkd->bqd"}> : () -> ()
    %cst_20 = arith.constant dense<0.000000e+00> : vector<2x8x8xf32>
    %68 = tpu.matmul %66, %67, %cst_20 {dimension_numbers = #tpu.dot_dimension_numbers<[2], [1], [1], [2], [0, 0, 0, 1, 1, 2], [0], [0]>} : vector<2x8x8xf32>, vector<2x8x8xf32>, vector<2x8x8xf32> -> vector<2x8x8xf32>
    "tpu.trace_stop"() : () -> ()
    %69 = vector.shape_cast %68 : vector<2x8x8xf32> to vector<16x8xf32>
    %70 = vector.extract_strided_slice %8 {offsets = [0, 0], sizes = [8, 32], strides = [1, 1]} : vector<32x32xf32> to vector<8x32xf32>
    %cst_21 = arith.constant dense<0.000000e+00> : vector<16x32xf32>
    %71 = tpu.matmul %69, %70, %cst_21 {dimension_numbers = #tpu.dot_dimension_numbers<[1], [0], [0], [1], [0, 0, 1, 1], [], []>} : vector<16x8xf32>, vector<8x32xf32>, vector<16x32xf32> -> vector<16x32xf32>
    %72 = vector.extract_strided_slice %47 {offsets = [0, 0, 8], sizes = [2, 8, 8], strides = [1, 1, 1]} : vector<2x8x32xf32> to vector<2x8x8xf32>
    %73 = vector.extract_strided_slice %45 {offsets = [0, 0, 8], sizes = [2, 8, 8], strides = [1, 1, 1]} : vector<2x8x32xf32> to vector<2x8x8xf32>
    "tpu.trace_start"() <{level = 10 : i32, message = "bqd,bkd->bqk"}> : () -> ()
    %cst_22 = arith.constant dense<0.000000e+00> : vector<2x8x8xf32>
    %74 = tpu.matmul %72, %73, %cst_22 {dimension_numbers = #tpu.dot_dimension_numbers<[2], [2], [1], [1], [0, 0, 0, 1, 1, 1], [0], [0]>} : vector<2x8x8xf32>, vector<2x8x8xf32>, vector<2x8x8xf32> -> vector<2x8x8xf32>
    %cst_23 = arith.constant 0xFF800000 : f32
    "tpu.trace_stop"() : () -> ()
    %75 = vector.shape_cast %4 : vector<1x8x8xi1> to vector<1x8x8xi1>
    %76 = vector.broadcast %75 : vector<1x8x8xi1> to vector<2x8x8xi1>
    %77 = vector.broadcast %cst_23 : f32 to vector<2x8x8xf32>
    %78 = arith.select %76, %74, %77 : vector<2x8x8xi1>, vector<2x8x8xf32>
    %cst_24 = arith.constant dense<0xFF800000> : vector<2x8xf32>
    %79 = vector.multi_reduction <maximumf>, %78, %cst_24 [1] : vector<2x8x8xf32> to vector<2x8xf32>
    %80 = vector.shape_cast %79 : vector<2x8xf32> to vector<2x1x8xf32>
    %81 = vector.broadcast %80 : vector<2x1x8xf32> to vector<2x8x8xf32>
    %82 = arith.subf %78, %81 : vector<2x8x8xf32>
    %83 = math.exp %82 : vector<2x8x8xf32>
    %cst_25 = arith.constant dense<0.000000e+00> : vector<2x8xf32>
    %84 = vector.multi_reduction <add>, %83, %cst_25 [1] : vector<2x8x8xf32> to vector<2x8xf32>
    %85 = vector.shape_cast %84 : vector<2x8xf32> to vector<2x1x8xf32>
    %86 = tpu.reciprocal %85 {approx = true} : vector<2x1x8xf32> -> vector<2x1x8xf32>
    %87 = vector.broadcast %86 : vector<2x1x8xf32> to vector<2x8x8xf32>
    %88 = arith.mulf %83, %87 : vector<2x8x8xf32>
    %89 = vector.extract_strided_slice %49 {offsets = [0, 0, 8], sizes = [2, 8, 8], strides = [1, 1, 1]} : vector<2x8x32xf32> to vector<2x8x8xf32>
    "tpu.trace_start"() <{level = 10 : i32, message = "bqk,bkd->bqd"}> : () -> ()
    %cst_26 = arith.constant dense<0.000000e+00> : vector<2x8x8xf32>
    %90 = tpu.matmul %88, %89, %cst_26 {dimension_numbers = #tpu.dot_dimension_numbers<[2], [1], [1], [2], [0, 0, 0, 1, 1, 2], [0], [0]>} : vector<2x8x8xf32>, vector<2x8x8xf32>, vector<2x8x8xf32> -> vector<2x8x8xf32>
    "tpu.trace_stop"() : () -> ()
    %91 = vector.shape_cast %90 : vector<2x8x8xf32> to vector<16x8xf32>
    %92 = vector.extract_strided_slice %8 {offsets = [8, 0], sizes = [8, 32], strides = [1, 1]} : vector<32x32xf32> to vector<8x32xf32>
    %cst_27 = arith.constant dense<0.000000e+00> : vector<16x32xf32>
    %93 = tpu.matmul %91, %92, %cst_27 {dimension_numbers = #tpu.dot_dimension_numbers<[1], [0], [0], [1], [0, 0, 1, 1], [], []>} : vector<16x8xf32>, vector<8x32xf32>, vector<16x32xf32> -> vector<16x32xf32>
    %94 = arith.addf %71, %93 : vector<16x32xf32>
    %95 = vector.extract_strided_slice %47 {offsets = [0, 0, 16], sizes = [2, 8, 8], strides = [1, 1, 1]} : vector<2x8x32xf32> to vector<2x8x8xf32>
    %96 = vector.extract_strided_slice %45 {offsets = [0, 0, 16], sizes = [2, 8, 8], strides = [1, 1, 1]} : vector<2x8x32xf32> to vector<2x8x8xf32>
    "tpu.trace_start"() <{level = 10 : i32, message = "bqd,bkd->bqk"}> : () -> ()
    %cst_28 = arith.constant dense<0.000000e+00> : vector<2x8x8xf32>
    %97 = tpu.matmul %95, %96, %cst_28 {dimension_numbers = #tpu.dot_dimension_numbers<[2], [2], [1], [1], [0, 0, 0, 1, 1, 1], [0], [0]>} : vector<2x8x8xf32>, vector<2x8x8xf32>, vector<2x8x8xf32> -> vector<2x8x8xf32>
    %cst_29 = arith.constant 0xFF800000 : f32
    "tpu.trace_stop"() : () -> ()
    %98 = vector.shape_cast %4 : vector<1x8x8xi1> to vector<1x8x8xi1>
    %99 = vector.broadcast %98 : vector<1x8x8xi1> to vector<2x8x8xi1>
    %100 = vector.broadcast %cst_29 : f32 to vector<2x8x8xf32>
    %101 = arith.select %99, %97, %100 : vector<2x8x8xi1>, vector<2x8x8xf32>
    %cst_30 = arith.constant dense<0xFF800000> : vector<2x8xf32>
    %102 = vector.multi_reduction <maximumf>, %101, %cst_30 [1] : vector<2x8x8xf32> to vector<2x8xf32>
    %103 = vector.shape_cast %102 : vector<2x8xf32> to vector<2x1x8xf32>
    %104 = vector.broadcast %103 : vector<2x1x8xf32> to vector<2x8x8xf32>
    %105 = arith.subf %101, %104 : vector<2x8x8xf32>
    %106 = math.exp %105 : vector<2x8x8xf32>
    %cst_31 = arith.constant dense<0.000000e+00> : vector<2x8xf32>
    %107 = vector.multi_reduction <add>, %106, %cst_31 [1] : vector<2x8x8xf32> to vector<2x8xf32>
    %108 = vector.shape_cast %107 : vector<2x8xf32> to vector<2x1x8xf32>
    %109 = tpu.reciprocal %108 {approx = true} : vector<2x1x8xf32> -> vector<2x1x8xf32>
    %110 = vector.broadcast %109 : vector<2x1x8xf32> to vector<2x8x8xf32>
    %111 = arith.mulf %106, %110 : vector<2x8x8xf32>
    %112 = vector.extract_strided_slice %49 {offsets = [0, 0, 16], sizes = [2, 8, 8], strides = [1, 1, 1]} : vector<2x8x32xf32> to vector<2x8x8xf32>
    "tpu.trace_start"() <{level = 10 : i32, message = "bqk,bkd->bqd"}> : () -> ()
    %cst_32 = arith.constant dense<0.000000e+00> : vector<2x8x8xf32>
    %113 = tpu.matmul %111, %112, %cst_32 {dimension_numbers = #tpu.dot_dimension_numbers<[2], [1], [1], [2], [0, 0, 0, 1, 1, 2], [0], [0]>} : vector<2x8x8xf32>, vector<2x8x8xf32>, vector<2x8x8xf32> -> vector<2x8x8xf32>
    "tpu.trace_stop"() : () -> ()
    %114 = vector.shape_cast %113 : vector<2x8x8xf32> to vector<16x8xf32>
    %115 = vector.extract_strided_slice %8 {offsets = [16, 0], sizes = [8, 32], strides = [1, 1]} : vector<32x32xf32> to vector<8x32xf32>
    %cst_33 = arith.constant dense<0.000000e+00> : vector<16x32xf32>
    %116 = tpu.matmul %114, %115, %cst_33 {dimension_numbers = #tpu.dot_dimension_numbers<[1], [0], [0], [1], [0, 0, 1, 1], [], []>} : vector<16x8xf32>, vector<8x32xf32>, vector<16x32xf32> -> vector<16x32xf32>
    %117 = arith.addf %94, %116 : vector<16x32xf32>
    %118 = vector.extract_strided_slice %47 {offsets = [0, 0, 24], sizes = [2, 8, 8], strides = [1, 1, 1]} : vector<2x8x32xf32> to vector<2x8x8xf32>
    %119 = vector.extract_strided_slice %45 {offsets = [0, 0, 24], sizes = [2, 8, 8], strides = [1, 1, 1]} : vector<2x8x32xf32> to vector<2x8x8xf32>
    "tpu.trace_start"() <{level = 10 : i32, message = "bqd,bkd->bqk"}> : () -> ()
    %cst_34 = arith.constant dense<0.000000e+00> : vector<2x8x8xf32>
    %120 = tpu.matmul %118, %119, %cst_34 {dimension_numbers = #tpu.dot_dimension_numbers<[2], [2], [1], [1], [0, 0, 0, 1, 1, 1], [0], [0]>} : vector<2x8x8xf32>, vector<2x8x8xf32>, vector<2x8x8xf32> -> vector<2x8x8xf32>
    %cst_35 = arith.constant 0xFF800000 : f32
    "tpu.trace_stop"() : () -> ()
    %121 = vector.shape_cast %4 : vector<1x8x8xi1> to vector<1x8x8xi1>
    %122 = vector.broadcast %121 : vector<1x8x8xi1> to vector<2x8x8xi1>
    %123 = vector.broadcast %cst_35 : f32 to vector<2x8x8xf32>
    %124 = arith.select %122, %120, %123 : vector<2x8x8xi1>, vector<2x8x8xf32>
    %cst_36 = arith.constant dense<0xFF800000> : vector<2x8xf32>
    %125 = vector.multi_reduction <maximumf>, %124, %cst_36 [1] : vector<2x8x8xf32> to vector<2x8xf32>
    %126 = vector.shape_cast %125 : vector<2x8xf32> to vector<2x1x8xf32>
    %127 = vector.broadcast %126 : vector<2x1x8xf32> to vector<2x8x8xf32>
    %128 = arith.subf %124, %127 : vector<2x8x8xf32>
    %129 = math.exp %128 : vector<2x8x8xf32>
    %cst_37 = arith.constant dense<0.000000e+00> : vector<2x8xf32>
    %130 = vector.multi_reduction <add>, %129, %cst_37 [1] : vector<2x8x8xf32> to vector<2x8xf32>
    %131 = vector.shape_cast %130 : vector<2x8xf32> to vector<2x1x8xf32>
    %132 = tpu.reciprocal %131 {approx = true} : vector<2x1x8xf32> -> vector<2x1x8xf32>
    %133 = vector.broadcast %132 : vector<2x1x8xf32> to vector<2x8x8xf32>
    %134 = arith.mulf %129, %133 : vector<2x8x8xf32>
    %135 = vector.extract_strided_slice %49 {offsets = [0, 0, 24], sizes = [2, 8, 8], strides = [1, 1, 1]} : vector<2x8x32xf32> to vector<2x8x8xf32>
    "tpu.trace_start"() <{level = 10 : i32, message = "bqk,bkd->bqd"}> : () -> ()
    %cst_38 = arith.constant dense<0.000000e+00> : vector<2x8x8xf32>
    %136 = tpu.matmul %134, %135, %cst_38 {dimension_numbers = #tpu.dot_dimension_numbers<[2], [1], [1], [2], [0, 0, 0, 1, 1, 2], [0], [0]>} : vector<2x8x8xf32>, vector<2x8x8xf32>, vector<2x8x8xf32> -> vector<2x8x8xf32>
    "tpu.trace_stop"() : () -> ()
    %137 = vector.shape_cast %136 : vector<2x8x8xf32> to vector<16x8xf32>
    %138 = vector.extract_strided_slice %8 {offsets = [24, 0], sizes = [8, 32], strides = [1, 1]} : vector<32x32xf32> to vector<8x32xf32>
    %cst_39 = arith.constant dense<0.000000e+00> : vector<16x32xf32>
    %139 = tpu.matmul %137, %138, %cst_39 {dimension_numbers = #tpu.dot_dimension_numbers<[1], [0], [0], [1], [0, 0, 1, 1], [], []>} : vector<16x8xf32>, vector<8x32xf32>, vector<16x32xf32> -> vector<16x32xf32>
    %140 = arith.addf %117, %139 : vector<16x32xf32>
    %141 = arith.addf %1, %140 : vector<16x32xf32>
    %142 = vector.broadcast %18 : vector<1x32xf32> to vector<16x32xf32>
    %143 = arith.addf %141, %142 : vector<16x32xf32>
    %cst_40 = arith.constant dense<0.000000e+00> : vector<16xf32>
    %144 = vector.multi_reduction <add>, %143, %cst_40 [1] : vector<16x32xf32> to vector<16xf32>
    %145 = vector.shape_cast %144 : vector<16xf32> to vector<16x1xf32>
    %cst_41 = arith.constant 3.200000e+01 : f32
    %146 = vector.broadcast %cst_41 : f32 to vector<16x1xf32>
    %147 = arith.divf %145, %146 : vector<16x1xf32>
    %148 = vector.broadcast %147 : vector<16x1xf32> to vector<16x32xf32>
    %149 = arith.subf %143, %148 : vector<16x32xf32>
    %150 = arith.mulf %149, %149 : vector<16x32xf32>
    %cst_42 = arith.constant dense<0.000000e+00> : vector<16xf32>
    %151 = vector.multi_reduction <add>, %150, %cst_42 [1] : vector<16x32xf32> to vector<16xf32>
    %152 = vector.shape_cast %151 : vector<16xf32> to vector<16x1xf32>
    %cst_43 = arith.constant 3.200000e+01 : f32
    %153 = vector.broadcast %cst_43 : f32 to vector<16x1xf32>
    %154 = arith.divf %152, %153 : vector<16x1xf32>
    %155 = vector.broadcast %147 : vector<16x1xf32> to vector<16x32xf32>
    %156 = arith.subf %143, %155 : vector<16x32xf32>
    %cst_44 = arith.constant 9.99999974E-6 : f32
    %157 = vector.broadcast %cst_44 : f32 to vector<16x1xf32>
    %158 = arith.addf %154, %157 : vector<16x1xf32>
    %159 = math.rsqrt %158 : vector<16x1xf32>
    %160 = vector.broadcast %159 : vector<16x1xf32> to vector<16x32xf32>
    %161 = arith.mulf %156, %160 : vector<16x32xf32>
    %162 = vector.broadcast %16 : vector<1x32xf32> to vector<16x32xf32>
    %163 = arith.mulf %161, %162 : vector<16x32xf32>
    %164 = vector.broadcast %17 : vector<1x32xf32> to vector<16x32xf32>
    %165 = arith.addf %163, %164 : vector<16x32xf32>
    %cst_45 = arith.constant dense<0.000000e+00> : vector<16x128xf32>
    %166 = tpu.matmul %165, %9, %cst_45 {dimension_numbers = #tpu.dot_dimension_numbers<[1], [0], [0], [1], [0, 0, 1, 1], [], []>} : vector<16x32xf32>, vector<32x128xf32>, vector<16x128xf32> -> vector<16x128xf32>
    %167 = vector.broadcast %20 : vector<1x128xf32> to vector<16x128xf32>
    %168 = arith.addf %166, %167 : vector<16x128xf32>
    %cst_46 = arith.constant 0.000000e+00 : f32
    %169 = vector.broadcast %cst_46 : f32 to vector<16x128xf32>
    %170 = arith.maximumf %168, %169 : vector<16x128xf32>
    %cst_47 = arith.constant dense<0.000000e+00> : vector<16x32xf32>
    %171 = tpu.matmul %170, %11, %cst_47 {dimension_numbers = #tpu.dot_dimension_numbers<[1], [0], [0], [1], [0, 0, 1, 1], [], []>} : vector<16x128xf32>, vector<128x32xf32>, vector<16x32xf32> -> vector<16x32xf32>
    %172 = arith.addf %143, %171 : vector<16x32xf32>
    %173 = vector.broadcast %19 : vector<1x32xf32> to vector<16x32xf32>
    %174 = arith.addf %172, %173 : vector<16x32xf32>
    %c1 = arith.constant 1 : index
    %c0_48 = arith.constant 0 : index
    %c0_49 = arith.constant 0 : index
    %175 = vector.load %arg2[%c1, %c0_48, %c0_49] : memref<3x32x256xf32, #tpu.memory_space<vmem>>, vector<1x32x256xf32>
    %176 = vector.shape_cast %175 : vector<1x32x256xf32> to vector<32x256xf32>
    %177 = vector.extract_strided_slice %176 {offsets = [0, 0], sizes = [32, 96], strides = [1, 1]} : vector<32x256xf32> to vector<32x96xf32>
    %178 = vector.extract_strided_slice %176 {offsets = [0, 96], sizes = [32, 32], strides = [1, 1]} : vector<32x256xf32> to vector<32x32xf32>
    %179 = vector.extract_strided_slice %176 {offsets = [0, 128], sizes = [32, 128], strides = [1, 1]} : vector<32x256xf32> to vector<32x128xf32>
    %c1_50 = arith.constant 1 : index
    %c0_51 = arith.constant 0 : index
    %c0_52 = arith.constant 0 : index
    %180 = vector.load %arg3[%c1_50, %c0_51, %c0_52] : memref<3x128x32xf32, #tpu.memory_space<vmem>>, vector<1x128x32xf32>
    %181 = vector.shape_cast %180 : vector<1x128x32xf32> to vector<128x32xf32>
    %c1_53 = arith.constant 1 : index
    %c0_54 = arith.constant 0 : index
    %c0_55 = arith.constant 0 : index
    %182 = vector.load %arg4[%c1_53, %c0_54, %c0_55] : memref<3x8x128xf32, #tpu.memory_space<vmem>>, vector<1x8x128xf32>
    %183 = vector.shape_cast %182 : vector<1x8x128xf32> to vector<8x128xf32>
    %184 = vector.extract_strided_slice %183 {offsets = [0, 0], sizes = [1, 32], strides = [1, 1]} : vector<8x128xf32> to vector<1x32xf32>
    %185 = vector.extract_strided_slice %183 {offsets = [1, 0], sizes = [1, 32], strides = [1, 1]} : vector<8x128xf32> to vector<1x32xf32>
    %186 = vector.extract_strided_slice %183 {offsets = [2, 0], sizes = [1, 32], strides = [1, 1]} : vector<8x128xf32> to vector<1x32xf32>
    %187 = vector.extract_strided_slice %183 {offsets = [3, 0], sizes = [1, 32], strides = [1, 1]} : vector<8x128xf32> to vector<1x32xf32>
    %188 = vector.extract_strided_slice %183 {offsets = [4, 0], sizes = [1, 32], strides = [1, 1]} : vector<8x128xf32> to vector<1x32xf32>
    %189 = vector.extract_strided_slice %183 {offsets = [5, 0], sizes = [1, 32], strides = [1, 1]} : vector<8x128xf32> to vector<1x32xf32>
    %190 = vector.extract_strided_slice %183 {offsets = [6, 0], sizes = [1, 128], strides = [1, 1]} : vector<8x128xf32> to vector<1x128xf32>
    %cst_56 = arith.constant dense<0.000000e+00> : vector<16xf32>
    %191 = vector.multi_reduction <add>, %174, %cst_56 [1] : vector<16x32xf32> to vector<16xf32>
    %192 = vector.shape_cast %191 : vector<16xf32> to vector<16x1xf32>
    %cst_57 = arith.constant 3.200000e+01 : f32
    %193 = vector.broadcast %cst_57 : f32 to vector<16x1xf32>
    %194 = arith.divf %192, %193 : vector<16x1xf32>
    %195 = vector.broadcast %194 : vector<16x1xf32> to vector<16x32xf32>
    %196 = arith.subf %174, %195 : vector<16x32xf32>
    %197 = arith.mulf %196, %196 : vector<16x32xf32>
    %cst_58 = arith.constant dense<0.000000e+00> : vector<16xf32>
    %198 = vector.multi_reduction <add>, %197, %cst_58 [1] : vector<16x32xf32> to vector<16xf32>
    %199 = vector.shape_cast %198 : vector<16xf32> to vector<16x1xf32>
    %cst_59 = arith.constant 3.200000e+01 : f32
    %200 = vector.broadcast %cst_59 : f32 to vector<16x1xf32>
    %201 = arith.divf %199, %200 : vector<16x1xf32>
    %202 = vector.broadcast %194 : vector<16x1xf32> to vector<16x32xf32>
    %203 = arith.subf %174, %202 : vector<16x32xf32>
    %cst_60 = arith.constant 9.99999974E-6 : f32
    %204 = vector.broadcast %cst_60 : f32 to vector<16x1xf32>
    %205 = arith.addf %201, %204 : vector<16x1xf32>
    %206 = math.rsqrt %205 : vector<16x1xf32>
    %207 = vector.broadcast %206 : vector<16x1xf32> to vector<16x32xf32>
    %208 = arith.mulf %203, %207 : vector<16x32xf32>
    %209 = vector.broadcast %184 : vector<1x32xf32> to vector<16x32xf32>
    %210 = arith.mulf %208, %209 : vector<16x32xf32>
    %211 = vector.broadcast %185 : vector<1x32xf32> to vector<16x32xf32>
    %212 = arith.addf %210, %211 : vector<16x32xf32>
    %cst_61 = arith.constant dense<0.000000e+00> : vector<16x96xf32>
    %213 = tpu.matmul %212, %177, %cst_61 {dimension_numbers = #tpu.dot_dimension_numbers<[1], [0], [0], [1], [0, 0, 1, 1], [], []>} : vector<16x32xf32>, vector<32x96xf32>, vector<16x96xf32> -> vector<16x96xf32>
    %214 = vector.extract_strided_slice %213 {offsets = [0, 0], sizes = [16, 32], strides = [1, 1]} : vector<16x96xf32> to vector<16x32xf32>
    %215 = vector.shape_cast %214 : vector<16x32xf32> to vector<2x8x32xf32>
    %216 = vector.extract_strided_slice %213 {offsets = [0, 32], sizes = [16, 32], strides = [1, 1]} : vector<16x96xf32> to vector<16x32xf32>
    %217 = vector.shape_cast %216 : vector<16x32xf32> to vector<2x8x32xf32>
    %218 = vector.extract_strided_slice %213 {offsets = [0, 64], sizes = [16, 32], strides = [1, 1]} : vector<16x96xf32> to vector<16x32xf32>
    %219 = vector.shape_cast %218 : vector<16x32xf32> to vector<2x8x32xf32>
    %220 = vector.extract_strided_slice %217 {offsets = [0, 0, 0], sizes = [2, 8, 8], strides = [1, 1, 1]} : vector<2x8x32xf32> to vector<2x8x8xf32>
    %221 = vector.extract_strided_slice %215 {offsets = [0, 0, 0], sizes = [2, 8, 8], strides = [1, 1, 1]} : vector<2x8x32xf32> to vector<2x8x8xf32>
    "tpu.trace_start"() <{level = 10 : i32, message = "bqd,bkd->bqk"}> : () -> ()
    %cst_62 = arith.constant dense<0.000000e+00> : vector<2x8x8xf32>
    %222 = tpu.matmul %220, %221, %cst_62 {dimension_numbers = #tpu.dot_dimension_numbers<[2], [2], [1], [1], [0, 0, 0, 1, 1, 1], [0], [0]>} : vector<2x8x8xf32>, vector<2x8x8xf32>, vector<2x8x8xf32> -> vector<2x8x8xf32>
    %cst_63 = arith.constant 0xFF800000 : f32
    "tpu.trace_stop"() : () -> ()
    %223 = vector.shape_cast %4 : vector<1x8x8xi1> to vector<1x8x8xi1>
    %224 = vector.broadcast %223 : vector<1x8x8xi1> to vector<2x8x8xi1>
    %225 = vector.broadcast %cst_63 : f32 to vector<2x8x8xf32>
    %226 = arith.select %224, %222, %225 : vector<2x8x8xi1>, vector<2x8x8xf32>
    %cst_64 = arith.constant dense<0xFF800000> : vector<2x8xf32>
    %227 = vector.multi_reduction <maximumf>, %226, %cst_64 [1] : vector<2x8x8xf32> to vector<2x8xf32>
    %228 = vector.shape_cast %227 : vector<2x8xf32> to vector<2x1x8xf32>
    %229 = vector.broadcast %228 : vector<2x1x8xf32> to vector<2x8x8xf32>
    %230 = arith.subf %226, %229 : vector<2x8x8xf32>
    %231 = math.exp %230 : vector<2x8x8xf32>
    %cst_65 = arith.constant dense<0.000000e+00> : vector<2x8xf32>
    %232 = vector.multi_reduction <add>, %231, %cst_65 [1] : vector<2x8x8xf32> to vector<2x8xf32>
    %233 = vector.shape_cast %232 : vector<2x8xf32> to vector<2x1x8xf32>
    %234 = tpu.reciprocal %233 {approx = true} : vector<2x1x8xf32> -> vector<2x1x8xf32>
    %235 = vector.broadcast %234 : vector<2x1x8xf32> to vector<2x8x8xf32>
    %236 = arith.mulf %231, %235 : vector<2x8x8xf32>
    %237 = vector.extract_strided_slice %219 {offsets = [0, 0, 0], sizes = [2, 8, 8], strides = [1, 1, 1]} : vector<2x8x32xf32> to vector<2x8x8xf32>
    "tpu.trace_start"() <{level = 10 : i32, message = "bqk,bkd->bqd"}> : () -> ()
    %cst_66 = arith.constant dense<0.000000e+00> : vector<2x8x8xf32>
    %238 = tpu.matmul %236, %237, %cst_66 {dimension_numbers = #tpu.dot_dimension_numbers<[2], [1], [1], [2], [0, 0, 0, 1, 1, 2], [0], [0]>} : vector<2x8x8xf32>, vector<2x8x8xf32>, vector<2x8x8xf32> -> vector<2x8x8xf32>
    "tpu.trace_stop"() : () -> ()
    %239 = vector.shape_cast %238 : vector<2x8x8xf32> to vector<16x8xf32>
    %240 = vector.extract_strided_slice %178 {offsets = [0, 0], sizes = [8, 32], strides = [1, 1]} : vector<32x32xf32> to vector<8x32xf32>
    %cst_67 = arith.constant dense<0.000000e+00> : vector<16x32xf32>
    %241 = tpu.matmul %239, %240, %cst_67 {dimension_numbers = #tpu.dot_dimension_numbers<[1], [0], [0], [1], [0, 0, 1, 1], [], []>} : vector<16x8xf32>, vector<8x32xf32>, vector<16x32xf32> -> vector<16x32xf32>
    %242 = vector.extract_strided_slice %217 {offsets = [0, 0, 8], sizes = [2, 8, 8], strides = [1, 1, 1]} : vector<2x8x32xf32> to vector<2x8x8xf32>
    %243 = vector.extract_strided_slice %215 {offsets = [0, 0, 8], sizes = [2, 8, 8], strides = [1, 1, 1]} : vector<2x8x32xf32> to vector<2x8x8xf32>
    "tpu.trace_start"() <{level = 10 : i32, message = "bqd,bkd->bqk"}> : () -> ()
    %cst_68 = arith.constant dense<0.000000e+00> : vector<2x8x8xf32>
    %244 = tpu.matmul %242, %243, %cst_68 {dimension_numbers = #tpu.dot_dimension_numbers<[2], [2], [1], [1], [0, 0, 0, 1, 1, 1], [0], [0]>} : vector<2x8x8xf32>, vector<2x8x8xf32>, vector<2x8x8xf32> -> vector<2x8x8xf32>
    %cst_69 = arith.constant 0xFF800000 : f32
    "tpu.trace_stop"() : () -> ()
    %245 = vector.shape_cast %4 : vector<1x8x8xi1> to vector<1x8x8xi1>
    %246 = vector.broadcast %245 : vector<1x8x8xi1> to vector<2x8x8xi1>
    %247 = vector.broadcast %cst_69 : f32 to vector<2x8x8xf32>
    %248 = arith.select %246, %244, %247 : vector<2x8x8xi1>, vector<2x8x8xf32>
    %cst_70 = arith.constant dense<0xFF800000> : vector<2x8xf32>
    %249 = vector.multi_reduction <maximumf>, %248, %cst_70 [1] : vector<2x8x8xf32> to vector<2x8xf32>
    %250 = vector.shape_cast %249 : vector<2x8xf32> to vector<2x1x8xf32>
    %251 = vector.broadcast %250 : vector<2x1x8xf32> to vector<2x8x8xf32>
    %252 = arith.subf %248, %251 : vector<2x8x8xf32>
    %253 = math.exp %252 : vector<2x8x8xf32>
    %cst_71 = arith.constant dense<0.000000e+00> : vector<2x8xf32>
    %254 = vector.multi_reduction <add>, %253, %cst_71 [1] : vector<2x8x8xf32> to vector<2x8xf32>
    %255 = vector.shape_cast %254 : vector<2x8xf32> to vector<2x1x8xf32>
    %256 = tpu.reciprocal %255 {approx = true} : vector<2x1x8xf32> -> vector<2x1x8xf32>
    %257 = vector.broadcast %256 : vector<2x1x8xf32> to vector<2x8x8xf32>
    %258 = arith.mulf %253, %257 : vector<2x8x8xf32>
    %259 = vector.extract_strided_slice %219 {offsets = [0, 0, 8], sizes = [2, 8, 8], strides = [1, 1, 1]} : vector<2x8x32xf32> to vector<2x8x8xf32>
    "tpu.trace_start"() <{level = 10 : i32, message = "bqk,bkd->bqd"}> : () -> ()
    %cst_72 = arith.constant dense<0.000000e+00> : vector<2x8x8xf32>
    %260 = tpu.matmul %258, %259, %cst_72 {dimension_numbers = #tpu.dot_dimension_numbers<[2], [1], [1], [2], [0, 0, 0, 1, 1, 2], [0], [0]>} : vector<2x8x8xf32>, vector<2x8x8xf32>, vector<2x8x8xf32> -> vector<2x8x8xf32>
    "tpu.trace_stop"() : () -> ()
    %261 = vector.shape_cast %260 : vector<2x8x8xf32> to vector<16x8xf32>
    %262 = vector.extract_strided_slice %178 {offsets = [8, 0], sizes = [8, 32], strides = [1, 1]} : vector<32x32xf32> to vector<8x32xf32>
    %cst_73 = arith.constant dense<0.000000e+00> : vector<16x32xf32>
    %263 = tpu.matmul %261, %262, %cst_73 {dimension_numbers = #tpu.dot_dimension_numbers<[1], [0], [0], [1], [0, 0, 1, 1], [], []>} : vector<16x8xf32>, vector<8x32xf32>, vector<16x32xf32> -> vector<16x32xf32>
    %264 = arith.addf %241, %263 : vector<16x32xf32>
    %265 = vector.extract_strided_slice %217 {offsets = [0, 0, 16], sizes = [2, 8, 8], strides = [1, 1, 1]} : vector<2x8x32xf32> to vector<2x8x8xf32>
    %266 = vector.extract_strided_slice %215 {offsets = [0, 0, 16], sizes = [2, 8, 8], strides = [1, 1, 1]} : vector<2x8x32xf32> to vector<2x8x8xf32>
    "tpu.trace_start"() <{level = 10 : i32, message = "bqd,bkd->bqk"}> : () -> ()
    %cst_74 = arith.constant dense<0.000000e+00> : vector<2x8x8xf32>
    %267 = tpu.matmul %265, %266, %cst_74 {dimension_numbers = #tpu.dot_dimension_numbers<[2], [2], [1], [1], [0, 0, 0, 1, 1, 1], [0], [0]>} : vector<2x8x8xf32>, vector<2x8x8xf32>, vector<2x8x8xf32> -> vector<2x8x8xf32>
    %cst_75 = arith.constant 0xFF800000 : f32
    "tpu.trace_stop"() : () -> ()
    %268 = vector.shape_cast %4 : vector<1x8x8xi1> to vector<1x8x8xi1>
    %269 = vector.broadcast %268 : vector<1x8x8xi1> to vector<2x8x8xi1>
    %270 = vector.broadcast %cst_75 : f32 to vector<2x8x8xf32>
    %271 = arith.select %269, %267, %270 : vector<2x8x8xi1>, vector<2x8x8xf32>
    %cst_76 = arith.constant dense<0xFF800000> : vector<2x8xf32>
    %272 = vector.multi_reduction <maximumf>, %271, %cst_76 [1] : vector<2x8x8xf32> to vector<2x8xf32>
    %273 = vector.shape_cast %272 : vector<2x8xf32> to vector<2x1x8xf32>
    %274 = vector.broadcast %273 : vector<2x1x8xf32> to vector<2x8x8xf32>
    %275 = arith.subf %271, %274 : vector<2x8x8xf32>
    %276 = math.exp %275 : vector<2x8x8xf32>
    %cst_77 = arith.constant dense<0.000000e+00> : vector<2x8xf32>
    %277 = vector.multi_reduction <add>, %276, %cst_77 [1] : vector<2x8x8xf32> to vector<2x8xf32>
    %278 = vector.shape_cast %277 : vector<2x8xf32> to vector<2x1x8xf32>
    %279 = tpu.reciprocal %278 {approx = true} : vector<2x1x8xf32> -> vector<2x1x8xf32>
    %280 = vector.broadcast %279 : vector<2x1x8xf32> to vector<2x8x8xf32>
    %281 = arith.mulf %276, %280 : vector<2x8x8xf32>
    %282 = vector.extract_strided_slice %219 {offsets = [0, 0, 16], sizes = [2, 8, 8], strides = [1, 1, 1]} : vector<2x8x32xf32> to vector<2x8x8xf32>
    "tpu.trace_start"() <{level = 10 : i32, message = "bqk,bkd->bqd"}> : () -> ()
    %cst_78 = arith.constant dense<0.000000e+00> : vector<2x8x8xf32>
    %283 = tpu.matmul %281, %282, %cst_78 {dimension_numbers = #tpu.dot_dimension_numbers<[2], [1], [1], [2], [0, 0, 0, 1, 1, 2], [0], [0]>} : vector<2x8x8xf32>, vector<2x8x8xf32>, vector<2x8x8xf32> -> vector<2x8x8xf32>
    "tpu.trace_stop"() : () -> ()
    %284 = vector.shape_cast %283 : vector<2x8x8xf32> to vector<16x8xf32>
    %285 = vector.extract_strided_slice %178 {offsets = [16, 0], sizes = [8, 32], strides = [1, 1]} : vector<32x32xf32> to vector<8x32xf32>
    %cst_79 = arith.constant dense<0.000000e+00> : vector<16x32xf32>
    %286 = tpu.matmul %284, %285, %cst_79 {dimension_numbers = #tpu.dot_dimension_numbers<[1], [0], [0], [1], [0, 0, 1, 1], [], []>} : vector<16x8xf32>, vector<8x32xf32>, vector<16x32xf32> -> vector<16x32xf32>
    %287 = arith.addf %264, %286 : vector<16x32xf32>
    %288 = vector.extract_strided_slice %217 {offsets = [0, 0, 24], sizes = [2, 8, 8], strides = [1, 1, 1]} : vector<2x8x32xf32> to vector<2x8x8xf32>
    %289 = vector.extract_strided_slice %215 {offsets = [0, 0, 24], sizes = [2, 8, 8], strides = [1, 1, 1]} : vector<2x8x32xf32> to vector<2x8x8xf32>
    "tpu.trace_start"() <{level = 10 : i32, message = "bqd,bkd->bqk"}> : () -> ()
    %cst_80 = arith.constant dense<0.000000e+00> : vector<2x8x8xf32>
    %290 = tpu.matmul %288, %289, %cst_80 {dimension_numbers = #tpu.dot_dimension_numbers<[2], [2], [1], [1], [0, 0, 0, 1, 1, 1], [0], [0]>} : vector<2x8x8xf32>, vector<2x8x8xf32>, vector<2x8x8xf32> -> vector<2x8x8xf32>
    %cst_81 = arith.constant 0xFF800000 : f32
    "tpu.trace_stop"() : () -> ()
    %291 = vector.shape_cast %4 : vector<1x8x8xi1> to vector<1x8x8xi1>
    %292 = vector.broadcast %291 : vector<1x8x8xi1> to vector<2x8x8xi1>
    %293 = vector.broadcast %cst_81 : f32 to vector<2x8x8xf32>
    %294 = arith.select %292, %290, %293 : vector<2x8x8xi1>, vector<2x8x8xf32>
    %cst_82 = arith.constant dense<0xFF800000> : vector<2x8xf32>
    %295 = vector.multi_reduction <maximumf>, %294, %cst_82 [1] : vector<2x8x8xf32> to vector<2x8xf32>
    %296 = vector.shape_cast %295 : vector<2x8xf32> to vector<2x1x8xf32>
    %297 = vector.broadcast %296 : vector<2x1x8xf32> to vector<2x8x8xf32>
    %298 = arith.subf %294, %297 : vector<2x8x8xf32>
    %299 = math.exp %298 : vector<2x8x8xf32>
    %cst_83 = arith.constant dense<0.000000e+00> : vector<2x8xf32>
    %300 = vector.multi_reduction <add>, %299, %cst_83 [1] : vector<2x8x8xf32> to vector<2x8xf32>
    %301 = vector.shape_cast %300 : vector<2x8xf32> to vector<2x1x8xf32>
    %302 = tpu.reciprocal %301 {approx = true} : vector<2x1x8xf32> -> vector<2x1x8xf32>
    %303 = vector.broadcast %302 : vector<2x1x8xf32> to vector<2x8x8xf32>
    %304 = arith.mulf %299, %303 : vector<2x8x8xf32>
    %305 = vector.extract_strided_slice %219 {offsets = [0, 0, 24], sizes = [2, 8, 8], strides = [1, 1, 1]} : vector<2x8x32xf32> to vector<2x8x8xf32>
    "tpu.trace_start"() <{level = 10 : i32, message = "bqk,bkd->bqd"}> : () -> ()
    %cst_84 = arith.constant dense<0.000000e+00> : vector<2x8x8xf32>
    %306 = tpu.matmul %304, %305, %cst_84 {dimension_numbers = #tpu.dot_dimension_numbers<[2], [1], [1], [2], [0, 0, 0, 1, 1, 2], [0], [0]>} : vector<2x8x8xf32>, vector<2x8x8xf32>, vector<2x8x8xf32> -> vector<2x8x8xf32>
    "tpu.trace_stop"() : () -> ()
    %307 = vector.shape_cast %306 : vector<2x8x8xf32> to vector<16x8xf32>
    %308 = vector.extract_strided_slice %178 {offsets = [24, 0], sizes = [8, 32], strides = [1, 1]} : vector<32x32xf32> to vector<8x32xf32>
    %cst_85 = arith.constant dense<0.000000e+00> : vector<16x32xf32>
    %309 = tpu.matmul %307, %308, %cst_85 {dimension_numbers = #tpu.dot_dimension_numbers<[1], [0], [0], [1], [0, 0, 1, 1], [], []>} : vector<16x8xf32>, vector<8x32xf32>, vector<16x32xf32> -> vector<16x32xf32>
    %310 = arith.addf %287, %309 : vector<16x32xf32>
    %311 = arith.addf %174, %310 : vector<16x32xf32>
    %312 = vector.broadcast %188 : vector<1x32xf32> to vector<16x32xf32>
    %313 = arith.addf %311, %312 : vector<16x32xf32>
    %cst_86 = arith.constant dense<0.000000e+00> : vector<16xf32>
    %314 = vector.multi_reduction <add>, %313, %cst_86 [1] : vector<16x32xf32> to vector<16xf32>
    %315 = vector.shape_cast %314 : vector<16xf32> to vector<16x1xf32>
    %cst_87 = arith.constant 3.200000e+01 : f32
    %316 = vector.broadcast %cst_87 : f32 to vector<16x1xf32>
    %317 = arith.divf %315, %316 : vector<16x1xf32>
    %318 = vector.broadcast %317 : vector<16x1xf32> to vector<16x32xf32>
    %319 = arith.subf %313, %318 : vector<16x32xf32>
    %320 = arith.mulf %319, %319 : vector<16x32xf32>
    %cst_88 = arith.constant dense<0.000000e+00> : vector<16xf32>
    %321 = vector.multi_reduction <add>, %320, %cst_88 [1] : vector<16x32xf32> to vector<16xf32>
    %322 = vector.shape_cast %321 : vector<16xf32> to vector<16x1xf32>
    %cst_89 = arith.constant 3.200000e+01 : f32
    %323 = vector.broadcast %cst_89 : f32 to vector<16x1xf32>
    %324 = arith.divf %322, %323 : vector<16x1xf32>
    %325 = vector.broadcast %317 : vector<16x1xf32> to vector<16x32xf32>
    %326 = arith.subf %313, %325 : vector<16x32xf32>
    %cst_90 = arith.constant 9.99999974E-6 : f32
    %327 = vector.broadcast %cst_90 : f32 to vector<16x1xf32>
    %328 = arith.addf %324, %327 : vector<16x1xf32>
    %329 = math.rsqrt %328 : vector<16x1xf32>
    %330 = vector.broadcast %329 : vector<16x1xf32> to vector<16x32xf32>
    %331 = arith.mulf %326, %330 : vector<16x32xf32>
    %332 = vector.broadcast %186 : vector<1x32xf32> to vector<16x32xf32>
    %333 = arith.mulf %331, %332 : vector<16x32xf32>
    %334 = vector.broadcast %187 : vector<1x32xf32> to vector<16x32xf32>
    %335 = arith.addf %333, %334 : vector<16x32xf32>
    %cst_91 = arith.constant dense<0.000000e+00> : vector<16x128xf32>
    %336 = tpu.matmul %335, %179, %cst_91 {dimension_numbers = #tpu.dot_dimension_numbers<[1], [0], [0], [1], [0, 0, 1, 1], [], []>} : vector<16x32xf32>, vector<32x128xf32>, vector<16x128xf32> -> vector<16x128xf32>
    %337 = vector.broadcast %190 : vector<1x128xf32> to vector<16x128xf32>
    %338 = arith.addf %336, %337 : vector<16x128xf32>
    %cst_92 = arith.constant 0.000000e+00 : f32
    %339 = vector.broadcast %cst_92 : f32 to vector<16x128xf32>
    %340 = arith.maximumf %338, %339 : vector<16x128xf32>
    %cst_93 = arith.constant dense<0.000000e+00> : vector<16x32xf32>
    %341 = tpu.matmul %340, %181, %cst_93 {dimension_numbers = #tpu.dot_dimension_numbers<[1], [0], [0], [1], [0, 0, 1, 1], [], []>} : vector<16x128xf32>, vector<128x32xf32>, vector<16x32xf32> -> vector<16x32xf32>
    %342 = arith.addf %313, %341 : vector<16x32xf32>
    %343 = vector.broadcast %189 : vector<1x32xf32> to vector<16x32xf32>
    %344 = arith.addf %342, %343 : vector<16x32xf32>
    %c2 = arith.constant 2 : index
    %c0_94 = arith.constant 0 : index
    %c0_95 = arith.constant 0 : index
    %345 = vector.load %arg2[%c2, %c0_94, %c0_95] : memref<3x32x256xf32, #tpu.memory_space<vmem>>, vector<1x32x256xf32>
    %346 = vector.shape_cast %345 : vector<1x32x256xf32> to vector<32x256xf32>
    %347 = vector.extract_strided_slice %346 {offsets = [0, 0], sizes = [32, 96], strides = [1, 1]} : vector<32x256xf32> to vector<32x96xf32>
    %348 = vector.extract_strided_slice %346 {offsets = [0, 96], sizes = [32, 32], strides = [1, 1]} : vector<32x256xf32> to vector<32x32xf32>
    %349 = vector.extract_strided_slice %346 {offsets = [0, 128], sizes = [32, 128], strides = [1, 1]} : vector<32x256xf32> to vector<32x128xf32>
    %c2_96 = arith.constant 2 : index
    %c0_97 = arith.constant 0 : index
    %c0_98 = arith.constant 0 : index
    %350 = vector.load %arg3[%c2_96, %c0_97, %c0_98] : memref<3x128x32xf32, #tpu.memory_space<vmem>>, vector<1x128x32xf32>
    %351 = vector.shape_cast %350 : vector<1x128x32xf32> to vector<128x32xf32>
    %c2_99 = arith.constant 2 : index
    %c0_100 = arith.constant 0 : index
    %c0_101 = arith.constant 0 : index
    %352 = vector.load %arg4[%c2_99, %c0_100, %c0_101] : memref<3x8x128xf32, #tpu.memory_space<vmem>>, vector<1x8x128xf32>
    %353 = vector.shape_cast %352 : vector<1x8x128xf32> to vector<8x128xf32>
    %354 = vector.extract_strided_slice %353 {offsets = [0, 0], sizes = [1, 32], strides = [1, 1]} : vector<8x128xf32> to vector<1x32xf32>
    %355 = vector.extract_strided_slice %353 {offsets = [1, 0], sizes = [1, 32], strides = [1, 1]} : vector<8x128xf32> to vector<1x32xf32>
    %356 = vector.extract_strided_slice %353 {offsets = [2, 0], sizes = [1, 32], strides = [1, 1]} : vector<8x128xf32> to vector<1x32xf32>
    %357 = vector.extract_strided_slice %353 {offsets = [3, 0], sizes = [1, 32], strides = [1, 1]} : vector<8x128xf32> to vector<1x32xf32>
    %358 = vector.extract_strided_slice %353 {offsets = [4, 0], sizes = [1, 32], strides = [1, 1]} : vector<8x128xf32> to vector<1x32xf32>
    %359 = vector.extract_strided_slice %353 {offsets = [5, 0], sizes = [1, 32], strides = [1, 1]} : vector<8x128xf32> to vector<1x32xf32>
    %360 = vector.extract_strided_slice %353 {offsets = [6, 0], sizes = [1, 128], strides = [1, 1]} : vector<8x128xf32> to vector<1x128xf32>
    %cst_102 = arith.constant dense<0.000000e+00> : vector<16xf32>
    %361 = vector.multi_reduction <add>, %344, %cst_102 [1] : vector<16x32xf32> to vector<16xf32>
    %362 = vector.shape_cast %361 : vector<16xf32> to vector<16x1xf32>
    %cst_103 = arith.constant 3.200000e+01 : f32
    %363 = vector.broadcast %cst_103 : f32 to vector<16x1xf32>
    %364 = arith.divf %362, %363 : vector<16x1xf32>
    %365 = vector.broadcast %364 : vector<16x1xf32> to vector<16x32xf32>
    %366 = arith.subf %344, %365 : vector<16x32xf32>
    %367 = arith.mulf %366, %366 : vector<16x32xf32>
    %cst_104 = arith.constant dense<0.000000e+00> : vector<16xf32>
    %368 = vector.multi_reduction <add>, %367, %cst_104 [1] : vector<16x32xf32> to vector<16xf32>
    %369 = vector.shape_cast %368 : vector<16xf32> to vector<16x1xf32>
    %cst_105 = arith.constant 3.200000e+01 : f32
    %370 = vector.broadcast %cst_105 : f32 to vector<16x1xf32>
    %371 = arith.divf %369, %370 : vector<16x1xf32>
    %372 = vector.broadcast %364 : vector<16x1xf32> to vector<16x32xf32>
    %373 = arith.subf %344, %372 : vector<16x32xf32>
    %cst_106 = arith.constant 9.99999974E-6 : f32
    %374 = vector.broadcast %cst_106 : f32 to vector<16x1xf32>
    %375 = arith.addf %371, %374 : vector<16x1xf32>
    %376 = math.rsqrt %375 : vector<16x1xf32>
    %377 = vector.broadcast %376 : vector<16x1xf32> to vector<16x32xf32>
    %378 = arith.mulf %373, %377 : vector<16x32xf32>
    %379 = vector.broadcast %354 : vector<1x32xf32> to vector<16x32xf32>
    %380 = arith.mulf %378, %379 : vector<16x32xf32>
    %381 = vector.broadcast %355 : vector<1x32xf32> to vector<16x32xf32>
    %382 = arith.addf %380, %381 : vector<16x32xf32>
    %cst_107 = arith.constant dense<0.000000e+00> : vector<16x96xf32>
    %383 = tpu.matmul %382, %347, %cst_107 {dimension_numbers = #tpu.dot_dimension_numbers<[1], [0], [0], [1], [0, 0, 1, 1], [], []>} : vector<16x32xf32>, vector<32x96xf32>, vector<16x96xf32> -> vector<16x96xf32>
    %384 = vector.extract_strided_slice %383 {offsets = [0, 0], sizes = [16, 32], strides = [1, 1]} : vector<16x96xf32> to vector<16x32xf32>
    %385 = vector.shape_cast %384 : vector<16x32xf32> to vector<2x8x32xf32>
    %386 = vector.extract_strided_slice %383 {offsets = [0, 32], sizes = [16, 32], strides = [1, 1]} : vector<16x96xf32> to vector<16x32xf32>
    %387 = vector.shape_cast %386 : vector<16x32xf32> to vector<2x8x32xf32>
    %388 = vector.extract_strided_slice %383 {offsets = [0, 64], sizes = [16, 32], strides = [1, 1]} : vector<16x96xf32> to vector<16x32xf32>
    %389 = vector.shape_cast %388 : vector<16x32xf32> to vector<2x8x32xf32>
    %390 = vector.extract_strided_slice %387 {offsets = [0, 0, 0], sizes = [2, 8, 8], strides = [1, 1, 1]} : vector<2x8x32xf32> to vector<2x8x8xf32>
    %391 = vector.extract_strided_slice %385 {offsets = [0, 0, 0], sizes = [2, 8, 8], strides = [1, 1, 1]} : vector<2x8x32xf32> to vector<2x8x8xf32>
    "tpu.trace_start"() <{level = 10 : i32, message = "bqd,bkd->bqk"}> : () -> ()
    %cst_108 = arith.constant dense<0.000000e+00> : vector<2x8x8xf32>
    %392 = tpu.matmul %390, %391, %cst_108 {dimension_numbers = #tpu.dot_dimension_numbers<[2], [2], [1], [1], [0, 0, 0, 1, 1, 1], [0], [0]>} : vector<2x8x8xf32>, vector<2x8x8xf32>, vector<2x8x8xf32> -> vector<2x8x8xf32>
    %cst_109 = arith.constant 0xFF800000 : f32
    "tpu.trace_stop"() : () -> ()
    %393 = vector.shape_cast %4 : vector<1x8x8xi1> to vector<1x8x8xi1>
    %394 = vector.broadcast %393 : vector<1x8x8xi1> to vector<2x8x8xi1>
    %395 = vector.broadcast %cst_109 : f32 to vector<2x8x8xf32>
    %396 = arith.select %394, %392, %395 : vector<2x8x8xi1>, vector<2x8x8xf32>
    %cst_110 = arith.constant dense<0xFF800000> : vector<2x8xf32>
    %397 = vector.multi_reduction <maximumf>, %396, %cst_110 [1] : vector<2x8x8xf32> to vector<2x8xf32>
    %398 = vector.shape_cast %397 : vector<2x8xf32> to vector<2x1x8xf32>
    %399 = vector.broadcast %398 : vector<2x1x8xf32> to vector<2x8x8xf32>
    %400 = arith.subf %396, %399 : vector<2x8x8xf32>
    %401 = math.exp %400 : vector<2x8x8xf32>
    %cst_111 = arith.constant dense<0.000000e+00> : vector<2x8xf32>
    %402 = vector.multi_reduction <add>, %401, %cst_111 [1] : vector<2x8x8xf32> to vector<2x8xf32>
    %403 = vector.shape_cast %402 : vector<2x8xf32> to vector<2x1x8xf32>
    %404 = tpu.reciprocal %403 {approx = true} : vector<2x1x8xf32> -> vector<2x1x8xf32>
    %405 = vector.broadcast %404 : vector<2x1x8xf32> to vector<2x8x8xf32>
    %406 = arith.mulf %401, %405 : vector<2x8x8xf32>
    %407 = vector.extract_strided_slice %389 {offsets = [0, 0, 0], sizes = [2, 8, 8], strides = [1, 1, 1]} : vector<2x8x32xf32> to vector<2x8x8xf32>
    "tpu.trace_start"() <{level = 10 : i32, message = "bqk,bkd->bqd"}> : () -> ()
    %cst_112 = arith.constant dense<0.000000e+00> : vector<2x8x8xf32>
    %408 = tpu.matmul %406, %407, %cst_112 {dimension_numbers = #tpu.dot_dimension_numbers<[2], [1], [1], [2], [0, 0, 0, 1, 1, 2], [0], [0]>} : vector<2x8x8xf32>, vector<2x8x8xf32>, vector<2x8x8xf32> -> vector<2x8x8xf32>
    "tpu.trace_stop"() : () -> ()
    %409 = vector.shape_cast %408 : vector<2x8x8xf32> to vector<16x8xf32>
    %410 = vector.extract_strided_slice %348 {offsets = [0, 0], sizes = [8, 32], strides = [1, 1]} : vector<32x32xf32> to vector<8x32xf32>
    %cst_113 = arith.constant dense<0.000000e+00> : vector<16x32xf32>
    %411 = tpu.matmul %409, %410, %cst_113 {dimension_numbers = #tpu.dot_dimension_numbers<[1], [0], [0], [1], [0, 0, 1, 1], [], []>} : vector<16x8xf32>, vector<8x32xf32>, vector<16x32xf32> -> vector<16x32xf32>
    %412 = vector.extract_strided_slice %387 {offsets = [0, 0, 8], sizes = [2, 8, 8], strides = [1, 1, 1]} : vector<2x8x32xf32> to vector<2x8x8xf32>
    %413 = vector.extract_strided_slice %385 {offsets = [0, 0, 8], sizes = [2, 8, 8], strides = [1, 1, 1]} : vector<2x8x32xf32> to vector<2x8x8xf32>
    "tpu.trace_start"() <{level = 10 : i32, message = "bqd,bkd->bqk"}> : () -> ()
    %cst_114 = arith.constant dense<0.000000e+00> : vector<2x8x8xf32>
    %414 = tpu.matmul %412, %413, %cst_114 {dimension_numbers = #tpu.dot_dimension_numbers<[2], [2], [1], [1], [0, 0, 0, 1, 1, 1], [0], [0]>} : vector<2x8x8xf32>, vector<2x8x8xf32>, vector<2x8x8xf32> -> vector<2x8x8xf32>
    %cst_115 = arith.constant 0xFF800000 : f32
    "tpu.trace_stop"() : () -> ()
    %415 = vector.shape_cast %4 : vector<1x8x8xi1> to vector<1x8x8xi1>
    %416 = vector.broadcast %415 : vector<1x8x8xi1> to vector<2x8x8xi1>
    %417 = vector.broadcast %cst_115 : f32 to vector<2x8x8xf32>
    %418 = arith.select %416, %414, %417 : vector<2x8x8xi1>, vector<2x8x8xf32>
    %cst_116 = arith.constant dense<0xFF800000> : vector<2x8xf32>
    %419 = vector.multi_reduction <maximumf>, %418, %cst_116 [1] : vector<2x8x8xf32> to vector<2x8xf32>
    %420 = vector.shape_cast %419 : vector<2x8xf32> to vector<2x1x8xf32>
    %421 = vector.broadcast %420 : vector<2x1x8xf32> to vector<2x8x8xf32>
    %422 = arith.subf %418, %421 : vector<2x8x8xf32>
    %423 = math.exp %422 : vector<2x8x8xf32>
    %cst_117 = arith.constant dense<0.000000e+00> : vector<2x8xf32>
    %424 = vector.multi_reduction <add>, %423, %cst_117 [1] : vector<2x8x8xf32> to vector<2x8xf32>
    %425 = vector.shape_cast %424 : vector<2x8xf32> to vector<2x1x8xf32>
    %426 = tpu.reciprocal %425 {approx = true} : vector<2x1x8xf32> -> vector<2x1x8xf32>
    %427 = vector.broadcast %426 : vector<2x1x8xf32> to vector<2x8x8xf32>
    %428 = arith.mulf %423, %427 : vector<2x8x8xf32>
    %429 = vector.extract_strided_slice %389 {offsets = [0, 0, 8], sizes = [2, 8, 8], strides = [1, 1, 1]} : vector<2x8x32xf32> to vector<2x8x8xf32>
    "tpu.trace_start"() <{level = 10 : i32, message = "bqk,bkd->bqd"}> : () -> ()
    %cst_118 = arith.constant dense<0.000000e+00> : vector<2x8x8xf32>
    %430 = tpu.matmul %428, %429, %cst_118 {dimension_numbers = #tpu.dot_dimension_numbers<[2], [1], [1], [2], [0, 0, 0, 1, 1, 2], [0], [0]>} : vector<2x8x8xf32>, vector<2x8x8xf32>, vector<2x8x8xf32> -> vector<2x8x8xf32>
    "tpu.trace_stop"() : () -> ()
    %431 = vector.shape_cast %430 : vector<2x8x8xf32> to vector<16x8xf32>
    %432 = vector.extract_strided_slice %348 {offsets = [8, 0], sizes = [8, 32], strides = [1, 1]} : vector<32x32xf32> to vector<8x32xf32>
    %cst_119 = arith.constant dense<0.000000e+00> : vector<16x32xf32>
    %433 = tpu.matmul %431, %432, %cst_119 {dimension_numbers = #tpu.dot_dimension_numbers<[1], [0], [0], [1], [0, 0, 1, 1], [], []>} : vector<16x8xf32>, vector<8x32xf32>, vector<16x32xf32> -> vector<16x32xf32>
    %434 = arith.addf %411, %433 : vector<16x32xf32>
    %435 = vector.extract_strided_slice %387 {offsets = [0, 0, 16], sizes = [2, 8, 8], strides = [1, 1, 1]} : vector<2x8x32xf32> to vector<2x8x8xf32>
    %436 = vector.extract_strided_slice %385 {offsets = [0, 0, 16], sizes = [2, 8, 8], strides = [1, 1, 1]} : vector<2x8x32xf32> to vector<2x8x8xf32>
    "tpu.trace_start"() <{level = 10 : i32, message = "bqd,bkd->bqk"}> : () -> ()
    %cst_120 = arith.constant dense<0.000000e+00> : vector<2x8x8xf32>
    %437 = tpu.matmul %435, %436, %cst_120 {dimension_numbers = #tpu.dot_dimension_numbers<[2], [2], [1], [1], [0, 0, 0, 1, 1, 1], [0], [0]>} : vector<2x8x8xf32>, vector<2x8x8xf32>, vector<2x8x8xf32> -> vector<2x8x8xf32>
    %cst_121 = arith.constant 0xFF800000 : f32
    "tpu.trace_stop"() : () -> ()
    %438 = vector.shape_cast %4 : vector<1x8x8xi1> to vector<1x8x8xi1>
    %439 = vector.broadcast %438 : vector<1x8x8xi1> to vector<2x8x8xi1>
    %440 = vector.broadcast %cst_121 : f32 to vector<2x8x8xf32>
    %441 = arith.select %439, %437, %440 : vector<2x8x8xi1>, vector<2x8x8xf32>
    %cst_122 = arith.constant dense<0xFF800000> : vector<2x8xf32>
    %442 = vector.multi_reduction <maximumf>, %441, %cst_122 [1] : vector<2x8x8xf32> to vector<2x8xf32>
    %443 = vector.shape_cast %442 : vector<2x8xf32> to vector<2x1x8xf32>
    %444 = vector.broadcast %443 : vector<2x1x8xf32> to vector<2x8x8xf32>
    %445 = arith.subf %441, %444 : vector<2x8x8xf32>
    %446 = math.exp %445 : vector<2x8x8xf32>
    %cst_123 = arith.constant dense<0.000000e+00> : vector<2x8xf32>
    %447 = vector.multi_reduction <add>, %446, %cst_123 [1] : vector<2x8x8xf32> to vector<2x8xf32>
    %448 = vector.shape_cast %447 : vector<2x8xf32> to vector<2x1x8xf32>
    %449 = tpu.reciprocal %448 {approx = true} : vector<2x1x8xf32> -> vector<2x1x8xf32>
    %450 = vector.broadcast %449 : vector<2x1x8xf32> to vector<2x8x8xf32>
    %451 = arith.mulf %446, %450 : vector<2x8x8xf32>
    %452 = vector.extract_strided_slice %389 {offsets = [0, 0, 16], sizes = [2, 8, 8], strides = [1, 1, 1]} : vector<2x8x32xf32> to vector<2x8x8xf32>
    "tpu.trace_start"() <{level = 10 : i32, message = "bqk,bkd->bqd"}> : () -> ()
    %cst_124 = arith.constant dense<0.000000e+00> : vector<2x8x8xf32>
    %453 = tpu.matmul %451, %452, %cst_124 {dimension_numbers = #tpu.dot_dimension_numbers<[2], [1], [1], [2], [0, 0, 0, 1, 1, 2], [0], [0]>} : vector<2x8x8xf32>, vector<2x8x8xf32>, vector<2x8x8xf32> -> vector<2x8x8xf32>
    "tpu.trace_stop"() : () -> ()
    %454 = vector.shape_cast %453 : vector<2x8x8xf32> to vector<16x8xf32>
    %455 = vector.extract_strided_slice %348 {offsets = [16, 0], sizes = [8, 32], strides = [1, 1]} : vector<32x32xf32> to vector<8x32xf32>
    %cst_125 = arith.constant dense<0.000000e+00> : vector<16x32xf32>
    %456 = tpu.matmul %454, %455, %cst_125 {dimension_numbers = #tpu.dot_dimension_numbers<[1], [0], [0], [1], [0, 0, 1, 1], [], []>} : vector<16x8xf32>, vector<8x32xf32>, vector<16x32xf32> -> vector<16x32xf32>
    %457 = arith.addf %434, %456 : vector<16x32xf32>
    %458 = vector.extract_strided_slice %387 {offsets = [0, 0, 24], sizes = [2, 8, 8], strides = [1, 1, 1]} : vector<2x8x32xf32> to vector<2x8x8xf32>
    %459 = vector.extract_strided_slice %385 {offsets = [0, 0, 24], sizes = [2, 8, 8], strides = [1, 1, 1]} : vector<2x8x32xf32> to vector<2x8x8xf32>
    "tpu.trace_start"() <{level = 10 : i32, message = "bqd,bkd->bqk"}> : () -> ()
    %cst_126 = arith.constant dense<0.000000e+00> : vector<2x8x8xf32>
    %460 = tpu.matmul %458, %459, %cst_126 {dimension_numbers = #tpu.dot_dimension_numbers<[2], [2], [1], [1], [0, 0, 0, 1, 1, 1], [0], [0]>} : vector<2x8x8xf32>, vector<2x8x8xf32>, vector<2x8x8xf32> -> vector<2x8x8xf32>
    %cst_127 = arith.constant 0xFF800000 : f32
    "tpu.trace_stop"() : () -> ()
    %461 = vector.shape_cast %4 : vector<1x8x8xi1> to vector<1x8x8xi1>
    %462 = vector.broadcast %461 : vector<1x8x8xi1> to vector<2x8x8xi1>
    %463 = vector.broadcast %cst_127 : f32 to vector<2x8x8xf32>
    %464 = arith.select %462, %460, %463 : vector<2x8x8xi1>, vector<2x8x8xf32>
    %cst_128 = arith.constant dense<0xFF800000> : vector<2x8xf32>
    %465 = vector.multi_reduction <maximumf>, %464, %cst_128 [1] : vector<2x8x8xf32> to vector<2x8xf32>
    %466 = vector.shape_cast %465 : vector<2x8xf32> to vector<2x1x8xf32>
    %467 = vector.broadcast %466 : vector<2x1x8xf32> to vector<2x8x8xf32>
    %468 = arith.subf %464, %467 : vector<2x8x8xf32>
    %469 = math.exp %468 : vector<2x8x8xf32>
    %cst_129 = arith.constant dense<0.000000e+00> : vector<2x8xf32>
    %470 = vector.multi_reduction <add>, %469, %cst_129 [1] : vector<2x8x8xf32> to vector<2x8xf32>
    %471 = vector.shape_cast %470 : vector<2x8xf32> to vector<2x1x8xf32>
    %472 = tpu.reciprocal %471 {approx = true} : vector<2x1x8xf32> -> vector<2x1x8xf32>
    %473 = vector.broadcast %472 : vector<2x1x8xf32> to vector<2x8x8xf32>
    %474 = arith.mulf %469, %473 : vector<2x8x8xf32>
    %475 = vector.extract_strided_slice %389 {offsets = [0, 0, 24], sizes = [2, 8, 8], strides = [1, 1, 1]} : vector<2x8x32xf32> to vector<2x8x8xf32>
    "tpu.trace_start"() <{level = 10 : i32, message = "bqk,bkd->bqd"}> : () -> ()
    %cst_130 = arith.constant dense<0.000000e+00> : vector<2x8x8xf32>
    %476 = tpu.matmul %474, %475, %cst_130 {dimension_numbers = #tpu.dot_dimension_numbers<[2], [1], [1], [2], [0, 0, 0, 1, 1, 2], [0], [0]>} : vector<2x8x8xf32>, vector<2x8x8xf32>, vector<2x8x8xf32> -> vector<2x8x8xf32>
    "tpu.trace_stop"() : () -> ()
    %477 = vector.shape_cast %476 : vector<2x8x8xf32> to vector<16x8xf32>
    %478 = vector.extract_strided_slice %348 {offsets = [24, 0], sizes = [8, 32], strides = [1, 1]} : vector<32x32xf32> to vector<8x32xf32>
    %cst_131 = arith.constant dense<0.000000e+00> : vector<16x32xf32>
    %479 = tpu.matmul %477, %478, %cst_131 {dimension_numbers = #tpu.dot_dimension_numbers<[1], [0], [0], [1], [0, 0, 1, 1], [], []>} : vector<16x8xf32>, vector<8x32xf32>, vector<16x32xf32> -> vector<16x32xf32>
    %480 = arith.addf %457, %479 : vector<16x32xf32>
    %481 = arith.addf %344, %480 : vector<16x32xf32>
    %482 = vector.broadcast %358 : vector<1x32xf32> to vector<16x32xf32>
    %483 = arith.addf %481, %482 : vector<16x32xf32>
    %cst_132 = arith.constant dense<0.000000e+00> : vector<16xf32>
    %484 = vector.multi_reduction <add>, %483, %cst_132 [1] : vector<16x32xf32> to vector<16xf32>
    %485 = vector.shape_cast %484 : vector<16xf32> to vector<16x1xf32>
    %cst_133 = arith.constant 3.200000e+01 : f32
    %486 = vector.broadcast %cst_133 : f32 to vector<16x1xf32>
    %487 = arith.divf %485, %486 : vector<16x1xf32>
    %488 = vector.broadcast %487 : vector<16x1xf32> to vector<16x32xf32>
    %489 = arith.subf %483, %488 : vector<16x32xf32>
    %490 = arith.mulf %489, %489 : vector<16x32xf32>
    %cst_134 = arith.constant dense<0.000000e+00> : vector<16xf32>
    %491 = vector.multi_reduction <add>, %490, %cst_134 [1] : vector<16x32xf32> to vector<16xf32>
    %492 = vector.shape_cast %491 : vector<16xf32> to vector<16x1xf32>
    %cst_135 = arith.constant 3.200000e+01 : f32
    %493 = vector.broadcast %cst_135 : f32 to vector<16x1xf32>
    %494 = arith.divf %492, %493 : vector<16x1xf32>
    %495 = vector.broadcast %487 : vector<16x1xf32> to vector<16x32xf32>
    %496 = arith.subf %483, %495 : vector<16x32xf32>
    %cst_136 = arith.constant 9.99999974E-6 : f32
    %497 = vector.broadcast %cst_136 : f32 to vector<16x1xf32>
    %498 = arith.addf %494, %497 : vector<16x1xf32>
    %499 = math.rsqrt %498 : vector<16x1xf32>
    %500 = vector.broadcast %499 : vector<16x1xf32> to vector<16x32xf32>
    %501 = arith.mulf %496, %500 : vector<16x32xf32>
    %502 = vector.broadcast %356 : vector<1x32xf32> to vector<16x32xf32>
    %503 = arith.mulf %501, %502 : vector<16x32xf32>
    %504 = vector.broadcast %357 : vector<1x32xf32> to vector<16x32xf32>
    %505 = arith.addf %503, %504 : vector<16x32xf32>
    %cst_137 = arith.constant dense<0.000000e+00> : vector<16x128xf32>
    %506 = tpu.matmul %505, %349, %cst_137 {dimension_numbers = #tpu.dot_dimension_numbers<[1], [0], [0], [1], [0, 0, 1, 1], [], []>} : vector<16x32xf32>, vector<32x128xf32>, vector<16x128xf32> -> vector<16x128xf32>
    %507 = vector.broadcast %360 : vector<1x128xf32> to vector<16x128xf32>
    %508 = arith.addf %506, %507 : vector<16x128xf32>
    %cst_138 = arith.constant 0.000000e+00 : f32
    %509 = vector.broadcast %cst_138 : f32 to vector<16x128xf32>
    %510 = arith.maximumf %508, %509 : vector<16x128xf32>
    %cst_139 = arith.constant dense<0.000000e+00> : vector<16x32xf32>
    %511 = tpu.matmul %510, %351, %cst_139 {dimension_numbers = #tpu.dot_dimension_numbers<[1], [0], [0], [1], [0, 0, 1, 1], [], []>} : vector<16x128xf32>, vector<128x32xf32>, vector<16x32xf32> -> vector<16x32xf32>
    %512 = arith.addf %483, %511 : vector<16x32xf32>
    %513 = vector.broadcast %359 : vector<1x32xf32> to vector<16x32xf32>
    %514 = arith.addf %512, %513 : vector<16x32xf32>
    %c0_140 = arith.constant 0 : index
    %c0_141 = arith.constant 0 : index
    %515 = vector.load %arg7[%c0_140, %c0_141] : memref<8x128xf32, #tpu.memory_space<vmem>>, vector<8x128xf32>
    %516 = vector.extract_strided_slice %515 {offsets = [0, 0], sizes = [1, 32], strides = [1, 1]} : vector<8x128xf32> to vector<1x32xf32>
    %517 = vector.extract_strided_slice %515 {offsets = [1, 0], sizes = [1, 32], strides = [1, 1]} : vector<8x128xf32> to vector<1x32xf32>
    %518 = vector.extract_strided_slice %515 {offsets = [2, 0], sizes = [1, 32], strides = [1, 1]} : vector<8x128xf32> to vector<1x32xf32>
    %519 = vector.extract_strided_slice %515 {offsets = [3, 0], sizes = [1, 128], strides = [1, 1]} : vector<8x128xf32> to vector<1x128xf32>
    %520 = vector.extract_strided_slice %515 {offsets = [4, 0], sizes = [1, 128], strides = [1, 1]} : vector<8x128xf32> to vector<1x128xf32>
    %c0_142 = arith.constant 0 : index
    %c0_143 = arith.constant 0 : index
    %521 = vector.load %arg5[%c0_142, %c0_143] : memref<32x256xf32, #tpu.memory_space<vmem>>, vector<32x256xf32>
    %522 = vector.extract_strided_slice %521 {offsets = [0, 0], sizes = [32, 128], strides = [1, 1]} : vector<32x256xf32> to vector<32x128xf32>
    %523 = vector.extract_strided_slice %521 {offsets = [0, 128], sizes = [32, 128], strides = [1, 1]} : vector<32x256xf32> to vector<32x128xf32>
    %c0_144 = arith.constant 0 : index
    %c0_145 = arith.constant 0 : index
    %524 = vector.load %arg6[%c0_144, %c0_145] : memref<128x32xf32, #tpu.memory_space<vmem>>, vector<128x32xf32>
    %cst_146 = arith.constant dense<0.000000e+00> : vector<16xf32>
    %525 = vector.multi_reduction <add>, %514, %cst_146 [1] : vector<16x32xf32> to vector<16xf32>
    %526 = vector.shape_cast %525 : vector<16xf32> to vector<16x1xf32>
    %cst_147 = arith.constant 3.200000e+01 : f32
    %527 = vector.broadcast %cst_147 : f32 to vector<16x1xf32>
    %528 = arith.divf %526, %527 : vector<16x1xf32>
    %529 = vector.broadcast %528 : vector<16x1xf32> to vector<16x32xf32>
    %530 = arith.subf %514, %529 : vector<16x32xf32>
    %531 = arith.mulf %530, %530 : vector<16x32xf32>
    %cst_148 = arith.constant dense<0.000000e+00> : vector<16xf32>
    %532 = vector.multi_reduction <add>, %531, %cst_148 [1] : vector<16x32xf32> to vector<16xf32>
    %533 = vector.shape_cast %532 : vector<16xf32> to vector<16x1xf32>
    %cst_149 = arith.constant 3.200000e+01 : f32
    %534 = vector.broadcast %cst_149 : f32 to vector<16x1xf32>
    %535 = arith.divf %533, %534 : vector<16x1xf32>
    %536 = vector.broadcast %528 : vector<16x1xf32> to vector<16x32xf32>
    %537 = arith.subf %514, %536 : vector<16x32xf32>
    %cst_150 = arith.constant 9.99999974E-6 : f32
    %538 = vector.broadcast %cst_150 : f32 to vector<16x1xf32>
    %539 = arith.addf %535, %538 : vector<16x1xf32>
    %540 = math.rsqrt %539 : vector<16x1xf32>
    %541 = vector.broadcast %540 : vector<16x1xf32> to vector<16x32xf32>
    %542 = arith.mulf %537, %541 : vector<16x32xf32>
    %543 = vector.broadcast %516 : vector<1x32xf32> to vector<16x32xf32>
    %544 = arith.mulf %542, %543 : vector<16x32xf32>
    %545 = vector.broadcast %517 : vector<1x32xf32> to vector<16x32xf32>
    %546 = arith.addf %544, %545 : vector<16x32xf32>
    %cst_151 = arith.constant dense<0.000000e+00> : vector<16x128xf32>
    %547 = tpu.matmul %546, %522, %cst_151 {dimension_numbers = #tpu.dot_dimension_numbers<[1], [0], [0], [1], [0, 0, 1, 1], [], []>} : vector<16x32xf32>, vector<32x128xf32>, vector<16x128xf32> -> vector<16x128xf32>
    %548 = vector.broadcast %519 : vector<1x128xf32> to vector<16x128xf32>
    %549 = arith.addf %547, %548 : vector<16x128xf32>
    %cst_152 = arith.constant 0.000000e+00 : f32
    %550 = vector.broadcast %cst_152 : f32 to vector<16x128xf32>
    %551 = arith.maximumf %549, %550 : vector<16x128xf32>
    %cst_153 = arith.constant dense<0.000000e+00> : vector<16x32xf32>
    %552 = tpu.matmul %551, %524, %cst_153 {dimension_numbers = #tpu.dot_dimension_numbers<[1], [0], [0], [1], [0, 0, 1, 1], [], []>} : vector<16x128xf32>, vector<128x32xf32>, vector<16x32xf32> -> vector<16x32xf32>
    %553 = vector.broadcast %518 : vector<1x32xf32> to vector<16x32xf32>
    %554 = arith.addf %552, %553 : vector<16x32xf32>
    %cst_154 = arith.constant dense<0.000000e+00> : vector<16x128xf32>
    %555 = tpu.matmul %554, %523, %cst_154 {dimension_numbers = #tpu.dot_dimension_numbers<[1], [0], [0], [1], [0, 0, 1, 1], [], []>} : vector<16x32xf32>, vector<32x128xf32>, vector<16x128xf32> -> vector<16x128xf32>
    %556 = vector.broadcast %520 : vector<1x128xf32> to vector<16x128xf32>
    %557 = arith.addf %555, %556 : vector<16x128xf32>
    %558 = vector.shape_cast %557 : vector<16x128xf32> to vector<2x8x128xf32>
    %c0_155 = arith.constant 0 : index
    %c0_156 = arith.constant 0 : index
    %c0_157 = arith.constant 0 : index
    %559 = vector.load %arg8[%c0_155, %c0_156, %c0_157] : memref<2x8x128xf32, #tpu.memory_space<vmem>>, vector<2x8x128xf32>
    tpu.vector_store %arg8[%c0_155, %c0_156, %c0_157], %558 {strides = array<i32>} : memref<2x8x128xf32, #tpu.memory_space<vmem>>, vector<2x8x128xf32>,
    return
  }
  func.func @transform_0(%arg0: i32) -> (i32, i32, i32) {
    %c0_i32 = arith.constant 0 : i32
    %c0_i32_0 = arith.constant 0 : i32
    %c0_i32_1 = arith.constant 0 : i32
    return %arg0, %c0_i32, %c0_i32_0 : i32, i32, i32
  }
  func.func @transform_1(%arg0: i32) -> (i32, i32, i32) {
    %c0_i32 = arith.constant 0 : i32
    %c0_i32_0 = arith.constant 0 : i32
    %c0_i32_1 = arith.constant 0 : i32
    %c0_i32_2 = arith.constant 0 : i32
    return %c0_i32, %c0_i32_0, %c0_i32_1 : i32, i32, i32
  }
  func.func @transform_2(%arg0: i32) -> (i32, i32, i32) {
    %c0_i32 = arith.constant 0 : i32
    %c0_i32_0 = arith.constant 0 : i32
    %c0_i32_1 = arith.constant 0 : i32
    %c0_i32_2 = arith.constant 0 : i32
    return %c0_i32, %c0_i32_0, %c0_i32_1 : i32, i32, i32
  }
  func.func @transform_3(%arg0: i32) -> (i32, i32, i32) {
    %c0_i32 = arith.constant 0 : i32
    %c0_i32_0 = arith.constant 0 : i32
    %c0_i32_1 = arith.constant 0 : i32
    %c0_i32_2 = arith.constant 0 : i32
    return %c0_i32, %c0_i32_0, %c0_i32_1 : i32, i32, i32
  }
  func.func @transform_4(%arg0: i32) -> (i32, i32) {
    %c0_i32 = arith.constant 0 : i32
    %c0_i32_0 = arith.constant 0 : i32
    %c0_i32_1 = arith.constant 0 : i32
    return %c0_i32, %c0_i32_0 : i32, i32
  }
  func.func @transform_5(%arg0: i32) -> (i32, i32) {
    %c0_i32 = arith.constant 0 : i32
    %c0_i32_0 = arith.constant 0 : i32
    %c0_i32_1 = arith.constant 0 : i32
    return %c0_i32, %c0_i32_0 : i32, i32
  }
  func.func @transform_6(%arg0: i32) -> (i32, i32) {
    %c0_i32 = arith.constant 0 : i32
    %c0_i32_0 = arith.constant 0 : i32
    %c0_i32_1 = arith.constant 0 : i32
    return %c0_i32, %c0_i32_0 : i32, i32
  }
  func.func @transform_7(%arg0: i32) -> (i32, i32, i32) {
    %c0_i32 = arith.constant 0 : i32
    %c0_i32_0 = arith.constant 0 : i32
    %c0_i32_1 = arith.constant 0 : i32
    return %arg0, %c0_i32, %c0_i32_0 : i32, i32, i32
  }
}

</mosaic_0001>

<llo_original>
// kernel: tpu_custom_call.1
$region0: #{tpu_custom_call.1}
  #allocation0 [shape = 'u32[]', space=smem, size = 0x4, offset = 0x4, fixed_abs, tag = 'smem constant byte address 0x4 - core index']
  #allocation1 [shape = 'u32[144,128]{1,0:T(1,128)}', space=vmem, size = 0x12000, scoped, tag = 'internal scratch']
  %s0 = inlined_call_operand.vmem [shape: f32[2,8,32], index: 0, kind: input, shape index: {}]
  %s1 = inlined_call_operand.vmem [shape: f32[3,32,256], index: 1, kind: input, shape index: {}]
  %s2 = inlined_call_operand.vmem [shape: f32[3,128,32], index: 2, kind: input, shape index: {}]
  %s3 = inlined_call_operand.vmem [shape: f32[3,8,128], index: 3, kind: input, shape index: {}]
  %s4 = inlined_call_operand.vmem [shape: f32[32,256], index: 4, kind: input, shape index: {}]
  %s5 = inlined_call_operand.vmem [shape: f32[128,32], index: 5, kind: input, shape index: {}]
  %s6 = inlined_call_operand.vmem [shape: f32[8,128], index: 6, kind: input, shape index: {}]
  %s7 = inlined_call_operand.hbm [shape: f32[2,8,128], index: 7, kind: output, shape index: {}]
  %s8 = sld [smem:[#allocation0]]
  $region38: #{tpu_custom_call.1} parent=0
    _
  %s10 = ssub.s32 1, %s8
  %s11 = scalar_select 0, %s10, %s8
  $region1: #{tpu_custom_call.1} parent=0
    #allocation2 [shape = 'u8[8192]{0}', space=vmem, size = 0x2000, scoped, tag = 'output window, operand 0, single buffered']
    #allocation3 [shape = 's32[1]{0}', space=sflag, size = 0x4, scoped, tag = 'scoped memory for tpu_custom_call.1']
    %12 = vsyncpa [#allocation3], 0
    // Predicated region
    $region2: #{tpu_custom_call.1} parent=1 // pred_check
      _
    $region3: #{tpu_custom_call.1} parent=1 // pred_check_branch
      %14 = sbr.rel (0) target = $region5
    $region4: #{tpu_custom_call.1} parent=1 // pred_region
      _
    $region5: #{tpu_custom_call.1} parent=1 // pred_fallthru
      _
    // Predicated region
    $region6: #{tpu_custom_call.1} parent=1 // pred_check
      _
    $region7: #{tpu_custom_call.1} parent=1 // pred_check_branch
      %16 = sbr.rel (0) target = $region9
    $region8: #{tpu_custom_call.1} parent=1 // pred_region
      _
    $region9: #{tpu_custom_call.1} parent=1 // pred_fallthru
      _
    // Predicated region
    $region10: #{tpu_custom_call.1} parent=1 // pred_check
      _
    $region11: #{tpu_custom_call.1} parent=1 // pred_check_branch
      %18 = sbr.rel (0) target = $region13
    $region12: #{tpu_custom_call.1} parent=1 // pred_region
      _
    $region13: #{tpu_custom_call.1} parent=1 // pred_fallthru
      _
    // Predicated region
    $region14: #{tpu_custom_call.1} parent=1 // pred_check
      _
    $region15: #{tpu_custom_call.1} parent=1 // pred_check_branch
      %20 = sbr.rel (0) target = $region17
    $region16: #{tpu_custom_call.1} parent=1 // pred_region
      _
    $region17: #{tpu_custom_call.1} parent=1 // pred_fallthru
      _
    // Predicated region
    $region18: #{tpu_custom_call.1} parent=1 // pred_check
      _
    $region19: #{tpu_custom_call.1} parent=1 // pred_check_branch
      %22 = sbr.rel (0) target = $region21
    $region20: #{tpu_custom_call.1} parent=1 // pred_region
      _
    $region21: #{tpu_custom_call.1} parent=1 // pred_fallthru
      _
    // Predicated region
    $region22: #{tpu_custom_call.1} parent=1 // pred_check
      _
    $region23: #{tpu_custom_call.1} parent=1 // pred_check_branch
      %24 = sbr.rel (0) target = $region25
    $region24: #{tpu_custom_call.1} parent=1 // pred_region
      _
    $region25: #{tpu_custom_call.1} parent=1 // pred_fallthru
      _
    // Predicated region
    $region26: #{tpu_custom_call.1} parent=1 // pred_check
      _
    $region27: #{tpu_custom_call.1} parent=1 // pred_check_branch
      %26 = sbr.rel (0) target = $region29
    $region28: #{tpu_custom_call.1} parent=1 // pred_region
      _
    $region29: #{tpu_custom_call.1} parent=1 // pred_fallthru
      _
    %v27 = vld [vmem:[%s0] sm:$0xff]
    %v28 = vld [vmem:[%s0 + $0x8] sm:$0xff]
    %v29 = vlaneseq
    %v30 = vshrl.u32 %v29, 7
    %v31 = vlaneseq
    %v32 = vand.u32 %v31, 127
    %vm33 = vcmp.le.s32.totalorder %v32, %v30
    %v34 = vld [vmem:[%s1] sm:$0xff]
    %v35 = vld [vmem:[%s1 + $0x8] sm:$0xff]
    %v36 = vld [vmem:[%s1 + $0x10] sm:$0xff]
    %v37 = vld [vmem:[%s1 + $0x18] sm:$0xff]
    %v38 = vld [vmem:[%s1 + $0x20] sm:$0xff]
    %v39 = vld [vmem:[%s1 + $0x28] sm:$0xff]
    %v40 = vld [vmem:[%s1 + $0x30] sm:$0xff]
    %v41 = vld [vmem:[%s1 + $0x38] sm:$0xff]
    %v42 = vld [vmem:[%s2] sm:$0xff]
    %v43 = vld [vmem:[%s2 + $0x8] sm:$0xff]
    %v44 = vld [vmem:[%s2 + $0x10] sm:$0xff]
    %v45 = vld [vmem:[%s2 + $0x18] sm:$0xff]
    %v46 = vld [vmem:[%s2 + $0x20] sm:$0xff]
    %v47 = vld [vmem:[%s2 + $0x28] sm:$0xff]
    %v48 = vld [vmem:[%s2 + $0x30] sm:$0xff]
    %v49 = vld [vmem:[%s2 + $0x38] sm:$0xff]
    %v50 = vld [vmem:[%s2 + $0x40] sm:$0xff]
    %v51 = vld [vmem:[%s2 + $0x48] sm:$0xff]
    %v52 = vld [vmem:[%s2 + $0x50] sm:$0xff]
    %v53 = vld [vmem:[%s2 + $0x58] sm:$0xff]
    %v54 = vld [vmem:[%s2 + $0x60] sm:$0xff]
    %v55 = vld [vmem:[%s2 + $0x68] sm:$0xff]
    %v56 = vld [vmem:[%s2 + $0x70] sm:$0xff]
    %v57 = vld [vmem:[%s2 + $0x78] sm:$0xff]
    %v58 = vld [vmem:[%s3] sm:$0xff]
    %vm59 = vcmask 261120
    %v60 = vsel %vm59, %v27, 0.0
    %61 = vadd.xlane.f32.xlu0 %v60
    %v62 = vpop.xlane.xlu0 %61
    %v63 = vsel %vm59, %v28, 0.0
    %64 = vadd.xlane.f32.xlu0 %v63
    %v65 = vpop.xlane.xlu0 %64
    %v66 = vrcp.pop 32.0
    %v67 = vmul.f32 %v62, %v66
    %v68 = vmul.f32 %v65, %v66
    %v69 = vsub.f32 %v27, %v67
    %v70 = vsub.f32 %v28, %v68
    %v71 = vmul.f32 %v69, %v69
    %v72 = vmul.f32 %v70, %v70
    %v73 = vsel %vm59, %v71, 0.0
    %74 = vadd.xlane.f32.xlu0 %v73
    %v75 = vpop.xlane.xlu0 %74
    %v76 = vsel %vm59, %v72, 0.0
    %77 = vadd.xlane.f32.xlu0 %v76
    %v78 = vpop.xlane.xlu0 %77
    %v79 = vmul.f32 %v75, %v66
    %v80 = vmul.f32 %v78, %v66
    %v81 = vadd.f32 %v79, 1e-05
    %v82 = vadd.f32 %v80, 1e-05
    %v83 = vrsqrt.pop %v81
    %v84 = vrsqrt.pop %v82
    %v85 = vmul.f32 %v69, %v83
    %v86 = vmul.f32 %v70, %v84
    %v87 = vlaneseq
    %v88 = vshrl.u32 %v87, 7
    %v89 = vsub.s32 0, %v88
    %v90 = vrot.slane %v58, %v89
    %v91 = vmul.f32 %v85, %v90
    %v92 = vmul.f32 %v86, %v90
    %v93 = vlaneseq
    %v94 = vshrl.u32 %v93, 7
    %v95 = vsub.s32 1, %v94
    %v96 = vrot.slane %v58, %v95
    %v97 = vadd.f32 %v91, %v96
    %v98 = vadd.f32 %v92, %v96
    %v100 = vsel %vm59, %v97, 0
    %v103 = vsel %vm59, %v98, 0
    %105 = vmatprep.subr.mxu0 0.0
    %106 = vmatpush1.msra.mxu0 %v34
    %107 = vmatprep.subr.mxu0 0.0
    %108 = vmatpush1.msra.mxu0 %v36
    %109 = vmatprep.subr.mxu0 0.0
    %110 = vmatpush1.msra.mxu0 %v38
    %111 = vmatprep.subr.mxu0 0.0
    %112 = vmatpush1.msra.mxu0 %v40
    %113 = vmatprep.subr.mxu0 0.0
    %114 = vmatpush1.msra.mxu0 0.0
    %115 = vmatprep.subr.mxu0 0.0
    %116 = vmatpush1.msra.mxu0 0.0
    %117 = vmatprep.subr.mxu0 0.0
    %118 = vmatpush1.msra.mxu0 0.0
    %119 = vmatprep.subr.mxu0 0.0
    %120 = vmatpush1.msra.mxu0 0.0
    %121 = vmatprep.subr.mxu0 0.0
    %122 = vmatpush1.msra.mxu0 0.0
    %123 = vmatprep.subr.mxu0 0.0
    %124 = vmatpush1.msra.mxu0 0.0
    %125 = vmatprep.subr.mxu0 0.0
    %126 = vmatpush1.msra.mxu0 0.0
    %127 = vmatprep.subr.mxu0 0.0
    %128 = vmatpush1.msra.mxu0 0.0
    %129 = vmatprep.subr.mxu0 0.0
    %130 = vmatpush1.msra.mxu0 0.0
    %131 = vmatprep.subr.mxu0 0.0
    %132 = vmatpush1.msra.mxu0 0.0
    %133 = vmatprep.subr.mxu0 0.0
    %134 = vmatpush1.msra.mxu0 0.0
    %135 = vmatprep.subr.mxu0 0.0
    %136 = vmatpush1.msra.mxu0 0.0
    %137 = vmatprep.subr.mxu0 0.0
    %138 = vmatpush1.msra.mxu0 0.0
    %139 = vmatprep.subr.mxu0 0.0
    %140 = vmatpush1.msra.mxu0 0.0
    %141 = vmatprep.subr.mxu0 0.0
    %142 = vmatpush1.msra.mxu0 0.0
    %143 = vmatprep.subr.mxu0 0.0
    %144 = vmatpush1.msra.mxu0 0.0
    %145 = vmatprep.subr.mxu0 0.0
    %146 = vmatpush1.msra.mxu0 0.0
    %147 = vmatprep.subr.mxu0 0.0
    %148 = vmatpush1.msra.mxu0 0.0
    %149 = vmatprep.subr.mxu0 0.0
    %150 = vmatpush1.msra.mxu0 0.0
    %151 = vmatprep.subr.mxu0 0.0
    %152 = vmatpush1.msra.mxu0 0.0
    %153 = vmatprep.subr.mxu0 0.0
    %154 = vmatpush1.msra.mxu0 0.0
    %155 = vmatprep.subr.mxu0 0.0
    %156 = vmatpush1.msra.mxu0 0.0
    %157 = vmatprep.subr.mxu0 0.0
    %158 = vmatpush1.msra.mxu0 0.0
    %159 = vmatprep.subr.mxu0 0.0
    %160 = vmatpush1.msra.mxu0 0.0
    %161 = vmatprep.subr.mxu0 0.0
    %162 = vmatpush1.msra.mxu0 0.0
    %163 = vmatprep.subr.mxu0 0.0
    %164 = vmatpush1.msra.mxu0 0.0
    %165 = vmatprep.subr.mxu0 0.0
    %166 = vmatpush1.msra.mxu0 0.0
    %167 = vmatprep.subr.mxu0 0.0
    %168 = vmatpush1.msra.mxu0 0.0
    %169 = vmatprep.mubr.f32.mxu0 0.0
    %170 = vmatmul.mubr.f32.gmra.mrb[0].mxu0 %v100
    %v171 = vpop.f32.mrb[0].mxu0
    %v172 = vadd.f32 0.0, %v171
    %v173 = vpop.f32.mrb[0].mxu0
    %174 = vmatprep.mubr.f32.mxu0 0.0
    %175 = vmatmul.mubr.f32.gmra.mrb[0].mxu0 %v103
    %v176 = vpop.f32.mrb[0].mxu0
    %v177 = vadd.f32 0.0, %v176
    %v178 = vpop.f32.mrb[0].mxu0
    %179 = vdwg.mxu0
    %181 = vrot.lane.b32.xlu0 %v172, 96
    %v182 = vpop.permute.xlu0 %181
    %vm183 = vcmask 64512
    %v184 = vsel %vm183, %v182, 0
    %v186 = vsel %vm183, %v172, 0
    %188 = vmatprep.subr.mxu0 0.0
    %189 = vmatpush1.xpose.msra.mxu0 %v186
    %190 = vmatprep.subr.mxu0 0.0
    %191 = vmatpush1.xpose.msra.mxu0 0.0
    %192 = vmatprep.subr.mxu0 0.0
    %193 = vmatpush1.xpose.msra.mxu0 0.0
    %194 = vmatprep.subr.mxu0 0.0
    %195 = vmatpush1.xpose.msra.mxu0 0.0
    %196 = vmatprep.subr.mxu0 0.0
    %197 = vmatpush1.xpose.msra.mxu0 0.0
    %198 = vmatprep.subr.mxu0 0.0
    %199 = vmatpush1.xpose.msra.mxu0 0.0
    %200 = vmatprep.subr.mxu0 0.0
    %201 = vmatpush1.xpose.msra.mxu0 0.0
    %202 = vmatprep.subr.mxu0 0.0
    %203 = vmatpush1.xpose.msra.mxu0 0.0
    %204 = vmatprep.subr.mxu0 0.0
    %205 = vmatpush1.xpose.msra.mxu0 0.0
    %206 = vmatprep.subr.mxu0 0.0
    %207 = vmatpush1.xpose.msra.mxu0 0.0
    %208 = vmatprep.subr.mxu0 0.0
    %209 = vmatpush1.xpose.msra.mxu0 0.0
    %210 = vmatprep.subr.mxu0 0.0
    %211 = vmatpush1.xpose.msra.mxu0 0.0
    %212 = vmatprep.subr.mxu0 0.0
    %213 = vmatpush1.xpose.msra.mxu0 0.0
    %214 = vmatprep.subr.mxu0 0.0
    %215 = vmatpush1.xpose.msra.mxu0 0.0
    %216 = vmatprep.subr.mxu0 0.0
    %217 = vmatpush1.xpose.msra.mxu0 0.0
    %218 = vmatprep.subr.mxu0 0.0
    %219 = vmatpush1.xpose.msra.mxu0 0.0
    %220 = vmatprep.subr.mxu0 0.0
    %221 = vmatpush1.xpose.msra.mxu0 0.0
    %222 = vmatprep.subr.mxu0 0.0
    %223 = vmatpush1.xpose.msra.mxu0 0.0
    %224 = vmatprep.subr.mxu0 0.0
    %225 = vmatpush1.xpose.msra.mxu0 0.0
    %226 = vmatprep.subr.mxu0 0.0
    %227 = vmatpush1.xpose.msra.mxu0 0.0
    %228 = vmatprep.subr.mxu0 0.0
    %229 = vmatpush1.xpose.msra.mxu0 0.0
    %230 = vmatprep.subr.mxu0 0.0
    %231 = vmatpush1.xpose.msra.mxu0 0.0
    %232 = vmatprep.subr.mxu0 0.0
    %233 = vmatpush1.xpose.msra.mxu0 0.0
    %234 = vmatprep.subr.mxu0 0.0
    %235 = vmatpush1.xpose.msra.mxu0 0.0
    %236 = vmatprep.subr.mxu0 0.0
    %237 = vmatpush1.xpose.msra.mxu0 0.0
    %238 = vmatprep.subr.mxu0 0.0
    %239 = vmatpush1.xpose.msra.mxu0 0.0
    %240 = vmatprep.subr.mxu0 0.0
    %241 = vmatpush1.xpose.msra.mxu0 0.0
    %242 = vmatprep.subr.mxu0 0.0
    %243 = vmatpush1.xpose.msra.mxu0 0.0
    %244 = vmatprep.subr.mxu0 0.0
    %245 = vmatpush1.xpose.msra.mxu0 0.0
    %246 = vmatprep.subr.mxu0 0.0
    %247 = vmatpush1.xpose.msra.mxu0 0.0
    %248 = vmatprep.subr.mxu0 0.0
    %249 = vmatpush1.xpose.msra.mxu0 0.0
    %250 = vmatprep.subr.mxu0 0.0
    %251 = vmatpush1.xpose.msra.mxu0 0.0
    %252 = vmatprep.mubr.f32.mxu0 0.0
    %253 = vmatmul.mubr.f32.gmra.mrb[0].mxu0 %v184
    %v254 = vpop.f32.mrb[0].mxu0
    %v255 = vadd.f32 0.0, %v254
    %v256 = vpop.f32.mrb[0].mxu0
    %257 = vdwg.mxu0
    %259 = vrot.lane.b32.xlu0 %v177, 96
    %v260 = vpop.permute.xlu0 %259
    %v261 = vsel %vm183, %v260, 0
    %v263 = vsel %vm183, %v177, 0
    %265 = vmatprep.subr.mxu0 0.0
    %266 = vmatpush1.xpose.msra.mxu0 %v263
    %267 = vmatprep.subr.mxu0 0.0
    %268 = vmatpush1.xpose.msra.mxu0 0.0
    %269 = vmatprep.subr.mxu0 0.0
    %270 = vmatpush1.xpose.msra.mxu0 0.0
    %271 = vmatprep.subr.mxu0 0.0
    %272 = vmatpush1.xpose.msra.mxu0 0.0
    %273 = vmatprep.subr.mxu0 0.0
    %274 = vmatpush1.xpose.msra.mxu0 0.0
    %275 = vmatprep.subr.mxu0 0.0
    %276 = vmatpush1.xpose.msra.mxu0 0.0
    %277 = vmatprep.subr.mxu0 0.0
    %278 = vmatpush1.xpose.msra.mxu0 0.0
    %279 = vmatprep.subr.mxu0 0.0
    %280 = vmatpush1.xpose.msra.mxu0 0.0
    %281 = vmatprep.subr.mxu0 0.0
    %282 = vmatpush1.xpose.msra.mxu0 0.0
    %283 = vmatprep.subr.mxu0 0.0
    %284 = vmatpush1.xpose.msra.mxu0 0.0
    %285 = vmatprep.subr.mxu0 0.0
    %286 = vmatpush1.xpose.msra.mxu0 0.0
    %287 = vmatprep.subr.mxu0 0.0
    %288 = vmatpush1.xpose.msra.mxu0 0.0
    %289 = vmatprep.subr.mxu0 0.0
    %290 = vmatpush1.xpose.msra.mxu0 0.0
    %291 = vmatprep.subr.mxu0 0.0
    %292 = vmatpush1.xpose.msra.mxu0 0.0
    %293 = vmatprep.subr.mxu0 0.0
    %294 = vmatpush1.xpose.msra.mxu0 0.0
    %295 = vmatprep.subr.mxu0 0.0
    %296 = vmatpush1.xpose.msra.mxu0 0.0
    %297 = vmatprep.subr.mxu0 0.0
    %298 = vmatpush1.xpose.msra.mxu0 0.0
    %299 = vmatprep.subr.mxu0 0.0
    %300 = vmatpush1.xpose.msra.mxu0 0.0
    %301 = vmatprep.subr.mxu0 0.0
    %302 = vmatpush1.xpose.msra.mxu0 0.0
    %303 = vmatprep.subr.mxu0 0.0
    %304 = vmatpush1.xpose.msra.mxu0 0.0
    %305 = vmatprep.subr.mxu0 0.0
    %306 = vmatpush1.xpose.msra.mxu0 0.0
    %307 = vmatprep.subr.mxu0 0.0
    %308 = vmatpush1.xpose.msra.mxu0 0.0
    %309 = vmatprep.subr.mxu0 0.0
    %310 = vmatpush1.xpose.msra.mxu0 0.0
    %311 = vmatprep.subr.mxu0 0.0
    %312 = vmatpush1.xpose.msra.mxu0 0.0
    %313 = vmatprep.subr.mxu0 0.0
    %314 = vmatpush1.xpose.msra.mxu0 0.0
    %315 = vmatprep.subr.mxu0 0.0
    %316 = vmatpush1.xpose.msra.mxu0 0.0
    %317 = vmatprep.subr.mxu0 0.0
    %318 = vmatpush1.xpose.msra.mxu0 0.0
    %319 = vmatprep.subr.mxu0 0.0
    %320 = vmatpush1.xpose.msra.mxu0 0.0
    %321 = vmatprep.subr.mxu0 0.0
    %322 = vmatpush1.xpose.msra.mxu0 0.0
    %323 = vmatprep.subr.mxu0 0.0
    %324 = vmatpush1.xpose.msra.mxu0 0.0
    %325 = vmatprep.subr.mxu0 0.0
    %326 = vmatpush1.xpose.msra.mxu0 0.0
    %327 = vmatprep.subr.mxu0 0.0
    %328 = vmatpush1.xpose.msra.mxu0 0.0
    %329 = vmatprep.mubr.f32.mxu0 0.0
    %330 = vmatmul.mubr.f32.gmra.mrb[0].mxu0 %v261
    %v331 = vpop.f32.mrb[0].mxu0
    %v332 = vadd.f32 0.0, %v331
    %v333 = vpop.f32.mrb[0].mxu0
    %334 = vdwg.mxu0
    %v335 = vsel %vm33, 1, 0
    %vm336 = vcmp.eq.s32.totalorder %v335, 1
    %v337 = vsel %vm336, %v255, -inf
    %v338 = vsel %vm336, %v332, -inf
    %v339 = vsel %vm183, %v337, -inf
    %v340 = vrot.slane %v339, 4
    %v341 = vmax.f32 %v339, %v340
    %v342 = vrot.slane %v341, 2
    %v343 = vmax.f32 %v341, %v342
    %v344 = vrot.slane %v343, 1
    %v345 = vmax.f32 %v343, %v344
    %v346 = vsel %vm183, %v338, -inf
    %v347 = vrot.slane %v346, 4
    %v348 = vmax.f32 %v346, %v347
    %v349 = vrot.slane %v348, 2
    %v350 = vmax.f32 %v348, %v349
    %v351 = vrot.slane %v350, 1
    %v352 = vmax.f32 %v350, %v351
    %v353 = vsub.f32 %v337, %v345
    %v354 = vsub.f32 %v338, %v352
    %v355 = vmul.f32 %v353, 1.442695
    %v356 = vpow.pop %v355
    %v357 = vmul.f32 %v354, 1.442695
    %v358 = vpow.pop %v357
    %v359 = vsel %vm183, %v356, 0.0
    %v360 = vrot.slane %v359, 4
    %v361 = vadd.f32 %v359, %v360
    %v362 = vrot.slane %v361, 2
    %v363 = vadd.f32 %v361, %v362
    %v364 = vrot.slane %v363, 1
    %v365 = vadd.f32 %v363, %v364
    %v366 = vsel %vm183, %v358, 0.0
    %v367 = vrot.slane %v366, 4
    %v368 = vadd.f32 %v366, %v367
    %v369 = vrot.slane %v368, 2
    %v370 = vadd.f32 %v368, %v369
    %v371 = vrot.slane %v370, 1
    %v372 = vadd.f32 %v370, %v371
    %v373 = vrcp.pop %v365
    %v374 = vrcp.pop %v372
    %v375 = vmul.f32 %v356, %v373
    %v376 = vmul.f32 %v358, %v374
    %377 = vrot.lane.b32.xlu0 %v172, 64
    %v378 = vpop.permute.xlu0 %377
    %v381 = vsel %vm183, %v375, 0
    %383 = vmatprep.subr.mxu0 0.0
    %384 = vmatpush1.msra.mxu0 %v378
    %385 = vmatprep.subr.mxu0 0.0
    %386 = vmatpush1.msra.mxu0 0.0
    %387 = vmatprep.subr.mxu0 0.0
    %388 = vmatpush1.msra.mxu0 0.0
    %389 = vmatprep.subr.mxu0 0.0
    %390 = vmatpush1.msra.mxu0 0.0
    %391 = vmatprep.subr.mxu0 0.0
    %392 = vmatpush1.msra.mxu0 0.0
    %393 = vmatprep.subr.mxu0 0.0
    %394 = vmatpush1.msra.mxu0 0.0
    %395 = vmatprep.subr.mxu0 0.0
    %396 = vmatpush1.msra.mxu0 0.0
    %397 = vmatprep.subr.mxu0 0.0
    %398 = vmatpush1.msra.mxu0 0.0
    %399 = vmatprep.subr.mxu0 0.0
    %400 = vmatpush1.msra.mxu0 0.0
    %401 = vmatprep.subr.mxu0 0.0
    %402 = vmatpush1.msra.mxu0 0.0
    %403 = vmatprep.subr.mxu0 0.0
    %404 = vmatpush1.msra.mxu0 0.0
    %405 = vmatprep.subr.mxu0 0.0
    %406 = vmatpush1.msra.mxu0 0.0
    %407 = vmatprep.subr.mxu0 0.0
    %408 = vmatpush1.msra.mxu0 0.0
    %409 = vmatprep.subr.mxu0 0.0
    %410 = vmatpush1.msra.mxu0 0.0
    %411 = vmatprep.subr.mxu0 0.0
    %412 = vmatpush1.msra.mxu0 0.0
    %413 = vmatprep.subr.mxu0 0.0
    %414 = vmatpush1.msra.mxu0 0.0
    %415 = vmatprep.subr.mxu0 0.0
    %416 = vmatpush1.msra.mxu0 0.0
    %417 = vmatprep.subr.mxu0 0.0
    %418 = vmatpush1.msra.mxu0 0.0
    %419 = vmatprep.subr.mxu0 0.0
    %420 = vmatpush1.msra.mxu0 0.0
    %421 = vmatprep.subr.mxu0 0.0
    %422 = vmatpush1.msra.mxu0 0.0
    %423 = vmatprep.subr.mxu0 0.0
    %424 = vmatpush1.msra.mxu0 0.0
    %425 = vmatprep.subr.mxu0 0.0
    %426 = vmatpush1.msra.mxu0 0.0
    %427 = vmatprep.subr.mxu0 0.0
    %428 = vmatpush1.msra.mxu0 0.0
    %429 = vmatprep.subr.mxu0 0.0
    %430 = vmatpush1.msra.mxu0 0.0
    %431 = vmatprep.subr.mxu0 0.0
    %432 = vmatpush1.msra.mxu0 0.0
    %433 = vmatprep.subr.mxu0 0.0
    %434 = vmatpush1.msra.mxu0 0.0
    %435 = vmatprep.subr.mxu0 0.0
    %436 = vmatpush1.msra.mxu0 0.0
    %437 = vmatprep.subr.mxu0 0.0
    %438 = vmatpush1.msra.mxu0 0.0
    %439 = vmatprep.subr.mxu0 0.0
    %440 = vmatpush1.msra.mxu0 0.0
    %441 = vmatprep.subr.mxu0 0.0
    %442 = vmatpush1.msra.mxu0 0.0
    %443 = vmatprep.subr.mxu0 0.0
    %444 = vmatpush1.msra.mxu0 0.0
    %445 = vmatprep.subr.mxu0 0.0
    %446 = vmatpush1.msra.mxu0 0.0
    %447 = vmatprep.mubr.f32.mxu0 0.0
    %448 = vmatmul.mubr.f32.gmra.mrb[0].mxu0 %v381
    %v449 = vpop.f32.mrb[0].mxu0
    %v450 = vadd.f32 0.0, %v449
    %v451 = vpop.f32.mrb[0].mxu0
    %452 = vdwg.mxu0
    %453 = vrot.lane.b32.xlu0 %v177, 64
    %v454 = vpop.permute.xlu0 %453
    %v457 = vsel %vm183, %v376, 0
    %459 = vmatprep.subr.mxu0 0.0
    %460 = vmatpush1.msra.mxu0 %v454
    %461 = vmatprep.subr.mxu0 0.0
    %462 = vmatpush1.msra.mxu0 0.0
    %463 = vmatprep.subr.mxu0 0.0
    %464 = vmatpush1.msra.mxu0 0.0
    %465 = vmatprep.subr.mxu0 0.0
    %466 = vmatpush1.msra.mxu0 0.0
    %467 = vmatprep.subr.mxu0 0.0
    %468 = vmatpush1.msra.mxu0 0.0
    %469 = vmatprep.subr.mxu0 0.0
    %470 = vmatpush1.msra.mxu0 0.0
    %471 = vmatprep.subr.mxu0 0.0
    %472 = vmatpush1.msra.mxu0 0.0
    %473 = vmatprep.subr.mxu0 0.0
    %474 = vmatpush1.msra.mxu0 0.0
    %475 = vmatprep.subr.mxu0 0.0
    %476 = vmatpush1.msra.mxu0 0.0
    %477 = vmatprep.subr.mxu0 0.0
    %478 = vmatpush1.msra.mxu0 0.0
    %479 = vmatprep.subr.mxu0 0.0
    %480 = vmatpush1.msra.mxu0 0.0
    %481 = vmatprep.subr.mxu0 0.0
    %482 = vmatpush1.msra.mxu0 0.0
    %483 = vmatprep.subr.mxu0 0.0
    %484 = vmatpush1.msra.mxu0 0.0
    %485 = vmatprep.subr.mxu0 0.0
    %486 = vmatpush1.msra.mxu0 0.0
    %487 = vmatprep.subr.mxu0 0.0
    %488 = vmatpush1.msra.mxu0 0.0
    %489 = vmatprep.subr.mxu0 0.0
    %490 = vmatpush1.msra.mxu0 0.0
    %491 = vmatprep.subr.mxu0 0.0
    %492 = vmatpush1.msra.mxu0 0.0
    %493 = vmatprep.subr.mxu0 0.0
    %494 = vmatpush1.msra.mxu0 0.0
    %495 = vmatprep.subr.mxu0 0.0
    %496 = vmatpush1.msra.mxu0 0.0
    %497 = vmatprep.subr.mxu0 0.0
    %498 = vmatpush1.msra.mxu0 0.0
    %499 = vmatprep.subr.mxu0 0.0
    %500 = vmatpush1.msra.mxu0 0.0
    %501 = vmatprep.subr.mxu0 0.0
    %502 = vmatpush1.msra.mxu0 0.0
    %503 = vmatprep.subr.mxu0 0.0
    %504 = vmatpush1.msra.mxu0 0.0
    %505 = vmatprep.subr.mxu0 0.0
    %506 = vmatpush1.msra.mxu0 0.0
    %507 = vmatprep.subr.mxu0 0.0
    %508 = vmatpush1.msra.mxu0 0.0
    %509 = vmatprep.subr.mxu0 0.0
    %510 = vmatpush1.msra.mxu0 0.0
    %511 = vmatprep.subr.mxu0 0.0
    %512 = vmatpush1.msra.mxu0 0.0
    %513 = vmatprep.subr.mxu0 0.0
    %514 = vmatpush1.msra.mxu0 0.0
    %515 = vmatprep.subr.mxu0 0.0
    %516 = vmatpush1.msra.mxu0 0.0
    %517 = vmatprep.subr.mxu0 0.0
    %518 = vmatpush1.msra.mxu0 0.0
    %519 = vmatprep.subr.mxu0 0.0
    %520 = vmatpush1.msra.mxu0 0.0
    %521 = vmatprep.subr.mxu0 0.0
    %522 = vmatpush1.msra.mxu0 0.0
    %523 = vmatprep.mubr.f32.mxu0 0.0
    %524 = vmatmul.mubr.f32.gmra.mrb[0].mxu0 %v457
    %v525 = vpop.f32.mrb[0].mxu0
    %v526 = vadd.f32 0.0, %v525
    %v527 = vpop.f32.mrb[0].mxu0
    %528 = vdwg.mxu0
    %529 = vrot.lane.b32.xlu0 %v172, 88
    %v530 = vpop.permute.xlu0 %529
    %531 = vrot.lane.b32.xlu0 %v172, 120
    %v532 = vpop.permute.xlu0 %531
    %v533 = vsel %vm183, %v530, 0
    %v535 = vsel %vm183, %v532, 0
    %537 = vmatprep.subr.mxu0 0.0
    %538 = vmatpush1.xpose.msra.mxu0 %v535
    %539 = vmatprep.subr.mxu0 0.0
    %540 = vmatpush1.xpose.msra.mxu0 0.0
    %541 = vmatprep.subr.mxu0 0.0
    %542 = vmatpush1.xpose.msra.mxu0 0.0
    %543 = vmatprep.subr.mxu0 0.0
    %544 = vmatpush1.xpose.msra.mxu0 0.0
    %545 = vmatprep.subr.mxu0 0.0
    %546 = vmatpush1.xpose.msra.mxu0 0.0
    %547 = vmatprep.subr.mxu0 0.0
    %548 = vmatpush1.xpose.msra.mxu0 0.0
    %549 = vmatprep.subr.mxu0 0.0
    %550 = vmatpush1.xpose.msra.mxu0 0.0
    %551 = vmatprep.subr.mxu0 0.0
    %552 = vmatpush1.xpose.msra.mxu0 0.0
    %553 = vmatprep.subr.mxu0 0.0
    %554 = vmatpush1.xpose.msra.mxu0 0.0
    %555 = vmatprep.subr.mxu0 0.0
    %556 = vmatpush1.xpose.msra.mxu0 0.0
    %557 = vmatprep.subr.mxu0 0.0
    %558 = vmatpush1.xpose.msra.mxu0 0.0
    %559 = vmatprep.subr.mxu0 0.0
    %560 = vmatpush1.xpose.msra.mxu0 0.0
    %561 = vmatprep.subr.mxu0 0.0
    %562 = vmatpush1.xpose.msra.mxu0 0.0
    %563 = vmatprep.subr.mxu0 0.0
    %564 = vmatpush1.xpose.msra.mxu0 0.0
    %565 = vmatprep.subr.mxu0 0.0
    %566 = vmatpush1.xpose.msra.mxu0 0.0
    %567 = vmatprep.subr.mxu0 0.0
    %568 = vmatpush1.xpose.msra.mxu0 0.0
    %569 = vmatprep.subr.mxu0 0.0
    %570 = vmatpush1.xpose.msra.mxu0 0.0
    %571 = vmatprep.subr.mxu0 0.0
    %572 = vmatpush1.xpose.msra.mxu0 0.0
    %573 = vmatprep.subr.mxu0 0.0
    %574 = vmatpush1.xpose.msra.mxu0 0.0
    %575 = vmatprep.subr.mxu0 0.0
    %576 = vmatpush1.xpose.msra.mxu0 0.0
    %577 = vmatprep.subr.mxu0 0.0
    %578 = vmatpush1.xpose.msra.mxu0 0.0
    %579 = vmatprep.subr.mxu0 0.0
    %580 = vmatpush1.xpose.msra.mxu0 0.0
    %581 = vmatprep.subr.mxu0 0.0
    %582 = vmatpush1.xpose.msra.mxu0 0.0
    %583 = vmatprep.subr.mxu0 0.0
    %584 = vmatpush1.xpose.msra.mxu0 0.0
    %585 = vmatprep.subr.mxu0 0.0
    %586 = vmatpush1.xpose.msra.mxu0 0.0
    %587 = vmatprep.subr.mxu0 0.0
    %588 = vmatpush1.xpose.msra.mxu0 0.0
    %589 = vmatprep.subr.mxu0 0.0
    %590 = vmatpush1.xpose.msra.mxu0 0.0
    %591 = vmatprep.subr.mxu0 0.0
    %592 = vmatpush1.xpose.msra.mxu0 0.0
    %593 = vmatprep.subr.mxu0 0.0
    %594 = vmatpush1.xpose.msra.mxu0 0.0
    %595 = vmatprep.subr.mxu0 0.0
    %596 = vmatpush1.xpose.msra.mxu0 0.0
    %597 = vmatprep.subr.mxu0 0.0
    %598 = vmatpush1.xpose.msra.mxu0 0.0
    %599 = vmatprep.subr.mxu0 0.0
    %600 = vmatpush1.xpose.msra.mxu0 0.0
    %601 = vmatprep.mubr.f32.mxu0 0.0
    %602 = vmatmul.mubr.f32.gmra.mrb[0].mxu0 %v533
    %v603 = vpop.f32.mrb[0].mxu0
    %v604 = vadd.f32 0.0, %v603
    %v605 = vpop.f32.mrb[0].mxu0
    %606 = vdwg.mxu0
    %607 = vrot.lane.b32.xlu0 %v177, 88
    %v608 = vpop.permute.xlu0 %607
    %609 = vrot.lane.b32.xlu0 %v177, 120
    %v610 = vpop.permute.xlu0 %609
    %v611 = vsel %vm183, %v608, 0
    %v613 = vsel %vm183, %v610, 0
    %615 = vmatprep.subr.mxu0 0.0
    %616 = vmatpush1.xpose.msra.mxu0 %v613
    %617 = vmatprep.subr.mxu0 0.0
    %618 = vmatpush1.xpose.msra.mxu0 0.0
    %619 = vmatprep.subr.mxu0 0.0
    %620 = vmatpush1.xpose.msra.mxu0 0.0
    %621 = vmatprep.subr.mxu0 0.0
    %622 = vmatpush1.xpose.msra.mxu0 0.0
    %623 = vmatprep.subr.mxu0 0.0
    %624 = vmatpush1.xpose.msra.mxu0 0.0
    %625 = vmatprep.subr.mxu0 0.0
    %626 = vmatpush1.xpose.msra.mxu0 0.0
    %627 = vmatprep.subr.mxu0 0.0
    %628 = vmatpush1.xpose.msra.mxu0 0.0
    %629 = vmatprep.subr.mxu0 0.0
    %630 = vmatpush1.xpose.msra.mxu0 0.0
    %631 = vmatprep.subr.mxu0 0.0
    %632 = vmatpush1.xpose.msra.mxu0 0.0
    %633 = vmatprep.subr.mxu0 0.0
    %634 = vmatpush1.xpose.msra.mxu0 0.0
    %635 = vmatprep.subr.mxu0 0.0
    %636 = vmatpush1.xpose.msra.mxu0 0.0
    %637 = vmatprep.subr.mxu0 0.0
    %638 = vmatpush1.xpose.msra.mxu0 0.0
    %639 = vmatprep.subr.mxu0 0.0
    %640 = vmatpush1.xpose.msra.mxu0 0.0
    %641 = vmatprep.subr.mxu0 0.0
    %642 = vmatpush1.xpose.msra.mxu0 0.0
    %643 = vmatprep.subr.mxu0 0.0
    %644 = vmatpush1.xpose.msra.mxu0 0.0
    %645 = vmatprep.subr.mxu0 0.0
    %646 = vmatpush1.xpose.msra.mxu0 0.0
    %647 = vmatprep.subr.mxu0 0.0
    %648 = vmatpush1.xpose.msra.mxu0 0.0
    %649 = vmatprep.subr.mxu0 0.0
    %650 = vmatpush1.xpose.msra.mxu0 0.0
    %651 = vmatprep.subr.mxu0 0.0
    %652 = vmatpush1.xpose.msra.mxu0 0.0
    %653 = vmatprep.subr.mxu0 0.0
    %654 = vmatpush1.xpose.msra.mxu0 0.0
    %655 = vmatprep.subr.mxu0 0.0
    %656 = vmatpush1.xpose.msra.mxu0 0.0
    %657 = vmatprep.subr.mxu0 0.0
    %658 = vmatpush1.xpose.msra.mxu0 0.0
    %659 = vmatprep.subr.mxu0 0.0
    %660 = vmatpush1.xpose.msra.mxu0 0.0
    %661 = vmatprep.subr.mxu0 0.0
    %662 = vmatpush1.xpose.msra.mxu0 0.0
    %663 = vmatprep.subr.mxu0 0.0
    %664 = vmatpush1.xpose.msra.mxu0 0.0
    %665 = vmatprep.subr.mxu0 0.0
    %666 = vmatpush1.xpose.msra.mxu0 0.0
    %667 = vmatprep.subr.mxu0 0.0
    %668 = vmatpush1.xpose.msra.mxu0 0.0
    %669 = vmatprep.subr.mxu0 0.0
    %670 = vmatpush1.xpose.msra.mxu0 0.0
    %671 = vmatprep.subr.mxu0 0.0
    %672 = vmatpush1.xpose.msra.mxu0 0.0
    %673 = vmatprep.subr.mxu0 0.0
    %674 = vmatpush1.xpose.msra.mxu0 0.0
    %675 = vmatprep.subr.mxu0 0.0
    %676 = vmatpush1.xpose.msra.mxu0 0.0
    %677 = vmatprep.subr.mxu0 0.0
    %678 = vmatpush1.xpose.msra.mxu0 0.0
    %679 = vmatprep.mubr.f32.mxu0 0.0
    %680 = vmatmul.mubr.f32.gmra.mrb[0].mxu0 %v611
    %v681 = vpop.f32.mrb[0].mxu0
    %v682 = vadd.f32 0.0, %v681
    %v683 = vpop.f32.mrb[0].mxu0
    %684 = vdwg.mxu0
    %v685 = vsel %vm336, %v604, -inf
    %v686 = vsel %vm336, %v682, -inf
    %v687 = vsel %vm183, %v685, -inf
    %v688 = vrot.slane %v687, 4
    %v689 = vmax.f32 %v687, %v688
    %v690 = vrot.slane %v689, 2
    %v691 = vmax.f32 %v689, %v690
    %v692 = vrot.slane %v691, 1
    %v693 = vmax.f32 %v691, %v692
    %v694 = vsel %vm183, %v686, -inf
    %v695 = vrot.slane %v694, 4
    %v696 = vmax.f32 %v694, %v695
    %v697 = vrot.slane %v696, 2
    %v698 = vmax.f32 %v696, %v697
    %v699 = vrot.slane %v698, 1
    %v700 = vmax.f32 %v698, %v699
    %v701 = vsub.f32 %v685, %v693
    %v702 = vsub.f32 %v686, %v700
    %v703 = vmul.f32 %v701, 1.442695
    %v704 = vpow.pop %v703
    %v705 = vmul.f32 %v702, 1.442695
    %v706 = vpow.pop %v705
    %v707 = vsel %vm183, %v704, 0.0
    %v708 = vrot.slane %v707, 4
    %v709 = vadd.f32 %v707, %v708
    %v710 = vrot.slane %v709, 2
    %v711 = vadd.f32 %v709, %v710
    %v712 = vrot.slane %v711, 1
    %v713 = vadd.f32 %v711, %v712
    %v714 = vsel %vm183, %v706, 0.0
    %v715 = vrot.slane %v714, 4
    %v716 = vadd.f32 %v714, %v715
    %v717 = vrot.slane %v716, 2
    %v718 = vadd.f32 %v716, %v717
    %v719 = vrot.slane %v718, 1
    %v720 = vadd.f32 %v718, %v719
    %v721 = vrcp.pop %v713
    %v722 = vrcp.pop %v720
    %v723 = vmul.f32 %v704, %v721
    %v724 = vmul.f32 %v706, %v722
    %725 = vrot.lane.b32.xlu0 %v172, 56
    %v726 = vpop.permute.xlu0 %725
    %v729 = vsel %vm183, %v723, 0
    %731 = vmatprep.subr.mxu0 0.0
    %732 = vmatpush1.msra.mxu0 %v726
    %733 = vmatprep.subr.mxu0 0.0
    %734 = vmatpush1.msra.mxu0 0.0
    %735 = vmatprep.subr.mxu0 0.0
    %736 = vmatpush1.msra.mxu0 0.0
    %737 = vmatprep.subr.mxu0 0.0
    %738 = vmatpush1.msra.mxu0 0.0
    %739 = vmatprep.subr.mxu0 0.0
    %740 = vmatpush1.msra.mxu0 0.0
    %741 = vmatprep.subr.mxu0 0.0
    %742 = vmatpush1.msra.mxu0 0.0
    %743 = vmatprep.subr.mxu0 0.0
    %744 = vmatpush1.msra.mxu0 0.0
    %745 = vmatprep.subr.mxu0 0.0
    %746 = vmatpush1.msra.mxu0 0.0
    %747 = vmatprep.subr.mxu0 0.0
    %748 = vmatpush1.msra.mxu0 0.0
    %749 = vmatprep.subr.mxu0 0.0
    %750 = vmatpush1.msra.mxu0 0.0
    %751 = vmatprep.subr.mxu0 0.0
    %752 = vmatpush1.msra.mxu0 0.0
    %753 = vmatprep.subr.mxu0 0.0
    %754 = vmatpush1.msra.mxu0 0.0
    %755 = vmatprep.subr.mxu0 0.0
    %756 = vmatpush1.msra.mxu0 0.0
    %757 = vmatprep.subr.mxu0 0.0
    %758 = vmatpush1.msra.mxu0 0.0
    %759 = vmatprep.subr.mxu0 0.0
    %760 = vmatpush1.msra.mxu0 0.0
    %761 = vmatprep.subr.mxu0 0.0
    %762 = vmatpush1.msra.mxu0 0.0
    %763 = vmatprep.subr.mxu0 0.0
    %764 = vmatpush1.msra.mxu0 0.0
    %765 = vmatprep.subr.mxu0 0.0
    %766 = vmatpush1.msra.mxu0 0.0
    %767 = vmatprep.subr.mxu0 0.0
    %768 = vmatpush1.msra.mxu0 0.0
    %769 = vmatprep.subr.mxu0 0.0
    %770 = vmatpush1.msra.mxu0 0.0
    %771 = vmatprep.subr.mxu0 0.0
    %772 = vmatpush1.msra.mxu0 0.0
    %773 = vmatprep.subr.mxu0 0.0
    %774 = vmatpush1.msra.mxu0 0.0
    %775 = vmatprep.subr.mxu0 0.0
    %776 = vmatpush1.msra.mxu0 0.0
    %777 = vmatprep.subr.mxu0 0.0
    %778 = vmatpush1.msra.mxu0 0.0
    %779 = vmatprep.subr.mxu0 0.0
    %780 = vmatpush1.msra.mxu0 0.0
    %781 = vmatprep.subr.mxu0 0.0
    %782 = vmatpush1.msra.mxu0 0.0
    %783 = vmatprep.subr.mxu0 0.0
    %784 = vmatpush1.msra.mxu0 0.0
    %785 = vmatprep.subr.mxu0 0.0
    %786 = vmatpush1.msra.mxu0 0.0
    %787 = vmatprep.subr.mxu0 0.0
    %788 = vmatpush1.msra.mxu0 0.0
    %789 = vmatprep.subr.mxu0 0.0
    %790 = vmatpush1.msra.mxu0 0.0
    %791 = vmatprep.subr.mxu0 0.0
    %792 = vmatpush1.msra.mxu0 0.0
    %793 = vmatprep.subr.mxu0 0.0
    %794 = vmatpush1.msra.mxu0 0.0
    %795 = vmatprep.mubr.f32.mxu0 0.0
    %796 = vmatmul.mubr.f32.gmra.mrb[0].mxu0 %v729
    %v797 = vpop.f32.mrb[0].mxu0
    %v798 = vadd.f32 0.0, %v797
    %v799 = vpop.f32.mrb[0].mxu0
    %800 = vdwg.mxu0
    %801 = vrot.lane.b32.xlu0 %v177, 56
    %v802 = vpop.permute.xlu0 %801
    %v805 = vsel %vm183, %v724, 0
    %807 = vmatprep.subr.mxu0 0.0
    %808 = vmatpush1.msra.mxu0 %v802
    %809 = vmatprep.subr.mxu0 0.0
    %810 = vmatpush1.msra.mxu0 0.0
    %811 = vmatprep.subr.mxu0 0.0
    %812 = vmatpush1.msra.mxu0 0.0
    %813 = vmatprep.subr.mxu0 0.0
    %814 = vmatpush1.msra.mxu0 0.0
    %815 = vmatprep.subr.mxu0 0.0
    %816 = vmatpush1.msra.mxu0 0.0
    %817 = vmatprep.subr.mxu0 0.0
    %818 = vmatpush1.msra.mxu0 0.0
    %819 = vmatprep.subr.mxu0 0.0
    %820 = vmatpush1.msra.mxu0 0.0
    %821 = vmatprep.subr.mxu0 0.0
    %822 = vmatpush1.msra.mxu0 0.0
    %823 = vmatprep.subr.mxu0 0.0
    %824 = vmatpush1.msra.mxu0 0.0
    %825 = vmatprep.subr.mxu0 0.0
    %826 = vmatpush1.msra.mxu0 0.0
    %827 = vmatprep.subr.mxu0 0.0
    %828 = vmatpush1.msra.mxu0 0.0
    %829 = vmatprep.subr.mxu0 0.0
    %830 = vmatpush1.msra.mxu0 0.0
    %831 = vmatprep.subr.mxu0 0.0
    %832 = vmatpush1.msra.mxu0 0.0
    %833 = vmatprep.subr.mxu0 0.0
    %834 = vmatpush1.msra.mxu0 0.0
    %835 = vmatprep.subr.mxu0 0.0
    %836 = vmatpush1.msra.mxu0 0.0
    %837 = vmatprep.subr.mxu0 0.0
    %838 = vmatpush1.msra.mxu0 0.0
    %839 = vmatprep.subr.mxu0 0.0
    %840 = vmatpush1.msra.mxu0 0.0
    %841 = vmatprep.subr.mxu0 0.0
    %842 = vmatpush1.msra.mxu0 0.0
    %843 = vmatprep.subr.mxu0 0.0
    %844 = vmatpush1.msra.mxu0 0.0
    %845 = vmatprep.subr.mxu0 0.0
    %846 = vmatpush1.msra.mxu0 0.0
    %847 = vmatprep.subr.mxu0 0.0
    %848 = vmatpush1.msra.mxu0 0.0
    %849 = vmatprep.subr.mxu0 0.0
    %850 = vmatpush1.msra.mxu0 0.0
    %851 = vmatprep.subr.mxu0 0.0
    %852 = vmatpush1.msra.mxu0 0.0
    %853 = vmatprep.subr.mxu0 0.0
    %854 = vmatpush1.msra.mxu0 0.0
    %855 = vmatprep.subr.mxu0 0.0
    %856 = vmatpush1.msra.mxu0 0.0
    %857 = vmatprep.subr.mxu0 0.0
    %858 = vmatpush1.msra.mxu0 0.0
    %859 = vmatprep.subr.mxu0 0.0
    %860 = vmatpush1.msra.mxu0 0.0
    %861 = vmatprep.subr.mxu0 0.0
    %862 = vmatpush1.msra.mxu0 0.0
    %863 = vmatprep.subr.mxu0 0.0
    %864 = vmatpush1.msra.mxu0 0.0
    %865 = vmatprep.subr.mxu0 0.0
    %866 = vmatpush1.msra.mxu0 0.0
    %867 = vmatprep.subr.mxu0 0.0
    %868 = vmatpush1.msra.mxu0 0.0
    %869 = vmatprep.subr.mxu0 0.0
    %870 = vmatpush1.msra.mxu0 0.0
    %871 = vmatprep.mubr.f32.mxu0 0.0
    %872 = vmatmul.mubr.f32.gmra.mrb[0].mxu0 %v805
    %v873 = vpop.f32.mrb[0].mxu0
    %v874 = vadd.f32 0.0, %v873
    %v875 = vpop.f32.mrb[0].mxu0
    %876 = vdwg.mxu0
    %878 = vrot.lane.b32.xlu0 %v36, 32
    %v879 = vpop.permute.xlu0 %878
    %v882 = vsel %vm183, %v798, 0
    %v885 = vsel %vm183, %v874, 0
    %887 = vmatprep.subr.mxu0 0.0
    %888 = vmatpush1.msra.mxu0 %v879
    %889 = vmatprep.subr.mxu0 0.0
    %890 = vmatpush1.msra.mxu0 0.0
    %891 = vmatprep.subr.mxu0 0.0
    %892 = vmatpush1.msra.mxu0 0.0
    %893 = vmatprep.subr.mxu0 0.0
    %894 = vmatpush1.msra.mxu0 0.0
    %895 = vmatprep.subr.mxu0 0.0
    %896 = vmatpush1.msra.mxu0 0.0
    %897 = vmatprep.subr.mxu0 0.0
    %898 = vmatpush1.msra.mxu0 0.0
    %899 = vmatprep.subr.mxu0 0.0
    %900 = vmatpush1.msra.mxu0 0.0
    %901 = vmatprep.subr.mxu0 0.0
    %902 = vmatpush1.msra.mxu0 0.0
    %903 = vmatprep.subr.mxu0 0.0
    %904 = vmatpush1.msra.mxu0 0.0
    %905 = vmatprep.subr.mxu0 0.0
    %906 = vmatpush1.msra.mxu0 0.0
    %907 = vmatprep.subr.mxu0 0.0
    %908 = vmatpush1.msra.mxu0 0.0
    %909 = vmatprep.subr.mxu0 0.0
    %910 = vmatpush1.msra.mxu0 0.0
    %911 = vmatprep.subr.mxu0 0.0
    %912 = vmatpush1.msra.mxu0 0.0
    %913 = vmatprep.subr.mxu0 0.0
    %914 = vmatpush1.msra.mxu0 0.0
    %915 = vmatprep.subr.mxu0 0.0
    %916 = vmatpush1.msra.mxu0 0.0
    %917 = vmatprep.subr.mxu0 0.0
    %918 = vmatpush1.msra.mxu0 0.0
    %919 = vmatprep.subr.mxu0 0.0
    %920 = vmatpush1.msra.mxu0 0.0
    %921 = vmatprep.subr.mxu0 0.0
    %922 = vmatpush1.msra.mxu0 0.0
    %923 = vmatprep.subr.mxu0 0.0
    %924 = vmatpush1.msra.mxu0 0.0
    %925 = vmatprep.subr.mxu0 0.0
    %926 = vmatpush1.msra.mxu0 0.0
    %927 = vmatprep.subr.mxu0 0.0
    %928 = vmatpush1.msra.mxu0 0.0
    %929 = vmatprep.subr.mxu0 0.0
    %930 = vmatpush1.msra.mxu0 0.0
    %931 = vmatprep.subr.mxu0 0.0
    %932 = vmatpush1.msra.mxu0 0.0
    %933 = vmatprep.subr.mxu0 0.0
    %934 = vmatpush1.msra.mxu0 0.0
    %935 = vmatprep.subr.mxu0 0.0
    %936 = vmatpush1.msra.mxu0 0.0
    %937 = vmatprep.subr.mxu0 0.0
    %938 = vmatpush1.msra.mxu0 0.0
    %939 = vmatprep.subr.mxu0 0.0
    %940 = vmatpush1.msra.mxu0 0.0
    %941 = vmatprep.subr.mxu0 0.0
    %942 = vmatpush1.msra.mxu0 0.0
    %943 = vmatprep.subr.mxu0 0.0
    %944 = vmatpush1.msra.mxu0 0.0
    %945 = vmatprep.subr.mxu0 0.0
    %946 = vmatpush1.msra.mxu0 0.0
    %947 = vmatprep.subr.mxu0 0.0
    %948 = vmatpush1.msra.mxu0 0.0
    %949 = vmatprep.subr.mxu0 0.0
    %950 = vmatpush1.msra.mxu0 0.0
    %951 = vmatprep.mubr.f32.mxu0 0.0
    %952 = vmatmul.mubr.f32.gmra.mrb[0].mxu0 %v882
    %v953 = vpop.f32.mrb[0].mxu0
    %v954 = vadd.f32 0.0, %v953
    %v955 = vpop.f32.mrb[0].mxu0
    %956 = vmatprep.mubr.f32.mxu0 0.0
    %957 = vmatmul.mubr.f32.gmra.mrb[0].mxu0 %v885
    %v958 = vpop.f32.mrb[0].mxu0
    %v959 = vadd.f32 0.0, %v958
    %v960 = vpop.f32.mrb[0].mxu0
    %961 = vdwg.mxu0
    %963 = vrot.lane.b32.xlu0 %v34, 32
    %v964 = vpop.permute.xlu0 %963
    %v967 = vsel %vm183, %v450, 0
    %v970 = vsel %vm183, %v526, 0
    %972 = vmatprep.subr.mxu0 0.0
    %973 = vmatpush1.msra.mxu0 %v964
    %974 = vmatprep.subr.mxu0 0.0
    %975 = vmatpush1.msra.mxu0 0.0
    %976 = vmatprep.subr.mxu0 0.0
    %977 = vmatpush1.msra.mxu0 0.0
    %978 = vmatprep.subr.mxu0 0.0
    %979 = vmatpush1.msra.mxu0 0.0
    %980 = vmatprep.subr.mxu0 0.0
    %981 = vmatpush1.msra.mxu0 0.0
    %982 = vmatprep.subr.mxu0 0.0
    %983 = vmatpush1.msra.mxu0 0.0
    %984 = vmatprep.subr.mxu0 0.0
    %985 = vmatpush1.msra.mxu0 0.0
    %986 = vmatprep.subr.mxu0 0.0
    %987 = vmatpush1.msra.mxu0 0.0
    %988 = vmatprep.subr.mxu0 0.0
    %989 = vmatpush1.msra.mxu0 0.0
    %990 = vmatprep.subr.mxu0 0.0
    %991 = vmatpush1.msra.mxu0 0.0
    %992 = vmatprep.subr.mxu0 0.0
    %993 = vmatpush1.msra.mxu0 0.0
    %994 = vmatprep.subr.mxu0 0.0
    %995 = vmatpush1.msra.mxu0 0.0
    %996 = vmatprep.subr.mxu0 0.0
    %997 = vmatpush1.msra.mxu0 0.0
    %998 = vmatprep.subr.mxu0 0.0
    %999 = vmatpush1.msra.mxu0 0.0
    %1000 = vmatprep.subr.mxu0 0.0
    %1001 = vmatpush1.msra.mxu0 0.0
    %1002 = vmatprep.subr.mxu0 0.0
    %1003 = vmatpush1.msra.mxu0 0.0
    %1004 = vmatprep.subr.mxu0 0.0
    %1005 = vmatpush1.msra.mxu0 0.0
    %1006 = vmatprep.subr.mxu0 0.0
    %1007 = vmatpush1.msra.mxu0 0.0
    %1008 = vmatprep.subr.mxu0 0.0
    %1009 = vmatpush1.msra.mxu0 0.0
    %1010 = vmatprep.subr.mxu0 0.0
    %1011 = vmatpush1.msra.mxu0 0.0
    %1012 = vmatprep.subr.mxu0 0.0
    %1013 = vmatpush1.msra.mxu0 0.0
    %1014 = vmatprep.subr.mxu0 0.0
    %1015 = vmatpush1.msra.mxu0 0.0
    %1016 = vmatprep.subr.mxu0 0.0
    %1017 = vmatpush1.msra.mxu0 0.0
    %1018 = vmatprep.subr.mxu0 0.0
    %1019 = vmatpush1.msra.mxu0 0.0
    %1020 = vmatprep.subr.mxu0 0.0
    %1021 = vmatpush1.msra.mxu0 0.0
    %1022 = vmatprep.subr.mxu0 0.0
    %1023 = vmatpush1.msra.mxu0 0.0
    %1024 = vmatprep.subr.mxu0 0.0
    %1025 = vmatpush1.msra.mxu0 0.0
    %1026 = vmatprep.subr.mxu0 0.0
    %1027 = vmatpush1.msra.mxu0 0.0
    %1028 = vmatprep.subr.mxu0 0.0
    %1029 = vmatpush1.msra.mxu0 0.0
    %1030 = vmatprep.subr.mxu0 0.0
    %1031 = vmatpush1.msra.mxu0 0.0
    %1032 = vmatprep.subr.mxu0 0.0
    %1033 = vmatpush1.msra.mxu0 0.0
    %1034 = vmatprep.subr.mxu0 0.0
    %1035 = vmatpush1.msra.mxu0 0.0
    %1036 = vmatprep.mubr.f32.mxu0 0.0
    %1037 = vmatmul.mubr.f32.gmra.mrb[0].mxu0 %v967
    %v1038 = vpop.f32.mrb[0].mxu0
    %v1039 = vadd.f32 %v954, %v1038
    %v1040 = vpop.f32.mrb[0].mxu0
    %1041 = vmatprep.mubr.f32.mxu0 0.0
    %1042 = vmatmul.mubr.f32.gmra.mrb[0].mxu0 %v970
    %v1043 = vpop.f32.mrb[0].mxu0
    %v1044 = vadd.f32 %v959, %v1043
    %v1045 = vpop.f32.mrb[0].mxu0
    %1046 = vdwg.mxu0
    %1047 = vrot.lane.b32.xlu0 %v172, 80
    %v1048 = vpop.permute.xlu0 %1047
    %1049 = vrot.lane.b32.xlu0 %v172, 112
    %v1050 = vpop.permute.xlu0 %1049
    %v1051 = vsel %vm183, %v1048, 0
    %v1053 = vsel %vm183, %v1050, 0
    %1055 = vmatprep.subr.mxu0 0.0
    %1056 = vmatpush1.xpose.msra.mxu0 %v1053
    %1057 = vmatprep.subr.mxu0 0.0
    %1058 = vmatpush1.xpose.msra.mxu0 0.0
    %1059 = vmatprep.subr.mxu0 0.0
    %1060 = vmatpush1.xpose.msra.mxu0 0.0
    %1061 = vmatprep.subr.mxu0 0.0
    %1062 = vmatpush1.xpose.msra.mxu0 0.0
    %1063 = vmatprep.subr.mxu0 0.0
    %1064 = vmatpush1.xpose.msra.mxu0 0.0
    %1065 = vmatprep.subr.mxu0 0.0
    %1066 = vmatpush1.xpose.msra.mxu0 0.0
    %1067 = vmatprep.subr.mxu0 0.0
    %1068 = vmatpush1.xpose.msra.mxu0 0.0
    %1069 = vmatprep.subr.mxu0 0.0
    %1070 = vmatpush1.xpose.msra.mxu0 0.0
    %1071 = vmatprep.subr.mxu0 0.0
    %1072 = vmatpush1.xpose.msra.mxu0 0.0
    %1073 = vmatprep.subr.mxu0 0.0
    %1074 = vmatpush1.xpose.msra.mxu0 0.0
    %1075 = vmatprep.subr.mxu0 0.0
    %1076 = vmatpush1.xpose.msra.mxu0 0.0
    %1077 = vmatprep.subr.mxu0 0.0
    %1078 = vmatpush1.xpose.msra.mxu0 0.0
    %1079 = vmatprep.subr.mxu0 0.0
    %1080 = vmatpush1.xpose.msra.mxu0 0.0
    %1081 = vmatprep.subr.mxu0 0.0
    %1082 = vmatpush1.xpose.msra.mxu0 0.0
    %1083 = vmatprep.subr.mxu0 0.0
    %1084 = vmatpush1.xpose.msra.mxu0 0.0
    %1085 = vmatprep.subr.mxu0 0.0
    %1086 = vmatpush1.xpose.msra.mxu0 0.0
    %1087 = vmatprep.subr.mxu0 0.0
    %1088 = vmatpush1.xpose.msra.mxu0 0.0
    %1089 = vmatprep.subr.mxu0 0.0
    %1090 = vmatpush1.xpose.msra.mxu0 0.0
    %1091 = vmatprep.subr.mxu0 0.0
    %1092 = vmatpush1.xpose.msra.mxu0 0.0
    %1093 = vmatprep.subr.mxu0 0.0
    %1094 = vmatpush1.xpose.msra.mxu0 0.0
    %1095 = vmatprep.subr.mxu0 0.0
    %1096 = vmatpush1.xpose.msra.mxu0 0.0
    %1097 = vmatprep.subr.mxu0 0.0
    %1098 = vmatpush1.xpose.msra.mxu0 0.0
    %1099 = vmatprep.subr.mxu0 0.0
    %1100 = vmatpush1.xpose.msra.mxu0 0.0
    %1101 = vmatprep.subr.mxu0 0.0
    %1102 = vmatpush1.xpose.msra.mxu0 0.0
    %1103 = vmatprep.subr.mxu0 0.0
    %1104 = vmatpush1.xpose.msra.mxu0 0.0
    %1105 = vmatprep.subr.mxu0 0.0
    %1106 = vmatpush1.xpose.msra.mxu0 0.0
    %1107 = vmatprep.subr.mxu0 0.0
    %1108 = vmatpush1.xpose.msra.mxu0 0.0
    %1109 = vmatprep.subr.mxu0 0.0
    %1110 = vmatpush1.xpose.msra.mxu0 0.0
    %1111 = vmatprep.subr.mxu0 0.0
    %1112 = vmatpush1.xpose.msra.mxu0 0.0
    %1113 = vmatprep.subr.mxu0 0.0
    %1114 = vmatpush1.xpose.msra.mxu0 0.0
    %1115 = vmatprep.subr.mxu0 0.0
    %1116 = vmatpush1.xpose.msra.mxu0 0.0
    %1117 = vmatprep.subr.mxu0 0.0
    %1118 = vmatpush1.xpose.msra.mxu0 0.0
    %1119 = vmatprep.mubr.f32.mxu0 0.0
    %1120 = vmatmul.mubr.f32.gmra.mrb[0].mxu0 %v1051
    %v1121 = vpop.f32.mrb[0].mxu0
    %v1122 = vadd.f32 0.0, %v1121
    %v1123 = vpop.f32.mrb[0].mxu0
    %1124 = vdwg.mxu0
    %1125 = vrot.lane.b32.xlu0 %v177, 80
    %v1126 = vpop.permute.xlu0 %1125
    %1127 = vrot.lane.b32.xlu0 %v177, 112
    %v1128 = vpop.permute.xlu0 %1127
    %v1129 = vsel %vm183, %v1126, 0
    %v1131 = vsel %vm183, %v1128, 0
    %1133 = vmatprep.subr.mxu0 0.0
    %1134 = vmatpush1.xpose.msra.mxu0 %v1131
    %1135 = vmatprep.subr.mxu0 0.0
    %1136 = vmatpush1.xpose.msra.mxu0 0.0
    %1137 = vmatprep.subr.mxu0 0.0
    %1138 = vmatpush1.xpose.msra.mxu0 0.0
    %1139 = vmatprep.subr.mxu0 0.0
    %1140 = vmatpush1.xpose.msra.mxu0 0.0
    %1141 = vmatprep.subr.mxu0 0.0
    %1142 = vmatpush1.xpose.msra.mxu0 0.0
    %1143 = vmatprep.subr.mxu0 0.0
    %1144 = vmatpush1.xpose.msra.mxu0 0.0
    %1145 = vmatprep.subr.mxu0 0.0
    %1146 = vmatpush1.xpose.msra.mxu0 0.0
    %1147 = vmatprep.subr.mxu0 0.0
    %1148 = vmatpush1.xpose.msra.mxu0 0.0
    %1149 = vmatprep.subr.mxu0 0.0
    %1150 = vmatpush1.xpose.msra.mxu0 0.0
    %1151 = vmatprep.subr.mxu0 0.0
    %1152 = vmatpush1.xpose.msra.mxu0 0.0
    %1153 = vmatprep.subr.mxu0 0.0
    %1154 = vmatpush1.xpose.msra.mxu0 0.0
    %1155 = vmatprep.subr.mxu0 0.0
    %1156 = vmatpush1.xpose.msra.mxu0 0.0
    %1157 = vmatprep.subr.mxu0 0.0
    %1158 = vmatpush1.xpose.msra.mxu0 0.0
    %1159 = vmatprep.subr.mxu0 0.0
    %1160 = vmatpush1.xpose.msra.mxu0 0.0
    %1161 = vmatprep.subr.mxu0 0.0
    %1162 = vmatpush1.xpose.msra.mxu0 0.0
    %1163 = vmatprep.subr.mxu0 0.0
    %1164 = vmatpush1.xpose.msra.mxu0 0.0
    %1165 = vmatprep.subr.mxu0 0.0
    %1166 = vmatpush1.xpose.msra.mxu0 0.0
    %1167 = vmatprep.subr.mxu0 0.0
    %1168 = vmatpush1.xpose.msra.mxu0 0.0
    %1169 = vmatprep.subr.mxu0 0.0
    %1170 = vmatpush1.xpose.msra.mxu0 0.0
    %1171 = vmatprep.subr.mxu0 0.0
    %1172 = vmatpush1.xpose.msra.mxu0 0.0
    %1173 = vmatprep.subr.mxu0 0.0
    %1174 = vmatpush1.xpose.msra.mxu0 0.0
    %1175 = vmatprep.subr.mxu0 0.0
    %1176 = vmatpush1.xpose.msra.mxu0 0.0
    %1177 = vmatprep.subr.mxu0 0.0
    %1178 = vmatpush1.xpose.msra.mxu0 0.0
    %1179 = vmatprep.subr.mxu0 0.0
    %1180 = vmatpush1.xpose.msra.mxu0 0.0
    %1181 = vmatprep.subr.mxu0 0.0
    %1182 = vmatpush1.xpose.msra.mxu0 0.0
    %1183 = vmatprep.subr.mxu0 0.0
    %1184 = vmatpush1.xpose.msra.mxu0 0.0
    %1185 = vmatprep.subr.mxu0 0.0
    %1186 = vmatpush1.xpose.msra.mxu0 0.0
    %1187 = vmatprep.subr.mxu0 0.0
    %1188 = vmatpush1.xpose.msra.mxu0 0.0
    %1189 = vmatprep.subr.mxu0 0.0
    %1190 = vmatpush1.xpose.msra.mxu0 0.0
    %1191 = vmatprep.subr.mxu0 0.0
    %1192 = vmatpush1.xpose.msra.mxu0 0.0
    %1193 = vmatprep.subr.mxu0 0.0
    %1194 = vmatpush1.xpose.msra.mxu0 0.0
    %1195 = vmatprep.subr.mxu0 0.0
    %1196 = vmatpush1.xpose.msra.mxu0 0.0
    %1197 = vmatprep.mubr.f32.mxu0 0.0
    %1198 = vmatmul.mubr.f32.gmra.mrb[0].mxu0 %v1129
    %v1199 = vpop.f32.mrb[0].mxu0
    %v1200 = vadd.f32 0.0, %v1199
    %v1201 = vpop.f32.mrb[0].mxu0
    %1202 = vdwg.mxu0
    %v1203 = vsel %vm336, %v1122, -inf
    %v1204 = vsel %vm336, %v1200, -inf
    %v1205 = vsel %vm183, %v1203, -inf
    %v1206 = vrot.slane %v1205, 4
    %v1207 = vmax.f32 %v1205, %v1206
    %v1208 = vrot.slane %v1207, 2
    %v1209 = vmax.f32 %v1207, %v1208
    %v1210 = vrot.slane %v1209, 1
    %v1211 = vmax.f32 %v1209, %v1210
    %v1212 = vsel %vm183, %v1204, -inf
    %v1213 = vrot.slane %v1212, 4
    %v1214 = vmax.f32 %v1212, %v1213
    %v1215 = vrot.slane %v1214, 2
    %v1216 = vmax.f32 %v1214, %v1215
    %v1217 = vrot.slane %v1216, 1
    %v1218 = vmax.f32 %v1216, %v1217
    %v1219 = vsub.f32 %v1203, %v1211
    %v1220 = vsub.f32 %v1204, %v1218
    %v1221 = vmul.f32 %v1219, 1.442695
    %v1222 = vpow.pop %v1221
    %v1223 = vmul.f32 %v1220, 1.442695
    %v1224 = vpow.pop %v1223
    %v1225 = vsel %vm183, %v1222, 0.0
    %v1226 = vrot.slane %v1225, 4
    %v1227 = vadd.f32 %v1225, %v1226
    %v1228 = vrot.slane %v1227, 2
    %v1229 = vadd.f32 %v1227, %v1228
    %v1230 = vrot.slane %v1229, 1
    %v1231 = vadd.f32 %v1229, %v1230
    %v1232 = vsel %vm183, %v1224, 0.0
    %v1233 = vrot.slane %v1232, 4
    %v1234 = vadd.f32 %v1232, %v1233
    %v1235 = vrot.slane %v1234, 2
    %v1236 = vadd.f32 %v1234, %v1235
    %v1237 = vrot.slane %v1236, 1
    %v1238 = vadd.f32 %v1236, %v1237
    %v1239 = vrcp.pop %v1231
    %v1240 = vrcp.pop %v1238
    %v1241 = vmul.f32 %v1222, %v1239
    %v1242 = vmul.f32 %v1224, %v1240
    %1243 = vrot.lane.b32.xlu0 %v172, 48
    %v1244 = vpop.permute.xlu0 %1243
    %v1247 = vsel %vm183, %v1241, 0
    %1249 = vmatprep.subr.mxu0 0.0
    %1250 = vmatpush1.msra.mxu0 %v1244
    %1251 = vmatprep.subr.mxu0 0.0
    %1252 = vmatpush1.msra.mxu0 0.0
    %1253 = vmatprep.subr.mxu0 0.0
    %1254 = vmatpush1.msra.mxu0 0.0
    %1255 = vmatprep.subr.mxu0 0.0
    %1256 = vmatpush1.msra.mxu0 0.0
    %1257 = vmatprep.subr.mxu0 0.0
    %1258 = vmatpush1.msra.mxu0 0.0
    %1259 = vmatprep.subr.mxu0 0.0
    %1260 = vmatpush1.msra.mxu0 0.0
    %1261 = vmatprep.subr.mxu0 0.0
    %1262 = vmatpush1.msra.mxu0 0.0
    %1263 = vmatprep.subr.mxu0 0.0
    %1264 = vmatpush1.msra.mxu0 0.0
    %1265 = vmatprep.subr.mxu0 0.0
    %1266 = vmatpush1.msra.mxu0 0.0
    %1267 = vmatprep.subr.mxu0 0.0
    %1268 = vmatpush1.msra.mxu0 0.0
    %1269 = vmatprep.subr.mxu0 0.0
    %1270 = vmatpush1.msra.mxu0 0.0
    %1271 = vmatprep.subr.mxu0 0.0
    %1272 = vmatpush1.msra.mxu0 0.0
    %1273 = vmatprep.subr.mxu0 0.0
    %1274 = vmatpush1.msra.mxu0 0.0
    %1275 = vmatprep.subr.mxu0 0.0
    %1276 = vmatpush1.msra.mxu0 0.0
    %1277 = vmatprep.subr.mxu0 0.0
    %1278 = vmatpush1.msra.mxu0 0.0
    %1279 = vmatprep.subr.mxu0 0.0
    %1280 = vmatpush1.msra.mxu0 0.0
    %1281 = vmatprep.subr.mxu0 0.0
    %1282 = vmatpush1.msra.mxu0 0.0
    %1283 = vmatprep.subr.mxu0 0.0
    %1284 = vmatpush1.msra.mxu0 0.0
    %1285 = vmatprep.subr.mxu0 0.0
    %1286 = vmatpush1.msra.mxu0 0.0
    %1287 = vmatprep.subr.mxu0 0.0
    %1288 = vmatpush1.msra.mxu0 0.0
    %1289 = vmatprep.subr.mxu0 0.0
    %1290 = vmatpush1.msra.mxu0 0.0
    %1291 = vmatprep.subr.mxu0 0.0
    %1292 = vmatpush1.msra.mxu0 0.0
    %1293 = vmatprep.subr.mxu0 0.0
    %1294 = vmatpush1.msra.mxu0 0.0
    %1295 = vmatprep.subr.mxu0 0.0
    %1296 = vmatpush1.msra.mxu0 0.0
    %1297 = vmatprep.subr.mxu0 0.0
    %1298 = vmatpush1.msra.mxu0 0.0
    %1299 = vmatprep.subr.mxu0 0.0
    %1300 = vmatpush1.msra.mxu0 0.0
    %1301 = vmatprep.subr.mxu0 0.0
    %1302 = vmatpush1.msra.mxu0 0.0
    %1303 = vmatprep.subr.mxu0 0.0
    %1304 = vmatpush1.msra.mxu0 0.0
    %1305 = vmatprep.subr.mxu0 0.0
    %1306 = vmatpush1.msra.mxu0 0.0
    %1307 = vmatprep.subr.mxu0 0.0
    %1308 = vmatpush1.msra.mxu0 0.0
    %1309 = vmatprep.subr.mxu0 0.0
    %1310 = vmatpush1.msra.mxu0 0.0
    %1311 = vmatprep.subr.mxu0 0.0
    %1312 = vmatpush1.msra.mxu0 0.0
    %1313 = vmatprep.mubr.f32.mxu0 0.0
    %1314 = vmatmul.mubr.f32.gmra.mrb[0].mxu0 %v1247
    %v1315 = vpop.f32.mrb[0].mxu0
    %v1316 = vadd.f32 0.0, %v1315
    %v1317 = vpop.f32.mrb[0].mxu0
    %1318 = vdwg.mxu0
    %1319 = vrot.lane.b32.xlu0 %v177, 48
    %v1320 = vpop.permute.xlu0 %1319
    %v1323 = vsel %vm183, %v1242, 0
    %1325 = vmatprep.subr.mxu0 0.0
    %1326 = vmatpush1.msra.mxu0 %v1320
    %1327 = vmatprep.subr.mxu0 0.0
    %1328 = vmatpush1.msra.mxu0 0.0
    %1329 = vmatprep.subr.mxu0 0.0
    %1330 = vmatpush1.msra.mxu0 0.0
    %1331 = vmatprep.subr.mxu0 0.0
    %1332 = vmatpush1.msra.mxu0 0.0
    %1333 = vmatprep.subr.mxu0 0.0
    %1334 = vmatpush1.msra.mxu0 0.0
    %1335 = vmatprep.subr.mxu0 0.0
    %1336 = vmatpush1.msra.mxu0 0.0
    %1337 = vmatprep.subr.mxu0 0.0
    %1338 = vmatpush1.msra.mxu0 0.0
    %1339 = vmatprep.subr.mxu0 0.0
    %1340 = vmatpush1.msra.mxu0 0.0
    %1341 = vmatprep.subr.mxu0 0.0
    %1342 = vmatpush1.msra.mxu0 0.0
    %1343 = vmatprep.subr.mxu0 0.0
    %1344 = vmatpush1.msra.mxu0 0.0
    %1345 = vmatprep.subr.mxu0 0.0
    %1346 = vmatpush1.msra.mxu0 0.0
    %1347 = vmatprep.subr.mxu0 0.0
    %1348 = vmatpush1.msra.mxu0 0.0
    %1349 = vmatprep.subr.mxu0 0.0
    %1350 = vmatpush1.msra.mxu0 0.0
    %1351 = vmatprep.subr.mxu0 0.0
    %1352 = vmatpush1.msra.mxu0 0.0
    %1353 = vmatprep.subr.mxu0 0.0
    %1354 = vmatpush1.msra.mxu0 0.0
    %1355 = vmatprep.subr.mxu0 0.0
    %1356 = vmatpush1.msra.mxu0 0.0
    %1357 = vmatprep.subr.mxu0 0.0
    %1358 = vmatpush1.msra.mxu0 0.0
    %1359 = vmatprep.subr.mxu0 0.0
    %1360 = vmatpush1.msra.mxu0 0.0
    %1361 = vmatprep.subr.mxu0 0.0
    %1362 = vmatpush1.msra.mxu0 0.0
    %1363 = vmatprep.subr.mxu0 0.0
    %1364 = vmatpush1.msra.mxu0 0.0
    %1365 = vmatprep.subr.mxu0 0.0
    %1366 = vmatpush1.msra.mxu0 0.0
    %1367 = vmatprep.subr.mxu0 0.0
    %1368 = vmatpush1.msra.mxu0 0.0
    %1369 = vmatprep.subr.mxu0 0.0
    %1370 = vmatpush1.msra.mxu0 0.0
    %1371 = vmatprep.subr.mxu0 0.0
    %1372 = vmatpush1.msra.mxu0 0.0
    %1373 = vmatprep.subr.mxu0 0.0
    %1374 = vmatpush1.msra.mxu0 0.0
    %1375 = vmatprep.subr.mxu0 0.0
    %1376 = vmatpush1.msra.mxu0 0.0
    %1377 = vmatprep.subr.mxu0 0.0
    %1378 = vmatpush1.msra.mxu0 0.0
    %1379 = vmatprep.subr.mxu0 0.0
    %1380 = vmatpush1.msra.mxu0 0.0
    %1381 = vmatprep.subr.mxu0 0.0
    %1382 = vmatpush1.msra.mxu0 0.0
    %1383 = vmatprep.subr.mxu0 0.0
    %1384 = vmatpush1.msra.mxu0 0.0
    %1385 = vmatprep.subr.mxu0 0.0
    %1386 = vmatpush1.msra.mxu0 0.0
    %1387 = vmatprep.subr.mxu0 0.0
    %1388 = vmatpush1.msra.mxu0 0.0
    %1389 = vmatprep.mubr.f32.mxu0 0.0
    %1390 = vmatmul.mubr.f32.gmra.mrb[0].mxu0 %v1323
    %v1391 = vpop.f32.mrb[0].mxu0
    %v1392 = vadd.f32 0.0, %v1391
    %v1393 = vpop.f32.mrb[0].mxu0
    %1394 = vdwg.mxu0
    %1396 = vrot.lane.b32.xlu0 %v38, 32
    %v1397 = vpop.permute.xlu0 %1396
    %v1400 = vsel %vm183, %v1316, 0
    %v1403 = vsel %vm183, %v1392, 0
    %1405 = vmatprep.subr.mxu0 0.0
    %1406 = vmatpush1.msra.mxu0 %v1397
    %1407 = vmatprep.subr.mxu0 0.0
    %1408 = vmatpush1.msra.mxu0 0.0
    %1409 = vmatprep.subr.mxu0 0.0
    %1410 = vmatpush1.msra.mxu0 0.0
    %1411 = vmatprep.subr.mxu0 0.0
    %1412 = vmatpush1.msra.mxu0 0.0
    %1413 = vmatprep.subr.mxu0 0.0
    %1414 = vmatpush1.msra.mxu0 0.0
    %1415 = vmatprep.subr.mxu0 0.0
    %1416 = vmatpush1.msra.mxu0 0.0
    %1417 = vmatprep.subr.mxu0 0.0
    %1418 = vmatpush1.msra.mxu0 0.0
    %1419 = vmatprep.subr.mxu0 0.0
    %1420 = vmatpush1.msra.mxu0 0.0
    %1421 = vmatprep.subr.mxu0 0.0
    %1422 = vmatpush1.msra.mxu0 0.0
    %1423 = vmatprep.subr.mxu0 0.0
    %1424 = vmatpush1.msra.mxu0 0.0
    %1425 = vmatprep.subr.mxu0 0.0
    %1426 = vmatpush1.msra.mxu0 0.0
    %1427 = vmatprep.subr.mxu0 0.0
    %1428 = vmatpush1.msra.mxu0 0.0
    %1429 = vmatprep.subr.mxu0 0.0
    %1430 = vmatpush1.msra.mxu0 0.0
    %1431 = vmatprep.subr.mxu0 0.0
    %1432 = vmatpush1.msra.mxu0 0.0
    %1433 = vmatprep.subr.mxu0 0.0
    %1434 = vmatpush1.msra.mxu0 0.0
    %1435 = vmatprep.subr.mxu0 0.0
    %1436 = vmatpush1.msra.mxu0 0.0
    %1437 = vmatprep.subr.mxu0 0.0
    %1438 = vmatpush1.msra.mxu0 0.0
    %1439 = vmatprep.subr.mxu0 0.0
    %1440 = vmatpush1.msra.mxu0 0.0
    %1441 = vmatprep.subr.mxu0 0.0
    %1442 = vmatpush1.msra.mxu0 0.0
    %1443 = vmatprep.subr.mxu0 0.0
    %1444 = vmatpush1.msra.mxu0 0.0
    %1445 = vmatprep.subr.mxu0 0.0
    %1446 = vmatpush1.msra.mxu0 0.0
    %1447 = vmatprep.subr.mxu0 0.0
    %1448 = vmatpush1.msra.mxu0 0.0
    %1449 = vmatprep.subr.mxu0 0.0
    %1450 = vmatpush1.msra.mxu0 0.0
    %1451 = vmatprep.subr.mxu0 0.0
    %1452 = vmatpush1.msra.mxu0 0.0
    %1453 = vmatprep.subr.mxu0 0.0
    %1454 = vmatpush1.msra.mxu0 0.0
    %1455 = vmatprep.subr.mxu0 0.0
    %1456 = vmatpush1.msra.mxu0 0.0
    %1457 = vmatprep.subr.mxu0 0.0
    %1458 = vmatpush1.msra.mxu0 0.0
    %1459 = vmatprep.subr.mxu0 0.0
    %1460 = vmatpush1.msra.mxu0 0.0
    %1461 = vmatprep.subr.mxu0 0.0
    %1462 = vmatpush1.msra.mxu0 0.0
    %1463 = vmatprep.subr.mxu0 0.0
    %1464 = vmatpush1.msra.mxu0 0.0
    %1465 = vmatprep.subr.mxu0 0.0
    %1466 = vmatpush1.msra.mxu0 0.0
    %1467 = vmatprep.subr.mxu0 0.0
    %1468 = vmatpush1.msra.mxu0 0.0
    %1469 = vmatprep.mubr.f32.mxu0 0.0
    %1470 = vmatmul.mubr.f32.gmra.mrb[0].mxu0 %v1400
    %v1471 = vpop.f32.mrb[0].mxu0
    %v1472 = vadd.f32 0.0, %v1471
    %v1473 = vpop.f32.mrb[0].mxu0
    %1474 = vmatprep.mubr.f32.mxu0 0.0
    %1475 = vmatmul.mubr.f32.gmra.mrb[0].mxu0 %v1403
    %v1476 = vpop.f32.mrb[0].mxu0
    %v1477 = vadd.f32 0.0, %v1476
    %v1478 = vpop.f32.mrb[0].mxu0
    %1479 = vdwg.mxu0
    %v1480 = vadd.f32 %v1039, %v1472
    %v1481 = vadd.f32 %v1044, %v1477
    %1482 = vrot.lane.b32.xlu0 %v172, 72
    %v1483 = vpop.permute.xlu0 %1482
    %1484 = vrot.lane.b32.xlu0 %v172, 104
    %v1485 = vpop.permute.xlu0 %1484
    %v1486 = vsel %vm183, %v1483, 0
    %v1488 = vsel %vm183, %v1485, 0
    %1490 = vmatprep.subr.mxu0 0.0
    %1491 = vmatpush1.xpose.msra.mxu0 %v1488
    %1492 = vmatprep.subr.mxu0 0.0
    %1493 = vmatpush1.xpose.msra.mxu0 0.0
    %1494 = vmatprep.subr.mxu0 0.0
    %1495 = vmatpush1.xpose.msra.mxu0 0.0
    %1496 = vmatprep.subr.mxu0 0.0
    %1497 = vmatpush1.xpose.msra.mxu0 0.0
    %1498 = vmatprep.subr.mxu0 0.0
    %1499 = vmatpush1.xpose.msra.mxu0 0.0
    %1500 = vmatprep.subr.mxu0 0.0
    %1501 = vmatpush1.xpose.msra.mxu0 0.0
    %1502 = vmatprep.subr.mxu0 0.0
    %1503 = vmatpush1.xpose.msra.mxu0 0.0
    %1504 = vmatprep.subr.mxu0 0.0
    %1505 = vmatpush1.xpose.msra.mxu0 0.0
    %1506 = vmatprep.subr.mxu0 0.0
    %1507 = vmatpush1.xpose.msra.mxu0 0.0
    %1508 = vmatprep.subr.mxu0 0.0
    %1509 = vmatpush1.xpose.msra.mxu0 0.0
    %1510 = vmatprep.subr.mxu0 0.0
    %1511 = vmatpush1.xpose.msra.mxu0 0.0
    %1512 = vmatprep.subr.mxu0 0.0
    %1513 = vmatpush1.xpose.msra.mxu0 0.0
    %1514 = vmatprep.subr.mxu0 0.0
    %1515 = vmatpush1.xpose.msra.mxu0 0.0
    %1516 = vmatprep.subr.mxu0 0.0
    %1517 = vmatpush1.xpose.msra.mxu0 0.0
    %1518 = vmatprep.subr.mxu0 0.0
    %1519 = vmatpush1.xpose.msra.mxu0 0.0
    %1520 = vmatprep.subr.mxu0 0.0
    %1521 = vmatpush1.xpose.msra.mxu0 0.0
    %1522 = vmatprep.subr.mxu0 0.0
    %1523 = vmatpush1.xpose.msra.mxu0 0.0
    %1524 = vmatprep.subr.mxu0 0.0
    %1525 = vmatpush1.xpose.msra.mxu0 0.0
    %1526 = vmatprep.subr.mxu0 0.0
    %1527 = vmatpush1.xpose.msra.mxu0 0.0
    %1528 = vmatprep.subr.mxu0 0.0
    %1529 = vmatpush1.xpose.msra.mxu0 0.0
    %1530 = vmatprep.subr.mxu0 0.0
    %1531 = vmatpush1.xpose.msra.mxu0 0.0
    %1532 = vmatprep.subr.mxu0 0.0
    %1533 = vmatpush1.xpose.msra.mxu0 0.0
    %1534 = vmatprep.subr.mxu0 0.0
    %1535 = vmatpush1.xpose.msra.mxu0 0.0
    %1536 = vmatprep.subr.mxu0 0.0
    %1537 = vmatpush1.xpose.msra.mxu0 0.0
    %1538 = vmatprep.subr.mxu0 0.0
    %1539 = vmatpush1.xpose.msra.mxu0 0.0
    %1540 = vmatprep.subr.mxu0 0.0
    %1541 = vmatpush1.xpose.msra.mxu0 0.0
    %1542 = vmatprep.subr.mxu0 0.0
    %1543 = vmatpush1.xpose.msra.mxu0 0.0
    %1544 = vmatprep.subr.mxu0 0.0
    %1545 = vmatpush1.xpose.msra.mxu0 0.0
    %1546 = vmatprep.subr.mxu0 0.0
    %1547 = vmatpush1.xpose.msra.mxu0 0.0
    %1548 = vmatprep.subr.mxu0 0.0
    %1549 = vmatpush1.xpose.msra.mxu0 0.0
    %1550 = vmatprep.subr.mxu0 0.0
    %1551 = vmatpush1.xpose.msra.mxu0 0.0
    %1552 = vmatprep.subr.mxu0 0.0
    %1553 = vmatpush1.xpose.msra.mxu0 0.0
    %1554 = vmatprep.mubr.f32.mxu0 0.0
    %1555 = vmatmul.mubr.f32.gmra.mrb[0].mxu0 %v1486
    %v1556 = vpop.f32.mrb[0].mxu0
    %v1557 = vadd.f32 0.0, %v1556
    %v1558 = vpop.f32.mrb[0].mxu0
    %1559 = vdwg.mxu0
    %1560 = vrot.lane.b32.xlu0 %v177, 72
    %v1561 = vpop.permute.xlu0 %1560
    %1562 = vrot.lane.b32.xlu0 %v177, 104
    %v1563 = vpop.permute.xlu0 %1562
    %v1564 = vsel %vm183, %v1561, 0
    %v1566 = vsel %vm183, %v1563, 0
    %1568 = vmatprep.subr.mxu0 0.0
    %1569 = vmatpush1.xpose.msra.mxu0 %v1566
    %1570 = vmatprep.subr.mxu0 0.0
    %1571 = vmatpush1.xpose.msra.mxu0 0.0
    %1572 = vmatprep.subr.mxu0 0.0
    %1573 = vmatpush1.xpose.msra.mxu0 0.0
    %1574 = vmatprep.subr.mxu0 0.0
    %1575 = vmatpush1.xpose.msra.mxu0 0.0
    %1576 = vmatprep.subr.mxu0 0.0
    %1577 = vmatpush1.xpose.msra.mxu0 0.0
    %1578 = vmatprep.subr.mxu0 0.0
    %1579 = vmatpush1.xpose.msra.mxu0 0.0
    %1580 = vmatprep.subr.mxu0 0.0
    %1581 = vmatpush1.xpose.msra.mxu0 0.0
    %1582 = vmatprep.subr.mxu0 0.0
    %1583 = vmatpush1.xpose.msra.mxu0 0.0
    %1584 = vmatprep.subr.mxu0 0.0
    %1585 = vmatpush1.xpose.msra.mxu0 0.0
    %1586 = vmatprep.subr.mxu0 0.0
    %1587 = vmatpush1.xpose.msra.mxu0 0.0
    %1588 = vmatprep.subr.mxu0 0.0
    %1589 = vmatpush1.xpose.msra.mxu0 0.0
    %1590 = vmatprep.subr.mxu0 0.0
    %1591 = vmatpush1.xpose.msra.mxu0 0.0
    %1592 = vmatprep.subr.mxu0 0.0
    %1593 = vmatpush1.xpose.msra.mxu0 0.0
    %1594 = vmatprep.subr.mxu0 0.0
    %1595 = vmatpush1.xpose.msra.mxu0 0.0
    %1596 = vmatprep.subr.mxu0 0.0
    %1597 = vmatpush1.xpose.msra.mxu0 0.0
    %1598 = vmatprep.subr.mxu0 0.0
    %1599 = vmatpush1.xpose.msra.mxu0 0.0
    %1600 = vmatprep.subr.mxu0 0.0
    %1601 = vmatpush1.xpose.msra.mxu0 0.0
    %1602 = vmatprep.subr.mxu0 0.0
    %1603 = vmatpush1.xpose.msra.mxu0 0.0
    %1604 = vmatprep.subr.mxu0 0.0
    %1605 = vmatpush1.xpose.msra.mxu0 0.0
    %1606 = vmatprep.subr.mxu0 0.0
    %1607 = vmatpush1.xpose.msra.mxu0 0.0
    %1608 = vmatprep.subr.mxu0 0.0
    %1609 = vmatpush1.xpose.msra.mxu0 0.0
    %1610 = vmatprep.subr.mxu0 0.0
    %1611 = vmatpush1.xpose.msra.mxu0 0.0
    %1612 = vmatprep.subr.mxu0 0.0
    %1613 = vmatpush1.xpose.msra.mxu0 0.0
    %1614 = vmatprep.subr.mxu0 0.0
    %1615 = vmatpush1.xpose.msra.mxu0 0.0
    %1616 = vmatprep.subr.mxu0 0.0
    %1617 = vmatpush1.xpose.msra.mxu0 0.0
    %1618 = vmatprep.subr.mxu0 0.0
    %1619 = vmatpush1.xpose.msra.mxu0 0.0
    %1620 = vmatprep.subr.mxu0 0.0
    %1621 = vmatpush1.xpose.msra.mxu0 0.0
    %1622 = vmatprep.subr.mxu0 0.0
    %1623 = vmatpush1.xpose.msra.mxu0 0.0
    %1624 = vmatprep.subr.mxu0 0.0
    %1625 = vmatpush1.xpose.msra.mxu0 0.0
    %1626 = vmatprep.subr.mxu0 0.0
    %1627 = vmatpush1.xpose.msra.mxu0 0.0
    %1628 = vmatprep.subr.mxu0 0.0
    %1629 = vmatpush1.xpose.msra.mxu0 0.0
    %1630 = vmatprep.subr.mxu0 0.0
    %1631 = vmatpush1.xpose.msra.mxu0 0.0
    %1632 = vmatprep.mubr.f32.mxu0 0.0
    %1633 = vmatmul.mubr.f32.gmra.mrb[0].mxu0 %v1564
    %v1634 = vpop.f32.mrb[0].mxu0
    %v1635 = vadd.f32 0.0, %v1634
    %v1636 = vpop.f32.mrb[0].mxu0
    %1637 = vdwg.mxu0
    %v1638 = vsel %vm336, %v1557, -inf
    %v1639 = vsel %vm336, %v1635, -inf
    %v1640 = vsel %vm183, %v1638, -inf
    %v1641 = vrot.slane %v1640, 4
    %v1642 = vmax.f32 %v1640, %v1641
    %v1643 = vrot.slane %v1642, 2
    %v1644 = vmax.f32 %v1642, %v1643
    %v1645 = vrot.slane %v1644, 1
    %v1646 = vmax.f32 %v1644, %v1645
    %v1647 = vsel %vm183, %v1639, -inf
    %v1648 = vrot.slane %v1647, 4
    %v1649 = vmax.f32 %v1647, %v1648
    %v1650 = vrot.slane %v1649, 2
    %v1651 = vmax.f32 %v1649, %v1650
    %v1652 = vrot.slane %v1651, 1
    %v1653 = vmax.f32 %v1651, %v1652
    %v1654 = vsub.f32 %v1638, %v1646
    %v1655 = vsub.f32 %v1639, %v1653
    %v1656 = vmul.f32 %v1654, 1.442695
    %v1657 = vpow.pop %v1656
    %v1658 = vmul.f32 %v1655, 1.442695
    %v1659 = vpow.pop %v1658
    %v1660 = vsel %vm183, %v1657, 0.0
    %v1661 = vrot.slane %v1660, 4
    %v1662 = vadd.f32 %v1660, %v1661
    %v1663 = vrot.slane %v1662, 2
    %v1664 = vadd.f32 %v1662, %v1663
    %v1665 = vrot.slane %v1664, 1
    %v1666 = vadd.f32 %v1664, %v1665
    %v1667 = vsel %vm183, %v1659, 0.0
    %v1668 = vrot.slane %v1667, 4
    %v1669 = vadd.f32 %v1667, %v1668
    %v1670 = vrot.slane %v1669, 2
    %v1671 = vadd.f32 %v1669, %v1670
    %v1672 = vrot.slane %v1671, 1
    %v1673 = vadd.f32 %v1671, %v1672
    %v1674 = vrcp.pop %v1666
    %v1675 = vrcp.pop %v1673
    %v1676 = vmul.f32 %v1657, %v1674
    %v1677 = vmul.f32 %v1659, %v1675
    %1678 = vrot.lane.b32.xlu0 %v172, 40
    %v1679 = vpop.permute.xlu0 %1678
    %v1682 = vsel %vm183, %v1676, 0
    %1684 = vmatprep.subr.mxu0 0.0
    %1685 = vmatpush1.msra.mxu0 %v1679
    %1686 = vmatprep.subr.mxu0 0.0
    %1687 = vmatpush1.msra.mxu0 0.0
    %1688 = vmatprep.subr.mxu0 0.0
    %1689 = vmatpush1.msra.mxu0 0.0
    %1690 = vmatprep.subr.mxu0 0.0
    %1691 = vmatpush1.msra.mxu0 0.0
    %1692 = vmatprep.subr.mxu0 0.0
    %1693 = vmatpush1.msra.mxu0 0.0
    %1694 = vmatprep.subr.mxu0 0.0
    %1695 = vmatpush1.msra.mxu0 0.0
    %1696 = vmatprep.subr.mxu0 0.0
    %1697 = vmatpush1.msra.mxu0 0.0
    %1698 = vmatprep.subr.mxu0 0.0
    %1699 = vmatpush1.msra.mxu0 0.0
    %1700 = vmatprep.subr.mxu0 0.0
    %1701 = vmatpush1.msra.mxu0 0.0
    %1702 = vmatprep.subr.mxu0 0.0
    %1703 = vmatpush1.msra.mxu0 0.0
    %1704 = vmatprep.subr.mxu0 0.0
    %1705 = vmatpush1.msra.mxu0 0.0
    %1706 = vmatprep.subr.mxu0 0.0
    %1707 = vmatpush1.msra.mxu0 0.0
    %1708 = vmatprep.subr.mxu0 0.0
    %1709 = vmatpush1.msra.mxu0 0.0
    %1710 = vmatprep.subr.mxu0 0.0
    %1711 = vmatpush1.msra.mxu0 0.0
    %1712 = vmatprep.subr.mxu0 0.0
    %1713 = vmatpush1.msra.mxu0 0.0
    %1714 = vmatprep.subr.mxu0 0.0
    %1715 = vmatpush1.msra.mxu0 0.0
    %1716 = vmatprep.subr.mxu0 0.0
    %1717 = vmatpush1.msra.mxu0 0.0
    %1718 = vmatprep.subr.mxu0 0.0
    %1719 = vmatpush1.msra.mxu0 0.0
    %1720 = vmatprep.subr.mxu0 0.0
    %1721 = vmatpush1.msra.mxu0 0.0
    %1722 = vmatprep.subr.mxu0 0.0
    %1723 = vmatpush1.msra.mxu0 0.0
    %1724 = vmatprep.subr.mxu0 0.0
    %1725 = vmatpush1.msra.mxu0 0.0
    %1726 = vmatprep.subr.mxu0 0.0
    %1727 = vmatpush1.msra.mxu0 0.0
    %1728 = vmatprep.subr.mxu0 0.0
    %1729 = vmatpush1.msra.mxu0 0.0
    %1730 = vmatprep.subr.mxu0 0.0
    %1731 = vmatpush1.msra.mxu0 0.0
    %1732 = vmatprep.subr.mxu0 0.0
    %1733 = vmatpush1.msra.mxu0 0.0
    %1734 = vmatprep.subr.mxu0 0.0
    %1735 = vmatpush1.msra.mxu0 0.0
    %1736 = vmatprep.subr.mxu0 0.0
    %1737 = vmatpush1.msra.mxu0 0.0
    %1738 = vmatprep.subr.mxu0 0.0
    %1739 = vmatpush1.msra.mxu0 0.0
    %1740 = vmatprep.subr.mxu0 0.0
    %1741 = vmatpush1.msra.mxu0 0.0
    %1742 = vmatprep.subr.mxu0 0.0
    %1743 = vmatpush1.msra.mxu0 0.0
    %1744 = vmatprep.subr.mxu0 0.0
    %1745 = vmatpush1.msra.mxu0 0.0
    %1746 = vmatprep.subr.mxu0 0.0
    %1747 = vmatpush1.msra.mxu0 0.0
    %1748 = vmatprep.mubr.f32.mxu0 0.0
    %1749 = vmatmul.mubr.f32.gmra.mrb[0].mxu0 %v1682
    %v1750 = vpop.f32.mrb[0].mxu0
    %v1751 = vadd.f32 0.0, %v1750
    %v1752 = vpop.f32.mrb[0].mxu0
    %1753 = vdwg.mxu0
    %1754 = vrot.lane.b32.xlu0 %v177, 40
    %v1755 = vpop.permute.xlu0 %1754
    %v1758 = vsel %vm183, %v1677, 0
    %1760 = vmatprep.subr.mxu0 0.0
    %1761 = vmatpush1.msra.mxu0 %v1755
    %1762 = vmatprep.subr.mxu0 0.0
    %1763 = vmatpush1.msra.mxu0 0.0
    %1764 = vmatprep.subr.mxu0 0.0
    %1765 = vmatpush1.msra.mxu0 0.0
    %1766 = vmatprep.subr.mxu0 0.0
    %1767 = vmatpush1.msra.mxu0 0.0
    %1768 = vmatprep.subr.mxu0 0.0
    %1769 = vmatpush1.msra.mxu0 0.0
    %1770 = vmatprep.subr.mxu0 0.0
    %1771 = vmatpush1.msra.mxu0 0.0
    %1772 = vmatprep.subr.mxu0 0.0
    %1773 = vmatpush1.msra.mxu0 0.0
    %1774 = vmatprep.subr.mxu0 0.0
    %1775 = vmatpush1.msra.mxu0 0.0
    %1776 = vmatprep.subr.mxu0 0.0
    %1777 = vmatpush1.msra.mxu0 0.0
    %1778 = vmatprep.subr.mxu0 0.0
    %1779 = vmatpush1.msra.mxu0 0.0
    %1780 = vmatprep.subr.mxu0 0.0
    %1781 = vmatpush1.msra.mxu0 0.0
    %1782 = vmatprep.subr.mxu0 0.0
    %1783 = vmatpush1.msra.mxu0 0.0
    %1784 = vmatprep.subr.mxu0 0.0
    %1785 = vmatpush1.msra.mxu0 0.0
    %1786 = vmatprep.subr.mxu0 0.0
    %1787 = vmatpush1.msra.mxu0 0.0
    %1788 = vmatprep.subr.mxu0 0.0
    %1789 = vmatpush1.msra.mxu0 0.0
    %1790 = vmatprep.subr.mxu0 0.0
    %1791 = vmatpush1.msra.mxu0 0.0
    %1792 = vmatprep.subr.mxu0 0.0
    %1793 = vmatpush1.msra.mxu0 0.0
    %1794 = vmatprep.subr.mxu0 0.0
    %1795 = vmatpush1.msra.mxu0 0.0
    %1796 = vmatprep.subr.mxu0 0.0
    %1797 = vmatpush1.msra.mxu0 0.0
    %1798 = vmatprep.subr.mxu0 0.0
    %1799 = vmatpush1.msra.mxu0 0.0
    %1800 = vmatprep.subr.mxu0 0.0
    %1801 = vmatpush1.msra.mxu0 0.0
    %1802 = vmatprep.subr.mxu0 0.0
    %1803 = vmatpush1.msra.mxu0 0.0
    %1804 = vmatprep.subr.mxu0 0.0
    %1805 = vmatpush1.msra.mxu0 0.0
    %1806 = vmatprep.subr.mxu0 0.0
    %1807 = vmatpush1.msra.mxu0 0.0
    %1808 = vmatprep.subr.mxu0 0.0
    %1809 = vmatpush1.msra.mxu0 0.0
    %1810 = vmatprep.subr.mxu0 0.0
    %1811 = vmatpush1.msra.mxu0 0.0
    %1812 = vmatprep.subr.mxu0 0.0
    %1813 = vmatpush1.msra.mxu0 0.0
    %1814 = vmatprep.subr.mxu0 0.0
    %1815 = vmatpush1.msra.mxu0 0.0
    %1816 = vmatprep.subr.mxu0 0.0
    %1817 = vmatpush1.msra.mxu0 0.0
    %1818 = vmatprep.subr.mxu0 0.0
    %1819 = vmatpush1.msra.mxu0 0.0
    %1820 = vmatprep.subr.mxu0 0.0
    %1821 = vmatpush1.msra.mxu0 0.0
    %1822 = vmatprep.subr.mxu0 0.0
    %1823 = vmatpush1.msra.mxu0 0.0
    %1824 = vmatprep.mubr.f32.mxu0 0.0
    %1825 = vmatmul.mubr.f32.gmra.mrb[0].mxu0 %v1758
    %v1826 = vpop.f32.mrb[0].mxu0
    %v1827 = vadd.f32 0.0, %v1826
    %v1828 = vpop.f32.mrb[0].mxu0
    %1829 = vdwg.mxu0
    %1831 = vrot.lane.b32.xlu0 %v40, 32
    %v1832 = vpop.permute.xlu0 %1831
    %v1835 = vsel %vm183, %v1751, 0
    %v1838 = vsel %vm183, %v1827, 0
    %1840 = vmatprep.subr.mxu0 0.0
    %1841 = vmatpush1.msra.mxu0 %v1832
    %1842 = vmatprep.subr.mxu0 0.0
    %1843 = vmatpush1.msra.mxu0 0.0
    %1844 = vmatprep.subr.mxu0 0.0
    %1845 = vmatpush1.msra.mxu0 0.0
    %1846 = vmatprep.subr.mxu0 0.0
    %1847 = vmatpush1.msra.mxu0 0.0
    %1848 = vmatprep.subr.mxu0 0.0
    %1849 = vmatpush1.msra.mxu0 0.0
    %1850 = vmatprep.subr.mxu0 0.0
    %1851 = vmatpush1.msra.mxu0 0.0
    %1852 = vmatprep.subr.mxu0 0.0
    %1853 = vmatpush1.msra.mxu0 0.0
    %1854 = vmatprep.subr.mxu0 0.0
    %1855 = vmatpush1.msra.mxu0 0.0
    %1856 = vmatprep.subr.mxu0 0.0
    %1857 = vmatpush1.msra.mxu0 0.0
    %1858 = vmatprep.subr.mxu0 0.0
    %1859 = vmatpush1.msra.mxu0 0.0
    %1860 = vmatprep.subr.mxu0 0.0
    %1861 = vmatpush1.msra.mxu0 0.0
    %1862 = vmatprep.subr.mxu0 0.0
    %1863 = vmatpush1.msra.mxu0 0.0
    %1864 = vmatprep.subr.mxu0 0.0
    %1865 = vmatpush1.msra.mxu0 0.0
    %1866 = vmatprep.subr.mxu0 0.0
    %1867 = vmatpush1.msra.mxu0 0.0
    %1868 = vmatprep.subr.mxu0 0.0
    %1869 = vmatpush1.msra.mxu0 0.0
    %1870 = vmatprep.subr.mxu0 0.0
    %1871 = vmatpush1.msra.mxu0 0.0
    %1872 = vmatprep.subr.mxu0 0.0
    %1873 = vmatpush1.msra.mxu0 0.0
    %1874 = vmatprep.subr.mxu0 0.0
    %1875 = vmatpush1.msra.mxu0 0.0
    %1876 = vmatprep.subr.mxu0 0.0
    %1877 = vmatpush1.msra.mxu0 0.0
    %1878 = vmatprep.subr.mxu0 0.0
    %1879 = vmatpush1.msra.mxu0 0.0
    %1880 = vmatprep.subr.mxu0 0.0
    %1881 = vmatpush1.msra.mxu0 0.0
    %1882 = vmatprep.subr.mxu0 0.0
    %1883 = vmatpush1.msra.mxu0 0.0
    %1884 = vmatprep.subr.mxu0 0.0
    %1885 = vmatpush1.msra.mxu0 0.0
    %1886 = vmatprep.subr.mxu0 0.0
    %1887 = vmatpush1.msra.mxu0 0.0
    %1888 = vmatprep.subr.mxu0 0.0
    %1889 = vmatpush1.msra.mxu0 0.0
    %1890 = vmatprep.subr.mxu0 0.0
    %1891 = vmatpush1.msra.mxu0 0.0
    %1892 = vmatprep.subr.mxu0 0.0
    %1893 = vmatpush1.msra.mxu0 0.0
    %1894 = vmatprep.subr.mxu0 0.0
    %1895 = vmatpush1.msra.mxu0 0.0
    %1896 = vmatprep.subr.mxu0 0.0
    %1897 = vmatpush1.msra.mxu0 0.0
    %1898 = vmatprep.subr.mxu0 0.0
    %1899 = vmatpush1.msra.mxu0 0.0
    %1900 = vmatprep.subr.mxu0 0.0
    %1901 = vmatpush1.msra.mxu0 0.0
    %1902 = vmatprep.subr.mxu0 0.0
    %1903 = vmatpush1.msra.mxu0 0.0
    %1904 = vmatprep.mubr.f32.mxu0 0.0
    %1905 = vmatmul.mubr.f32.gmra.mrb[0].mxu0 %v1835
    %v1906 = vpop.f32.mrb[0].mxu0
    %v1907 = vadd.f32 0.0, %v1906
    %v1908 = vpop.f32.mrb[0].mxu0
    %1909 = vmatprep.mubr.f32.mxu0 0.0
    %1910 = vmatmul.mubr.f32.gmra.mrb[0].mxu0 %v1838
    %v1911 = vpop.f32.mrb[0].mxu0
    %v1912 = vadd.f32 0.0, %v1911
    %v1913 = vpop.f32.mrb[0].mxu0
    %1914 = vdwg.mxu0
    %v1915 = vadd.f32 %v1480, %v1907
    %v1916 = vadd.f32 %v1481, %v1912
    %v1917 = vadd.f32 %v27, %v1915
    %v1918 = vadd.f32 %v28, %v1916
    %v1919 = vlaneseq
    %v1920 = vshrl.u32 %v1919, 7
    %v1921 = vsub.s32 4, %v1920
    %v1922 = vrot.slane %v58, %v1921
    %v1923 = vadd.f32 %v1917, %v1922
    %v1924 = vadd.f32 %v1918, %v1922
    %v1925 = vsel %vm59, %v1923, 0.0
    %1926 = vadd.xlane.f32.xlu0 %v1925
    %v1927 = vpop.xlane.xlu0 %1926
    %v1928 = vsel %vm59, %v1924, 0.0
    %1929 = vadd.xlane.f32.xlu0 %v1928
    %v1930 = vpop.xlane.xlu0 %1929
    %v1931 = vmul.f32 %v1927, %v66
    %v1932 = vmul.f32 %v1930, %v66
    %v1933 = vsub.f32 %v1923, %v1931
    %v1934 = vsub.f32 %v1924, %v1932
    %v1935 = vmul.f32 %v1933, %v1933
    %v1936 = vmul.f32 %v1934, %v1934
    %v1937 = vsel %vm59, %v1935, 0.0
    %1938 = vadd.xlane.f32.xlu0 %v1937
    %v1939 = vpop.xlane.xlu0 %1938
    %v1940 = vsel %vm59, %v1936, 0.0
    %1941 = vadd.xlane.f32.xlu0 %v1940
    %v1942 = vpop.xlane.xlu0 %1941
    %v1943 = vmul.f32 %v1939, %v66
    %v1944 = vmul.f32 %v1942, %v66
    %v1945 = vadd.f32 %v1943, 1e-05
    %v1946 = vadd.f32 %v1944, 1e-05
    %v1947 = vrsqrt.pop %v1945
    %v1948 = vrsqrt.pop %v1946
    %v1949 = vmul.f32 %v1933, %v1947
    %v1950 = vmul.f32 %v1934, %v1948
    %v1951 = vlaneseq
    %v1952 = vshrl.u32 %v1951, 7
    %v1953 = vsub.s32 2, %v1952
    %v1954 = vrot.slane %v58, %v1953
    %v1955 = vmul.f32 %v1949, %v1954
    %v1956 = vmul.f32 %v1950, %v1954
    %v1957 = vlaneseq
    %v1958 = vshrl.u32 %v1957, 7
    %v1959 = vsub.s32 3, %v1958
    %v1960 = vrot.slane %v58, %v1959
    %v1961 = vadd.f32 %v1955, %v1960
    %v1962 = vadd.f32 %v1956, %v1960
    %v1963 = vlaneseq
    %v1964 = vshrl.u32 %v1963, 7
    %v1965 = vsub.s32 6, %v1964
    %v1966 = vrot.slane %v58, %v1965
    %v1968 = vsel %vm59, %v1961, 0
    %v1971 = vsel %vm59, %v1962, 0
    %1973 = vmatprep.subr.mxu0 0.0
    %1974 = vmatpush1.msra.mxu0 %v35
    %1975 = vmatprep.subr.mxu0 0.0
    %1976 = vmatpush1.msra.mxu0 %v37
    %1977 = vmatprep.subr.mxu0 0.0
    %1978 = vmatpush1.msra.mxu0 %v39
    %1979 = vmatprep.subr.mxu0 0.0
    %1980 = vmatpush1.msra.mxu0 %v41
    %1981 = vmatprep.subr.mxu0 0.0
    %1982 = vmatpush1.msra.mxu0 0.0
    %1983 = vmatprep.subr.mxu0 0.0
    %1984 = vmatpush1.msra.mxu0 0.0
    %1985 = vmatprep.subr.mxu0 0.0
    %1986 = vmatpush1.msra.mxu0 0.0
    %1987 = vmatprep.subr.mxu0 0.0
    %1988 = vmatpush1.msra.mxu0 0.0
    %1989 = vmatprep.subr.mxu0 0.0
    %1990 = vmatpush1.msra.mxu0 0.0
    %1991 = vmatprep.subr.mxu0 0.0
    %1992 = vmatpush1.msra.mxu0 0.0
    %1993 = vmatprep.subr.mxu0 0.0
    %1994 = vmatpush1.msra.mxu0 0.0
    %1995 = vmatprep.subr.mxu0 0.0
    %1996 = vmatpush1.msra.mxu0 0.0
    %1997 = vmatprep.subr.mxu0 0.0
    %1998 = vmatpush1.msra.mxu0 0.0
    %1999 = vmatprep.subr.mxu0 0.0
    %2000 = vmatpush1.msra.mxu0 0.0
    %2001 = vmatprep.subr.mxu0 0.0
    %2002 = vmatpush1.msra.mxu0 0.0
    %2003 = vmatprep.subr.mxu0 0.0
    %2004 = vmatpush1.msra.mxu0 0.0
    %2005 = vmatprep.subr.mxu0 0.0
    %2006 = vmatpush1.msra.mxu0 0.0
    %2007 = vmatprep.subr.mxu0 0.0
    %2008 = vmatpush1.msra.mxu0 0.0
    %2009 = vmatprep.subr.mxu0 0.0
    %2010 = vmatpush1.msra.mxu0 0.0
    %2011 = vmatprep.subr.mxu0 0.0
    %2012 = vmatpush1.msra.mxu0 0.0
    %2013 = vmatprep.subr.mxu0 0.0
    %2014 = vmatpush1.msra.mxu0 0.0
    %2015 = vmatprep.subr.mxu0 0.0
    %2016 = vmatpush1.msra.mxu0 0.0
    %2017 = vmatprep.subr.mxu0 0.0
    %2018 = vmatpush1.msra.mxu0 0.0
    %2019 = vmatprep.subr.mxu0 0.0
    %2020 = vmatpush1.msra.mxu0 0.0
    %2021 = vmatprep.subr.mxu0 0.0
    %2022 = vmatpush1.msra.mxu0 0.0
    %2023 = vmatprep.subr.mxu0 0.0
    %2024 = vmatpush1.msra.mxu0 0.0
    %2025 = vmatprep.subr.mxu0 0.0
    %2026 = vmatpush1.msra.mxu0 0.0
    %2027 = vmatprep.subr.mxu0 0.0
    %2028 = vmatpush1.msra.mxu0 0.0
    %2029 = vmatprep.subr.mxu0 0.0
    %2030 = vmatpush1.msra.mxu0 0.0
    %2031 = vmatprep.subr.mxu0 0.0
    %2032 = vmatpush1.msra.mxu0 0.0
    %2033 = vmatprep.subr.mxu0 0.0
    %2034 = vmatpush1.msra.mxu0 0.0
    %2035 = vmatprep.subr.mxu0 0.0
    %2036 = vmatpush1.msra.mxu0 0.0
    %2037 = vmatprep.mubr.f32.mxu0 0.0
    %2038 = vmatmul.mubr.f32.gmra.mrb[0].mxu0 %v1968
    %v2039 = vpop.f32.mrb[0].mxu0
    %v2040 = vadd.f32 %v1966, %v2039
    %v2041 = vpop.f32.mrb[0].mxu0
    %2042 = vmatprep.mubr.f32.mxu0 0.0
    %2043 = vmatmul.mubr.f32.gmra.mrb[0].mxu0 %v1971
    %v2044 = vpop.f32.mrb[0].mxu0
    %v2045 = vadd.f32 %v1966, %v2044
    %v2046 = vpop.f32.mrb[0].mxu0
    %2047 = vdwg.mxu0
    %v2048 = vmax.f32 %v2040, 0.0
    %v2049 = vmax.f32 %v2045, 0.0
    %2050 = vmatprep.subr.mxu0 0.0
    %2051 = vmatpush1.msra.mxu0 %v42
    %2052 = vmatprep.subr.mxu0 0.0
    %2053 = vmatpush1.msra.mxu0 %v43
    %2054 = vmatprep.subr.mxu0 0.0
    %2055 = vmatpush1.msra.mxu0 %v44
    %2056 = vmatprep.subr.mxu0 0.0
    %2057 = vmatpush1.msra.mxu0 %v45
    %2058 = vmatprep.subr.mxu0 0.0
    %2059 = vmatpush1.msra.mxu0 %v46
    %2060 = vmatprep.subr.mxu0 0.0
    %2061 = vmatpush1.msra.mxu0 %v47
    %2062 = vmatprep.subr.mxu0 0.0
    %2063 = vmatpush1.msra.mxu0 %v48
    %2064 = vmatprep.subr.mxu0 0.0
    %2065 = vmatpush1.msra.mxu0 %v49
    %2066 = vmatprep.subr.mxu0 0.0
    %2067 = vmatpush1.msra.mxu0 %v50
    %2068 = vmatprep.subr.mxu0 0.0
    %2069 = vmatpush1.msra.mxu0 %v51
    %2070 = vmatprep.subr.mxu0 0.0
    %2071 = vmatpush1.msra.mxu0 %v52
    %2072 = vmatprep.subr.mxu0 0.0
    %2073 = vmatpush1.msra.mxu0 %v53
    %2074 = vmatprep.subr.mxu0 0.0
    %2075 = vmatpush1.msra.mxu0 %v54
    %2076 = vmatprep.subr.mxu0 0.0
    %2077 = vmatpush1.msra.mxu0 %v55
    %2078 = vmatprep.subr.mxu0 0.0
    %2079 = vmatpush1.msra.mxu0 %v56
    %2080 = vmatprep.subr.mxu0 0.0
    %2081 = vmatpush1.msra.mxu0 %v57
    %2082 = vmatprep.subr.mxu0 0.0
    %2083 = vmatpush1.msra.mxu0 0.0
    %2084 = vmatprep.subr.mxu0 0.0
    %2085 = vmatpush1.msra.mxu0 0.0
    %2086 = vmatprep.subr.mxu0 0.0
    %2087 = vmatpush1.msra.mxu0 0.0
    %2088 = vmatprep.subr.mxu0 0.0
    %2089 = vmatpush1.msra.mxu0 0.0
    %2090 = vmatprep.subr.mxu0 0.0
    %2091 = vmatpush1.msra.mxu0 0.0
    %2092 = vmatprep.subr.mxu0 0.0
    %2093 = vmatpush1.msra.mxu0 0.0
    %2094 = vmatprep.subr.mxu0 0.0
    %2095 = vmatpush1.msra.mxu0 0.0
    %2096 = vmatprep.subr.mxu0 0.0
    %2097 = vmatpush1.msra.mxu0 0.0
    %2098 = vmatprep.subr.mxu0 0.0
    %2099 = vmatpush1.msra.mxu0 0.0
    %2100 = vmatprep.subr.mxu0 0.0
    %2101 = vmatpush1.msra.mxu0 0.0
    %2102 = vmatprep.subr.mxu0 0.0
    %2103 = vmatpush1.msra.mxu0 0.0
    %2104 = vmatprep.subr.mxu0 0.0
    %2105 = vmatpush1.msra.mxu0 0.0
    %2106 = vmatprep.subr.mxu0 0.0
    %2107 = vmatpush1.msra.mxu0 0.0
    %2108 = vmatprep.subr.mxu0 0.0
    %2109 = vmatpush1.msra.mxu0 0.0
    %2110 = vmatprep.subr.mxu0 0.0
    %2111 = vmatpush1.msra.mxu0 0.0
    %2112 = vmatprep.subr.mxu0 0.0
    %2113 = vmatpush1.msra.mxu0 0.0
    %2114 = vmatprep.mubr.f32.mxu0 0.0
    %2115 = vmatmul.mubr.f32.gmra.mrb[0].mxu0 %v2048
    %v2116 = vpop.f32.mrb[0].mxu0
    %v2117 = vadd.f32 0.0, %v2116
    %v2118 = vpop.f32.mrb[0].mxu0
    %2119 = vmatprep.mubr.f32.mxu0 0.0
    %2120 = vmatmul.mubr.f32.gmra.mrb[0].mxu0 %v2049
    %v2121 = vpop.f32.mrb[0].mxu0
    %v2122 = vadd.f32 0.0, %v2121
    %v2123 = vpop.f32.mrb[0].mxu0
    %2124 = vdwg.mxu0
    %v2125 = vadd.f32 %v1923, %v2117
    %v2126 = vadd.f32 %v1924, %v2122
    %v2127 = vlaneseq
    %v2128 = vshrl.u32 %v2127, 7
    %v2129 = vsub.s32 5, %v2128
    %v2130 = vrot.slane %v58, %v2129
    %v2131 = vadd.f32 %v2125, %v2130
    %v2132 = vadd.f32 %v2126, %v2130
    %s2133 = scalar_lea.vmem %s1, 64
    %v2134 = vld [vmem:[%s2133] sm:$0xff]
    %v2135 = vld [vmem:[%s2133 + $0x8] sm:$0xff]
    %v2136 = vld [vmem:[%s2133 + $0x10] sm:$0xff]
    %v2137 = vld [vmem:[%s2133 + $0x18] sm:$0xff]
    %v2138 = vld [vmem:[%s2133 + $0x20] sm:$0xff]
    %v2139 = vld [vmem:[%s2133 + $0x28] sm:$0xff]
    %v2140 = vld [vmem:[%s2133 + $0x30] sm:$0xff]
    %v2141 = vld [vmem:[%s2133 + $0x38] sm:$0xff]
    %s2142 = scalar_lea.vmem %s2, 128
    %v2143 = vld [vmem:[%s2142] sm:$0xff]
    %v2144 = vld [vmem:[%s2142 + $0x8] sm:$0xff]
    %v2145 = vld [vmem:[%s2142 + $0x10] sm:$0xff]
    %v2146 = vld [vmem:[%s2142 + $0x18] sm:$0xff]
    %v2147 = vld [vmem:[%s2142 + $0x20] sm:$0xff]
    %v2148 = vld [vmem:[%s2142 + $0x28] sm:$0xff]
    %v2149 = vld [vmem:[%s2142 + $0x30] sm:$0xff]
    %v2150 = vld [vmem:[%s2142 + $0x38] sm:$0xff]
    %v2151 = vld [vmem:[%s2142 + $0x40] sm:$0xff]
    %v2152 = vld [vmem:[%s2142 + $0x48] sm:$0xff]
    %v2153 = vld [vmem:[%s2142 + $0x50] sm:$0xff]
    %v2154 = vld [vmem:[%s2142 + $0x58] sm:$0xff]
    %v2155 = vld [vmem:[%s2142 + $0x60] sm:$0xff]
    %v2156 = vld [vmem:[%s2142 + $0x68] sm:$0xff]
    %v2157 = vld [vmem:[%s2142 + $0x70] sm:$0xff]
    %v2158 = vld [vmem:[%s2142 + $0x78] sm:$0xff]
    %s2159 = scalar_lea.vmem %s3, 8
    %v2160 = vld [vmem:[%s2159] sm:$0xff]
    %v2161 = vsel %vm59, %v2131, 0.0
    %2162 = vadd.xlane.f32.xlu0 %v2161
    %v2163 = vpop.xlane.xlu0 %2162
    %v2164 = vsel %vm59, %v2132, 0.0
    %2165 = vadd.xlane.f32.xlu0 %v2164
    %v2166 = vpop.xlane.xlu0 %2165
    %v2167 = vmul.f32 %v2163, %v66
    %v2168 = vmul.f32 %v2166, %v66
    %v2169 = vsub.f32 %v2131, %v2167
    %v2170 = vsub.f32 %v2132, %v2168
    %v2171 = vmul.f32 %v2169, %v2169
    %v2172 = vmul.f32 %v2170, %v2170
    %v2173 = vsel %vm59, %v2171, 0.0
    %2174 = vadd.xlane.f32.xlu0 %v2173
    %v2175 = vpop.xlane.xlu0 %2174
    %v2176 = vsel %vm59, %v2172, 0.0
    %2177 = vadd.xlane.f32.xlu0 %v2176
    %v2178 = vpop.xlane.xlu0 %2177
    %v2179 = vmul.f32 %v2175, %v66
    %v2180 = vmul.f32 %v2178, %v66
    %v2181 = vadd.f32 %v2179, 1e-05
    %v2182 = vadd.f32 %v2180, 1e-05
    %v2183 = vrsqrt.pop %v2181
    %v2184 = vrsqrt.pop %v2182
    %v2185 = vmul.f32 %v2169, %v2183
    %v2186 = vmul.f32 %v2170, %v2184
    %v2187 = vlaneseq
    %v2188 = vshrl.u32 %v2187, 7
    %v2189 = vsub.s32 0, %v2188
    %v2190 = vrot.slane %v2160, %v2189
    %v2191 = vmul.f32 %v2185, %v2190
    %v2192 = vmul.f32 %v2186, %v2190
    %v2193 = vlaneseq
    %v2194 = vshrl.u32 %v2193, 7
    %v2195 = vsub.s32 1, %v2194
    %v2196 = vrot.slane %v2160, %v2195
    %v2197 = vadd.f32 %v2191, %v2196
    %v2198 = vadd.f32 %v2192, %v2196
    %v2200 = vsel %vm59, %v2197, 0
    %v2203 = vsel %vm59, %v2198, 0
    %2205 = vmatprep.subr.mxu0 0.0
    %2206 = vmatpush1.msra.mxu0 %v2134
    %2207 = vmatprep.subr.mxu0 0.0
    %2208 = vmatpush1.msra.mxu0 %v2136
    %2209 = vmatprep.subr.mxu0 0.0
    %2210 = vmatpush1.msra.mxu0 %v2138
    %2211 = vmatprep.subr.mxu0 0.0
    %2212 = vmatpush1.msra.mxu0 %v2140
    %2213 = vmatprep.subr.mxu0 0.0
    %2214 = vmatpush1.msra.mxu0 0.0
    %2215 = vmatprep.subr.mxu0 0.0
    %2216 = vmatpush1.msra.mxu0 0.0
    %2217 = vmatprep.subr.mxu0 0.0
    %2218 = vmatpush1.msra.mxu0 0.0
    %2219 = vmatprep.subr.mxu0 0.0
    %2220 = vmatpush1.msra.mxu0 0.0
    %2221 = vmatprep.subr.mxu0 0.0
    %2222 = vmatpush1.msra.mxu0 0.0
    %2223 = vmatprep.subr.mxu0 0.0
    %2224 = vmatpush1.msra.mxu0 0.0
    %2225 = vmatprep.subr.mxu0 0.0
    %2226 = vmatpush1.msra.mxu0 0.0
    %2227 = vmatprep.subr.mxu0 0.0
    %2228 = vmatpush1.msra.mxu0 0.0
    %2229 = vmatprep.subr.mxu0 0.0
    %2230 = vmatpush1.msra.mxu0 0.0
    %2231 = vmatprep.subr.mxu0 0.0
    %2232 = vmatpush1.msra.mxu0 0.0
    %2233 = vmatprep.subr.mxu0 0.0
    %2234 = vmatpush1.msra.mxu0 0.0
    %2235 = vmatprep.subr.mxu0 0.0
    %2236 = vmatpush1.msra.mxu0 0.0
    %2237 = vmatprep.subr.mxu0 0.0
    %2238 = vmatpush1.msra.mxu0 0.0
    %2239 = vmatprep.subr.mxu0 0.0
    %2240 = vmatpush1.msra.mxu0 0.0
    %2241 = vmatprep.subr.mxu0 0.0
    %2242 = vmatpush1.msra.mxu0 0.0
    %2243 = vmatprep.subr.mxu0 0.0
    %2244 = vmatpush1.msra.mxu0 0.0
    %2245 = vmatprep.subr.mxu0 0.0
    %2246 = vmatpush1.msra.mxu0 0.0
    %2247 = vmatprep.subr.mxu0 0.0
    %2248 = vmatpush1.msra.mxu0 0.0
    %2249 = vmatprep.subr.mxu0 0.0
    %2250 = vmatpush1.msra.mxu0 0.0
    %2251 = vmatprep.subr.mxu0 0.0
    %2252 = vmatpush1.msra.mxu0 0.0
    %2253 = vmatprep.subr.mxu0 0.0
    %2254 = vmatpush1.msra.mxu0 0.0
    %2255 = vmatprep.subr.mxu0 0.0
    %2256 = vmatpush1.msra.mxu0 0.0
    %2257 = vmatprep.subr.mxu0 0.0
    %2258 = vmatpush1.msra.mxu0 0.0
    %2259 = vmatprep.subr.mxu0 0.0
    %2260 = vmatpush1.msra.mxu0 0.0
    %2261 = vmatprep.subr.mxu0 0.0
    %2262 = vmatpush1.msra.mxu0 0.0
    %2263 = vmatprep.subr.mxu0 0.0
    %2264 = vmatpush1.msra.mxu0 0.0
    %2265 = vmatprep.subr.mxu0 0.0
    %2266 = vmatpush1.msra.mxu0 0.0
    %2267 = vmatprep.subr.mxu0 0.0
    %2268 = vmatpush1.msra.mxu0 0.0
    %2269 = vmatprep.mubr.f32.mxu0 0.0
    %2270 = vmatmul.mubr.f32.gmra.mrb[0].mxu0 %v2200
    %v2271 = vpop.f32.mrb[0].mxu0
    %v2272 = vadd.f32 0.0, %v2271
    %v2273 = vpop.f32.mrb[0].mxu0
    %2274 = vmatprep.mubr.f32.mxu0 0.0
    %2275 = vmatmul.mubr.f32.gmra.mrb[0].mxu0 %v2203
    %v2276 = vpop.f32.mrb[0].mxu0
    %v2277 = vadd.f32 0.0, %v2276
    %v2278 = vpop.f32.mrb[0].mxu0
    %2279 = vdwg.mxu0
    %2281 = vrot.lane.b32.xlu0 %v2272, 96
    %v2282 = vpop.permute.xlu0 %2281
    %v2283 = vsel %vm183, %v2282, 0
    %v2285 = vsel %vm183, %v2272, 0
    %2287 = vmatprep.subr.mxu0 0.0
    %2288 = vmatpush1.xpose.msra.mxu0 %v2285
    %2289 = vmatprep.subr.mxu0 0.0
    %2290 = vmatpush1.xpose.msra.mxu0 0.0
    %2291 = vmatprep.subr.mxu0 0.0
    %2292 = vmatpush1.xpose.msra.mxu0 0.0
    %2293 = vmatprep.subr.mxu0 0.0
    %2294 = vmatpush1.xpose.msra.mxu0 0.0
    %2295 = vmatprep.subr.mxu0 0.0
    %2296 = vmatpush1.xpose.msra.mxu0 0.0
    %2297 = vmatprep.subr.mxu0 0.0
    %2298 = vmatpush1.xpose.msra.mxu0 0.0
    %2299 = vmatprep.subr.mxu0 0.0
    %2300 = vmatpush1.xpose.msra.mxu0 0.0
    %2301 = vmatprep.subr.mxu0 0.0
    %2302 = vmatpush1.xpose.msra.mxu0 0.0
    %2303 = vmatprep.subr.mxu0 0.0
    %2304 = vmatpush1.xpose.msra.mxu0 0.0
    %2305 = vmatprep.subr.mxu0 0.0
    %2306 = vmatpush1.xpose.msra.mxu0 0.0
    %2307 = vmatprep.subr.mxu0 0.0
    %2308 = vmatpush1.xpose.msra.mxu0 0.0
    %2309 = vmatprep.subr.mxu0 0.0
    %2310 = vmatpush1.xpose.msra.mxu0 0.0
    %2311 = vmatprep.subr.mxu0 0.0
    %2312 = vmatpush1.xpose.msra.mxu0 0.0
    %2313 = vmatprep.subr.mxu0 0.0
    %2314 = vmatpush1.xpose.msra.mxu0 0.0
    %2315 = vmatprep.subr.mxu0 0.0
    %2316 = vmatpush1.xpose.msra.mxu0 0.0
    %2317 = vmatprep.subr.mxu0 0.0
    %2318 = vmatpush1.xpose.msra.mxu0 0.0
    %2319 = vmatprep.subr.mxu0 0.0
    %2320 = vmatpush1.xpose.msra.mxu0 0.0
    %2321 = vmatprep.subr.mxu0 0.0
    %2322 = vmatpush1.xpose.msra.mxu0 0.0
    %2323 = vmatprep.subr.mxu0 0.0
    %2324 = vmatpush1.xpose.msra.mxu0 0.0
    %2325 = vmatprep.subr.mxu0 0.0
    %2326 = vmatpush1.xpose.msra.mxu0 0.0
    %2327 = vmatprep.subr.mxu0 0.0
    %2328 = vmatpush1.xpose.msra.mxu0 0.0
    %2329 = vmatprep.subr.mxu0 0.0
    %2330 = vmatpush1.xpose.msra.mxu0 0.0
    %2331 = vmatprep.subr.mxu0 0.0
    %2332 = vmatpush1.xpose.msra.mxu0 0.0
    %2333 = vmatprep.subr.mxu0 0.0
    %2334 = vmatpush1.xpose.msra.mxu0 0.0
    %2335 = vmatprep.subr.mxu0 0.0
    %2336 = vmatpush1.xpose.msra.mxu0 0.0
    %2337 = vmatprep.subr.mxu0 0.0
    %2338 = vmatpush1.xpose.msra.mxu0 0.0
    %2339 = vmatprep.subr.mxu0 0.0
    %2340 = vmatpush1.xpose.msra.mxu0 0.0
    %2341 = vmatprep.subr.mxu0 0.0
    %2342 = vmatpush1.xpose.msra.mxu0 0.0
    %2343 = vmatprep.subr.mxu0 0.0
    %2344 = vmatpush1.xpose.msra.mxu0 0.0
    %2345 = vmatprep.subr.mxu0 0.0
    %2346 = vmatpush1.xpose.msra.mxu0 0.0
    %2347 = vmatprep.subr.mxu0 0.0
    %2348 = vmatpush1.xpose.msra.mxu0 0.0
    %2349 = vmatprep.subr.mxu0 0.0
    %2350 = vmatpush1.xpose.msra.mxu0 0.0
    %2351 = vmatprep.mubr.f32.mxu0 0.0
    %2352 = vmatmul.mubr.f32.gmra.mrb[0].mxu0 %v2283
    %v2353 = vpop.f32.mrb[0].mxu0
    %v2354 = vadd.f32 0.0, %v2353
    %v2355 = vpop.f32.mrb[0].mxu0
    %2356 = vdwg.mxu0
    %2358 = vrot.lane.b32.xlu0 %v2277, 96
    %v2359 = vpop.permute.xlu0 %2358
    %v2360 = vsel %vm183, %v2359, 0
    %v2362 = vsel %vm183, %v2277, 0
    %2364 = vmatprep.subr.mxu0 0.0
    %2365 = vmatpush1.xpose.msra.mxu0 %v2362
    %2366 = vmatprep.subr.mxu0 0.0
    %2367 = vmatpush1.xpose.msra.mxu0 0.0
    %2368 = vmatprep.subr.mxu0 0.0
    %2369 = vmatpush1.xpose.msra.mxu0 0.0
    %2370 = vmatprep.subr.mxu0 0.0
    %2371 = vmatpush1.xpose.msra.mxu0 0.0
    %2372 = vmatprep.subr.mxu0 0.0
    %2373 = vmatpush1.xpose.msra.mxu0 0.0
    %2374 = vmatprep.subr.mxu0 0.0
    %2375 = vmatpush1.xpose.msra.mxu0 0.0
    %2376 = vmatprep.subr.mxu0 0.0
    %2377 = vmatpush1.xpose.msra.mxu0 0.0
    %2378 = vmatprep.subr.mxu0 0.0
    %2379 = vmatpush1.xpose.msra.mxu0 0.0
    %2380 = vmatprep.subr.mxu0 0.0
    %2381 = vmatpush1.xpose.msra.mxu0 0.0
    %2382 = vmatprep.subr.mxu0 0.0
    %2383 = vmatpush1.xpose.msra.mxu0 0.0
    %2384 = vmatprep.subr.mxu0 0.0
    %2385 = vmatpush1.xpose.msra.mxu0 0.0
    %2386 = vmatprep.subr.mxu0 0.0
    %2387 = vmatpush1.xpose.msra.mxu0 0.0
    %2388 = vmatprep.subr.mxu0 0.0
    %2389 = vmatpush1.xpose.msra.mxu0 0.0
    %2390 = vmatprep.subr.mxu0 0.0
    %2391 = vmatpush1.xpose.msra.mxu0 0.0
    %2392 = vmatprep.subr.mxu0 0.0
    %2393 = vmatpush1.xpose.msra.mxu0 0.0
    %2394 = vmatprep.subr.mxu0 0.0
    %2395 = vmatpush1.xpose.msra.mxu0 0.0
    %2396 = vmatprep.subr.mxu0 0.0
    %2397 = vmatpush1.xpose.msra.mxu0 0.0
    %2398 = vmatprep.subr.mxu0 0.0
    %2399 = vmatpush1.xpose.msra.mxu0 0.0
    %2400 = vmatprep.subr.mxu0 0.0
    %2401 = vmatpush1.xpose.msra.mxu0 0.0
    %2402 = vmatprep.subr.mxu0 0.0
    %2403 = vmatpush1.xpose.msra.mxu0 0.0
    %2404 = vmatprep.subr.mxu0 0.0
    %2405 = vmatpush1.xpose.msra.mxu0 0.0
    %2406 = vmatprep.subr.mxu0 0.0
    %2407 = vmatpush1.xpose.msra.mxu0 0.0
    %2408 = vmatprep.subr.mxu0 0.0
    %2409 = vmatpush1.xpose.msra.mxu0 0.0
    %2410 = vmatprep.subr.mxu0 0.0
    %2411 = vmatpush1.xpose.msra.mxu0 0.0
    %2412 = vmatprep.subr.mxu0 0.0
    %2413 = vmatpush1.xpose.msra.mxu0 0.0
    %2414 = vmatprep.subr.mxu0 0.0
    %2415 = vmatpush1.xpose.msra.mxu0 0.0
    %2416 = vmatprep.subr.mxu0 0.0
    %2417 = vmatpush1.xpose.msra.mxu0 0.0
    %2418 = vmatprep.subr.mxu0 0.0
    %2419 = vmatpush1.xpose.msra.mxu0 0.0
    %2420 = vmatprep.subr.mxu0 0.0
    %2421 = vmatpush1.xpose.msra.mxu0 0.0
    %2422 = vmatprep.subr.mxu0 0.0
    %2423 = vmatpush1.xpose.msra.mxu0 0.0
    %2424 = vmatprep.subr.mxu0 0.0
    %2425 = vmatpush1.xpose.msra.mxu0 0.0
    %2426 = vmatprep.subr.mxu0 0.0
    %2427 = vmatpush1.xpose.msra.mxu0 0.0
    %2428 = vmatprep.mubr.f32.mxu0 0.0
    %2429 = vmatmul.mubr.f32.gmra.mrb[0].mxu0 %v2360
    %v2430 = vpop.f32.mrb[0].mxu0
    %v2431 = vadd.f32 0.0, %v2430
    %v2432 = vpop.f32.mrb[0].mxu0
    %2433 = vdwg.mxu0
    %v2434 = vsel %vm336, %v2354, -inf
    %v2435 = vsel %vm336, %v2431, -inf
    %v2436 = vsel %vm183, %v2434, -inf
    %v2437 = vrot.slane %v2436, 4
    %v2438 = vmax.f32 %v2436, %v2437
    %v2439 = vrot.slane %v2438, 2
    %v2440 = vmax.f32 %v2438, %v2439
    %v2441 = vrot.slane %v2440, 1
    %v2442 = vmax.f32 %v2440, %v2441
    %v2443 = vsel %vm183, %v2435, -inf
    %v2444 = vrot.slane %v2443, 4
    %v2445 = vmax.f32 %v2443, %v2444
    %v2446 = vrot.slane %v2445, 2
    %v2447 = vmax.f32 %v2445, %v2446
    %v2448 = vrot.slane %v2447, 1
    %v2449 = vmax.f32 %v2447, %v2448
    %v2450 = vsub.f32 %v2434, %v2442
    %v2451 = vsub.f32 %v2435, %v2449
    %v2452 = vmul.f32 %v2450, 1.442695
    %v2453 = vpow.pop %v2452
    %v2454 = vmul.f32 %v2451, 1.442695
    %v2455 = vpow.pop %v2454
    %v2456 = vsel %vm183, %v2453, 0.0
    %v2457 = vrot.slane %v2456, 4
    %v2458 = vadd.f32 %v2456, %v2457
    %v2459 = vrot.slane %v2458, 2
    %v2460 = vadd.f32 %v2458, %v2459
    %v2461 = vrot.slane %v2460, 1
    %v2462 = vadd.f32 %v2460, %v2461
    %v2463 = vsel %vm183, %v2455, 0.0
    %v2464 = vrot.slane %v2463, 4
    %v2465 = vadd.f32 %v2463, %v2464
    %v2466 = vrot.slane %v2465, 2
    %v2467 = vadd.f32 %v2465, %v2466
    %v2468 = vrot.slane %v2467, 1
    %v2469 = vadd.f32 %v2467, %v2468
    %v2470 = vrcp.pop %v2462
    %v2471 = vrcp.pop %v2469
    %v2472 = vmul.f32 %v2453, %v2470
    %v2473 = vmul.f32 %v2455, %v2471
    %2474 = vrot.lane.b32.xlu0 %v2272, 64
    %v2475 = vpop.permute.xlu0 %2474
    %v2478 = vsel %vm183, %v2472, 0
    %2480 = vmatprep.subr.mxu0 0.0
    %2481 = vmatpush1.msra.mxu0 %v2475
    %2482 = vmatprep.subr.mxu0 0.0
    %2483 = vmatpush1.msra.mxu0 0.0
    %2484 = vmatprep.subr.mxu0 0.0
    %2485 = vmatpush1.msra.mxu0 0.0
    %2486 = vmatprep.subr.mxu0 0.0
    %2487 = vmatpush1.msra.mxu0 0.0
    %2488 = vmatprep.subr.mxu0 0.0
    %2489 = vmatpush1.msra.mxu0 0.0
    %2490 = vmatprep.subr.mxu0 0.0
    %2491 = vmatpush1.msra.mxu0 0.0
    %2492 = vmatprep.subr.mxu0 0.0
    %2493 = vmatpush1.msra.mxu0 0.0
    %2494 = vmatprep.subr.mxu0 0.0
    %2495 = vmatpush1.msra.mxu0 0.0
    %2496 = vmatprep.subr.mxu0 0.0
    %2497 = vmatpush1.msra.mxu0 0.0
    %2498 = vmatprep.subr.mxu0 0.0
    %2499 = vmatpush1.msra.mxu0 0.0
    %2500 = vmatprep.subr.mxu0 0.0
    %2501 = vmatpush1.msra.mxu0 0.0
    %2502 = vmatprep.subr.mxu0 0.0
    %2503 = vmatpush1.msra.mxu0 0.0
    %2504 = vmatprep.subr.mxu0 0.0
    %2505 = vmatpush1.msra.mxu0 0.0
    %2506 = vmatprep.subr.mxu0 0.0
    %2507 = vmatpush1.msra.mxu0 0.0
    %2508 = vmatprep.subr.mxu0 0.0
    %2509 = vmatpush1.msra.mxu0 0.0
    %2510 = vmatprep.subr.mxu0 0.0
    %2511 = vmatpush1.msra.mxu0 0.0
    %2512 = vmatprep.subr.mxu0 0.0
    %2513 = vmatpush1.msra.mxu0 0.0
    %2514 = vmatprep.subr.mxu0 0.0
    %2515 = vmatpush1.msra.mxu0 0.0
    %2516 = vmatprep.subr.mxu0 0.0
    %2517 = vmatpush1.msra.mxu0 0.0
    %2518 = vmatprep.subr.mxu0 0.0
    %2519 = vmatpush1.msra.mxu0 0.0
    %2520 = vmatprep.subr.mxu0 0.0
    %2521 = vmatpush1.msra.mxu0 0.0
    %2522 = vmatprep.subr.mxu0 0.0
    %2523 = vmatpush1.msra.mxu0 0.0
    %2524 = vmatprep.subr.mxu0 0.0
    %2525 = vmatpush1.msra.mxu0 0.0
    %2526 = vmatprep.subr.mxu0 0.0
    %2527 = vmatpush1.msra.mxu0 0.0
    %2528 = vmatprep.subr.mxu0 0.0
    %2529 = vmatpush1.msra.mxu0 0.0
    %2530 = vmatprep.subr.mxu0 0.0
    %2531 = vmatpush1.msra.mxu0 0.0
    %2532 = vmatprep.subr.mxu0 0.0
    %2533 = vmatpush1.msra.mxu0 0.0
    %2534 = vmatprep.subr.mxu0 0.0
    %2535 = vmatpush1.msra.mxu0 0.0
    %2536 = vmatprep.subr.mxu0 0.0
    %2537 = vmatpush1.msra.mxu0 0.0
    %2538 = vmatprep.subr.mxu0 0.0
    %2539 = vmatpush1.msra.mxu0 0.0
    %2540 = vmatprep.subr.mxu0 0.0
    %2541 = vmatpush1.msra.mxu0 0.0
    %2542 = vmatprep.subr.mxu0 0.0
    %2543 = vmatpush1.msra.mxu0 0.0
    %2544 = vmatprep.mubr.f32.mxu0 0.0
    %2545 = vmatmul.mubr.f32.gmra.mrb[0].mxu0 %v2478
    %v2546 = vpop.f32.mrb[0].mxu0
    %v2547 = vadd.f32 0.0, %v2546
    %v2548 = vpop.f32.mrb[0].mxu0
    %2549 = vdwg.mxu0
    %2550 = vrot.lane.b32.xlu0 %v2277, 64
    %v2551 = vpop.permute.xlu0 %2550
    %v2554 = vsel %vm183, %v2473, 0
    %2556 = vmatprep.subr.mxu0 0.0
    %2557 = vmatpush1.msra.mxu0 %v2551
    %2558 = vmatprep.subr.mxu0 0.0
    %2559 = vmatpush1.msra.mxu0 0.0
    %2560 = vmatprep.subr.mxu0 0.0
    %2561 = vmatpush1.msra.mxu0 0.0
    %2562 = vmatprep.subr.mxu0 0.0
    %2563 = vmatpush1.msra.mxu0 0.0
    %2564 = vmatprep.subr.mxu0 0.0
    %2565 = vmatpush1.msra.mxu0 0.0
    %2566 = vmatprep.subr.mxu0 0.0
    %2567 = vmatpush1.msra.mxu0 0.0
    %2568 = vmatprep.subr.mxu0 0.0
    %2569 = vmatpush1.msra.mxu0 0.0
    %2570 = vmatprep.subr.mxu0 0.0
    %2571 = vmatpush1.msra.mxu0 0.0
    %2572 = vmatprep.subr.mxu0 0.0
    %2573 = vmatpush1.msra.mxu0 0.0
    %2574 = vmatprep.subr.mxu0 0.0
    %2575 = vmatpush1.msra.mxu0 0.0
    %2576 = vmatprep.subr.mxu0 0.0
    %2577 = vmatpush1.msra.mxu0 0.0
    %2578 = vmatprep.subr.mxu0 0.0
    %2579 = vmatpush1.msra.mxu0 0.0
    %2580 = vmatprep.subr.mxu0 0.0
    %2581 = vmatpush1.msra.mxu0 0.0
    %2582 = vmatprep.subr.mxu0 0.0
    %2583 = vmatpush1.msra.mxu0 0.0
    %2584 = vmatprep.subr.mxu0 0.0
    %2585 = vmatpush1.msra.mxu0 0.0
    %2586 = vmatprep.subr.mxu0 0.0
    %2587 = vmatpush1.msra.mxu0 0.0
    %2588 = vmatprep.subr.mxu0 0.0
    %2589 = vmatpush1.msra.mxu0 0.0
    %2590 = vmatprep.subr.mxu0 0.0
    %2591 = vmatpush1.msra.mxu0 0.0
    %2592 = vmatprep.subr.mxu0 0.0
    %2593 = vmatpush1.msra.mxu0 0.0
    %2594 = vmatprep.subr.mxu0 0.0
    %2595 = vmatpush1.msra.mxu0 0.0
    %2596 = vmatprep.subr.mxu0 0.0
    %2597 = vmatpush1.msra.mxu0 0.0
    %2598 = vmatprep.subr.mxu0 0.0
    %2599 = vmatpush1.msra.mxu0 0.0
    %2600 = vmatprep.subr.mxu0 0.0
    %2601 = vmatpush1.msra.mxu0 0.0
    %2602 = vmatprep.subr.mxu0 0.0
    %2603 = vmatpush1.msra.mxu0 0.0
    %2604 = vmatprep.subr.mxu0 0.0
    %2605 = vmatpush1.msra.mxu0 0.0
    %2606 = vmatprep.subr.mxu0 0.0
    %2607 = vmatpush1.msra.mxu0 0.0
    %2608 = vmatprep.subr.mxu0 0.0
    %2609 = vmatpush1.msra.mxu0 0.0
    %2610 = vmatprep.subr.mxu0 0.0
    %2611 = vmatpush1.msra.mxu0 0.0
    %2612 = vmatprep.subr.mxu0 0.0
    %2613 = vmatpush1.msra.mxu0 0.0
    %2614 = vmatprep.subr.mxu0 0.0
    %2615 = vmatpush1.msra.mxu0 0.0
    %2616 = vmatprep.subr.mxu0 0.0
    %2617 = vmatpush1.msra.mxu0 0.0
    %2618 = vmatprep.subr.mxu0 0.0
    %2619 = vmatpush1.msra.mxu0 0.0
    %2620 = vmatprep.mubr.f32.mxu0 0.0
    %2621 = vmatmul.mubr.f32.gmra.mrb[0].mxu0 %v2554
    %v2622 = vpop.f32.mrb[0].mxu0
    %v2623 = vadd.f32 0.0, %v2622
    %v2624 = vpop.f32.mrb[0].mxu0
    %2625 = vdwg.mxu0
    %2626 = vrot.lane.b32.xlu0 %v2272, 88
    %v2627 = vpop.permute.xlu0 %2626
    %2628 = vrot.lane.b32.xlu0 %v2272, 120
    %v2629 = vpop.permute.xlu0 %2628
    %v2630 = vsel %vm183, %v2627, 0
    %v2632 = vsel %vm183, %v2629, 0
    %2634 = vmatprep.subr.mxu0 0.0
    %2635 = vmatpush1.xpose.msra.mxu0 %v2632
    %2636 = vmatprep.subr.mxu0 0.0
    %2637 = vmatpush1.xpose.msra.mxu0 0.0
    %2638 = vmatprep.subr.mxu0 0.0
    %2639 = vmatpush1.xpose.msra.mxu0 0.0
    %2640 = vmatprep.subr.mxu0 0.0
    %2641 = vmatpush1.xpose.msra.mxu0 0.0
    %2642 = vmatprep.subr.mxu0 0.0
    %2643 = vmatpush1.xpose.msra.mxu0 0.0
    %2644 = vmatprep.subr.mxu0 0.0
    %2645 = vmatpush1.xpose.msra.mxu0 0.0
    %2646 = vmatprep.subr.mxu0 0.0
    %2647 = vmatpush1.xpose.msra.mxu0 0.0
    %2648 = vmatprep.subr.mxu0 0.0
    %2649 = vmatpush1.xpose.msra.mxu0 0.0
    %2650 = vmatprep.subr.mxu0 0.0
    %2651 = vmatpush1.xpose.msra.mxu0 0.0
    %2652 = vmatprep.subr.mxu0 0.0
    %2653 = vmatpush1.xpose.msra.mxu0 0.0
    %2654 = vmatprep.subr.mxu0 0.0
    %2655 = vmatpush1.xpose.msra.mxu0 0.0
    %2656 = vmatprep.subr.mxu0 0.0
    %2657 = vmatpush1.xpose.msra.mxu0 0.0
    %2658 = vmatprep.subr.mxu0 0.0
    %2659 = vmatpush1.xpose.msra.mxu0 0.0
    %2660 = vmatprep.subr.mxu0 0.0
    %2661 = vmatpush1.xpose.msra.mxu0 0.0
    %2662 = vmatprep.subr.mxu0 0.0
    %2663 = vmatpush1.xpose.msra.mxu0 0.0
    %2664 = vmatprep.subr.mxu0 0.0
    %2665 = vmatpush1.xpose.msra.mxu0 0.0
    %2666 = vmatprep.subr.mxu0 0.0
    %2667 = vmatpush1.xpose.msra.mxu0 0.0
    %2668 = vmatprep.subr.mxu0 0.0
    %2669 = vmatpush1.xpose.msra.mxu0 0.0
    %2670 = vmatprep.subr.mxu0 0.0
    %2671 = vmatpush1.xpose.msra.mxu0 0.0
    %2672 = vmatprep.subr.mxu0 0.0
    %2673 = vmatpush1.xpose.msra.mxu0 0.0
    %2674 = vmatprep.subr.mxu0 0.0
    %2675 = vmatpush1.xpose.msra.mxu0 0.0
    %2676 = vmatprep.subr.mxu0 0.0
    %2677 = vmatpush1.xpose.msra.mxu0 0.0
    %2678 = vmatprep.subr.mxu0 0.0
    %2679 = vmatpush1.xpose.msra.mxu0 0.0
    %2680 = vmatprep.subr.mxu0 0.0
    %2681 = vmatpush1.xpose.msra.mxu0 0.0
    %2682 = vmatprep.subr.mxu0 0.0
    %2683 = vmatpush1.xpose.msra.mxu0 0.0
    %2684 = vmatprep.subr.mxu0 0.0
    %2685 = vmatpush1.xpose.msra.mxu0 0.0
    %2686 = vmatprep.subr.mxu0 0.0
    %2687 = vmatpush1.xpose.msra.mxu0 0.0
    %2688 = vmatprep.subr.mxu0 0.0
    %2689 = vmatpush1.xpose.msra.mxu0 0.0
    %2690 = vmatprep.subr.mxu0 0.0
    %2691 = vmatpush1.xpose.msra.mxu0 0.0
    %2692 = vmatprep.subr.mxu0 0.0
    %2693 = vmatpush1.xpose.msra.mxu0 0.0
    %2694 = vmatprep.subr.mxu0 0.0
    %2695 = vmatpush1.xpose.msra.mxu0 0.0
    %2696 = vmatprep.subr.mxu0 0.0
    %2697 = vmatpush1.xpose.msra.mxu0 0.0
    %2698 = vmatprep.mubr.f32.mxu0 0.0
    %2699 = vmatmul.mubr.f32.gmra.mrb[0].mxu0 %v2630
    %v2700 = vpop.f32.mrb[0].mxu0
    %v2701 = vadd.f32 0.0, %v2700
    %v2702 = vpop.f32.mrb[0].mxu0
    %2703 = vdwg.mxu0
    %2704 = vrot.lane.b32.xlu0 %v2277, 88
    %v2705 = vpop.permute.xlu0 %2704
    %2706 = vrot.lane.b32.xlu0 %v2277, 120
    %v2707 = vpop.permute.xlu0 %2706
    %v2708 = vsel %vm183, %v2705, 0
    %v2710 = vsel %vm183, %v2707, 0
    %2712 = vmatprep.subr.mxu0 0.0
    %2713 = vmatpush1.xpose.msra.mxu0 %v2710
    %2714 = vmatprep.subr.mxu0 0.0
    %2715 = vmatpush1.xpose.msra.mxu0 0.0
    %2716 = vmatprep.subr.mxu0 0.0
    %2717 = vmatpush1.xpose.msra.mxu0 0.0
    %2718 = vmatprep.subr.mxu0 0.0
    %2719 = vmatpush1.xpose.msra.mxu0 0.0
    %2720 = vmatprep.subr.mxu0 0.0
    %2721 = vmatpush1.xpose.msra.mxu0 0.0
    %2722 = vmatprep.subr.mxu0 0.0
    %2723 = vmatpush1.xpose.msra.mxu0 0.0
    %2724 = vmatprep.subr.mxu0 0.0
    %2725 = vmatpush1.xpose.msra.mxu0 0.0
    %2726 = vmatprep.subr.mxu0 0.0
    %2727 = vmatpush1.xpose.msra.mxu0 0.0
    %2728 = vmatprep.subr.mxu0 0.0
    %2729 = vmatpush1.xpose.msra.mxu0 0.0
    %2730 = vmatprep.subr.mxu0 0.0
    %2731 = vmatpush1.xpose.msra.mxu0 0.0
    %2732 = vmatprep.subr.mxu0 0.0
    %2733 = vmatpush1.xpose.msra.mxu0 0.0
    %2734 = vmatprep.subr.mxu0 0.0
    %2735 = vmatpush1.xpose.msra.mxu0 0.0
    %2736 = vmatprep.subr.mxu0 0.0
    %2737 = vmatpush1.xpose.msra.mxu0 0.0
    %2738 = vmatprep.subr.mxu0 0.0
    %2739 = vmatpush1.xpose.msra.mxu0 0.0
    %2740 = vmatprep.subr.mxu0 0.0
    %2741 = vmatpush1.xpose.msra.mxu0 0.0
    %2742 = vmatprep.subr.mxu0 0.0
    %2743 = vmatpush1.xpose.msra.mxu0 0.0
    %2744 = vmatprep.subr.mxu0 0.0
    %2745 = vmatpush1.xpose.msra.mxu0 0.0
    %2746 = vmatprep.subr.mxu0 0.0
    %2747 = vmatpush1.xpose.msra.mxu0 0.0
    %2748 = vmatprep.subr.mxu0 0.0
    %2749 = vmatpush1.xpose.msra.mxu0 0.0
    %2750 = vmatprep.subr.mxu0 0.0
    %2751 = vmatpush1.xpose.msra.mxu0 0.0
    %2752 = vmatprep.subr.mxu0 0.0
    %2753 = vmatpush1.xpose.msra.mxu0 0.0
    %2754 = vmatprep.subr.mxu0 0.0
    %2755 = vmatpush1.xpose.msra.mxu0 0.0
    %2756 = vmatprep.subr.mxu0 0.0
    %2757 = vmatpush1.xpose.msra.mxu0 0.0
    %2758 = vmatprep.subr.mxu0 0.0
    %2759 = vmatpush1.xpose.msra.mxu0 0.0
    %2760 = vmatprep.subr.mxu0 0.0
    %2761 = vmatpush1.xpose.msra.mxu0 0.0
    %2762 = vmatprep.subr.mxu0 0.0
    %2763 = vmatpush1.xpose.msra.mxu0 0.0
    %2764 = vmatprep.subr.mxu0 0.0
    %2765 = vmatpush1.xpose.msra.mxu0 0.0
    %2766 = vmatprep.subr.mxu0 0.0
    %2767 = vmatpush1.xpose.msra.mxu0 0.0
    %2768 = vmatprep.subr.mxu0 0.0
    %2769 = vmatpush1.xpose.msra.mxu0 0.0
    %2770 = vmatprep.subr.mxu0 0.0
    %2771 = vmatpush1.xpose.msra.mxu0 0.0
    %2772 = vmatprep.subr.mxu0 0.0
    %2773 = vmatpush1.xpose.msra.mxu0 0.0
    %2774 = vmatprep.subr.mxu0 0.0
    %2775 = vmatpush1.xpose.msra.mxu0 0.0
    %2776 = vmatprep.mubr.f32.mxu0 0.0
    %2777 = vmatmul.mubr.f32.gmra.mrb[0].mxu0 %v2708
    %v2778 = vpop.f32.mrb[0].mxu0
    %v2779 = vadd.f32 0.0, %v2778
    %v2780 = vpop.f32.mrb[0].mxu0
    %2781 = vdwg.mxu0
    %v2782 = vsel %vm336, %v2701, -inf
    %v2783 = vsel %vm336, %v2779, -inf
    %v2784 = vsel %vm183, %v2782, -inf
    %v2785 = vrot.slane %v2784, 4
    %v2786 = vmax.f32 %v2784, %v2785
    %v2787 = vrot.slane %v2786, 2
    %v2788 = vmax.f32 %v2786, %v2787
    %v2789 = vrot.slane %v2788, 1
    %v2790 = vmax.f32 %v2788, %v2789
    %v2791 = vsel %vm183, %v2783, -inf
    %v2792 = vrot.slane %v2791, 4
    %v2793 = vmax.f32 %v2791, %v2792
    %v2794 = vrot.slane %v2793, 2
    %v2795 = vmax.f32 %v2793, %v2794
    %v2796 = vrot.slane %v2795, 1
    %v2797 = vmax.f32 %v2795, %v2796
    %v2798 = vsub.f32 %v2782, %v2790
    %v2799 = vsub.f32 %v2783, %v2797
    %v2800 = vmul.f32 %v2798, 1.442695
    %v2801 = vpow.pop %v2800
    %v2802 = vmul.f32 %v2799, 1.442695
    %v2803 = vpow.pop %v2802
    %v2804 = vsel %vm183, %v2801, 0.0
    %v2805 = vrot.slane %v2804, 4
    %v2806 = vadd.f32 %v2804, %v2805
    %v2807 = vrot.slane %v2806, 2
    %v2808 = vadd.f32 %v2806, %v2807
    %v2809 = vrot.slane %v2808, 1
    %v2810 = vadd.f32 %v2808, %v2809
    %v2811 = vsel %vm183, %v2803, 0.0
    %v2812 = vrot.slane %v2811, 4
    %v2813 = vadd.f32 %v2811, %v2812
    %v2814 = vrot.slane %v2813, 2
    %v2815 = vadd.f32 %v2813, %v2814
    %v2816 = vrot.slane %v2815, 1
    %v2817 = vadd.f32 %v2815, %v2816
    %v2818 = vrcp.pop %v2810
    %v2819 = vrcp.pop %v2817
    %v2820 = vmul.f32 %v2801, %v2818
    %v2821 = vmul.f32 %v2803, %v2819
    %2822 = vrot.lane.b32.xlu0 %v2272, 56
    %v2823 = vpop.permute.xlu0 %2822
    %v2826 = vsel %vm183, %v2820, 0
    %2828 = vmatprep.subr.mxu0 0.0
    %2829 = vmatpush1.msra.mxu0 %v2823
    %2830 = vmatprep.subr.mxu0 0.0
    %2831 = vmatpush1.msra.mxu0 0.0
    %2832 = vmatprep.subr.mxu0 0.0
    %2833 = vmatpush1.msra.mxu0 0.0
    %2834 = vmatprep.subr.mxu0 0.0
    %2835 = vmatpush1.msra.mxu0 0.0
    %2836 = vmatprep.subr.mxu0 0.0
    %2837 = vmatpush1.msra.mxu0 0.0
    %2838 = vmatprep.subr.mxu0 0.0
    %2839 = vmatpush1.msra.mxu0 0.0
    %2840 = vmatprep.subr.mxu0 0.0
    %2841 = vmatpush1.msra.mxu0 0.0
    %2842 = vmatprep.subr.mxu0 0.0
    %2843 = vmatpush1.msra.mxu0 0.0
    %2844 = vmatprep.subr.mxu0 0.0
    %2845 = vmatpush1.msra.mxu0 0.0
    %2846 = vmatprep.subr.mxu0 0.0
    %2847 = vmatpush1.msra.mxu0 0.0
    %2848 = vmatprep.subr.mxu0 0.0
    %2849 = vmatpush1.msra.mxu0 0.0
    %2850 = vmatprep.subr.mxu0 0.0
    %2851 = vmatpush1.msra.mxu0 0.0
    %2852 = vmatprep.subr.mxu0 0.0
    %2853 = vmatpush1.msra.mxu0 0.0
    %2854 = vmatprep.subr.mxu0 0.0
    %2855 = vmatpush1.msra.mxu0 0.0
    %2856 = vmatprep.subr.mxu0 0.0
    %2857 = vmatpush1.msra.mxu0 0.0
    %2858 = vmatprep.subr.mxu0 0.0
    %2859 = vmatpush1.msra.mxu0 0.0
    %2860 = vmatprep.subr.mxu0 0.0
    %2861 = vmatpush1.msra.mxu0 0.0
    %2862 = vmatprep.subr.mxu0 0.0
    %2863 = vmatpush1.msra.mxu0 0.0
    %2864 = vmatprep.subr.mxu0 0.0
    %2865 = vmatpush1.msra.mxu0 0.0
    %2866 = vmatprep.subr.mxu0 0.0
    %2867 = vmatpush1.msra.mxu0 0.0
    %2868 = vmatprep.subr.mxu0 0.0
    %2869 = vmatpush1.msra.mxu0 0.0
    %2870 = vmatprep.subr.mxu0 0.0
    %2871 = vmatpush1.msra.mxu0 0.0
    %2872 = vmatprep.subr.mxu0 0.0
    %2873 = vmatpush1.msra.mxu0 0.0
    %2874 = vmatprep.subr.mxu0 0.0
    %2875 = vmatpush1.msra.mxu0 0.0
    %2876 = vmatprep.subr.mxu0 0.0
    %2877 = vmatpush1.msra.mxu0 0.0
    %2878 = vmatprep.subr.mxu0 0.0
    %2879 = vmatpush1.msra.mxu0 0.0
    %2880 = vmatprep.subr.mxu0 0.0
    %2881 = vmatpush1.msra.mxu0 0.0
    %2882 = vmatprep.subr.mxu0 0.0
    %2883 = vmatpush1.msra.mxu0 0.0
    %2884 = vmatprep.subr.mxu0 0.0
    %2885 = vmatpush1.msra.mxu0 0.0
    %2886 = vmatprep.subr.mxu0 0.0
    %2887 = vmatpush1.msra.mxu0 0.0
    %2888 = vmatprep.subr.mxu0 0.0
    %2889 = vmatpush1.msra.mxu0 0.0
    %2890 = vmatprep.subr.mxu0 0.0
    %2891 = vmatpush1.msra.mxu0 0.0
    %2892 = vmatprep.mubr.f32.mxu0 0.0
    %2893 = vmatmul.mubr.f32.gmra.mrb[0].mxu0 %v2826
    %v2894 = vpop.f32.mrb[0].mxu0
    %v2895 = vadd.f32 0.0, %v2894
    %v2896 = vpop.f32.mrb[0].mxu0
    %2897 = vdwg.mxu0
    %2898 = vrot.lane.b32.xlu0 %v2277, 56
    %v2899 = vpop.permute.xlu0 %2898
    %v2902 = vsel %vm183, %v2821, 0
    %2904 = vmatprep.subr.mxu0 0.0
    %2905 = vmatpush1.msra.mxu0 %v2899
    %2906 = vmatprep.subr.mxu0 0.0
    %2907 = vmatpush1.msra.mxu0 0.0
    %2908 = vmatprep.subr.mxu0 0.0
    %2909 = vmatpush1.msra.mxu0 0.0
    %2910 = vmatprep.subr.mxu0 0.0
    %2911 = vmatpush1.msra.mxu0 0.0
    %2912 = vmatprep.subr.mxu0 0.0
    %2913 = vmatpush1.msra.mxu0 0.0
    %2914 = vmatprep.subr.mxu0 0.0
    %2915 = vmatpush1.msra.mxu0 0.0
    %2916 = vmatprep.subr.mxu0 0.0
    %2917 = vmatpush1.msra.mxu0 0.0
    %2918 = vmatprep.subr.mxu0 0.0
    %2919 = vmatpush1.msra.mxu0 0.0
    %2920 = vmatprep.subr.mxu0 0.0
    %2921 = vmatpush1.msra.mxu0 0.0
    %2922 = vmatprep.subr.mxu0 0.0
    %2923 = vmatpush1.msra.mxu0 0.0
    %2924 = vmatprep.subr.mxu0 0.0
    %2925 = vmatpush1.msra.mxu0 0.0
    %2926 = vmatprep.subr.mxu0 0.0
    %2927 = vmatpush1.msra.mxu0 0.0
    %2928 = vmatprep.subr.mxu0 0.0
    %2929 = vmatpush1.msra.mxu0 0.0
    %2930 = vmatprep.subr.mxu0 0.0
    %2931 = vmatpush1.msra.mxu0 0.0
    %2932 = vmatprep.subr.mxu0 0.0
    %2933 = vmatpush1.msra.mxu0 0.0
    %2934 = vmatprep.subr.mxu0 0.0
    %2935 = vmatpush1.msra.mxu0 0.0
    %2936 = vmatprep.subr.mxu0 0.0
    %2937 = vmatpush1.msra.mxu0 0.0
    %2938 = vmatprep.subr.mxu0 0.0
    %2939 = vmatpush1.msra.mxu0 0.0
    %2940 = vmatprep.subr.mxu0 0.0
    %2941 = vmatpush1.msra.mxu0 0.0
    %2942 = vmatprep.subr.mxu0 0.0
    %2943 = vmatpush1.msra.mxu0 0.0
    %2944 = vmatprep.subr.mxu0 0.0
    %2945 = vmatpush1.msra.mxu0 0.0
    %2946 = vmatprep.subr.mxu0 0.0
    %2947 = vmatpush1.msra.mxu0 0.0
    %2948 = vmatprep.subr.mxu0 0.0
    %2949 = vmatpush1.msra.mxu0 0.0
    %2950 = vmatprep.subr.mxu0 0.0
    %2951 = vmatpush1.msra.mxu0 0.0
    %2952 = vmatprep.subr.mxu0 0.0
    %2953 = vmatpush1.msra.mxu0 0.0
    %2954 = vmatprep.subr.mxu0 0.0
    %2955 = vmatpush1.msra.mxu0 0.0
    %2956 = vmatprep.subr.mxu0 0.0
    %2957 = vmatpush1.msra.mxu0 0.0
    %2958 = vmatprep.subr.mxu0 0.0
    %2959 = vmatpush1.msra.mxu0 0.0
    %2960 = vmatprep.subr.mxu0 0.0
    %2961 = vmatpush1.msra.mxu0 0.0
    %2962 = vmatprep.subr.mxu0 0.0
    %2963 = vmatpush1.msra.mxu0 0.0
    %2964 = vmatprep.subr.mxu0 0.0
    %2965 = vmatpush1.msra.mxu0 0.0
    %2966 = vmatprep.subr.mxu0 0.0
    %2967 = vmatpush1.msra.mxu0 0.0
    %2968 = vmatprep.mubr.f32.mxu0 0.0
    %2969 = vmatmul.mubr.f32.gmra.mrb[0].mxu0 %v2902
    %v2970 = vpop.f32.mrb[0].mxu0
    %v2971 = vadd.f32 0.0, %v2970
    %v2972 = vpop.f32.mrb[0].mxu0
    %2973 = vdwg.mxu0
    %2975 = vrot.lane.b32.xlu0 %v2136, 32
    %v2976 = vpop.permute.xlu0 %2975
    %v2979 = vsel %vm183, %v2895, 0
    %v2982 = vsel %vm183, %v2971, 0
    %2984 = vmatprep.subr.mxu0 0.0
    %2985 = vmatpush1.msra.mxu0 %v2976
    %2986 = vmatprep.subr.mxu0 0.0
    %2987 = vmatpush1.msra.mxu0 0.0
    %2988 = vmatprep.subr.mxu0 0.0
    %2989 = vmatpush1.msra.mxu0 0.0
    %2990 = vmatprep.subr.mxu0 0.0
    %2991 = vmatpush1.msra.mxu0 0.0
    %2992 = vmatprep.subr.mxu0 0.0
    %2993 = vmatpush1.msra.mxu0 0.0
    %2994 = vmatprep.subr.mxu0 0.0
    %2995 = vmatpush1.msra.mxu0 0.0
    %2996 = vmatprep.subr.mxu0 0.0
    %2997 = vmatpush1.msra.mxu0 0.0
    %2998 = vmatprep.subr.mxu0 0.0
    %2999 = vmatpush1.msra.mxu0 0.0
    %3000 = vmatprep.subr.mxu0 0.0
    %3001 = vmatpush1.msra.mxu0 0.0
    %3002 = vmatprep.subr.mxu0 0.0
    %3003 = vmatpush1.msra.mxu0 0.0
    %3004 = vmatprep.subr.mxu0 0.0
    %3005 = vmatpush1.msra.mxu0 0.0
    %3006 = vmatprep.subr.mxu0 0.0
    %3007 = vmatpush1.msra.mxu0 0.0
    %3008 = vmatprep.subr.mxu0 0.0
    %3009 = vmatpush1.msra.mxu0 0.0
    %3010 = vmatprep.subr.mxu0 0.0
    %3011 = vmatpush1.msra.mxu0 0.0
    %3012 = vmatprep.subr.mxu0 0.0
    %3013 = vmatpush1.msra.mxu0 0.0
    %3014 = vmatprep.subr.mxu0 0.0
    %3015 = vmatpush1.msra.mxu0 0.0
    %3016 = vmatprep.subr.mxu0 0.0
    %3017 = vmatpush1.msra.mxu0 0.0
    %3018 = vmatprep.subr.mxu0 0.0
    %3019 = vmatpush1.msra.mxu0 0.0
    %3020 = vmatprep.subr.mxu0 0.0
    %3021 = vmatpush1.msra.mxu0 0.0
    %3022 = vmatprep.subr.mxu0 0.0
    %3023 = vmatpush1.msra.mxu0 0.0
    %3024 = vmatprep.subr.mxu0 0.0
    %3025 = vmatpush1.msra.mxu0 0.0
    %3026 = vmatprep.subr.mxu0 0.0
    %3027 = vmatpush1.msra.mxu0 0.0
    %3028 = vmatprep.subr.mxu0 0.0
    %3029 = vmatpush1.msra.mxu0 0.0
    %3030 = vmatprep.subr.mxu0 0.0
    %3031 = vmatpush1.msra.mxu0 0.0
    %3032 = vmatprep.subr.mxu0 0.0
    %3033 = vmatpush1.msra.mxu0 0.0
    %3034 = vmatprep.subr.mxu0 0.0
    %3035 = vmatpush1.msra.mxu0 0.0
    %3036 = vmatprep.subr.mxu0 0.0
    %3037 = vmatpush1.msra.mxu0 0.0
    %3038 = vmatprep.subr.mxu0 0.0
    %3039 = vmatpush1.msra.mxu0 0.0
    %3040 = vmatprep.subr.mxu0 0.0
    %3041 = vmatpush1.msra.mxu0 0.0
    %3042 = vmatprep.subr.mxu0 0.0
    %3043 = vmatpush1.msra.mxu0 0.0
    %3044 = vmatprep.subr.mxu0 0.0
    %3045 = vmatpush1.msra.mxu0 0.0
    %3046 = vmatprep.subr.mxu0 0.0
    %3047 = vmatpush1.msra.mxu0 0.0
    %3048 = vmatprep.mubr.f32.mxu0 0.0
    %3049 = vmatmul.mubr.f32.gmra.mrb[0].mxu0 %v2979
    %v3050 = vpop.f32.mrb[0].mxu0
    %v3051 = vadd.f32 0.0, %v3050
    %v3052 = vpop.f32.mrb[0].mxu0
    %3053 = vmatprep.mubr.f32.mxu0 0.0
    %3054 = vmatmul.mubr.f32.gmra.mrb[0].mxu0 %v2982
    %v3055 = vpop.f32.mrb[0].mxu0
    %v3056 = vadd.f32 0.0, %v3055
    %v3057 = vpop.f32.mrb[0].mxu0
    %3058 = vdwg.mxu0
    %3060 = vrot.lane.b32.xlu0 %v2134, 32
    %v3061 = vpop.permute.xlu0 %3060
    %v3064 = vsel %vm183, %v2547, 0
    %v3067 = vsel %vm183, %v2623, 0
    %3069 = vmatprep.subr.mxu0 0.0
    %3070 = vmatpush1.msra.mxu0 %v3061
    %3071 = vmatprep.subr.mxu0 0.0
    %3072 = vmatpush1.msra.mxu0 0.0
    %3073 = vmatprep.subr.mxu0 0.0
    %3074 = vmatpush1.msra.mxu0 0.0
    %3075 = vmatprep.subr.mxu0 0.0
    %3076 = vmatpush1.msra.mxu0 0.0
    %3077 = vmatprep.subr.mxu0 0.0
    %3078 = vmatpush1.msra.mxu0 0.0
    %3079 = vmatprep.subr.mxu0 0.0
    %3080 = vmatpush1.msra.mxu0 0.0
    %3081 = vmatprep.subr.mxu0 0.0
    %3082 = vmatpush1.msra.mxu0 0.0
    %3083 = vmatprep.subr.mxu0 0.0
    %3084 = vmatpush1.msra.mxu0 0.0
    %3085 = vmatprep.subr.mxu0 0.0
    %3086 = vmatpush1.msra.mxu0 0.0
    %3087 = vmatprep.subr.mxu0 0.0
    %3088 = vmatpush1.msra.mxu0 0.0
    %3089 = vmatprep.subr.mxu0 0.0
    %3090 = vmatpush1.msra.mxu0 0.0
    %3091 = vmatprep.subr.mxu0 0.0
    %3092 = vmatpush1.msra.mxu0 0.0
    %3093 = vmatprep.subr.mxu0 0.0
    %3094 = vmatpush1.msra.mxu0 0.0
    %3095 = vmatprep.subr.mxu0 0.0
    %3096 = vmatpush1.msra.mxu0 0.0
    %3097 = vmatprep.subr.mxu0 0.0
    %3098 = vmatpush1.msra.mxu0 0.0
    %3099 = vmatprep.subr.mxu0 0.0
    %3100 = vmatpush1.msra.mxu0 0.0
    %3101 = vmatprep.subr.mxu0 0.0
    %3102 = vmatpush1.msra.mxu0 0.0
    %3103 = vmatprep.subr.mxu0 0.0
    %3104 = vmatpush1.msra.mxu0 0.0
    %3105 = vmatprep.subr.mxu0 0.0
    %3106 = vmatpush1.msra.mxu0 0.0
    %3107 = vmatprep.subr.mxu0 0.0
    %3108 = vmatpush1.msra.mxu0 0.0
    %3109 = vmatprep.subr.mxu0 0.0
    %3110 = vmatpush1.msra.mxu0 0.0
    %3111 = vmatprep.subr.mxu0 0.0
    %3112 = vmatpush1.msra.mxu0 0.0
    %3113 = vmatprep.subr.mxu0 0.0
    %3114 = vmatpush1.msra.mxu0 0.0
    %3115 = vmatprep.subr.mxu0 0.0
    %3116 = vmatpush1.msra.mxu0 0.0
    %3117 = vmatprep.subr.mxu0 0.0
    %3118 = vmatpush1.msra.mxu0 0.0
    %3119 = vmatprep.subr.mxu0 0.0
    %3120 = vmatpush1.msra.mxu0 0.0
    %3121 = vmatprep.subr.mxu0 0.0
    %3122 = vmatpush1.msra.mxu0 0.0
    %3123 = vmatprep.subr.mxu0 0.0
    %3124 = vmatpush1.msra.mxu0 0.0
    %3125 = vmatprep.subr.mxu0 0.0
    %3126 = vmatpush1.msra.mxu0 0.0
    %3127 = vmatprep.subr.mxu0 0.0
    %3128 = vmatpush1.msra.mxu0 0.0
    %3129 = vmatprep.subr.mxu0 0.0
    %3130 = vmatpush1.msra.mxu0 0.0
    %3131 = vmatprep.subr.mxu0 0.0
    %3132 = vmatpush1.msra.mxu0 0.0
    %3133 = vmatprep.mubr.f32.mxu0 0.0
    %3134 = vmatmul.mubr.f32.gmra.mrb[0].mxu0 %v3064
    %v3135 = vpop.f32.mrb[0].mxu0
    %v3136 = vadd.f32 %v3051, %v3135
    %v3137 = vpop.f32.mrb[0].mxu0
    %3138 = vmatprep.mubr.f32.mxu0 0.0
    %3139 = vmatmul.mubr.f32.gmra.mrb[0].mxu0 %v3067
    %v3140 = vpop.f32.mrb[0].mxu0
    %v3141 = vadd.f32 %v3056, %v3140
    %v3142 = vpop.f32.mrb[0].mxu0
    %3143 = vdwg.mxu0
    %3144 = vrot.lane.b32.xlu0 %v2272, 80
    %v3145 = vpop.permute.xlu0 %3144
    %3146 = vrot.lane.b32.xlu0 %v2272, 112
    %v3147 = vpop.permute.xlu0 %3146
    %v3148 = vsel %vm183, %v3145, 0
    %v3150 = vsel %vm183, %v3147, 0
    %3152 = vmatprep.subr.mxu0 0.0
    %3153 = vmatpush1.xpose.msra.mxu0 %v3150
    %3154 = vmatprep.subr.mxu0 0.0
    %3155 = vmatpush1.xpose.msra.mxu0 0.0
    %3156 = vmatprep.subr.mxu0 0.0
    %3157 = vmatpush1.xpose.msra.mxu0 0.0
    %3158 = vmatprep.subr.mxu0 0.0
    %3159 = vmatpush1.xpose.msra.mxu0 0.0
    %3160 = vmatprep.subr.mxu0 0.0
    %3161 = vmatpush1.xpose.msra.mxu0 0.0
    %3162 = vmatprep.subr.mxu0 0.0
    %3163 = vmatpush1.xpose.msra.mxu0 0.0
    %3164 = vmatprep.subr.mxu0 0.0
    %3165 = vmatpush1.xpose.msra.mxu0 0.0
    %3166 = vmatprep.subr.mxu0 0.0
    %3167 = vmatpush1.xpose.msra.mxu0 0.0
    %3168 = vmatprep.subr.mxu0 0.0
    %3169 = vmatpush1.xpose.msra.mxu0 0.0
    %3170 = vmatprep.subr.mxu0 0.0
    %3171 = vmatpush1.xpose.msra.mxu0 0.0
    %3172 = vmatprep.subr.mxu0 0.0
    %3173 = vmatpush1.xpose.msra.mxu0 0.0
    %3174 = vmatprep.subr.mxu0 0.0
    %3175 = vmatpush1.xpose.msra.mxu0 0.0
    %3176 = vmatprep.subr.mxu0 0.0
    %3177 = vmatpush1.xpose.msra.mxu0 0.0
    %3178 = vmatprep.subr.mxu0 0.0
    %3179 = vmatpush1.xpose.msra.mxu0 0.0
    %3180 = vmatprep.subr.mxu0 0.0
    %3181 = vmatpush1.xpose.msra.mxu0 0.0
    %3182 = vmatprep.subr.mxu0 0.0
    %3183 = vmatpush1.xpose.msra.mxu0 0.0
    %3184 = vmatprep.subr.mxu0 0.0
    %3185 = vmatpush1.xpose.msra.mxu0 0.0
    %3186 = vmatprep.subr.mxu0 0.0
    %3187 = vmatpush1.xpose.msra.mxu0 0.0
    %3188 = vmatprep.subr.mxu0 0.0
    %3189 = vmatpush1.xpose.msra.mxu0 0.0
    %3190 = vmatprep.subr.mxu0 0.0
    %3191 = vmatpush1.xpose.msra.mxu0 0.0
    %3192 = vmatprep.subr.mxu0 0.0
    %3193 = vmatpush1.xpose.msra.mxu0 0.0
    %3194 = vmatprep.subr.mxu0 0.0
    %3195 = vmatpush1.xpose.msra.mxu0 0.0
    %3196 = vmatprep.subr.mxu0 0.0
    %3197 = vmatpush1.xpose.msra.mxu0 0.0
    %3198 = vmatprep.subr.mxu0 0.0
    %3199 = vmatpush1.xpose.msra.mxu0 0.0
    %3200 = vmatprep.subr.mxu0 0.0
    %3201 = vmatpush1.xpose.msra.mxu0 0.0
    %3202 = vmatprep.subr.mxu0 0.0
    %3203 = vmatpush1.xpose.msra.mxu0 0.0
    %3204 = vmatprep.subr.mxu0 0.0
    %3205 = vmatpush1.xpose.msra.mxu0 0.0
    %3206 = vmatprep.subr.mxu0 0.0
    %3207 = vmatpush1.xpose.msra.mxu0 0.0
    %3208 = vmatprep.subr.mxu0 0.0
    %3209 = vmatpush1.xpose.msra.mxu0 0.0
    %3210 = vmatprep.subr.mxu0 0.0
    %3211 = vmatpush1.xpose.msra.mxu0 0.0
    %3212 = vmatprep.subr.mxu0 0.0
    %3213 = vmatpush1.xpose.msra.mxu0 0.0
    %3214 = vmatprep.subr.mxu0 0.0
    %3215 = vmatpush1.xpose.msra.mxu0 0.0
    %3216 = vmatprep.mubr.f32.mxu0 0.0
    %3217 = vmatmul.mubr.f32.gmra.mrb[0].mxu0 %v3148
    %v3218 = vpop.f32.mrb[0].mxu0
    %v3219 = vadd.f32 0.0, %v3218
    %v3220 = vpop.f32.mrb[0].mxu0
    %3221 = vdwg.mxu0
    %3222 = vrot.lane.b32.xlu0 %v2277, 80
    %v3223 = vpop.permute.xlu0 %3222
    %3224 = vrot.lane.b32.xlu0 %v2277, 112
    %v3225 = vpop.permute.xlu0 %3224
    %v3226 = vsel %vm183, %v3223, 0
    %v3228 = vsel %vm183, %v3225, 0
    %3230 = vmatprep.subr.mxu0 0.0
    %3231 = vmatpush1.xpose.msra.mxu0 %v3228
    %3232 = vmatprep.subr.mxu0 0.0
    %3233 = vmatpush1.xpose.msra.mxu0 0.0
    %3234 = vmatprep.subr.mxu0 0.0
    %3235 = vmatpush1.xpose.msra.mxu0 0.0
    %3236 = vmatprep.subr.mxu0 0.0
    %3237 = vmatpush1.xpose.msra.mxu0 0.0
    %3238 = vmatprep.subr.mxu0 0.0
    %3239 = vmatpush1.xpose.msra.mxu0 0.0
    %3240 = vmatprep.subr.mxu0 0.0
    %3241 = vmatpush1.xpose.msra.mxu0 0.0
    %3242 = vmatprep.subr.mxu0 0.0
    %3243 = vmatpush1.xpose.msra.mxu0 0.0
    %3244 = vmatprep.subr.mxu0 0.0
    %3245 = vmatpush1.xpose.msra.mxu0 0.0
    %3246 = vmatprep.subr.mxu0 0.0
    %3247 = vmatpush1.xpose.msra.mxu0 0.0
    %3248 = vmatprep.subr.mxu0 0.0
    %3249 = vmatpush1.xpose.msra.mxu0 0.0
    %3250 = vmatprep.subr.mxu0 0.0
    %3251 = vmatpush1.xpose.msra.mxu0 0.0
    %3252 = vmatprep.subr.mxu0 0.0
    %3253 = vmatpush1.xpose.msra.mxu0 0.0
    %3254 = vmatprep.subr.mxu0 0.0
    %3255 = vmatpush1.xpose.msra.mxu0 0.0
    %3256 = vmatprep.subr.mxu0 0.0
    %3257 = vmatpush1.xpose.msra.mxu0 0.0
    %3258 = vmatprep.subr.mxu0 0.0
    %3259 = vmatpush1.xpose.msra.mxu0 0.0
    %3260 = vmatprep.subr.mxu0 0.0
    %3261 = vmatpush1.xpose.msra.mxu0 0.0
    %3262 = vmatprep.subr.mxu0 0.0
    %3263 = vmatpush1.xpose.msra.mxu0 0.0
    %3264 = vmatprep.subr.mxu0 0.0
    %3265 = vmatpush1.xpose.msra.mxu0 0.0
    %3266 = vmatprep.subr.mxu0 0.0
    %3267 = vmatpush1.xpose.msra.mxu0 0.0
    %3268 = vmatprep.subr.mxu0 0.0
    %3269 = vmatpush1.xpose.msra.mxu0 0.0
    %3270 = vmatprep.subr.mxu0 0.0
    %3271 = vmatpush1.xpose.msra.mxu0 0.0
    %3272 = vmatprep.subr.mxu0 0.0
    %3273 = vmatpush1.xpose.msra.mxu0 0.0
    %3274 = vmatprep.subr.mxu0 0.0
    %3275 = vmatpush1.xpose.msra.mxu0 0.0
    %3276 = vmatprep.subr.mxu0 0.0
    %3277 = vmatpush1.xpose.msra.mxu0 0.0
    %3278 = vmatprep.subr.mxu0 0.0
    %3279 = vmatpush1.xpose.msra.mxu0 0.0
    %3280 = vmatprep.subr.mxu0 0.0
    %3281 = vmatpush1.xpose.msra.mxu0 0.0
    %3282 = vmatprep.subr.mxu0 0.0
    %3283 = vmatpush1.xpose.msra.mxu0 0.0
    %3284 = vmatprep.subr.mxu0 0.0
    %3285 = vmatpush1.xpose.msra.mxu0 0.0
    %3286 = vmatprep.subr.mxu0 0.0
    %3287 = vmatpush1.xpose.msra.mxu0 0.0
    %3288 = vmatprep.subr.mxu0 0.0
    %3289 = vmatpush1.xpose.msra.mxu0 0.0
    %3290 = vmatprep.subr.mxu0 0.0
    %3291 = vmatpush1.xpose.msra.mxu0 0.0
    %3292 = vmatprep.subr.mxu0 0.0
    %3293 = vmatpush1.xpose.msra.mxu0 0.0
    %3294 = vmatprep.mubr.f32.mxu0 0.0
    %3295 = vmatmul.mubr.f32.gmra.mrb[0].mxu0 %v3226
    %v3296 = vpop.f32.mrb[0].mxu0
    %v3297 = vadd.f32 0.0, %v3296
    %v3298 = vpop.f32.mrb[0].mxu0
    %3299 = vdwg.mxu0
    %v3300 = vsel %vm336, %v3219, -inf
    %v3301 = vsel %vm336, %v3297, -inf
    %v3302 = vsel %vm183, %v3300, -inf
    %v3303 = vrot.slane %v3302, 4
    %v3304 = vmax.f32 %v3302, %v3303
    %v3305 = vrot.slane %v3304, 2
    %v3306 = vmax.f32 %v3304, %v3305
    %v3307 = vrot.slane %v3306, 1
    %v3308 = vmax.f32 %v3306, %v3307
    %v3309 = vsel %vm183, %v3301, -inf
    %v3310 = vrot.slane %v3309, 4
    %v3311 = vmax.f32 %v3309, %v3310
    %v3312 = vrot.slane %v3311, 2
    %v3313 = vmax.f32 %v3311, %v3312
    %v3314 = vrot.slane %v3313, 1
    %v3315 = vmax.f32 %v3313, %v3314
    %v3316 = vsub.f32 %v3300, %v3308
    %v3317 = vsub.f32 %v3301, %v3315
    %v3318 = vmul.f32 %v3316, 1.442695
    %v3319 = vpow.pop %v3318
    %v3320 = vmul.f32 %v3317, 1.442695
    %v3321 = vpow.pop %v3320
    %v3322 = vsel %vm183, %v3319, 0.0
    %v3323 = vrot.slane %v3322, 4
    %v3324 = vadd.f32 %v3322, %v3323
    %v3325 = vrot.slane %v3324, 2
    %v3326 = vadd.f32 %v3324, %v3325
    %v3327 = vrot.slane %v3326, 1
    %v3328 = vadd.f32 %v3326, %v3327
    %v3329 = vsel %vm183, %v3321, 0.0
    %v3330 = vrot.slane %v3329, 4
    %v3331 = vadd.f32 %v3329, %v3330
    %v3332 = vrot.slane %v3331, 2
    %v3333 = vadd.f32 %v3331, %v3332
    %v3334 = vrot.slane %v3333, 1
    %v3335 = vadd.f32 %v3333, %v3334
    %v3336 = vrcp.pop %v3328
    %v3337 = vrcp.pop %v3335
    %v3338 = vmul.f32 %v3319, %v3336
    %v3339 = vmul.f32 %v3321, %v3337
    %3340 = vrot.lane.b32.xlu0 %v2272, 48
    %v3341 = vpop.permute.xlu0 %3340
    %v3344 = vsel %vm183, %v3338, 0
    %3346 = vmatprep.subr.mxu0 0.0
    %3347 = vmatpush1.msra.mxu0 %v3341
    %3348 = vmatprep.subr.mxu0 0.0
    %3349 = vmatpush1.msra.mxu0 0.0
    %3350 = vmatprep.subr.mxu0 0.0
    %3351 = vmatpush1.msra.mxu0 0.0
    %3352 = vmatprep.subr.mxu0 0.0
    %3353 = vmatpush1.msra.mxu0 0.0
    %3354 = vmatprep.subr.mxu0 0.0
    %3355 = vmatpush1.msra.mxu0 0.0
    %3356 = vmatprep.subr.mxu0 0.0
    %3357 = vmatpush1.msra.mxu0 0.0
    %3358 = vmatprep.subr.mxu0 0.0
    %3359 = vmatpush1.msra.mxu0 0.0
    %3360 = vmatprep.subr.mxu0 0.0
    %3361 = vmatpush1.msra.mxu0 0.0
    %3362 = vmatprep.subr.mxu0 0.0
    %3363 = vmatpush1.msra.mxu0 0.0
    %3364 = vmatprep.subr.mxu0 0.0
    %3365 = vmatpush1.msra.mxu0 0.0
    %3366 = vmatprep.subr.mxu0 0.0
    %3367 = vmatpush1.msra.mxu0 0.0
    %3368 = vmatprep.subr.mxu0 0.0
    %3369 = vmatpush1.msra.mxu0 0.0
    %3370 = vmatprep.subr.mxu0 0.0
    %3371 = vmatpush1.msra.mxu0 0.0
    %3372 = vmatprep.subr.mxu0 0.0
    %3373 = vmatpush1.msra.mxu0 0.0
    %3374 = vmatprep.subr.mxu0 0.0
    %3375 = vmatpush1.msra.mxu0 0.0
    %3376 = vmatprep.subr.mxu0 0.0
    %3377 = vmatpush1.msra.mxu0 0.0
    %3378 = vmatprep.subr.mxu0 0.0
    %3379 = vmatpush1.msra.mxu0 0.0
    %3380 = vmatprep.subr.mxu0 0.0
    %3381 = vmatpush1.msra.mxu0 0.0
    %3382 = vmatprep.subr.mxu0 0.0
    %3383 = vmatpush1.msra.mxu0 0.0
    %3384 = vmatprep.subr.mxu0 0.0
    %3385 = vmatpush1.msra.mxu0 0.0
    %3386 = vmatprep.subr.mxu0 0.0
    %3387 = vmatpush1.msra.mxu0 0.0
    %3388 = vmatprep.subr.mxu0 0.0
    %3389 = vmatpush1.msra.mxu0 0.0
    %3390 = vmatprep.subr.mxu0 0.0
    %3391 = vmatpush1.msra.mxu0 0.0
    %3392 = vmatprep.subr.mxu0 0.0
    %3393 = vmatpush1.msra.mxu0 0.0
    %3394 = vmatprep.subr.mxu0 0.0
    %3395 = vmatpush1.msra.mxu0 0.0
    %3396 = vmatprep.subr.mxu0 0.0
    %3397 = vmatpush1.msra.mxu0 0.0
    %3398 = vmatprep.subr.mxu0 0.0
    %3399 = vmatpush1.msra.mxu0 0.0
    %3400 = vmatprep.subr.mxu0 0.0
    %3401 = vmatpush1.msra.mxu0 0.0
    %3402 = vmatprep.subr.mxu0 0.0
    %3403 = vmatpush1.msra.mxu0 0.0
    %3404 = vmatprep.subr.mxu0 0.0
    %3405 = vmatpush1.msra.mxu0 0.0
    %3406 = vmatprep.subr.mxu0 0.0
    %3407 = vmatpush1.msra.mxu0 0.0
    %3408 = vmatprep.subr.mxu0 0.0
    %3409 = vmatpush1.msra.mxu0 0.0
    %3410 = vmatprep.mubr.f32.mxu0 0.0
    %3411 = vmatmul.mubr.f32.gmra.mrb[0].mxu0 %v3344
    %v3412 = vpop.f32.mrb[0].mxu0
    %v3413 = vadd.f32 0.0, %v3412
    %v3414 = vpop.f32.mrb[0].mxu0
    %3415 = vdwg.mxu0
    %3416 = vrot.lane.b32.xlu0 %v2277, 48
    %v3417 = vpop.permute.xlu0 %3416
    %v3420 = vsel %vm183, %v3339, 0
    %3422 = vmatprep.subr.mxu0 0.0
    %3423 = vmatpush1.msra.mxu0 %v3417
    %3424 = vmatprep.subr.mxu0 0.0
    %3425 = vmatpush1.msra.mxu0 0.0
    %3426 = vmatprep.subr.mxu0 0.0
    %3427 = vmatpush1.msra.mxu0 0.0
    %3428 = vmatprep.subr.mxu0 0.0
    %3429 = vmatpush1.msra.mxu0 0.0
    %3430 = vmatprep.subr.mxu0 0.0
    %3431 = vmatpush1.msra.mxu0 0.0
    %3432 = vmatprep.subr.mxu0 0.0
    %3433 = vmatpush1.msra.mxu0 0.0
    %3434 = vmatprep.subr.mxu0 0.0
    %3435 = vmatpush1.msra.mxu0 0.0
    %3436 = vmatprep.subr.mxu0 0.0
    %3437 = vmatpush1.msra.mxu0 0.0
    %3438 = vmatprep.subr.mxu0 0.0
    %3439 = vmatpush1.msra.mxu0 0.0
    %3440 = vmatprep.subr.mxu0 0.0
    %3441 = vmatpush1.msra.mxu0 0.0
    %3442 = vmatprep.subr.mxu0 0.0
    %3443 = vmatpush1.msra.mxu0 0.0
    %3444 = vmatprep.subr.mxu0 0.0
    %3445 = vmatpush1.msra.mxu0 0.0
    %3446 = vmatprep.subr.mxu0 0.0
    %3447 = vmatpush1.msra.mxu0 0.0
    %3448 = vmatprep.subr.mxu0 0.0
    %3449 = vmatpush1.msra.mxu0 0.0
    %3450 = vmatprep.subr.mxu0 0.0
    %3451 = vmatpush1.msra.mxu0 0.0
    %3452 = vmatprep.subr.mxu0 0.0
    %3453 = vmatpush1.msra.mxu0 0.0
    %3454 = vmatprep.subr.mxu0 0.0
    %3455 = vmatpush1.msra.mxu0 0.0
    %3456 = vmatprep.subr.mxu0 0.0
    %3457 = vmatpush1.msra.mxu0 0.0
    %3458 = vmatprep.subr.mxu0 0.0
    %3459 = vmatpush1.msra.mxu0 0.0
    %3460 = vmatprep.subr.mxu0 0.0
    %3461 = vmatpush1.msra.mxu0 0.0
    %3462 = vmatprep.subr.mxu0 0.0
    %3463 = vmatpush1.msra.mxu0 0.0
    %3464 = vmatprep.subr.mxu0 0.0
    %3465 = vmatpush1.msra.mxu0 0.0
    %3466 = vmatprep.subr.mxu0 0.0
    %3467 = vmatpush1.msra.mxu0 0.0
    %3468 = vmatprep.subr.mxu0 0.0
    %3469 = vmatpush1.msra.mxu0 0.0
    %3470 = vmatprep.subr.mxu0 0.0
    %3471 = vmatpush1.msra.mxu0 0.0
    %3472 = vmatprep.subr.mxu0 0.0
    %3473 = vmatpush1.msra.mxu0 0.0
    %3474 = vmatprep.subr.mxu0 0.0
    %3475 = vmatpush1.msra.mxu0 0.0
    %3476 = vmatprep.subr.mxu0 0.0
    %3477 = vmatpush1.msra.mxu0 0.0
    %3478 = vmatprep.subr.mxu0 0.0
    %3479 = vmatpush1.msra.mxu0 0.0
    %3480 = vmatprep.subr.mxu0 0.0
    %3481 = vmatpush1.msra.mxu0 0.0
    %3482 = vmatprep.subr.mxu0 0.0
    %3483 = vmatpush1.msra.mxu0 0.0
    %3484 = vmatprep.subr.mxu0 0.0
    %3485 = vmatpush1.msra.mxu0 0.0
    %3486 = vmatprep.mubr.f32.mxu0 0.0
    %3487 = vmatmul.mubr.f32.gmra.mrb[0].mxu0 %v3420
    %v3488 = vpop.f32.mrb[0].mxu0
    %v3489 = vadd.f32 0.0, %v3488
    %v3490 = vpop.f32.mrb[0].mxu0
    %3491 = vdwg.mxu0
    %3493 = vrot.lane.b32.xlu0 %v2138, 32
    %v3494 = vpop.permute.xlu0 %3493
    %v3497 = vsel %vm183, %v3413, 0
    %v3500 = vsel %vm183, %v3489, 0
    %3502 = vmatprep.subr.mxu0 0.0
    %3503 = vmatpush1.msra.mxu0 %v3494
    %3504 = vmatprep.subr.mxu0 0.0
    %3505 = vmatpush1.msra.mxu0 0.0
    %3506 = vmatprep.subr.mxu0 0.0
    %3507 = vmatpush1.msra.mxu0 0.0
    %3508 = vmatprep.subr.mxu0 0.0
    %3509 = vmatpush1.msra.mxu0 0.0
    %3510 = vmatprep.subr.mxu0 0.0
    %3511 = vmatpush1.msra.mxu0 0.0
    %3512 = vmatprep.subr.mxu0 0.0
    %3513 = vmatpush1.msra.mxu0 0.0
    %3514 = vmatprep.subr.mxu0 0.0
    %3515 = vmatpush1.msra.mxu0 0.0
    %3516 = vmatprep.subr.mxu0 0.0
    %3517 = vmatpush1.msra.mxu0 0.0
    %3518 = vmatprep.subr.mxu0 0.0
    %3519 = vmatpush1.msra.mxu0 0.0
    %3520 = vmatprep.subr.mxu0 0.0
    %3521 = vmatpush1.msra.mxu0 0.0
    %3522 = vmatprep.subr.mxu0 0.0
    %3523 = vmatpush1.msra.mxu0 0.0
    %3524 = vmatprep.subr.mxu0 0.0
    %3525 = vmatpush1.msra.mxu0 0.0
    %3526 = vmatprep.subr.mxu0 0.0
    %3527 = vmatpush1.msra.mxu0 0.0
    %3528 = vmatprep.subr.mxu0 0.0
    %3529 = vmatpush1.msra.mxu0 0.0
    %3530 = vmatprep.subr.mxu0 0.0
    %3531 = vmatpush1.msra.mxu0 0.0
    %3532 = vmatprep.subr.mxu0 0.0
    %3533 = vmatpush1.msra.mxu0 0.0
    %3534 = vmatprep.subr.mxu0 0.0
    %3535 = vmatpush1.msra.mxu0 0.0
    %3536 = vmatprep.subr.mxu0 0.0
    %3537 = vmatpush1.msra.mxu0 0.0
    %3538 = vmatprep.subr.mxu0 0.0
    %3539 = vmatpush1.msra.mxu0 0.0
    %3540 = vmatprep.subr.mxu0 0.0
    %3541 = vmatpush1.msra.mxu0 0.0
    %3542 = vmatprep.subr.mxu0 0.0
    %3543 = vmatpush1.msra.mxu0 0.0
    %3544 = vmatprep.subr.mxu0 0.0
    %3545 = vmatpush1.msra.mxu0 0.0
    %3546 = vmatprep.subr.mxu0 0.0
    %3547 = vmatpush1.msra.mxu0 0.0
    %3548 = vmatprep.subr.mxu0 0.0
    %3549 = vmatpush1.msra.mxu0 0.0
    %3550 = vmatprep.subr.mxu0 0.0
    %3551 = vmatpush1.msra.mxu0 0.0
    %3552 = vmatprep.subr.mxu0 0.0
    %3553 = vmatpush1.msra.mxu0 0.0
    %3554 = vmatprep.subr.mxu0 0.0
    %3555 = vmatpush1.msra.mxu0 0.0
    %3556 = vmatprep.subr.mxu0 0.0
    %3557 = vmatpush1.msra.mxu0 0.0
    %3558 = vmatprep.subr.mxu0 0.0
    %3559 = vmatpush1.msra.mxu0 0.0
    %3560 = vmatprep.subr.mxu0 0.0
    %3561 = vmatpush1.msra.mxu0 0.0
    %3562 = vmatprep.subr.mxu0 0.0
    %3563 = vmatpush1.msra.mxu0 0.0
    %3564 = vmatprep.subr.mxu0 0.0
    %3565 = vmatpush1.msra.mxu0 0.0
    %3566 = vmatprep.mubr.f32.mxu0 0.0
    %3567 = vmatmul.mubr.f32.gmra.mrb[0].mxu0 %v3497
    %v3568 = vpop.f32.mrb[0].mxu0
    %v3569 = vadd.f32 0.0, %v3568
    %v3570 = vpop.f32.mrb[0].mxu0
    %3571 = vmatprep.mubr.f32.mxu0 0.0
    %3572 = vmatmul.mubr.f32.gmra.mrb[0].mxu0 %v3500
    %v3573 = vpop.f32.mrb[0].mxu0
    %v3574 = vadd.f32 0.0, %v3573
    %v3575 = vpop.f32.mrb[0].mxu0
    %3576 = vdwg.mxu0
    %v3577 = vadd.f32 %v3136, %v3569
    %v3578 = vadd.f32 %v3141, %v3574
    %3579 = vrot.lane.b32.xlu0 %v2272, 72
    %v3580 = vpop.permute.xlu0 %3579
    %3581 = vrot.lane.b32.xlu0 %v2272, 104
    %v3582 = vpop.permute.xlu0 %3581
    %v3583 = vsel %vm183, %v3580, 0
    %v3585 = vsel %vm183, %v3582, 0
    %3587 = vmatprep.subr.mxu0 0.0
    %3588 = vmatpush1.xpose.msra.mxu0 %v3585
    %3589 = vmatprep.subr.mxu0 0.0
    %3590 = vmatpush1.xpose.msra.mxu0 0.0
    %3591 = vmatprep.subr.mxu0 0.0
    %3592 = vmatpush1.xpose.msra.mxu0 0.0
    %3593 = vmatprep.subr.mxu0 0.0
    %3594 = vmatpush1.xpose.msra.mxu0 0.0
    %3595 = vmatprep.subr.mxu0 0.0
    %3596 = vmatpush1.xpose.msra.mxu0 0.0
    %3597 = vmatprep.subr.mxu0 0.0
    %3598 = vmatpush1.xpose.msra.mxu0 0.0
    %3599 = vmatprep.subr.mxu0 0.0
    %3600 = vmatpush1.xpose.msra.mxu0 0.0
    %3601 = vmatprep.subr.mxu0 0.0
    %3602 = vmatpush1.xpose.msra.mxu0 0.0
    %3603 = vmatprep.subr.mxu0 0.0
    %3604 = vmatpush1.xpose.msra.mxu0 0.0
    %3605 = vmatprep.subr.mxu0 0.0
    %3606 = vmatpush1.xpose.msra.mxu0 0.0
    %3607 = vmatprep.subr.mxu0 0.0
    %3608 = vmatpush1.xpose.msra.mxu0 0.0
    %3609 = vmatprep.subr.mxu0 0.0
    %3610 = vmatpush1.xpose.msra.mxu0 0.0
    %3611 = vmatprep.subr.mxu0 0.0
    %3612 = vmatpush1.xpose.msra.mxu0 0.0
    %3613 = vmatprep.subr.mxu0 0.0
    %3614 = vmatpush1.xpose.msra.mxu0 0.0
    %3615 = vmatprep.subr.mxu0 0.0
    %3616 = vmatpush1.xpose.msra.mxu0 0.0
    %3617 = vmatprep.subr.mxu0 0.0
    %3618 = vmatpush1.xpose.msra.mxu0 0.0
    %3619 = vmatprep.subr.mxu0 0.0
    %3620 = vmatpush1.xpose.msra.mxu0 0.0
    %3621 = vmatprep.subr.mxu0 0.0
    %3622 = vmatpush1.xpose.msra.mxu0 0.0
    %3623 = vmatprep.subr.mxu0 0.0
    %3624 = vmatpush1.xpose.msra.mxu0 0.0
    %3625 = vmatprep.subr.mxu0 0.0
    %3626 = vmatpush1.xpose.msra.mxu0 0.0
    %3627 = vmatprep.subr.mxu0 0.0
    %3628 = vmatpush1.xpose.msra.mxu0 0.0
    %3629 = vmatprep.subr.mxu0 0.0
    %3630 = vmatpush1.xpose.msra.mxu0 0.0
    %3631 = vmatprep.subr.mxu0 0.0
    %3632 = vmatpush1.xpose.msra.mxu0 0.0
    %3633 = vmatprep.subr.mxu0 0.0
    %3634 = vmatpush1.xpose.msra.mxu0 0.0
    %3635 = vmatprep.subr.mxu0 0.0
    %3636 = vmatpush1.xpose.msra.mxu0 0.0
    %3637 = vmatprep.subr.mxu0 0.0
    %3638 = vmatpush1.xpose.msra.mxu0 0.0
    %3639 = vmatprep.subr.mxu0 0.0
    %3640 = vmatpush1.xpose.msra.mxu0 0.0
    %3641 = vmatprep.subr.mxu0 0.0
    %3642 = vmatpush1.xpose.msra.mxu0 0.0
    %3643 = vmatprep.subr.mxu0 0.0
    %3644 = vmatpush1.xpose.msra.mxu0 0.0
    %3645 = vmatprep.subr.mxu0 0.0
    %3646 = vmatpush1.xpose.msra.mxu0 0.0
    %3647 = vmatprep.subr.mxu0 0.0
    %3648 = vmatpush1.xpose.msra.mxu0 0.0
    %3649 = vmatprep.subr.mxu0 0.0
    %3650 = vmatpush1.xpose.msra.mxu0 0.0
    %3651 = vmatprep.mubr.f32.mxu0 0.0
    %3652 = vmatmul.mubr.f32.gmra.mrb[0].mxu0 %v3583
    %v3653 = vpop.f32.mrb[0].mxu0
    %v3654 = vadd.f32 0.0, %v3653
    %v3655 = vpop.f32.mrb[0].mxu0
    %3656 = vdwg.mxu0
    %3657 = vrot.lane.b32.xlu0 %v2277, 72
    %v3658 = vpop.permute.xlu0 %3657
    %3659 = vrot.lane.b32.xlu0 %v2277, 104
    %v3660 = vpop.permute.xlu0 %3659
    %v3661 = vsel %vm183, %v3658, 0
    %v3663 = vsel %vm183, %v3660, 0
    %3665 = vmatprep.subr.mxu0 0.0
    %3666 = vmatpush1.xpose.msra.mxu0 %v3663
    %3667 = vmatprep.subr.mxu0 0.0
    %3668 = vmatpush1.xpose.msra.mxu0 0.0
    %3669 = vmatprep.subr.mxu0 0.0
    %3670 = vmatpush1.xpose.msra.mxu0 0.0
    %3671 = vmatprep.subr.mxu0 0.0
    %3672 = vmatpush1.xpose.msra.mxu0 0.0
    %3673 = vmatprep.subr.mxu0 0.0
    %3674 = vmatpush1.xpose.msra.mxu0 0.0
    %3675 = vmatprep.subr.mxu0 0.0
    %3676 = vmatpush1.xpose.msra.mxu0 0.0
    %3677 = vmatprep.subr.mxu0 0.0
    %3678 = vmatpush1.xpose.msra.mxu0 0.0
    %3679 = vmatprep.subr.mxu0 0.0
    %3680 = vmatpush1.xpose.msra.mxu0 0.0
    %3681 = vmatprep.subr.mxu0 0.0
    %3682 = vmatpush1.xpose.msra.mxu0 0.0
    %3683 = vmatprep.subr.mxu0 0.0
    %3684 = vmatpush1.xpose.msra.mxu0 0.0
    %3685 = vmatprep.subr.mxu0 0.0
    %3686 = vmatpush1.xpose.msra.mxu0 0.0
    %3687 = vmatprep.subr.mxu0 0.0
    %3688 = vmatpush1.xpose.msra.mxu0 0.0
    %3689 = vmatprep.subr.mxu0 0.0
    %3690 = vmatpush1.xpose.msra.mxu0 0.0
    %3691 = vmatprep.subr.mxu0 0.0
    %3692 = vmatpush1.xpose.msra.mxu0 0.0
    %3693 = vmatprep.subr.mxu0 0.0
    %3694 = vmatpush1.xpose.msra.mxu0 0.0
    %3695 = vmatprep.subr.mxu0 0.0
    %3696 = vmatpush1.xpose.msra.mxu0 0.0
    %3697 = vmatprep.subr.mxu0 0.0
    %3698 = vmatpush1.xpose.msra.mxu0 0.0
    %3699 = vmatprep.subr.mxu0 0.0
    %3700 = vmatpush1.xpose.msra.mxu0 0.0
    %3701 = vmatprep.subr.mxu0 0.0
    %3702 = vmatpush1.xpose.msra.mxu0 0.0
    %3703 = vmatprep.subr.mxu0 0.0
    %3704 = vmatpush1.xpose.msra.mxu0 0.0
    %3705 = vmatprep.subr.mxu0 0.0
    %3706 = vmatpush1.xpose.msra.mxu0 0.0
    %3707 = vmatprep.subr.mxu0 0.0
    %3708 = vmatpush1.xpose.msra.mxu0 0.0
    %3709 = vmatprep.subr.mxu0 0.0
    %3710 = vmatpush1.xpose.msra.mxu0 0.0
    %3711 = vmatprep.subr.mxu0 0.0
    %3712 = vmatpush1.xpose.msra.mxu0 0.0
    %3713 = vmatprep.subr.mxu0 0.0
    %3714 = vmatpush1.xpose.msra.mxu0 0.0
    %3715 = vmatprep.subr.mxu0 0.0
    %3716 = vmatpush1.xpose.msra.mxu0 0.0
    %3717 = vmatprep.subr.mxu0 0.0
    %3718 = vmatpush1.xpose.msra.mxu0 0.0
    %3719 = vmatprep.subr.mxu0 0.0
    %3720 = vmatpush1.xpose.msra.mxu0 0.0
    %3721 = vmatprep.subr.mxu0 0.0
    %3722 = vmatpush1.xpose.msra.mxu0 0.0
    %3723 = vmatprep.subr.mxu0 0.0
    %3724 = vmatpush1.xpose.msra.mxu0 0.0
    %3725 = vmatprep.subr.mxu0 0.0
    %3726 = vmatpush1.xpose.msra.mxu0 0.0
    %3727 = vmatprep.subr.mxu0 0.0
    %3728 = vmatpush1.xpose.msra.mxu0 0.0
    %3729 = vmatprep.mubr.f32.mxu0 0.0
    %3730 = vmatmul.mubr.f32.gmra.mrb[0].mxu0 %v3661
    %v3731 = vpop.f32.mrb[0].mxu0
    %v3732 = vadd.f32 0.0, %v3731
    %v3733 = vpop.f32.mrb[0].mxu0
    %3734 = vdwg.mxu0
    %v3735 = vsel %vm336, %v3654, -inf
    %v3736 = vsel %vm336, %v3732, -inf
    %v3737 = vsel %vm183, %v3735, -inf
    %v3738 = vrot.slane %v3737, 4
    %v3739 = vmax.f32 %v3737, %v3738
    %v3740 = vrot.slane %v3739, 2
    %v3741 = vmax.f32 %v3739, %v3740
    %v3742 = vrot.slane %v3741, 1
    %v3743 = vmax.f32 %v3741, %v3742
    %v3744 = vsel %vm183, %v3736, -inf
    %v3745 = vrot.slane %v3744, 4
    %v3746 = vmax.f32 %v3744, %v3745
    %v3747 = vrot.slane %v3746, 2
    %v3748 = vmax.f32 %v3746, %v3747
    %v3749 = vrot.slane %v3748, 1
    %v3750 = vmax.f32 %v3748, %v3749
    %v3751 = vsub.f32 %v3735, %v3743
    %v3752 = vsub.f32 %v3736, %v3750
    %v3753 = vmul.f32 %v3751, 1.442695
    %v3754 = vpow.pop %v3753
    %v3755 = vmul.f32 %v3752, 1.442695
    %v3756 = vpow.pop %v3755
    %v3757 = vsel %vm183, %v3754, 0.0
    %v3758 = vrot.slane %v3757, 4
    %v3759 = vadd.f32 %v3757, %v3758
    %v3760 = vrot.slane %v3759, 2
    %v3761 = vadd.f32 %v3759, %v3760
    %v3762 = vrot.slane %v3761, 1
    %v3763 = vadd.f32 %v3761, %v3762
    %v3764 = vsel %vm183, %v3756, 0.0
    %v3765 = vrot.slane %v3764, 4
    %v3766 = vadd.f32 %v3764, %v3765
    %v3767 = vrot.slane %v3766, 2
    %v3768 = vadd.f32 %v3766, %v3767
    %v3769 = vrot.slane %v3768, 1
    %v3770 = vadd.f32 %v3768, %v3769
    %v3771 = vrcp.pop %v3763
    %v3772 = vrcp.pop %v3770
    %v3773 = vmul.f32 %v3754, %v3771
    %v3774 = vmul.f32 %v3756, %v3772
    %3775 = vrot.lane.b32.xlu0 %v2272, 40
    %v3776 = vpop.permute.xlu0 %3775
    %v3779 = vsel %vm183, %v3773, 0
    %3781 = vmatprep.subr.mxu0 0.0
    %3782 = vmatpush1.msra.mxu0 %v3776
    %3783 = vmatprep.subr.mxu0 0.0
    %3784 = vmatpush1.msra.mxu0 0.0
    %3785 = vmatprep.subr.mxu0 0.0
    %3786 = vmatpush1.msra.mxu0 0.0
    %3787 = vmatprep.subr.mxu0 0.0
    %3788 = vmatpush1.msra.mxu0 0.0
    %3789 = vmatprep.subr.mxu0 0.0
    %3790 = vmatpush1.msra.mxu0 0.0
    %3791 = vmatprep.subr.mxu0 0.0
    %3792 = vmatpush1.msra.mxu0 0.0
    %3793 = vmatprep.subr.mxu0 0.0
    %3794 = vmatpush1.msra.mxu0 0.0
    %3795 = vmatprep.subr.mxu0 0.0
    %3796 = vmatpush1.msra.mxu0 0.0
    %3797 = vmatprep.subr.mxu0 0.0
    %3798 = vmatpush1.msra.mxu0 0.0
    %3799 = vmatprep.subr.mxu0 0.0
    %3800 = vmatpush1.msra.mxu0 0.0
    %3801 = vmatprep.subr.mxu0 0.0
    %3802 = vmatpush1.msra.mxu0 0.0
    %3803 = vmatprep.subr.mxu0 0.0
    %3804 = vmatpush1.msra.mxu0 0.0
    %3805 = vmatprep.subr.mxu0 0.0
    %3806 = vmatpush1.msra.mxu0 0.0
    %3807 = vmatprep.subr.mxu0 0.0
    %3808 = vmatpush1.msra.mxu0 0.0
    %3809 = vmatprep.subr.mxu0 0.0
    %3810 = vmatpush1.msra.mxu0 0.0
    %3811 = vmatprep.subr.mxu0 0.0
    %3812 = vmatpush1.msra.mxu0 0.0
    %3813 = vmatprep.subr.mxu0 0.0
    %3814 = vmatpush1.msra.mxu0 0.0
    %3815 = vmatprep.subr.mxu0 0.0
    %3816 = vmatpush1.msra.mxu0 0.0
    %3817 = vmatprep.subr.mxu0 0.0
    %3818 = vmatpush1.msra.mxu0 0.0
    %3819 = vmatprep.subr.mxu0 0.0
    %3820 = vmatpush1.msra.mxu0 0.0
    %3821 = vmatprep.subr.mxu0 0.0
    %3822 = vmatpush1.msra.mxu0 0.0
    %3823 = vmatprep.subr.mxu0 0.0
    %3824 = vmatpush1.msra.mxu0 0.0
    %3825 = vmatprep.subr.mxu0 0.0
    %3826 = vmatpush1.msra.mxu0 0.0
    %3827 = vmatprep.subr.mxu0 0.0
    %3828 = vmatpush1.msra.mxu0 0.0
    %3829 = vmatprep.subr.mxu0 0.0
    %3830 = vmatpush1.msra.mxu0 0.0
    %3831 = vmatprep.subr.mxu0 0.0
    %3832 = vmatpush1.msra.mxu0 0.0
    %3833 = vmatprep.subr.mxu0 0.0
    %3834 = vmatpush1.msra.mxu0 0.0
    %3835 = vmatprep.subr.mxu0 0.0
    %3836 = vmatpush1.msra.mxu0 0.0
    %3837 = vmatprep.subr.mxu0 0.0
    %3838 = vmatpush1.msra.mxu0 0.0
    %3839 = vmatprep.subr.mxu0 0.0
    %3840 = vmatpush1.msra.mxu0 0.0
    %3841 = vmatprep.subr.mxu0 0.0
    %3842 = vmatpush1.msra.mxu0 0.0
    %3843 = vmatprep.subr.mxu0 0.0
    %3844 = vmatpush1.msra.mxu0 0.0
    %3845 = vmatprep.mubr.f32.mxu0 0.0
    %3846 = vmatmul.mubr.f32.gmra.mrb[0].mxu0 %v3779
    %v3847 = vpop.f32.mrb[0].mxu0
    %v3848 = vadd.f32 0.0, %v3847
    %v3849 = vpop.f32.mrb[0].mxu0
    %3850 = vdwg.mxu0
    %3851 = vrot.lane.b32.xlu0 %v2277, 40
    %v3852 = vpop.permute.xlu0 %3851
    %v3855 = vsel %vm183, %v3774, 0
    %3857 = vmatprep.subr.mxu0 0.0
    %3858 = vmatpush1.msra.mxu0 %v3852
    %3859 = vmatprep.subr.mxu0 0.0
    %3860 = vmatpush1.msra.mxu0 0.0
    %3861 = vmatprep.subr.mxu0 0.0
    %3862 = vmatpush1.msra.mxu0 0.0
    %3863 = vmatprep.subr.mxu0 0.0
    %3864 = vmatpush1.msra.mxu0 0.0
    %3865 = vmatprep.subr.mxu0 0.0
    %3866 = vmatpush1.msra.mxu0 0.0
    %3867 = vmatprep.subr.mxu0 0.0
    %3868 = vmatpush1.msra.mxu0 0.0
    %3869 = vmatprep.subr.mxu0 0.0
    %3870 = vmatpush1.msra.mxu0 0.0
    %3871 = vmatprep.subr.mxu0 0.0
    %3872 = vmatpush1.msra.mxu0 0.0
    %3873 = vmatprep.subr.mxu0 0.0
    %3874 = vmatpush1.msra.mxu0 0.0
    %3875 = vmatprep.subr.mxu0 0.0
    %3876 = vmatpush1.msra.mxu0 0.0
    %3877 = vmatprep.subr.mxu0 0.0
    %3878 = vmatpush1.msra.mxu0 0.0
    %3879 = vmatprep.subr.mxu0 0.0
    %3880 = vmatpush1.msra.mxu0 0.0
    %3881 = vmatprep.subr.mxu0 0.0
    %3882 = vmatpush1.msra.mxu0 0.0
    %3883 = vmatprep.subr.mxu0 0.0
    %3884 = vmatpush1.msra.mxu0 0.0
    %3885 = vmatprep.subr.mxu0 0.0
    %3886 = vmatpush1.msra.mxu0 0.0
    %3887 = vmatprep.subr.mxu0 0.0
    %3888 = vmatpush1.msra.mxu0 0.0
    %3889 = vmatprep.subr.mxu0 0.0
    %3890 = vmatpush1.msra.mxu0 0.0
    %3891 = vmatprep.subr.mxu0 0.0
    %3892 = vmatpush1.msra.mxu0 0.0
    %3893 = vmatprep.subr.mxu0 0.0
    %3894 = vmatpush1.msra.mxu0 0.0
    %3895 = vmatprep.subr.mxu0 0.0
    %3896 = vmatpush1.msra.mxu0 0.0
    %3897 = vmatprep.subr.mxu0 0.0
    %3898 = vmatpush1.msra.mxu0 0.0
    %3899 = vmatprep.subr.mxu0 0.0
    %3900 = vmatpush1.msra.mxu0 0.0
    %3901 = vmatprep.subr.mxu0 0.0
    %3902 = vmatpush1.msra.mxu0 0.0
    %3903 = vmatprep.subr.mxu0 0.0
    %3904 = vmatpush1.msra.mxu0 0.0
    %3905 = vmatprep.subr.mxu0 0.0
    %3906 = vmatpush1.msra.mxu0 0.0
    %3907 = vmatprep.subr.mxu0 0.0
    %3908 = vmatpush1.msra.mxu0 0.0
    %3909 = vmatprep.subr.mxu0 0.0
    %3910 = vmatpush1.msra.mxu0 0.0
    %3911 = vmatprep.subr.mxu0 0.0
    %3912 = vmatpush1.msra.mxu0 0.0
    %3913 = vmatprep.subr.mxu0 0.0
    %3914 = vmatpush1.msra.mxu0 0.0
    %3915 = vmatprep.subr.mxu0 0.0
    %3916 = vmatpush1.msra.mxu0 0.0
    %3917 = vmatprep.subr.mxu0 0.0
    %3918 = vmatpush1.msra.mxu0 0.0
    %3919 = vmatprep.subr.mxu0 0.0
    %3920 = vmatpush1.msra.mxu0 0.0
    %3921 = vmatprep.mubr.f32.mxu0 0.0
    %3922 = vmatmul.mubr.f32.gmra.mrb[0].mxu0 %v3855
    %v3923 = vpop.f32.mrb[0].mxu0
    %v3924 = vadd.f32 0.0, %v3923
    %v3925 = vpop.f32.mrb[0].mxu0
    %3926 = vdwg.mxu0
    %3928 = vrot.lane.b32.xlu0 %v2140, 32
    %v3929 = vpop.permute.xlu0 %3928
    %v3932 = vsel %vm183, %v3848, 0
    %v3935 = vsel %vm183, %v3924, 0
    %3937 = vmatprep.subr.mxu0 0.0
    %3938 = vmatpush1.msra.mxu0 %v3929
    %3939 = vmatprep.subr.mxu0 0.0
    %3940 = vmatpush1.msra.mxu0 0.0
    %3941 = vmatprep.subr.mxu0 0.0
    %3942 = vmatpush1.msra.mxu0 0.0
    %3943 = vmatprep.subr.mxu0 0.0
    %3944 = vmatpush1.msra.mxu0 0.0
    %3945 = vmatprep.subr.mxu0 0.0
    %3946 = vmatpush1.msra.mxu0 0.0
    %3947 = vmatprep.subr.mxu0 0.0
    %3948 = vmatpush1.msra.mxu0 0.0
    %3949 = vmatprep.subr.mxu0 0.0
    %3950 = vmatpush1.msra.mxu0 0.0
    %3951 = vmatprep.subr.mxu0 0.0
    %3952 = vmatpush1.msra.mxu0 0.0
    %3953 = vmatprep.subr.mxu0 0.0
    %3954 = vmatpush1.msra.mxu0 0.0
    %3955 = vmatprep.subr.mxu0 0.0
    %3956 = vmatpush1.msra.mxu0 0.0
    %3957 = vmatprep.subr.mxu0 0.0
    %3958 = vmatpush1.msra.mxu0 0.0
    %3959 = vmatprep.subr.mxu0 0.0
    %3960 = vmatpush1.msra.mxu0 0.0
    %3961 = vmatprep.subr.mxu0 0.0
    %3962 = vmatpush1.msra.mxu0 0.0
    %3963 = vmatprep.subr.mxu0 0.0
    %3964 = vmatpush1.msra.mxu0 0.0
    %3965 = vmatprep.subr.mxu0 0.0
    %3966 = vmatpush1.msra.mxu0 0.0
    %3967 = vmatprep.subr.mxu0 0.0
    %3968 = vmatpush1.msra.mxu0 0.0
    %3969 = vmatprep.subr.mxu0 0.0
    %3970 = vmatpush1.msra.mxu0 0.0
    %3971 = vmatprep.subr.mxu0 0.0
    %3972 = vmatpush1.msra.mxu0 0.0
    %3973 = vmatprep.subr.mxu0 0.0
    %3974 = vmatpush1.msra.mxu0 0.0
    %3975 = vmatprep.subr.mxu0 0.0
    %3976 = vmatpush1.msra.mxu0 0.0
    %3977 = vmatprep.subr.mxu0 0.0
    %3978 = vmatpush1.msra.mxu0 0.0
    %3979 = vmatprep.subr.mxu0 0.0
    %3980 = vmatpush1.msra.mxu0 0.0
    %3981 = vmatprep.subr.mxu0 0.0
    %3982 = vmatpush1.msra.mxu0 0.0
    %3983 = vmatprep.subr.mxu0 0.0
    %3984 = vmatpush1.msra.mxu0 0.0
    %3985 = vmatprep.subr.mxu0 0.0
    %3986 = vmatpush1.msra.mxu0 0.0
    %3987 = vmatprep.subr.mxu0 0.0
    %3988 = vmatpush1.msra.mxu0 0.0
    %3989 = vmatprep.subr.mxu0 0.0
    %3990 = vmatpush1.msra.mxu0 0.0
    %3991 = vmatprep.subr.mxu0 0.0
    %3992 = vmatpush1.msra.mxu0 0.0
    %3993 = vmatprep.subr.mxu0 0.0
    %3994 = vmatpush1.msra.mxu0 0.0
    %3995 = vmatprep.subr.mxu0 0.0
    %3996 = vmatpush1.msra.mxu0 0.0
    %3997 = vmatprep.subr.mxu0 0.0
    %3998 = vmatpush1.msra.mxu0 0.0
    %3999 = vmatprep.subr.mxu0 0.0
    %4000 = vmatpush1.msra.mxu0 0.0
    %4001 = vmatprep.mubr.f32.mxu0 0.0
    %4002 = vmatmul.mubr.f32.gmra.mrb[0].mxu0 %v3932
    %v4003 = vpop.f32.mrb[0].mxu0
    %v4004 = vadd.f32 0.0, %v4003
    %v4005 = vpop.f32.mrb[0].mxu0
    %4006 = vmatprep.mubr.f32.mxu0 0.0
    %4007 = vmatmul.mubr.f32.gmra.mrb[0].mxu0 %v3935
    %v4008 = vpop.f32.mrb[0].mxu0
    %v4009 = vadd.f32 0.0, %v4008
    %v4010 = vpop.f32.mrb[0].mxu0
    %4011 = vdwg.mxu0
    %v4012 = vadd.f32 %v3577, %v4004
    %v4013 = vadd.f32 %v3578, %v4009
    %v4014 = vadd.f32 %v2131, %v4012
    %v4015 = vadd.f32 %v2132, %v4013
    %v4016 = vlaneseq
    %v4017 = vshrl.u32 %v4016, 7
    %v4018 = vsub.s32 4, %v4017
    %v4019 = vrot.slane %v2160, %v4018
    %v4020 = vadd.f32 %v4014, %v4019
    %v4021 = vadd.f32 %v4015, %v4019
    %v4022 = vsel %vm59, %v4020, 0.0
    %4023 = vadd.xlane.f32.xlu0 %v4022
    %v4024 = vpop.xlane.xlu0 %4023
    %v4025 = vsel %vm59, %v4021, 0.0
    %4026 = vadd.xlane.f32.xlu0 %v4025
    %v4027 = vpop.xlane.xlu0 %4026
    %v4028 = vmul.f32 %v4024, %v66
    %v4029 = vmul.f32 %v4027, %v66
    %v4030 = vsub.f32 %v4020, %v4028
    %v4031 = vsub.f32 %v4021, %v4029
    %v4032 = vmul.f32 %v4030, %v4030
    %v4033 = vmul.f32 %v4031, %v4031
    %v4034 = vsel %vm59, %v4032, 0.0
    %4035 = vadd.xlane.f32.xlu0 %v4034
    %v4036 = vpop.xlane.xlu0 %4035
    %v4037 = vsel %vm59, %v4033, 0.0
    %4038 = vadd.xlane.f32.xlu0 %v4037
    %v4039 = vpop.xlane.xlu0 %4038
    %v4040 = vmul.f32 %v4036, %v66
    %v4041 = vmul.f32 %v4039, %v66
    %v4042 = vadd.f32 %v4040, 1e-05
    %v4043 = vadd.f32 %v4041, 1e-05
    %v4044 = vrsqrt.pop %v4042
    %v4045 = vrsqrt.pop %v4043
    %v4046 = vmul.f32 %v4030, %v4044
    %v4047 = vmul.f32 %v4031, %v4045
    %v4048 = vlaneseq
    %v4049 = vshrl.u32 %v4048, 7
    %v4050 = vsub.s32 2, %v4049
    %v4051 = vrot.slane %v2160, %v4050
    %v4052 = vmul.f32 %v4046, %v4051
    %v4053 = vmul.f32 %v4047, %v4051
    %v4054 = vlaneseq
    %v4055 = vshrl.u32 %v4054, 7
    %v4056 = vsub.s32 3, %v4055
    %v4057 = vrot.slane %v2160, %v4056
    %v4058 = vadd.f32 %v4052, %v4057
    %v4059 = vadd.f32 %v4053, %v4057
    %v4060 = vlaneseq
    %v4061 = vshrl.u32 %v4060, 7
    %v4062 = vsub.s32 6, %v4061
    %v4063 = vrot.slane %v2160, %v4062
    %v4065 = vsel %vm59, %v4058, 0
    %v4068 = vsel %vm59, %v4059, 0
    %4070 = vmatprep.subr.mxu0 0.0
    %4071 = vmatpush1.msra.mxu0 %v2135
    %4072 = vmatprep.subr.mxu0 0.0
    %4073 = vmatpush1.msra.mxu0 %v2137
    %4074 = vmatprep.subr.mxu0 0.0
    %4075 = vmatpush1.msra.mxu0 %v2139
    %4076 = vmatprep.subr.mxu0 0.0
    %4077 = vmatpush1.msra.mxu0 %v2141
    %4078 = vmatprep.subr.mxu0 0.0
    %4079 = vmatpush1.msra.mxu0 0.0
    %4080 = vmatprep.subr.mxu0 0.0
    %4081 = vmatpush1.msra.mxu0 0.0
    %4082 = vmatprep.subr.mxu0 0.0
    %4083 = vmatpush1.msra.mxu0 0.0
    %4084 = vmatprep.subr.mxu0 0.0
    %4085 = vmatpush1.msra.mxu0 0.0
    %4086 = vmatprep.subr.mxu0 0.0
    %4087 = vmatpush1.msra.mxu0 0.0
    %4088 = vmatprep.subr.mxu0 0.0
    %4089 = vmatpush1.msra.mxu0 0.0
    %4090 = vmatprep.subr.mxu0 0.0
    %4091 = vmatpush1.msra.mxu0 0.0
    %4092 = vmatprep.subr.mxu0 0.0
    %4093 = vmatpush1.msra.mxu0 0.0
    %4094 = vmatprep.subr.mxu0 0.0
    %4095 = vmatpush1.msra.mxu0 0.0
    %4096 = vmatprep.subr.mxu0 0.0
    %4097 = vmatpush1.msra.mxu0 0.0
    %4098 = vmatprep.subr.mxu0 0.0
    %4099 = vmatpush1.msra.mxu0 0.0
    %4100 = vmatprep.subr.mxu0 0.0
    %4101 = vmatpush1.msra.mxu0 0.0
    %4102 = vmatprep.subr.mxu0 0.0
    %4103 = vmatpush1.msra.mxu0 0.0
    %4104 = vmatprep.subr.mxu0 0.0
    %4105 = vmatpush1.msra.mxu0 0.0
    %4106 = vmatprep.subr.mxu0 0.0
    %4107 = vmatpush1.msra.mxu0 0.0
    %4108 = vmatprep.subr.mxu0 0.0
    %4109 = vmatpush1.msra.mxu0 0.0
    %4110 = vmatprep.subr.mxu0 0.0
    %4111 = vmatpush1.msra.mxu0 0.0
    %4112 = vmatprep.subr.mxu0 0.0
    %4113 = vmatpush1.msra.mxu0 0.0
    %4114 = vmatprep.subr.mxu0 0.0
    %4115 = vmatpush1.msra.mxu0 0.0
    %4116 = vmatprep.subr.mxu0 0.0
    %4117 = vmatpush1.msra.mxu0 0.0
    %4118 = vmatprep.subr.mxu0 0.0
    %4119 = vmatpush1.msra.mxu0 0.0
    %4120 = vmatprep.subr.mxu0 0.0
    %4121 = vmatpush1.msra.mxu0 0.0
    %4122 = vmatprep.subr.mxu0 0.0
    %4123 = vmatpush1.msra.mxu0 0.0
    %4124 = vmatprep.subr.mxu0 0.0
    %4125 = vmatpush1.msra.mxu0 0.0
    %4126 = vmatprep.subr.mxu0 0.0
    %4127 = vmatpush1.msra.mxu0 0.0
    %4128 = vmatprep.subr.mxu0 0.0
    %4129 = vmatpush1.msra.mxu0 0.0
    %4130 = vmatprep.subr.mxu0 0.0
    %4131 = vmatpush1.msra.mxu0 0.0
    %4132 = vmatprep.subr.mxu0 0.0
    %4133 = vmatpush1.msra.mxu0 0.0
    %4134 = vmatprep.mubr.f32.mxu0 0.0
    %4135 = vmatmul.mubr.f32.gmra.mrb[0].mxu0 %v4065
    %v4136 = vpop.f32.mrb[0].mxu0
    %v4137 = vadd.f32 %v4063, %v4136
    %v4138 = vpop.f32.mrb[0].mxu0
    %4139 = vmatprep.mubr.f32.mxu0 0.0
    %4140 = vmatmul.mubr.f32.gmra.mrb[0].mxu0 %v4068
    %v4141 = vpop.f32.mrb[0].mxu0
    %v4142 = vadd.f32 %v4063, %v4141
    %v4143 = vpop.f32.mrb[0].mxu0
    %4144 = vdwg.mxu0
    %v4145 = vmax.f32 %v4137, 0.0
    %v4146 = vmax.f32 %v4142, 0.0
    %4147 = vmatprep.subr.mxu0 0.0
    %4148 = vmatpush1.msra.mxu0 %v2143
    %4149 = vmatprep.subr.mxu0 0.0
    %4150 = vmatpush1.msra.mxu0 %v2144
    %4151 = vmatprep.subr.mxu0 0.0
    %4152 = vmatpush1.msra.mxu0 %v2145
    %4153 = vmatprep.subr.mxu0 0.0
    %4154 = vmatpush1.msra.mxu0 %v2146
    %4155 = vmatprep.subr.mxu0 0.0
    %4156 = vmatpush1.msra.mxu0 %v2147
    %4157 = vmatprep.subr.mxu0 0.0
    %4158 = vmatpush1.msra.mxu0 %v2148
    %4159 = vmatprep.subr.mxu0 0.0
    %4160 = vmatpush1.msra.mxu0 %v2149
    %4161 = vmatprep.subr.mxu0 0.0
    %4162 = vmatpush1.msra.mxu0 %v2150
    %4163 = vmatprep.subr.mxu0 0.0
    %4164 = vmatpush1.msra.mxu0 %v2151
    %4165 = vmatprep.subr.mxu0 0.0
    %4166 = vmatpush1.msra.mxu0 %v2152
    %4167 = vmatprep.subr.mxu0 0.0
    %4168 = vmatpush1.msra.mxu0 %v2153
    %4169 = vmatprep.subr.mxu0 0.0
    %4170 = vmatpush1.msra.mxu0 %v2154
    %4171 = vmatprep.subr.mxu0 0.0
    %4172 = vmatpush1.msra.mxu0 %v2155
    %4173 = vmatprep.subr.mxu0 0.0
    %4174 = vmatpush1.msra.mxu0 %v2156
    %4175 = vmatprep.subr.mxu0 0.0
    %4176 = vmatpush1.msra.mxu0 %v2157
    %4177 = vmatprep.subr.mxu0 0.0
    %4178 = vmatpush1.msra.mxu0 %v2158
    %4179 = vmatprep.subr.mxu0 0.0
    %4180 = vmatpush1.msra.mxu0 0.0
    %4181 = vmatprep.subr.mxu0 0.0
    %4182 = vmatpush1.msra.mxu0 0.0
    %4183 = vmatprep.subr.mxu0 0.0
    %4184 = vmatpush1.msra.mxu0 0.0
    %4185 = vmatprep.subr.mxu0 0.0
    %4186 = vmatpush1.msra.mxu0 0.0
    %4187 = vmatprep.subr.mxu0 0.0
    %4188 = vmatpush1.msra.mxu0 0.0
    %4189 = vmatprep.subr.mxu0 0.0
    %4190 = vmatpush1.msra.mxu0 0.0
    %4191 = vmatprep.subr.mxu0 0.0
    %4192 = vmatpush1.msra.mxu0 0.0
    %4193 = vmatprep.subr.mxu0 0.0
    %4194 = vmatpush1.msra.mxu0 0.0
    %4195 = vmatprep.subr.mxu0 0.0
    %4196 = vmatpush1.msra.mxu0 0.0
    %4197 = vmatprep.subr.mxu0 0.0
    %4198 = vmatpush1.msra.mxu0 0.0
    %4199 = vmatprep.subr.mxu0 0.0
    %4200 = vmatpush1.msra.mxu0 0.0
    %4201 = vmatprep.subr.mxu0 0.0
    %4202 = vmatpush1.msra.mxu0 0.0
    %4203 = vmatprep.subr.mxu0 0.0
    %4204 = vmatpush1.msra.mxu0 0.0
    %4205 = vmatprep.subr.mxu0 0.0
    %4206 = vmatpush1.msra.mxu0 0.0
    %4207 = vmatprep.subr.mxu0 0.0
    %4208 = vmatpush1.msra.mxu0 0.0
    %4209 = vmatprep.subr.mxu0 0.0
    %4210 = vmatpush1.msra.mxu0 0.0
    %4211 = vmatprep.mubr.f32.mxu0 0.0
    %4212 = vmatmul.mubr.f32.gmra.mrb[0].mxu0 %v4145
    %v4213 = vpop.f32.mrb[0].mxu0
    %v4214 = vadd.f32 0.0, %v4213
    %v4215 = vpop.f32.mrb[0].mxu0
    %4216 = vmatprep.mubr.f32.mxu0 0.0
    %4217 = vmatmul.mubr.f32.gmra.mrb[0].mxu0 %v4146
    %v4218 = vpop.f32.mrb[0].mxu0
    %v4219 = vadd.f32 0.0, %v4218
    %v4220 = vpop.f32.mrb[0].mxu0
    %4221 = vdwg.mxu0
    %v4222 = vadd.f32 %v4020, %v4214
    %v4223 = vadd.f32 %v4021, %v4219
    %v4224 = vlaneseq
    %v4225 = vshrl.u32 %v4224, 7
    %v4226 = vsub.s32 5, %v4225
    %v4227 = vrot.slane %v2160, %v4226
    %v4228 = vadd.f32 %v4222, %v4227
    %v4229 = vadd.f32 %v4223, %v4227
    %s4230 = scalar_lea.vmem %s1, 128
    %v4231 = vld [vmem:[%s4230] sm:$0xff]
    %v4232 = vld [vmem:[%s4230 + $0x8] sm:$0xff]
    %v4233 = vld [vmem:[%s4230 + $0x10] sm:$0xff]
    %v4234 = vld [vmem:[%s4230 + $0x18] sm:$0xff]
    %v4235 = vld [vmem:[%s4230 + $0x20] sm:$0xff]
    %v4236 = vld [vmem:[%s4230 + $0x28] sm:$0xff]
    %v4237 = vld [vmem:[%s4230 + $0x30] sm:$0xff]
    %v4238 = vld [vmem:[%s4230 + $0x38] sm:$0xff]
    %s4239 = scalar_lea.vmem %s2, 256
    %v4240 = vld [vmem:[%s4239] sm:$0xff]
    %v4241 = vld [vmem:[%s4239 + $0x8] sm:$0xff]
    %v4242 = vld [vmem:[%s4239 + $0x10] sm:$0xff]
    %v4243 = vld [vmem:[%s4239 + $0x18] sm:$0xff]
    %v4244 = vld [vmem:[%s4239 + $0x20] sm:$0xff]
    %v4245 = vld [vmem:[%s4239 + $0x28] sm:$0xff]
    %v4246 = vld [vmem:[%s4239 + $0x30] sm:$0xff]
    %v4247 = vld [vmem:[%s4239 + $0x38] sm:$0xff]
    %v4248 = vld [vmem:[%s4239 + $0x40] sm:$0xff]
    %v4249 = vld [vmem:[%s4239 + $0x48] sm:$0xff]
    %v4250 = vld [vmem:[%s4239 + $0x50] sm:$0xff]
    %v4251 = vld [vmem:[%s4239 + $0x58] sm:$0xff]
    %v4252 = vld [vmem:[%s4239 + $0x60] sm:$0xff]
    %v4253 = vld [vmem:[%s4239 + $0x68] sm:$0xff]
    %v4254 = vld [vmem:[%s4239 + $0x70] sm:$0xff]
    %v4255 = vld [vmem:[%s4239 + $0x78] sm:$0xff]
    %s4256 = scalar_lea.vmem %s3, 16
    %v4257 = vld [vmem:[%s4256] sm:$0xff]
    %v4258 = vsel %vm59, %v4228, 0.0
    %4259 = vadd.xlane.f32.xlu0 %v4258
    %v4260 = vpop.xlane.xlu0 %4259
    %v4261 = vsel %vm59, %v4229, 0.0
    %4262 = vadd.xlane.f32.xlu0 %v4261
    %v4263 = vpop.xlane.xlu0 %4262
    %v4264 = vmul.f32 %v4260, %v66
    %v4265 = vmul.f32 %v4263, %v66
    %v4266 = vsub.f32 %v4228, %v4264
    %v4267 = vsub.f32 %v4229, %v4265
    %v4268 = vmul.f32 %v4266, %v4266
    %v4269 = vmul.f32 %v4267, %v4267
    %v4270 = vsel %vm59, %v4268, 0.0
    %4271 = vadd.xlane.f32.xlu0 %v4270
    %v4272 = vpop.xlane.xlu0 %4271
    %v4273 = vsel %vm59, %v4269, 0.0
    %4274 = vadd.xlane.f32.xlu0 %v4273
    %v4275 = vpop.xlane.xlu0 %4274
    %v4276 = vmul.f32 %v4272, %v66
    %v4277 = vmul.f32 %v4275, %v66
    %v4278 = vadd.f32 %v4276, 1e-05
    %v4279 = vadd.f32 %v4277, 1e-05
    %v4280 = vrsqrt.pop %v4278
    %v4281 = vrsqrt.pop %v4279
    %v4282 = vmul.f32 %v4266, %v4280
    %v4283 = vmul.f32 %v4267, %v4281
    %v4284 = vlaneseq
    %v4285 = vshrl.u32 %v4284, 7
    %v4286 = vsub.s32 0, %v4285
    %v4287 = vrot.slane %v4257, %v4286
    %v4288 = vmul.f32 %v4282, %v4287
    %v4289 = vmul.f32 %v4283, %v4287
    %v4290 = vlaneseq
    %v4291 = vshrl.u32 %v4290, 7
    %v4292 = vsub.s32 1, %v4291
    %v4293 = vrot.slane %v4257, %v4292
    %v4294 = vadd.f32 %v4288, %v4293
    %v4295 = vadd.f32 %v4289, %v4293
    %v4297 = vsel %vm59, %v4294, 0
    %v4300 = vsel %vm59, %v4295, 0
    %4302 = vmatprep.subr.mxu0 0.0
    %4303 = vmatpush1.msra.mxu0 %v4231
    %4304 = vmatprep.subr.mxu0 0.0
    %4305 = vmatpush1.msra.mxu0 %v4233
    %4306 = vmatprep.subr.mxu0 0.0
    %4307 = vmatpush1.msra.mxu0 %v4235
    %4308 = vmatprep.subr.mxu0 0.0
    %4309 = vmatpush1.msra.mxu0 %v4237
    %4310 = vmatprep.subr.mxu0 0.0
    %4311 = vmatpush1.msra.mxu0 0.0
    %4312 = vmatprep.subr.mxu0 0.0
    %4313 = vmatpush1.msra.mxu0 0.0
    %4314 = vmatprep.subr.mxu0 0.0
    %4315 = vmatpush1.msra.mxu0 0.0
    %4316 = vmatprep.subr.mxu0 0.0
    %4317 = vmatpush1.msra.mxu0 0.0
    %4318 = vmatprep.subr.mxu0 0.0
    %4319 = vmatpush1.msra.mxu0 0.0
    %4320 = vmatprep.subr.mxu0 0.0
    %4321 = vmatpush1.msra.mxu0 0.0
    %4322 = vmatprep.subr.mxu0 0.0
    %4323 = vmatpush1.msra.mxu0 0.0
    %4324 = vmatprep.subr.mxu0 0.0
    %4325 = vmatpush1.msra.mxu0 0.0
    %4326 = vmatprep.subr.mxu0 0.0
    %4327 = vmatpush1.msra.mxu0 0.0
    %4328 = vmatprep.subr.mxu0 0.0
    %4329 = vmatpush1.msra.mxu0 0.0
    %4330 = vmatprep.subr.mxu0 0.0
    %4331 = vmatpush1.msra.mxu0 0.0
    %4332 = vmatprep.subr.mxu0 0.0
    %4333 = vmatpush1.msra.mxu0 0.0
    %4334 = vmatprep.subr.mxu0 0.0
    %4335 = vmatpush1.msra.mxu0 0.0
    %4336 = vmatprep.subr.mxu0 0.0
    %4337 = vmatpush1.msra.mxu0 0.0
    %4338 = vmatprep.subr.mxu0 0.0
    %4339 = vmatpush1.msra.mxu0 0.0
    %4340 = vmatprep.subr.mxu0 0.0
    %4341 = vmatpush1.msra.mxu0 0.0
    %4342 = vmatprep.subr.mxu0 0.0
    %4343 = vmatpush1.msra.mxu0 0.0
    %4344 = vmatprep.subr.mxu0 0.0
    %4345 = vmatpush1.msra.mxu0 0.0
    %4346 = vmatprep.subr.mxu0 0.0
    %4347 = vmatpush1.msra.mxu0 0.0
    %4348 = vmatprep.subr.mxu0 0.0
    %4349 = vmatpush1.msra.mxu0 0.0
    %4350 = vmatprep.subr.mxu0 0.0
    %4351 = vmatpush1.msra.mxu0 0.0
    %4352 = vmatprep.subr.mxu0 0.0
    %4353 = vmatpush1.msra.mxu0 0.0
    %4354 = vmatprep.subr.mxu0 0.0
    %4355 = vmatpush1.msra.mxu0 0.0
    %4356 = vmatprep.subr.mxu0 0.0
    %4357 = vmatpush1.msra.mxu0 0.0
    %4358 = vmatprep.subr.mxu0 0.0
    %4359 = vmatpush1.msra.mxu0 0.0
    %4360 = vmatprep.subr.mxu0 0.0
    %4361 = vmatpush1.msra.mxu0 0.0
    %4362 = vmatprep.subr.mxu0 0.0
    %4363 = vmatpush1.msra.mxu0 0.0
    %4364 = vmatprep.subr.mxu0 0.0
    %4365 = vmatpush1.msra.mxu0 0.0
    %4366 = vmatprep.mubr.f32.mxu0 0.0
    %4367 = vmatmul.mubr.f32.gmra.mrb[0].mxu0 %v4297
    %v4368 = vpop.f32.mrb[0].mxu0
    %v4369 = vadd.f32 0.0, %v4368
    %v4370 = vpop.f32.mrb[0].mxu0
    %4371 = vmatprep.mubr.f32.mxu0 0.0
    %4372 = vmatmul.mubr.f32.gmra.mrb[0].mxu0 %v4300
    %v4373 = vpop.f32.mrb[0].mxu0
    %v4374 = vadd.f32 0.0, %v4373
    %v4375 = vpop.f32.mrb[0].mxu0
    %4376 = vdwg.mxu0
    %4378 = vrot.lane.b32.xlu0 %v4369, 96
    %v4379 = vpop.permute.xlu0 %4378
    %v4380 = vsel %vm183, %v4379, 0
    %v4382 = vsel %vm183, %v4369, 0
    %4384 = vmatprep.subr.mxu0 0.0
    %4385 = vmatpush1.xpose.msra.mxu0 %v4382
    %4386 = vmatprep.subr.mxu0 0.0
    %4387 = vmatpush1.xpose.msra.mxu0 0.0
    %4388 = vmatprep.subr.mxu0 0.0
    %4389 = vmatpush1.xpose.msra.mxu0 0.0
    %4390 = vmatprep.subr.mxu0 0.0
    %4391 = vmatpush1.xpose.msra.mxu0 0.0
    %4392 = vmatprep.subr.mxu0 0.0
    %4393 = vmatpush1.xpose.msra.mxu0 0.0
    %4394 = vmatprep.subr.mxu0 0.0
    %4395 = vmatpush1.xpose.msra.mxu0 0.0
    %4396 = vmatprep.subr.mxu0 0.0
    %4397 = vmatpush1.xpose.msra.mxu0 0.0
    %4398 = vmatprep.subr.mxu0 0.0
    %4399 = vmatpush1.xpose.msra.mxu0 0.0
    %4400 = vmatprep.subr.mxu0 0.0
    %4401 = vmatpush1.xpose.msra.mxu0 0.0
    %4402 = vmatprep.subr.mxu0 0.0
    %4403 = vmatpush1.xpose.msra.mxu0 0.0
    %4404 = vmatprep.subr.mxu0 0.0
    %4405 = vmatpush1.xpose.msra.mxu0 0.0
    %4406 = vmatprep.subr.mxu0 0.0
    %4407 = vmatpush1.xpose.msra.mxu0 0.0
    %4408 = vmatprep.subr.mxu0 0.0
    %4409 = vmatpush1.xpose.msra.mxu0 0.0
    %4410 = vmatprep.subr.mxu0 0.0
    %4411 = vmatpush1.xpose.msra.mxu0 0.0
    %4412 = vmatprep.subr.mxu0 0.0
    %4413 = vmatpush1.xpose.msra.mxu0 0.0
    %4414 = vmatprep.subr.mxu0 0.0
    %4415 = vmatpush1.xpose.msra.mxu0 0.0
    %4416 = vmatprep.subr.mxu0 0.0
    %4417 = vmatpush1.xpose.msra.mxu0 0.0
    %4418 = vmatprep.subr.mxu0 0.0
    %4419 = vmatpush1.xpose.msra.mxu0 0.0
    %4420 = vmatprep.subr.mxu0 0.0
    %4421 = vmatpush1.xpose.msra.mxu0 0.0
    %4422 = vmatprep.subr.mxu0 0.0
    %4423 = vmatpush1.xpose.msra.mxu0 0.0
    %4424 = vmatprep.subr.mxu0 0.0
    %4425 = vmatpush1.xpose.msra.mxu0 0.0
    %4426 = vmatprep.subr.mxu0 0.0
    %4427 = vmatpush1.xpose.msra.mxu0 0.0
    %4428 = vmatprep.subr.mxu0 0.0
    %4429 = vmatpush1.xpose.msra.mxu0 0.0
    %4430 = vmatprep.subr.mxu0 0.0
    %4431 = vmatpush1.xpose.msra.mxu0 0.0
    %4432 = vmatprep.subr.mxu0 0.0
    %4433 = vmatpush1.xpose.msra.mxu0 0.0
    %4434 = vmatprep.subr.mxu0 0.0
    %4435 = vmatpush1.xpose.msra.mxu0 0.0
    %4436 = vmatprep.subr.mxu0 0.0
    %4437 = vmatpush1.xpose.msra.mxu0 0.0
    %4438 = vmatprep.subr.mxu0 0.0
    %4439 = vmatpush1.xpose.msra.mxu0 0.0
    %4440 = vmatprep.subr.mxu0 0.0
    %4441 = vmatpush1.xpose.msra.mxu0 0.0
    %4442 = vmatprep.subr.mxu0 0.0
    %4443 = vmatpush1.xpose.msra.mxu0 0.0
    %4444 = vmatprep.subr.mxu0 0.0
    %4445 = vmatpush1.xpose.msra.mxu0 0.0
    %4446 = vmatprep.subr.mxu0 0.0
    %4447 = vmatpush1.xpose.msra.mxu0 0.0
    %4448 = vmatprep.mubr.f32.mxu0 0.0
    %4449 = vmatmul.mubr.f32.gmra.mrb[0].mxu0 %v4380
    %v4450 = vpop.f32.mrb[0].mxu0
    %v4451 = vadd.f32 0.0, %v4450
    %v4452 = vpop.f32.mrb[0].mxu0
    %4453 = vdwg.mxu0
    %4455 = vrot.lane.b32.xlu0 %v4374, 96
    %v4456 = vpop.permute.xlu0 %4455
    %v4457 = vsel %vm183, %v4456, 0
    %v4459 = vsel %vm183, %v4374, 0
    %4461 = vmatprep.subr.mxu0 0.0
    %4462 = vmatpush1.xpose.msra.mxu0 %v4459
    %4463 = vmatprep.subr.mxu0 0.0
    %4464 = vmatpush1.xpose.msra.mxu0 0.0
    %4465 = vmatprep.subr.mxu0 0.0
    %4466 = vmatpush1.xpose.msra.mxu0 0.0
    %4467 = vmatprep.subr.mxu0 0.0
    %4468 = vmatpush1.xpose.msra.mxu0 0.0
    %4469 = vmatprep.subr.mxu0 0.0
    %4470 = vmatpush1.xpose.msra.mxu0 0.0
    %4471 = vmatprep.subr.mxu0 0.0
    %4472 = vmatpush1.xpose.msra.mxu0 0.0
    %4473 = vmatprep.subr.mxu0 0.0
    %4474 = vmatpush1.xpose.msra.mxu0 0.0
    %4475 = vmatprep.subr.mxu0 0.0
    %4476 = vmatpush1.xpose.msra.mxu0 0.0
    %4477 = vmatprep.subr.mxu0 0.0
    %4478 = vmatpush1.xpose.msra.mxu0 0.0
    %4479 = vmatprep.subr.mxu0 0.0
    %4480 = vmatpush1.xpose.msra.mxu0 0.0
    %4481 = vmatprep.subr.mxu0 0.0
    %4482 = vmatpush1.xpose.msra.mxu0 0.0
    %4483 = vmatprep.subr.mxu0 0.0
    %4484 = vmatpush1.xpose.msra.mxu0 0.0
    %4485 = vmatprep.subr.mxu0 0.0
    %4486 = vmatpush1.xpose.msra.mxu0 0.0
    %4487 = vmatprep.subr.mxu0 0.0
    %4488 = vmatpush1.xpose.msra.mxu0 0.0
    %4489 = vmatprep.subr.mxu0 0.0
    %4490 = vmatpush1.xpose.msra.mxu0 0.0
    %4491 = vmatprep.subr.mxu0 0.0
    %4492 = vmatpush1.xpose.msra.mxu0 0.0
    %4493 = vmatprep.subr.mxu0 0.0
    %4494 = vmatpush1.xpose.msra.mxu0 0.0
    %4495 = vmatprep.subr.mxu0 0.0
    %4496 = vmatpush1.xpose.msra.mxu0 0.0
    %4497 = vmatprep.subr.mxu0 0.0
    %4498 = vmatpush1.xpose.msra.mxu0 0.0
    %4499 = vmatprep.subr.mxu0 0.0
    %4500 = vmatpush1.xpose.msra.mxu0 0.0
    %4501 = vmatprep.subr.mxu0 0.0
    %4502 = vmatpush1.xpose.msra.mxu0 0.0
    %4503 = vmatprep.subr.mxu0 0.0
    %4504 = vmatpush1.xpose.msra.mxu0 0.0
    %4505 = vmatprep.subr.mxu0 0.0
    %4506 = vmatpush1.xpose.msra.mxu0 0.0
    %4507 = vmatprep.subr.mxu0 0.0
    %4508 = vmatpush1.xpose.msra.mxu0 0.0
    %4509 = vmatprep.subr.mxu0 0.0
    %4510 = vmatpush1.xpose.msra.mxu0 0.0
    %4511 = vmatprep.subr.mxu0 0.0
    %4512 = vmatpush1.xpose.msra.mxu0 0.0
    %4513 = vmatprep.subr.mxu0 0.0
    %4514 = vmatpush1.xpose.msra.mxu0 0.0
    %4515 = vmatprep.subr.mxu0 0.0
    %4516 = vmatpush1.xpose.msra.mxu0 0.0
    %4517 = vmatprep.subr.mxu0 0.0
    %4518 = vmatpush1.xpose.msra.mxu0 0.0
    %4519 = vmatprep.subr.mxu0 0.0
    %4520 = vmatpush1.xpose.msra.mxu0 0.0
    %4521 = vmatprep.subr.mxu0 0.0
    %4522 = vmatpush1.xpose.msra.mxu0 0.0
    %4523 = vmatprep.subr.mxu0 0.0
    %4524 = vmatpush1.xpose.msra.mxu0 0.0
    %4525 = vmatprep.mubr.f32.mxu0 0.0
    %4526 = vmatmul.mubr.f32.gmra.mrb[0].mxu0 %v4457
    %v4527 = vpop.f32.mrb[0].mxu0
    %v4528 = vadd.f32 0.0, %v4527
    %v4529 = vpop.f32.mrb[0].mxu0
    %4530 = vdwg.mxu0
    %v4531 = vsel %vm336, %v4451, -inf
    %v4532 = vsel %vm336, %v4528, -inf
    %v4533 = vsel %vm183, %v4531, -inf
    %v4534 = vrot.slane %v4533, 4
    %v4535 = vmax.f32 %v4533, %v4534
    %v4536 = vrot.slane %v4535, 2
    %v4537 = vmax.f32 %v4535, %v4536
    %v4538 = vrot.slane %v4537, 1
    %v4539 = vmax.f32 %v4537, %v4538
    %v4540 = vsel %vm183, %v4532, -inf
    %v4541 = vrot.slane %v4540, 4
    %v4542 = vmax.f32 %v4540, %v4541
    %v4543 = vrot.slane %v4542, 2
    %v4544 = vmax.f32 %v4542, %v4543
    %v4545 = vrot.slane %v4544, 1
    %v4546 = vmax.f32 %v4544, %v4545
    %v4547 = vsub.f32 %v4531, %v4539
    %v4548 = vsub.f32 %v4532, %v4546
    %v4549 = vmul.f32 %v4547, 1.442695
    %v4550 = vpow.pop %v4549
    %v4551 = vmul.f32 %v4548, 1.442695
    %v4552 = vpow.pop %v4551
    %v4553 = vsel %vm183, %v4550, 0.0
    %v4554 = vrot.slane %v4553, 4
    %v4555 = vadd.f32 %v4553, %v4554
    %v4556 = vrot.slane %v4555, 2
    %v4557 = vadd.f32 %v4555, %v4556
    %v4558 = vrot.slane %v4557, 1
    %v4559 = vadd.f32 %v4557, %v4558
    %v4560 = vsel %vm183, %v4552, 0.0
    %v4561 = vrot.slane %v4560, 4
    %v4562 = vadd.f32 %v4560, %v4561
    %v4563 = vrot.slane %v4562, 2
    %v4564 = vadd.f32 %v4562, %v4563
    %v4565 = vrot.slane %v4564, 1
    %v4566 = vadd.f32 %v4564, %v4565
    %v4567 = vrcp.pop %v4559
    %v4568 = vrcp.pop %v4566
    %v4569 = vmul.f32 %v4550, %v4567
    %v4570 = vmul.f32 %v4552, %v4568
    %4571 = vrot.lane.b32.xlu0 %v4369, 64
    %v4572 = vpop.permute.xlu0 %4571
    %v4575 = vsel %vm183, %v4569, 0
    %4577 = vmatprep.subr.mxu0 0.0
    %4578 = vmatpush1.msra.mxu0 %v4572
    %4579 = vmatprep.subr.mxu0 0.0
    %4580 = vmatpush1.msra.mxu0 0.0
    %4581 = vmatprep.subr.mxu0 0.0
    %4582 = vmatpush1.msra.mxu0 0.0
    %4583 = vmatprep.subr.mxu0 0.0
    %4584 = vmatpush1.msra.mxu0 0.0
    %4585 = vmatprep.subr.mxu0 0.0
    %4586 = vmatpush1.msra.mxu0 0.0
    %4587 = vmatprep.subr.mxu0 0.0
    %4588 = vmatpush1.msra.mxu0 0.0
    %4589 = vmatprep.subr.mxu0 0.0
    %4590 = vmatpush1.msra.mxu0 0.0
    %4591 = vmatprep.subr.mxu0 0.0
    %4592 = vmatpush1.msra.mxu0 0.0
    %4593 = vmatprep.subr.mxu0 0.0
    %4594 = vmatpush1.msra.mxu0 0.0
    %4595 = vmatprep.subr.mxu0 0.0
    %4596 = vmatpush1.msra.mxu0 0.0
    %4597 = vmatprep.subr.mxu0 0.0
    %4598 = vmatpush1.msra.mxu0 0.0
    %4599 = vmatprep.subr.mxu0 0.0
    %4600 = vmatpush1.msra.mxu0 0.0
    %4601 = vmatprep.subr.mxu0 0.0
    %4602 = vmatpush1.msra.mxu0 0.0
    %4603 = vmatprep.subr.mxu0 0.0
    %4604 = vmatpush1.msra.mxu0 0.0
    %4605 = vmatprep.subr.mxu0 0.0
    %4606 = vmatpush1.msra.mxu0 0.0
    %4607 = vmatprep.subr.mxu0 0.0
    %4608 = vmatpush1.msra.mxu0 0.0
    %4609 = vmatprep.subr.mxu0 0.0
    %4610 = vmatpush1.msra.mxu0 0.0
    %4611 = vmatprep.subr.mxu0 0.0
    %4612 = vmatpush1.msra.mxu0 0.0
    %4613 = vmatprep.subr.mxu0 0.0
    %4614 = vmatpush1.msra.mxu0 0.0
    %4615 = vmatprep.subr.mxu0 0.0
    %4616 = vmatpush1.msra.mxu0 0.0
    %4617 = vmatprep.subr.mxu0 0.0
    %4618 = vmatpush1.msra.mxu0 0.0
    %4619 = vmatprep.subr.mxu0 0.0
    %4620 = vmatpush1.msra.mxu0 0.0
    %4621 = vmatprep.subr.mxu0 0.0
    %4622 = vmatpush1.msra.mxu0 0.0
    %4623 = vmatprep.subr.mxu0 0.0
    %4624 = vmatpush1.msra.mxu0 0.0
    %4625 = vmatprep.subr.mxu0 0.0
    %4626 = vmatpush1.msra.mxu0 0.0
    %4627 = vmatprep.subr.mxu0 0.0
    %4628 = vmatpush1.msra.mxu0 0.0
    %4629 = vmatprep.subr.mxu0 0.0
    %4630 = vmatpush1.msra.mxu0 0.0
    %4631 = vmatprep.subr.mxu0 0.0
    %4632 = vmatpush1.msra.mxu0 0.0
    %4633 = vmatprep.subr.mxu0 0.0
    %4634 = vmatpush1.msra.mxu0 0.0
    %4635 = vmatprep.subr.mxu0 0.0
    %4636 = vmatpush1.msra.mxu0 0.0
    %4637 = vmatprep.subr.mxu0 0.0
    %4638 = vmatpush1.msra.mxu0 0.0
    %4639 = vmatprep.subr.mxu0 0.0
    %4640 = vmatpush1.msra.mxu0 0.0
    %4641 = vmatprep.mubr.f32.mxu0 0.0
    %4642 = vmatmul.mubr.f32.gmra.mrb[0].mxu0 %v4575
    %v4643 = vpop.f32.mrb[0].mxu0
    %v4644 = vadd.f32 0.0, %v4643
    %v4645 = vpop.f32.mrb[0].mxu0
    %4646 = vdwg.mxu0
    %4647 = vrot.lane.b32.xlu0 %v4374, 64
    %v4648 = vpop.permute.xlu0 %4647
    %v4651 = vsel %vm183, %v4570, 0
    %4653 = vmatprep.subr.mxu0 0.0
    %4654 = vmatpush1.msra.mxu0 %v4648
    %4655 = vmatprep.subr.mxu0 0.0
    %4656 = vmatpush1.msra.mxu0 0.0
    %4657 = vmatprep.subr.mxu0 0.0
    %4658 = vmatpush1.msra.mxu0 0.0
    %4659 = vmatprep.subr.mxu0 0.0
    %4660 = vmatpush1.msra.mxu0 0.0
    %4661 = vmatprep.subr.mxu0 0.0
    %4662 = vmatpush1.msra.mxu0 0.0
    %4663 = vmatprep.subr.mxu0 0.0
    %4664 = vmatpush1.msra.mxu0 0.0
    %4665 = vmatprep.subr.mxu0 0.0
    %4666 = vmatpush1.msra.mxu0 0.0
    %4667 = vmatprep.subr.mxu0 0.0
    %4668 = vmatpush1.msra.mxu0 0.0
    %4669 = vmatprep.subr.mxu0 0.0
    %4670 = vmatpush1.msra.mxu0 0.0
    %4671 = vmatprep.subr.mxu0 0.0
    %4672 = vmatpush1.msra.mxu0 0.0
    %4673 = vmatprep.subr.mxu0 0.0
    %4674 = vmatpush1.msra.mxu0 0.0
    %4675 = vmatprep.subr.mxu0 0.0
    %4676 = vmatpush1.msra.mxu0 0.0
    %4677 = vmatprep.subr.mxu0 0.0
    %4678 = vmatpush1.msra.mxu0 0.0
    %4679 = vmatprep.subr.mxu0 0.0
    %4680 = vmatpush1.msra.mxu0 0.0
    %4681 = vmatprep.subr.mxu0 0.0
    %4682 = vmatpush1.msra.mxu0 0.0
    %4683 = vmatprep.subr.mxu0 0.0
    %4684 = vmatpush1.msra.mxu0 0.0
    %4685 = vmatprep.subr.mxu0 0.0
    %4686 = vmatpush1.msra.mxu0 0.0
    %4687 = vmatprep.subr.mxu0 0.0
    %4688 = vmatpush1.msra.mxu0 0.0
    %4689 = vmatprep.subr.mxu0 0.0
    %4690 = vmatpush1.msra.mxu0 0.0
    %4691 = vmatprep.subr.mxu0 0.0
    %4692 = vmatpush1.msra.mxu0 0.0
    %4693 = vmatprep.subr.mxu0 0.0
    %4694 = vmatpush1.msra.mxu0 0.0
    %4695 = vmatprep.subr.mxu0 0.0
    %4696 = vmatpush1.msra.mxu0 0.0
    %4697 = vmatprep.subr.mxu0 0.0
    %4698 = vmatpush1.msra.mxu0 0.0
    %4699 = vmatprep.subr.mxu0 0.0
    %4700 = vmatpush1.msra.mxu0 0.0
    %4701 = vmatprep.subr.mxu0 0.0
    %4702 = vmatpush1.msra.mxu0 0.0
    %4703 = vmatprep.subr.mxu0 0.0
    %4704 = vmatpush1.msra.mxu0 0.0
    %4705 = vmatprep.subr.mxu0 0.0
    %4706 = vmatpush1.msra.mxu0 0.0
    %4707 = vmatprep.subr.mxu0 0.0
    %4708 = vmatpush1.msra.mxu0 0.0
    %4709 = vmatprep.subr.mxu0 0.0
    %4710 = vmatpush1.msra.mxu0 0.0
    %4711 = vmatprep.subr.mxu0 0.0
    %4712 = vmatpush1.msra.mxu0 0.0
    %4713 = vmatprep.subr.mxu0 0.0
    %4714 = vmatpush1.msra.mxu0 0.0
    %4715 = vmatprep.subr.mxu0 0.0
    %4716 = vmatpush1.msra.mxu0 0.0
    %4717 = vmatprep.mubr.f32.mxu0 0.0
    %4718 = vmatmul.mubr.f32.gmra.mrb[0].mxu0 %v4651
    %v4719 = vpop.f32.mrb[0].mxu0
    %v4720 = vadd.f32 0.0, %v4719
    %v4721 = vpop.f32.mrb[0].mxu0
    %4722 = vdwg.mxu0
    %4723 = vrot.lane.b32.xlu0 %v4369, 88
    %v4724 = vpop.permute.xlu0 %4723
    %4725 = vrot.lane.b32.xlu0 %v4369, 120
    %v4726 = vpop.permute.xlu0 %4725
    %v4727 = vsel %vm183, %v4724, 0
    %v4729 = vsel %vm183, %v4726, 0
    %4731 = vmatprep.subr.mxu0 0.0
    %4732 = vmatpush1.xpose.msra.mxu0 %v4729
    %4733 = vmatprep.subr.mxu0 0.0
    %4734 = vmatpush1.xpose.msra.mxu0 0.0
    %4735 = vmatprep.subr.mxu0 0.0
    %4736 = vmatpush1.xpose.msra.mxu0 0.0
    %4737 = vmatprep.subr.mxu0 0.0
    %4738 = vmatpush1.xpose.msra.mxu0 0.0
    %4739 = vmatprep.subr.mxu0 0.0
    %4740 = vmatpush1.xpose.msra.mxu0 0.0
    %4741 = vmatprep.subr.mxu0 0.0
    %4742 = vmatpush1.xpose.msra.mxu0 0.0
    %4743 = vmatprep.subr.mxu0 0.0
    %4744 = vmatpush1.xpose.msra.mxu0 0.0
    %4745 = vmatprep.subr.mxu0 0.0
    %4746 = vmatpush1.xpose.msra.mxu0 0.0
    %4747 = vmatprep.subr.mxu0 0.0
    %4748 = vmatpush1.xpose.msra.mxu0 0.0
    %4749 = vmatprep.subr.mxu0 0.0
    %4750 = vmatpush1.xpose.msra.mxu0 0.0
    %4751 = vmatprep.subr.mxu0 0.0
    %4752 = vmatpush1.xpose.msra.mxu0 0.0
    %4753 = vmatprep.subr.mxu0 0.0
    %4754 = vmatpush1.xpose.msra.mxu0 0.0
    %4755 = vmatprep.subr.mxu0 0.0
    %4756 = vmatpush1.xpose.msra.mxu0 0.0
    %4757 = vmatprep.subr.mxu0 0.0
    %4758 = vmatpush1.xpose.msra.mxu0 0.0
    %4759 = vmatprep.subr.mxu0 0.0
    %4760 = vmatpush1.xpose.msra.mxu0 0.0
    %4761 = vmatprep.subr.mxu0 0.0
    %4762 = vmatpush1.xpose.msra.mxu0 0.0
    %4763 = vmatprep.subr.mxu0 0.0
    %4764 = vmatpush1.xpose.msra.mxu0 0.0
    %4765 = vmatprep.subr.mxu0 0.0
    %4766 = vmatpush1.xpose.msra.mxu0 0.0
    %4767 = vmatprep.subr.mxu0 0.0
    %4768 = vmatpush1.xpose.msra.mxu0 0.0
    %4769 = vmatprep.subr.mxu0 0.0
    %4770 = vmatpush1.xpose.msra.mxu0 0.0
    %4771 = vmatprep.subr.mxu0 0.0
    %4772 = vmatpush1.xpose.msra.mxu0 0.0
    %4773 = vmatprep.subr.mxu0 0.0
    %4774 = vmatpush1.xpose.msra.mxu0 0.0
    %4775 = vmatprep.subr.mxu0 0.0
    %4776 = vmatpush1.xpose.msra.mxu0 0.0
    %4777 = vmatprep.subr.mxu0 0.0
    %4778 = vmatpush1.xpose.msra.mxu0 0.0
    %4779 = vmatprep.subr.mxu0 0.0
    %4780 = vmatpush1.xpose.msra.mxu0 0.0
    %4781 = vmatprep.subr.mxu0 0.0
    %4782 = vmatpush1.xpose.msra.mxu0 0.0
    %4783 = vmatprep.subr.mxu0 0.0
    %4784 = vmatpush1.xpose.msra.mxu0 0.0
    %4785 = vmatprep.subr.mxu0 0.0
    %4786 = vmatpush1.xpose.msra.mxu0 0.0
    %4787 = vmatprep.subr.mxu0 0.0
    %4788 = vmatpush1.xpose.msra.mxu0 0.0
    %4789 = vmatprep.subr.mxu0 0.0
    %4790 = vmatpush1.xpose.msra.mxu0 0.0
    %4791 = vmatprep.subr.mxu0 0.0
    %4792 = vmatpush1.xpose.msra.mxu0 0.0
    %4793 = vmatprep.subr.mxu0 0.0
    %4794 = vmatpush1.xpose.msra.mxu0 0.0
    %4795 = vmatprep.mubr.f32.mxu0 0.0
    %4796 = vmatmul.mubr.f32.gmra.mrb[0].mxu0 %v4727
    %v4797 = vpop.f32.mrb[0].mxu0
    %v4798 = vadd.f32 0.0, %v4797
    %v4799 = vpop.f32.mrb[0].mxu0
    %4800 = vdwg.mxu0
    %4801 = vrot.lane.b32.xlu0 %v4374, 88
    %v4802 = vpop.permute.xlu0 %4801
    %4803 = vrot.lane.b32.xlu0 %v4374, 120
    %v4804 = vpop.permute.xlu0 %4803
    %v4805 = vsel %vm183, %v4802, 0
    %v4807 = vsel %vm183, %v4804, 0
    %4809 = vmatprep.subr.mxu0 0.0
    %4810 = vmatpush1.xpose.msra.mxu0 %v4807
    %4811 = vmatprep.subr.mxu0 0.0
    %4812 = vmatpush1.xpose.msra.mxu0 0.0
    %4813 = vmatprep.subr.mxu0 0.0
    %4814 = vmatpush1.xpose.msra.mxu0 0.0
    %4815 = vmatprep.subr.mxu0 0.0
    %4816 = vmatpush1.xpose.msra.mxu0 0.0
    %4817 = vmatprep.subr.mxu0 0.0
    %4818 = vmatpush1.xpose.msra.mxu0 0.0
    %4819 = vmatprep.subr.mxu0 0.0
    %4820 = vmatpush1.xpose.msra.mxu0 0.0
    %4821 = vmatprep.subr.mxu0 0.0
    %4822 = vmatpush1.xpose.msra.mxu0 0.0
    %4823 = vmatprep.subr.mxu0 0.0
    %4824 = vmatpush1.xpose.msra.mxu0 0.0
    %4825 = vmatprep.subr.mxu0 0.0
    %4826 = vmatpush1.xpose.msra.mxu0 0.0
    %4827 = vmatprep.subr.mxu0 0.0
    %4828 = vmatpush1.xpose.msra.mxu0 0.0
    %4829 = vmatprep.subr.mxu0 0.0
    %4830 = vmatpush1.xpose.msra.mxu0 0.0
    %4831 = vmatprep.subr.mxu0 0.0
    %4832 = vmatpush1.xpose.msra.mxu0 0.0
    %4833 = vmatprep.subr.mxu0 0.0
    %4834 = vmatpush1.xpose.msra.mxu0 0.0
    %4835 = vmatprep.subr.mxu0 0.0
    %4836 = vmatpush1.xpose.msra.mxu0 0.0
    %4837 = vmatprep.subr.mxu0 0.0
    %4838 = vmatpush1.xpose.msra.mxu0 0.0
    %4839 = vmatprep.subr.mxu0 0.0
    %4840 = vmatpush1.xpose.msra.mxu0 0.0
    %4841 = vmatprep.subr.mxu0 0.0
    %4842 = vmatpush1.xpose.msra.mxu0 0.0
    %4843 = vmatprep.subr.mxu0 0.0
    %4844 = vmatpush1.xpose.msra.mxu0 0.0
    %4845 = vmatprep.subr.mxu0 0.0
    %4846 = vmatpush1.xpose.msra.mxu0 0.0
    %4847 = vmatprep.subr.mxu0 0.0
    %4848 = vmatpush1.xpose.msra.mxu0 0.0
    %4849 = vmatprep.subr.mxu0 0.0
    %4850 = vmatpush1.xpose.msra.mxu0 0.0
    %4851 = vmatprep.subr.mxu0 0.0
    %4852 = vmatpush1.xpose.msra.mxu0 0.0
    %4853 = vmatprep.subr.mxu0 0.0
    %4854 = vmatpush1.xpose.msra.mxu0 0.0
    %4855 = vmatprep.subr.mxu0 0.0
    %4856 = vmatpush1.xpose.msra.mxu0 0.0
    %4857 = vmatprep.subr.mxu0 0.0
    %4858 = vmatpush1.xpose.msra.mxu0 0.0
    %4859 = vmatprep.subr.mxu0 0.0
    %4860 = vmatpush1.xpose.msra.mxu0 0.0
    %4861 = vmatprep.subr.mxu0 0.0
    %4862 = vmatpush1.xpose.msra.mxu0 0.0
    %4863 = vmatprep.subr.mxu0 0.0
    %4864 = vmatpush1.xpose.msra.mxu0 0.0
    %4865 = vmatprep.subr.mxu0 0.0
    %4866 = vmatpush1.xpose.msra.mxu0 0.0
    %4867 = vmatprep.subr.mxu0 0.0
    %4868 = vmatpush1.xpose.msra.mxu0 0.0
    %4869 = vmatprep.subr.mxu0 0.0
    %4870 = vmatpush1.xpose.msra.mxu0 0.0
    %4871 = vmatprep.subr.mxu0 0.0
    %4872 = vmatpush1.xpose.msra.mxu0 0.0
    %4873 = vmatprep.mubr.f32.mxu0 0.0
    %4874 = vmatmul.mubr.f32.gmra.mrb[0].mxu0 %v4805
    %v4875 = vpop.f32.mrb[0].mxu0
    %v4876 = vadd.f32 0.0, %v4875
    %v4877 = vpop.f32.mrb[0].mxu0
    %4878 = vdwg.mxu0
    %v4879 = vsel %vm336, %v4798, -inf
    %v4880 = vsel %vm336, %v4876, -inf
    %v4881 = vsel %vm183, %v4879, -inf
    %v4882 = vrot.slane %v4881, 4
    %v4883 = vmax.f32 %v4881, %v4882
    %v4884 = vrot.slane %v4883, 2
    %v4885 = vmax.f32 %v4883, %v4884
    %v4886 = vrot.slane %v4885, 1
    %v4887 = vmax.f32 %v4885, %v4886
    %v4888 = vsel %vm183, %v4880, -inf
    %v4889 = vrot.slane %v4888, 4
    %v4890 = vmax.f32 %v4888, %v4889
    %v4891 = vrot.slane %v4890, 2
    %v4892 = vmax.f32 %v4890, %v4891
    %v4893 = vrot.slane %v4892, 1
    %v4894 = vmax.f32 %v4892, %v4893
    %v4895 = vsub.f32 %v4879, %v4887
    %v4896 = vsub.f32 %v4880, %v4894
    %v4897 = vmul.f32 %v4895, 1.442695
    %v4898 = vpow.pop %v4897
    %v4899 = vmul.f32 %v4896, 1.442695
    %v4900 = vpow.pop %v4899
    %v4901 = vsel %vm183, %v4898, 0.0
    %v4902 = vrot.slane %v4901, 4
    %v4903 = vadd.f32 %v4901, %v4902
    %v4904 = vrot.slane %v4903, 2
    %v4905 = vadd.f32 %v4903, %v4904
    %v4906 = vrot.slane %v4905, 1
    %v4907 = vadd.f32 %v4905, %v4906
    %v4908 = vsel %vm183, %v4900, 0.0
    %v4909 = vrot.slane %v4908, 4
    %v4910 = vadd.f32 %v4908, %v4909
    %v4911 = vrot.slane %v4910, 2
    %v4912 = vadd.f32 %v4910, %v4911
    %v4913 = vrot.slane %v4912, 1
    %v4914 = vadd.f32 %v4912, %v4913
    %v4915 = vrcp.pop %v4907
    %v4916 = vrcp.pop %v4914
    %v4917 = vmul.f32 %v4898, %v4915
    %v4918 = vmul.f32 %v4900, %v4916
    %4919 = vrot.lane.b32.xlu0 %v4369, 56
    %v4920 = vpop.permute.xlu0 %4919
    %v4923 = vsel %vm183, %v4917, 0
    %4925 = vmatprep.subr.mxu0 0.0
    %4926 = vmatpush1.msra.mxu0 %v4920
    %4927 = vmatprep.subr.mxu0 0.0
    %4928 = vmatpush1.msra.mxu0 0.0
    %4929 = vmatprep.subr.mxu0 0.0
    %4930 = vmatpush1.msra.mxu0 0.0
    %4931 = vmatprep.subr.mxu0 0.0
    %4932 = vmatpush1.msra.mxu0 0.0
    %4933 = vmatprep.subr.mxu0 0.0
    %4934 = vmatpush1.msra.mxu0 0.0
    %4935 = vmatprep.subr.mxu0 0.0
    %4936 = vmatpush1.msra.mxu0 0.0
    %4937 = vmatprep.subr.mxu0 0.0
    %4938 = vmatpush1.msra.mxu0 0.0
    %4939 = vmatprep.subr.mxu0 0.0
    %4940 = vmatpush1.msra.mxu0 0.0
    %4941 = vmatprep.subr.mxu0 0.0
    %4942 = vmatpush1.msra.mxu0 0.0
    %4943 = vmatprep.subr.mxu0 0.0
    %4944 = vmatpush1.msra.mxu0 0.0
    %4945 = vmatprep.subr.mxu0 0.0
    %4946 = vmatpush1.msra.mxu0 0.0
    %4947 = vmatprep.subr.mxu0 0.0
    %4948 = vmatpush1.msra.mxu0 0.0
    %4949 = vmatprep.subr.mxu0 0.0
    %4950 = vmatpush1.msra.mxu0 0.0
    %4951 = vmatprep.subr.mxu0 0.0
    %4952 = vmatpush1.msra.mxu0 0.0
    %4953 = vmatprep.subr.mxu0 0.0
    %4954 = vmatpush1.msra.mxu0 0.0
    %4955 = vmatprep.subr.mxu0 0.0
    %4956 = vmatpush1.msra.mxu0 0.0
    %4957 = vmatprep.subr.mxu0 0.0
    %4958 = vmatpush1.msra.mxu0 0.0
    %4959 = vmatprep.subr.mxu0 0.0
    %4960 = vmatpush1.msra.mxu0 0.0
    %4961 = vmatprep.subr.mxu0 0.0
    %4962 = vmatpush1.msra.mxu0 0.0
    %4963 = vmatprep.subr.mxu0 0.0
    %4964 = vmatpush1.msra.mxu0 0.0
    %4965 = vmatprep.subr.mxu0 0.0
    %4966 = vmatpush1.msra.mxu0 0.0
    %4967 = vmatprep.subr.mxu0 0.0
    %4968 = vmatpush1.msra.mxu0 0.0
    %4969 = vmatprep.subr.mxu0 0.0
    %4970 = vmatpush1.msra.mxu0 0.0
    %4971 = vmatprep.subr.mxu0 0.0
    %4972 = vmatpush1.msra.mxu0 0.0
    %4973 = vmatprep.subr.mxu0 0.0
    %4974 = vmatpush1.msra.mxu0 0.0
    %4975 = vmatprep.subr.mxu0 0.0
    %4976 = vmatpush1.msra.mxu0 0.0
    %4977 = vmatprep.subr.mxu0 0.0
    %4978 = vmatpush1.msra.mxu0 0.0
    %4979 = vmatprep.subr.mxu0 0.0
    %4980 = vmatpush1.msra.mxu0 0.0
    %4981 = vmatprep.subr.mxu0 0.0
    %4982 = vmatpush1.msra.mxu0 0.0
    %4983 = vmatprep.subr.mxu0 0.0
    %4984 = vmatpush1.msra.mxu0 0.0
    %4985 = vmatprep.subr.mxu0 0.0
    %4986 = vmatpush1.msra.mxu0 0.0
    %4987 = vmatprep.subr.mxu0 0.0
    %4988 = vmatpush1.msra.mxu0 0.0
    %4989 = vmatprep.mubr.f32.mxu0 0.0
    %4990 = vmatmul.mubr.f32.gmra.mrb[0].mxu0 %v4923
    %v4991 = vpop.f32.mrb[0].mxu0
    %v4992 = vadd.f32 0.0, %v4991
    %v4993 = vpop.f32.mrb[0].mxu0
    %4994 = vdwg.mxu0
    %4995 = vrot.lane.b32.xlu0 %v4374, 56
    %v4996 = vpop.permute.xlu0 %4995
    %v4999 = vsel %vm183, %v4918, 0
    %5001 = vmatprep.subr.mxu0 0.0
    %5002 = vmatpush1.msra.mxu0 %v4996
    %5003 = vmatprep.subr.mxu0 0.0
    %5004 = vmatpush1.msra.mxu0 0.0
    %5005 = vmatprep.subr.mxu0 0.0
    %5006 = vmatpush1.msra.mxu0 0.0
    %5007 = vmatprep.subr.mxu0 0.0
    %5008 = vmatpush1.msra.mxu0 0.0
    %5009 = vmatprep.subr.mxu0 0.0
    %5010 = vmatpush1.msra.mxu0 0.0
    %5011 = vmatprep.subr.mxu0 0.0
    %5012 = vmatpush1.msra.mxu0 0.0
    %5013 = vmatprep.subr.mxu0 0.0
    %5014 = vmatpush1.msra.mxu0 0.0
    %5015 = vmatprep.subr.mxu0 0.0
    %5016 = vmatpush1.msra.mxu0 0.0
    %5017 = vmatprep.subr.mxu0 0.0
    %5018 = vmatpush1.msra.mxu0 0.0
    %5019 = vmatprep.subr.mxu0 0.0
    %5020 = vmatpush1.msra.mxu0 0.0
    %5021 = vmatprep.subr.mxu0 0.0
    %5022 = vmatpush1.msra.mxu0 0.0
    %5023 = vmatprep.subr.mxu0 0.0
    %5024 = vmatpush1.msra.mxu0 0.0
    %5025 = vmatprep.subr.mxu0 0.0
    %5026 = vmatpush1.msra.mxu0 0.0
    %5027 = vmatprep.subr.mxu0 0.0
    %5028 = vmatpush1.msra.mxu0 0.0
    %5029 = vmatprep.subr.mxu0 0.0
    %5030 = vmatpush1.msra.mxu0 0.0
    %5031 = vmatprep.subr.mxu0 0.0
    %5032 = vmatpush1.msra.mxu0 0.0
    %5033 = vmatprep.subr.mxu0 0.0
    %5034 = vmatpush1.msra.mxu0 0.0
    %5035 = vmatprep.subr.mxu0 0.0
    %5036 = vmatpush1.msra.mxu0 0.0
    %5037 = vmatprep.subr.mxu0 0.0
    %5038 = vmatpush1.msra.mxu0 0.0
    %5039 = vmatprep.subr.mxu0 0.0
    %5040 = vmatpush1.msra.mxu0 0.0
    %5041 = vmatprep.subr.mxu0 0.0
    %5042 = vmatpush1.msra.mxu0 0.0
    %5043 = vmatprep.subr.mxu0 0.0
    %5044 = vmatpush1.msra.mxu0 0.0
    %5045 = vmatprep.subr.mxu0 0.0
    %5046 = vmatpush1.msra.mxu0 0.0
    %5047 = vmatprep.subr.mxu0 0.0
    %5048 = vmatpush1.msra.mxu0 0.0
    %5049 = vmatprep.subr.mxu0 0.0
    %5050 = vmatpush1.msra.mxu0 0.0
    %5051 = vmatprep.subr.mxu0 0.0
    %5052 = vmatpush1.msra.mxu0 0.0
    %5053 = vmatprep.subr.mxu0 0.0
    %5054 = vmatpush1.msra.mxu0 0.0
    %5055 = vmatprep.subr.mxu0 0.0
    %5056 = vmatpush1.msra.mxu0 0.0
    %5057 = vmatprep.subr.mxu0 0.0
    %5058 = vmatpush1.msra.mxu0 0.0
    %5059 = vmatprep.subr.mxu0 0.0
    %5060 = vmatpush1.msra.mxu0 0.0
    %5061 = vmatprep.subr.mxu0 0.0
    %5062 = vmatpush1.msra.mxu0 0.0
    %5063 = vmatprep.subr.mxu0 0.0
    %5064 = vmatpush1.msra.mxu0 0.0
    %5065 = vmatprep.mubr.f32.mxu0 0.0
    %5066 = vmatmul.mubr.f32.gmra.mrb[0].mxu0 %v4999
    %v5067 = vpop.f32.mrb[0].mxu0
    %v5068 = vadd.f32 0.0, %v5067
    %v5069 = vpop.f32.mrb[0].mxu0
    %5070 = vdwg.mxu0
    %5072 = vrot.lane.b32.xlu0 %v4233, 32
    %v5073 = vpop.permute.xlu0 %5072
    %v5076 = vsel %vm183, %v4992, 0
    %v5079 = vsel %vm183, %v5068, 0
    %5081 = vmatprep.subr.mxu0 0.0
    %5082 = vmatpush1.msra.mxu0 %v5073
    %5083 = vmatprep.subr.mxu0 0.0
    %5084 = vmatpush1.msra.mxu0 0.0
    %5085 = vmatprep.subr.mxu0 0.0
    %5086 = vmatpush1.msra.mxu0 0.0
    %5087 = vmatprep.subr.mxu0 0.0
    %5088 = vmatpush1.msra.mxu0 0.0
    %5089 = vmatprep.subr.mxu0 0.0
    %5090 = vmatpush1.msra.mxu0 0.0
    %5091 = vmatprep.subr.mxu0 0.0
    %5092 = vmatpush1.msra.mxu0 0.0
    %5093 = vmatprep.subr.mxu0 0.0
    %5094 = vmatpush1.msra.mxu0 0.0
    %5095 = vmatprep.subr.mxu0 0.0
    %5096 = vmatpush1.msra.mxu0 0.0
    %5097 = vmatprep.subr.mxu0 0.0
    %5098 = vmatpush1.msra.mxu0 0.0
    %5099 = vmatprep.subr.mxu0 0.0
    %5100 = vmatpush1.msra.mxu0 0.0
    %5101 = vmatprep.subr.mxu0 0.0
    %5102 = vmatpush1.msra.mxu0 0.0
    %5103 = vmatprep.subr.mxu0 0.0
    %5104 = vmatpush1.msra.mxu0 0.0
    %5105 = vmatprep.subr.mxu0 0.0
    %5106 = vmatpush1.msra.mxu0 0.0
    %5107 = vmatprep.subr.mxu0 0.0
    %5108 = vmatpush1.msra.mxu0 0.0
    %5109 = vmatprep.subr.mxu0 0.0
    %5110 = vmatpush1.msra.mxu0 0.0
    %5111 = vmatprep.subr.mxu0 0.0
    %5112 = vmatpush1.msra.mxu0 0.0
    %5113 = vmatprep.subr.mxu0 0.0
    %5114 = vmatpush1.msra.mxu0 0.0
    %5115 = vmatprep.subr.mxu0 0.0
    %5116 = vmatpush1.msra.mxu0 0.0
    %5117 = vmatprep.subr.mxu0 0.0
    %5118 = vmatpush1.msra.mxu0 0.0
    %5119 = vmatprep.subr.mxu0 0.0
    %5120 = vmatpush1.msra.mxu0 0.0
    %5121 = vmatprep.subr.mxu0 0.0
    %5122 = vmatpush1.msra.mxu0 0.0
    %5123 = vmatprep.subr.mxu0 0.0
    %5124 = vmatpush1.msra.mxu0 0.0
    %5125 = vmatprep.subr.mxu0 0.0
    %5126 = vmatpush1.msra.mxu0 0.0
    %5127 = vmatprep.subr.mxu0 0.0
    %5128 = vmatpush1.msra.mxu0 0.0
    %5129 = vmatprep.subr.mxu0 0.0
    %5130 = vmatpush1.msra.mxu0 0.0
    %5131 = vmatprep.subr.mxu0 0.0
    %5132 = vmatpush1.msra.mxu0 0.0
    %5133 = vmatprep.subr.mxu0 0.0
    %5134 = vmatpush1.msra.mxu0 0.0
    %5135 = vmatprep.subr.mxu0 0.0
    %5136 = vmatpush1.msra.mxu0 0.0
    %5137 = vmatprep.subr.mxu0 0.0
    %5138 = vmatpush1.msra.mxu0 0.0
    %5139 = vmatprep.subr.mxu0 0.0
    %5140 = vmatpush1.msra.mxu0 0.0
    %5141 = vmatprep.subr.mxu0 0.0
    %5142 = vmatpush1.msra.mxu0 0.0
    %5143 = vmatprep.subr.mxu0 0.0
    %5144 = vmatpush1.msra.mxu0 0.0
    %5145 = vmatprep.mubr.f32.mxu0 0.0
    %5146 = vmatmul.mubr.f32.gmra.mrb[0].mxu0 %v5076
    %v5147 = vpop.f32.mrb[0].mxu0
    %v5148 = vadd.f32 0.0, %v5147
    %v5149 = vpop.f32.mrb[0].mxu0
    %5150 = vmatprep.mubr.f32.mxu0 0.0
    %5151 = vmatmul.mubr.f32.gmra.mrb[0].mxu0 %v5079
    %v5152 = vpop.f32.mrb[0].mxu0
    %v5153 = vadd.f32 0.0, %v5152
    %v5154 = vpop.f32.mrb[0].mxu0
    %5155 = vdwg.mxu0
    %5157 = vrot.lane.b32.xlu0 %v4231, 32
    %v5158 = vpop.permute.xlu0 %5157
    %v5161 = vsel %vm183, %v4644, 0
    %v5164 = vsel %vm183, %v4720, 0
    %5166 = vmatprep.subr.mxu0 0.0
    %5167 = vmatpush1.msra.mxu0 %v5158
    %5168 = vmatprep.subr.mxu0 0.0
    %5169 = vmatpush1.msra.mxu0 0.0
    %5170 = vmatprep.subr.mxu0 0.0
    %5171 = vmatpush1.msra.mxu0 0.0
    %5172 = vmatprep.subr.mxu0 0.0
    %5173 = vmatpush1.msra.mxu0 0.0
    %5174 = vmatprep.subr.mxu0 0.0
    %5175 = vmatpush1.msra.mxu0 0.0
    %5176 = vmatprep.subr.mxu0 0.0
    %5177 = vmatpush1.msra.mxu0 0.0
    %5178 = vmatprep.subr.mxu0 0.0
    %5179 = vmatpush1.msra.mxu0 0.0
    %5180 = vmatprep.subr.mxu0 0.0
    %5181 = vmatpush1.msra.mxu0 0.0
    %5182 = vmatprep.subr.mxu0 0.0
    %5183 = vmatpush1.msra.mxu0 0.0
    %5184 = vmatprep.subr.mxu0 0.0
    %5185 = vmatpush1.msra.mxu0 0.0
    %5186 = vmatprep.subr.mxu0 0.0
    %5187 = vmatpush1.msra.mxu0 0.0
    %5188 = vmatprep.subr.mxu0 0.0
    %5189 = vmatpush1.msra.mxu0 0.0
    %5190 = vmatprep.subr.mxu0 0.0
    %5191 = vmatpush1.msra.mxu0 0.0
    %5192 = vmatprep.subr.mxu0 0.0
    %5193 = vmatpush1.msra.mxu0 0.0
    %5194 = vmatprep.subr.mxu0 0.0
    %5195 = vmatpush1.msra.mxu0 0.0
    %5196 = vmatprep.subr.mxu0 0.0
    %5197 = vmatpush1.msra.mxu0 0.0
    %5198 = vmatprep.subr.mxu0 0.0
    %5199 = vmatpush1.msra.mxu0 0.0
    %5200 = vmatprep.subr.mxu0 0.0
    %5201 = vmatpush1.msra.mxu0 0.0
    %5202 = vmatprep.subr.mxu0 0.0
    %5203 = vmatpush1.msra.mxu0 0.0
    %5204 = vmatprep.subr.mxu0 0.0
    %5205 = vmatpush1.msra.mxu0 0.0
    %5206 = vmatprep.subr.mxu0 0.0
    %5207 = vmatpush1.msra.mxu0 0.0
    %5208 = vmatprep.subr.mxu0 0.0
    %5209 = vmatpush1.msra.mxu0 0.0
    %5210 = vmatprep.subr.mxu0 0.0
    %5211 = vmatpush1.msra.mxu0 0.0
    %5212 = vmatprep.subr.mxu0 0.0
    %5213 = vmatpush1.msra.mxu0 0.0
    %5214 = vmatprep.subr.mxu0 0.0
    %5215 = vmatpush1.msra.mxu0 0.0
    %5216 = vmatprep.subr.mxu0 0.0
    %5217 = vmatpush1.msra.mxu0 0.0
    %5218 = vmatprep.subr.mxu0 0.0
    %5219 = vmatpush1.msra.mxu0 0.0
    %5220 = vmatprep.subr.mxu0 0.0
    %5221 = vmatpush1.msra.mxu0 0.0
    %5222 = vmatprep.subr.mxu0 0.0
    %5223 = vmatpush1.msra.mxu0 0.0
    %5224 = vmatprep.subr.mxu0 0.0
    %5225 = vmatpush1.msra.mxu0 0.0
    %5226 = vmatprep.subr.mxu0 0.0
    %5227 = vmatpush1.msra.mxu0 0.0
    %5228 = vmatprep.subr.mxu0 0.0
    %5229 = vmatpush1.msra.mxu0 0.0
    %5230 = vmatprep.mubr.f32.mxu0 0.0
    %5231 = vmatmul.mubr.f32.gmra.mrb[0].mxu0 %v5161
    %v5232 = vpop.f32.mrb[0].mxu0
    %v5233 = vadd.f32 %v5148, %v5232
    %v5234 = vpop.f32.mrb[0].mxu0
    %5235 = vmatprep.mubr.f32.mxu0 0.0
    %5236 = vmatmul.mubr.f32.gmra.mrb[0].mxu0 %v5164
    %v5237 = vpop.f32.mrb[0].mxu0
    %v5238 = vadd.f32 %v5153, %v5237
    %v5239 = vpop.f32.mrb[0].mxu0
    %5240 = vdwg.mxu0
    %5241 = vrot.lane.b32.xlu0 %v4369, 80
    %v5242 = vpop.permute.xlu0 %5241
    %5243 = vrot.lane.b32.xlu0 %v4369, 112
    %v5244 = vpop.permute.xlu0 %5243
    %v5245 = vsel %vm183, %v5242, 0
    %v5247 = vsel %vm183, %v5244, 0
    %5249 = vmatprep.subr.mxu0 0.0
    %5250 = vmatpush1.xpose.msra.mxu0 %v5247
    %5251 = vmatprep.subr.mxu0 0.0
    %5252 = vmatpush1.xpose.msra.mxu0 0.0
    %5253 = vmatprep.subr.mxu0 0.0
    %5254 = vmatpush1.xpose.msra.mxu0 0.0
    %5255 = vmatprep.subr.mxu0 0.0
    %5256 = vmatpush1.xpose.msra.mxu0 0.0
    %5257 = vmatprep.subr.mxu0 0.0
    %5258 = vmatpush1.xpose.msra.mxu0 0.0
    %5259 = vmatprep.subr.mxu0 0.0
    %5260 = vmatpush1.xpose.msra.mxu0 0.0
    %5261 = vmatprep.subr.mxu0 0.0
    %5262 = vmatpush1.xpose.msra.mxu0 0.0
    %5263 = vmatprep.subr.mxu0 0.0
    %5264 = vmatpush1.xpose.msra.mxu0 0.0
    %5265 = vmatprep.subr.mxu0 0.0
    %5266 = vmatpush1.xpose.msra.mxu0 0.0
    %5267 = vmatprep.subr.mxu0 0.0
    %5268 = vmatpush1.xpose.msra.mxu0 0.0
    %5269 = vmatprep.subr.mxu0 0.0
    %5270 = vmatpush1.xpose.msra.mxu0 0.0
    %5271 = vmatprep.subr.mxu0 0.0
    %5272 = vmatpush1.xpose.msra.mxu0 0.0
    %5273 = vmatprep.subr.mxu0 0.0
    %5274 = vmatpush1.xpose.msra.mxu0 0.0
    %5275 = vmatprep.subr.mxu0 0.0
    %5276 = vmatpush1.xpose.msra.mxu0 0.0
    %5277 = vmatprep.subr.mxu0 0.0
    %5278 = vmatpush1.xpose.msra.mxu0 0.0
    %5279 = vmatprep.subr.mxu0 0.0
    %5280 = vmatpush1.xpose.msra.mxu0 0.0
    %5281 = vmatprep.subr.mxu0 0.0
    %5282 = vmatpush1.xpose.msra.mxu0 0.0
    %5283 = vmatprep.subr.mxu0 0.0
    %5284 = vmatpush1.xpose.msra.mxu0 0.0
    %5285 = vmatprep.subr.mxu0 0.0
    %5286 = vmatpush1.xpose.msra.mxu0 0.0
    %5287 = vmatprep.subr.mxu0 0.0
    %5288 = vmatpush1.xpose.msra.mxu0 0.0
    %5289 = vmatprep.subr.mxu0 0.0
    %5290 = vmatpush1.xpose.msra.mxu0 0.0
    %5291 = vmatprep.subr.mxu0 0.0
    %5292 = vmatpush1.xpose.msra.mxu0 0.0
    %5293 = vmatprep.subr.mxu0 0.0
    %5294 = vmatpush1.xpose.msra.mxu0 0.0
    %5295 = vmatprep.subr.mxu0 0.0
    %5296 = vmatpush1.xpose.msra.mxu0 0.0
    %5297 = vmatprep.subr.mxu0 0.0
    %5298 = vmatpush1.xpose.msra.mxu0 0.0
    %5299 = vmatprep.subr.mxu0 0.0
    %5300 = vmatpush1.xpose.msra.mxu0 0.0
    %5301 = vmatprep.subr.mxu0 0.0
    %5302 = vmatpush1.xpose.msra.mxu0 0.0
    %5303 = vmatprep.subr.mxu0 0.0
    %5304 = vmatpush1.xpose.msra.mxu0 0.0
    %5305 = vmatprep.subr.mxu0 0.0
    %5306 = vmatpush1.xpose.msra.mxu0 0.0
    %5307 = vmatprep.subr.mxu0 0.0
    %5308 = vmatpush1.xpose.msra.mxu0 0.0
    %5309 = vmatprep.subr.mxu0 0.0
    %5310 = vmatpush1.xpose.msra.mxu0 0.0
    %5311 = vmatprep.subr.mxu0 0.0
    %5312 = vmatpush1.xpose.msra.mxu0 0.0
    %5313 = vmatprep.mubr.f32.mxu0 0.0
    %5314 = vmatmul.mubr.f32.gmra.mrb[0].mxu0 %v5245
    %v5315 = vpop.f32.mrb[0].mxu0
    %v5316 = vadd.f32 0.0, %v5315
    %v5317 = vpop.f32.mrb[0].mxu0
    %5318 = vdwg.mxu0
    %5319 = vrot.lane.b32.xlu0 %v4374, 80
    %v5320 = vpop.permute.xlu0 %5319
    %5321 = vrot.lane.b32.xlu0 %v4374, 112
    %v5322 = vpop.permute.xlu0 %5321
    %v5323 = vsel %vm183, %v5320, 0
    %v5325 = vsel %vm183, %v5322, 0
    %5327 = vmatprep.subr.mxu0 0.0
    %5328 = vmatpush1.xpose.msra.mxu0 %v5325
    %5329 = vmatprep.subr.mxu0 0.0
    %5330 = vmatpush1.xpose.msra.mxu0 0.0
    %5331 = vmatprep.subr.mxu0 0.0
    %5332 = vmatpush1.xpose.msra.mxu0 0.0
    %5333 = vmatprep.subr.mxu0 0.0
    %5334 = vmatpush1.xpose.msra.mxu0 0.0
    %5335 = vmatprep.subr.mxu0 0.0
    %5336 = vmatpush1.xpose.msra.mxu0 0.0
    %5337 = vmatprep.subr.mxu0 0.0
    %5338 = vmatpush1.xpose.msra.mxu0 0.0
    %5339 = vmatprep.subr.mxu0 0.0
    %5340 = vmatpush1.xpose.msra.mxu0 0.0
    %5341 = vmatprep.subr.mxu0 0.0
    %5342 = vmatpush1.xpose.msra.mxu0 0.0
    %5343 = vmatprep.subr.mxu0 0.0
    %5344 = vmatpush1.xpose.msra.mxu0 0.0
    %5345 = vmatprep.subr.mxu0 0.0
    %5346 = vmatpush1.xpose.msra.mxu0 0.0
    %5347 = vmatprep.subr.mxu0 0.0
    %5348 = vmatpush1.xpose.msra.mxu0 0.0
    %5349 = vmatprep.subr.mxu0 0.0
    %5350 = vmatpush1.xpose.msra.mxu0 0.0
    %5351 = vmatprep.subr.mxu0 0.0
    %5352 = vmatpush1.xpose.msra.mxu0 0.0
    %5353 = vmatprep.subr.mxu0 0.0
    %5354 = vmatpush1.xpose.msra.mxu0 0.0
    %5355 = vmatprep.subr.mxu0 0.0
    %5356 = vmatpush1.xpose.msra.mxu0 0.0
    %5357 = vmatprep.subr.mxu0 0.0
    %5358 = vmatpush1.xpose.msra.mxu0 0.0
    %5359 = vmatprep.subr.mxu0 0.0
    %5360 = vmatpush1.xpose.msra.mxu0 0.0
    %5361 = vmatprep.subr.mxu0 0.0
    %5362 = vmatpush1.xpose.msra.mxu0 0.0
    %5363 = vmatprep.subr.mxu0 0.0
    %5364 = vmatpush1.xpose.msra.mxu0 0.0
    %5365 = vmatprep.subr.mxu0 0.0
    %5366 = vmatpush1.xpose.msra.mxu0 0.0
    %5367 = vmatprep.subr.mxu0 0.0
    %5368 = vmatpush1.xpose.msra.mxu0 0.0
    %5369 = vmatprep.subr.mxu0 0.0
    %5370 = vmatpush1.xpose.msra.mxu0 0.0
    %5371 = vmatprep.subr.mxu0 0.0
    %5372 = vmatpush1.xpose.msra.mxu0 0.0
    %5373 = vmatprep.subr.mxu0 0.0
    %5374 = vmatpush1.xpose.msra.mxu0 0.0
    %5375 = vmatprep.subr.mxu0 0.0
    %5376 = vmatpush1.xpose.msra.mxu0 0.0
    %5377 = vmatprep.subr.mxu0 0.0
    %5378 = vmatpush1.xpose.msra.mxu0 0.0
    %5379 = vmatprep.subr.mxu0 0.0
    %5380 = vmatpush1.xpose.msra.mxu0 0.0
    %5381 = vmatprep.subr.mxu0 0.0
    %5382 = vmatpush1.xpose.msra.mxu0 0.0
    %5383 = vmatprep.subr.mxu0 0.0
    %5384 = vmatpush1.xpose.msra.mxu0 0.0
    %5385 = vmatprep.subr.mxu0 0.0
    %5386 = vmatpush1.xpose.msra.mxu0 0.0
    %5387 = vmatprep.subr.mxu0 0.0
    %5388 = vmatpush1.xpose.msra.mxu0 0.0
    %5389 = vmatprep.subr.mxu0 0.0
    %5390 = vmatpush1.xpose.msra.mxu0 0.0
    %5391 = vmatprep.mubr.f32.mxu0 0.0
    %5392 = vmatmul.mubr.f32.gmra.mrb[0].mxu0 %v5323
    %v5393 = vpop.f32.mrb[0].mxu0
    %v5394 = vadd.f32 0.0, %v5393
    %v5395 = vpop.f32.mrb[0].mxu0
    %5396 = vdwg.mxu0
    %v5397 = vsel %vm336, %v5316, -inf
    %v5398 = vsel %vm336, %v5394, -inf
    %v5399 = vsel %vm183, %v5397, -inf
    %v5400 = vrot.slane %v5399, 4
    %v5401 = vmax.f32 %v5399, %v5400
    %v5402 = vrot.slane %v5401, 2
    %v5403 = vmax.f32 %v5401, %v5402
    %v5404 = vrot.slane %v5403, 1
    %v5405 = vmax.f32 %v5403, %v5404
    %v5406 = vsel %vm183, %v5398, -inf
    %v5407 = vrot.slane %v5406, 4
    %v5408 = vmax.f32 %v5406, %v5407
    %v5409 = vrot.slane %v5408, 2
    %v5410 = vmax.f32 %v5408, %v5409
    %v5411 = vrot.slane %v5410, 1
    %v5412 = vmax.f32 %v5410, %v5411
    %v5413 = vsub.f32 %v5397, %v5405
    %v5414 = vsub.f32 %v5398, %v5412
    %v5415 = vmul.f32 %v5413, 1.442695
    %v5416 = vpow.pop %v5415
    %v5417 = vmul.f32 %v5414, 1.442695
    %v5418 = vpow.pop %v5417
    %v5419 = vsel %vm183, %v5416, 0.0
    %v5420 = vrot.slane %v5419, 4
    %v5421 = vadd.f32 %v5419, %v5420
    %v5422 = vrot.slane %v5421, 2
    %v5423 = vadd.f32 %v5421, %v5422
    %v5424 = vrot.slane %v5423, 1
    %v5425 = vadd.f32 %v5423, %v5424
    %v5426 = vsel %vm183, %v5418, 0.0
    %v5427 = vrot.slane %v5426, 4
    %v5428 = vadd.f32 %v5426, %v5427
    %v5429 = vrot.slane %v5428, 2
    %v5430 = vadd.f32 %v5428, %v5429
    %v5431 = vrot.slane %v5430, 1
    %v5432 = vadd.f32 %v5430, %v5431
    %v5433 = vrcp.pop %v5425
    %v5434 = vrcp.pop %v5432
    %v5435 = vmul.f32 %v5416, %v5433
    %v5436 = vmul.f32 %v5418, %v5434
    %5437 = vrot.lane.b32.xlu0 %v4369, 48
    %v5438 = vpop.permute.xlu0 %5437
    %v5441 = vsel %vm183, %v5435, 0
    %5443 = vmatprep.subr.mxu0 0.0
    %5444 = vmatpush1.msra.mxu0 %v5438
    %5445 = vmatprep.subr.mxu0 0.0
    %5446 = vmatpush1.msra.mxu0 0.0
    %5447 = vmatprep.subr.mxu0 0.0
    %5448 = vmatpush1.msra.mxu0 0.0
    %5449 = vmatprep.subr.mxu0 0.0
    %5450 = vmatpush1.msra.mxu0 0.0
    %5451 = vmatprep.subr.mxu0 0.0
    %5452 = vmatpush1.msra.mxu0 0.0
    %5453 = vmatprep.subr.mxu0 0.0
    %5454 = vmatpush1.msra.mxu0 0.0
    %5455 = vmatprep.subr.mxu0 0.0
    %5456 = vmatpush1.msra.mxu0 0.0
    %5457 = vmatprep.subr.mxu0 0.0
    %5458 = vmatpush1.msra.mxu0 0.0
    %5459 = vmatprep.subr.mxu0 0.0
    %5460 = vmatpush1.msra.mxu0 0.0
    %5461 = vmatprep.subr.mxu0 0.0
    %5462 = vmatpush1.msra.mxu0 0.0
    %5463 = vmatprep.subr.mxu0 0.0
    %5464 = vmatpush1.msra.mxu0 0.0
    %5465 = vmatprep.subr.mxu0 0.0
    %5466 = vmatpush1.msra.mxu0 0.0
    %5467 = vmatprep.subr.mxu0 0.0
    %5468 = vmatpush1.msra.mxu0 0.0
    %5469 = vmatprep.subr.mxu0 0.0
    %5470 = vmatpush1.msra.mxu0 0.0
    %5471 = vmatprep.subr.mxu0 0.0
    %5472 = vmatpush1.msra.mxu0 0.0
    %5473 = vmatprep.subr.mxu0 0.0
    %5474 = vmatpush1.msra.mxu0 0.0
    %5475 = vmatprep.subr.mxu0 0.0
    %5476 = vmatpush1.msra.mxu0 0.0
    %5477 = vmatprep.subr.mxu0 0.0
    %5478 = vmatpush1.msra.mxu0 0.0
    %5479 = vmatprep.subr.mxu0 0.0
    %5480 = vmatpush1.msra.mxu0 0.0
    %5481 = vmatprep.subr.mxu0 0.0
    %5482 = vmatpush1.msra.mxu0 0.0
    %5483 = vmatprep.subr.mxu0 0.0
    %5484 = vmatpush1.msra.mxu0 0.0
    %5485 = vmatprep.subr.mxu0 0.0
    %5486 = vmatpush1.msra.mxu0 0.0
    %5487 = vmatprep.subr.mxu0 0.0
    %5488 = vmatpush1.msra.mxu0 0.0
    %5489 = vmatprep.subr.mxu0 0.0
    %5490 = vmatpush1.msra.mxu0 0.0
    %5491 = vmatprep.subr.mxu0 0.0
    %5492 = vmatpush1.msra.mxu0 0.0
    %5493 = vmatprep.subr.mxu0 0.0
    %5494 = vmatpush1.msra.mxu0 0.0
    %5495 = vmatprep.subr.mxu0 0.0
    %5496 = vmatpush1.msra.mxu0 0.0
    %5497 = vmatprep.subr.mxu0 0.0
    %5498 = vmatpush1.msra.mxu0 0.0
    %5499 = vmatprep.subr.mxu0 0.0
    %5500 = vmatpush1.msra.mxu0 0.0
    %5501 = vmatprep.subr.mxu0 0.0
    %5502 = vmatpush1.msra.mxu0 0.0
    %5503 = vmatprep.subr.mxu0 0.0
    %5504 = vmatpush1.msra.mxu0 0.0
    %5505 = vmatprep.subr.mxu0 0.0
    %5506 = vmatpush1.msra.mxu0 0.0
    %5507 = vmatprep.mubr.f32.mxu0 0.0
    %5508 = vmatmul.mubr.f32.gmra.mrb[0].mxu0 %v5441
    %v5509 = vpop.f32.mrb[0].mxu0
    %v5510 = vadd.f32 0.0, %v5509
    %v5511 = vpop.f32.mrb[0].mxu0
    %5512 = vdwg.mxu0
    %5513 = vrot.lane.b32.xlu0 %v4374, 48
    %v5514 = vpop.permute.xlu0 %5513
    %v5517 = vsel %vm183, %v5436, 0
    %5519 = vmatprep.subr.mxu0 0.0
    %5520 = vmatpush1.msra.mxu0 %v5514
    %5521 = vmatprep.subr.mxu0 0.0
    %5522 = vmatpush1.msra.mxu0 0.0
    %5523 = vmatprep.subr.mxu0 0.0
    %5524 = vmatpush1.msra.mxu0 0.0
    %5525 = vmatprep.subr.mxu0 0.0
    %5526 = vmatpush1.msra.mxu0 0.0
    %5527 = vmatprep.subr.mxu0 0.0
    %5528 = vmatpush1.msra.mxu0 0.0
    %5529 = vmatprep.subr.mxu0 0.0
    %5530 = vmatpush1.msra.mxu0 0.0
    %5531 = vmatprep.subr.mxu0 0.0
    %5532 = vmatpush1.msra.mxu0 0.0
    %5533 = vmatprep.subr.mxu0 0.0
    %5534 = vmatpush1.msra.mxu0 0.0
    %5535 = vmatprep.subr.mxu0 0.0
    %5536 = vmatpush1.msra.mxu0 0.0
    %5537 = vmatprep.subr.mxu0 0.0
    %5538 = vmatpush1.msra.mxu0 0.0
    %5539 = vmatprep.subr.mxu0 0.0
    %5540 = vmatpush1.msra.mxu0 0.0
    %5541 = vmatprep.subr.mxu0 0.0
    %5542 = vmatpush1.msra.mxu0 0.0
    %5543 = vmatprep.subr.mxu0 0.0
    %5544 = vmatpush1.msra.mxu0 0.0
    %5545 = vmatprep.subr.mxu0 0.0
    %5546 = vmatpush1.msra.mxu0 0.0
    %5547 = vmatprep.subr.mxu0 0.0
    %5548 = vmatpush1.msra.mxu0 0.0
    %5549 = vmatprep.subr.mxu0 0.0
    %5550 = vmatpush1.msra.mxu0 0.0
    %5551 = vmatprep.subr.mxu0 0.0
    %5552 = vmatpush1.msra.mxu0 0.0
    %5553 = vmatprep.subr.mxu0 0.0
    %5554 = vmatpush1.msra.mxu0 0.0
    %5555 = vmatprep.subr.mxu0 0.0
    %5556 = vmatpush1.msra.mxu0 0.0
    %5557 = vmatprep.subr.mxu0 0.0
    %5558 = vmatpush1.msra.mxu0 0.0
    %5559 = vmatprep.subr.mxu0 0.0
    %5560 = vmatpush1.msra.mxu0 0.0
    %5561 = vmatprep.subr.mxu0 0.0
    %5562 = vmatpush1.msra.mxu0 0.0
    %5563 = vmatprep.subr.mxu0 0.0
    %5564 = vmatpush1.msra.mxu0 0.0
    %5565 = vmatprep.subr.mxu0 0.0
    %5566 = vmatpush1.msra.mxu0 0.0
    %5567 = vmatprep.subr.mxu0 0.0
    %5568 = vmatpush1.msra.mxu0 0.0
    %5569 = vmatprep.subr.mxu0 0.0
    %5570 = vmatpush1.msra.mxu0 0.0
    %5571 = vmatprep.subr.mxu0 0.0
    %5572 = vmatpush1.msra.mxu0 0.0
    %5573 = vmatprep.subr.mxu0 0.0
    %5574 = vmatpush1.msra.mxu0 0.0
    %5575 = vmatprep.subr.mxu0 0.0
    %5576 = vmatpush1.msra.mxu0 0.0
    %5577 = vmatprep.subr.mxu0 0.0
    %5578 = vmatpush1.msra.mxu0 0.0
    %5579 = vmatprep.subr.mxu0 0.0
    %5580 = vmatpush1.msra.mxu0 0.0
    %5581 = vmatprep.subr.mxu0 0.0
    %5582 = vmatpush1.msra.mxu0 0.0
    %5583 = vmatprep.mubr.f32.mxu0 0.0
    %5584 = vmatmul.mubr.f32.gmra.mrb[0].mxu0 %v5517
    %v5585 = vpop.f32.mrb[0].mxu0
    %v5586 = vadd.f32 0.0, %v5585
    %v5587 = vpop.f32.mrb[0].mxu0
    %5588 = vdwg.mxu0
    %5590 = vrot.lane.b32.xlu0 %v4235, 32
    %v5591 = vpop.permute.xlu0 %5590
    %v5594 = vsel %vm183, %v5510, 0
    %v5597 = vsel %vm183, %v5586, 0
    %5599 = vmatprep.subr.mxu0 0.0
    %5600 = vmatpush1.msra.mxu0 %v5591
    %5601 = vmatprep.subr.mxu0 0.0
    %5602 = vmatpush1.msra.mxu0 0.0
    %5603 = vmatprep.subr.mxu0 0.0
    %5604 = vmatpush1.msra.mxu0 0.0
    %5605 = vmatprep.subr.mxu0 0.0
    %5606 = vmatpush1.msra.mxu0 0.0
    %5607 = vmatprep.subr.mxu0 0.0
    %5608 = vmatpush1.msra.mxu0 0.0
    %5609 = vmatprep.subr.mxu0 0.0
    %5610 = vmatpush1.msra.mxu0 0.0
    %5611 = vmatprep.subr.mxu0 0.0
    %5612 = vmatpush1.msra.mxu0 0.0
    %5613 = vmatprep.subr.mxu0 0.0
    %5614 = vmatpush1.msra.mxu0 0.0
    %5615 = vmatprep.subr.mxu0 0.0
    %5616 = vmatpush1.msra.mxu0 0.0
    %5617 = vmatprep.subr.mxu0 0.0
    %5618 = vmatpush1.msra.mxu0 0.0
    %5619 = vmatprep.subr.mxu0 0.0
    %5620 = vmatpush1.msra.mxu0 0.0
    %5621 = vmatprep.subr.mxu0 0.0
    %5622 = vmatpush1.msra.mxu0 0.0
    %5623 = vmatprep.subr.mxu0 0.0
    %5624 = vmatpush1.msra.mxu0 0.0
    %5625 = vmatprep.subr.mxu0 0.0
    %5626 = vmatpush1.msra.mxu0 0.0
    %5627 = vmatprep.subr.mxu0 0.0
    %5628 = vmatpush1.msra.mxu0 0.0
    %5629 = vmatprep.subr.mxu0 0.0
    %5630 = vmatpush1.msra.mxu0 0.0
    %5631 = vmatprep.subr.mxu0 0.0
    %5632 = vmatpush1.msra.mxu0 0.0
    %5633 = vmatprep.subr.mxu0 0.0
    %5634 = vmatpush1.msra.mxu0 0.0
    %5635 = vmatprep.subr.mxu0 0.0
    %5636 = vmatpush1.msra.mxu0 0.0
    %5637 = vmatprep.subr.mxu0 0.0
    %5638 = vmatpush1.msra.mxu0 0.0
    %5639 = vmatprep.subr.mxu0 0.0
    %5640 = vmatpush1.msra.mxu0 0.0
    %5641 = vmatprep.subr.mxu0 0.0
    %5642 = vmatpush1.msra.mxu0 0.0
    %5643 = vmatprep.subr.mxu0 0.0
    %5644 = vmatpush1.msra.mxu0 0.0
    %5645 = vmatprep.subr.mxu0 0.0
    %5646 = vmatpush1.msra.mxu0 0.0
    %5647 = vmatprep.subr.mxu0 0.0
    %5648 = vmatpush1.msra.mxu0 0.0
    %5649 = vmatprep.subr.mxu0 0.0
    %5650 = vmatpush1.msra.mxu0 0.0
    %5651 = vmatprep.subr.mxu0 0.0
    %5652 = vmatpush1.msra.mxu0 0.0
    %5653 = vmatprep.subr.mxu0 0.0
    %5654 = vmatpush1.msra.mxu0 0.0
    %5655 = vmatprep.subr.mxu0 0.0
    %5656 = vmatpush1.msra.mxu0 0.0
    %5657 = vmatprep.subr.mxu0 0.0
    %5658 = vmatpush1.msra.mxu0 0.0
    %5659 = vmatprep.subr.mxu0 0.0
    %5660 = vmatpush1.msra.mxu0 0.0
    %5661 = vmatprep.subr.mxu0 0.0
    %5662 = vmatpush1.msra.mxu0 0.0
    %5663 = vmatprep.mubr.f32.mxu0 0.0
    %5664 = vmatmul.mubr.f32.gmra.mrb[0].mxu0 %v5594
    %v5665 = vpop.f32.mrb[0].mxu0
    %v5666 = vadd.f32 0.0, %v5665
    %v5667 = vpop.f32.mrb[0].mxu0
    %5668 = vmatprep.mubr.f32.mxu0 0.0
    %5669 = vmatmul.mubr.f32.gmra.mrb[0].mxu0 %v5597
    %v5670 = vpop.f32.mrb[0].mxu0
    %v5671 = vadd.f32 0.0, %v5670
    %v5672 = vpop.f32.mrb[0].mxu0
    %5673 = vdwg.mxu0
    %v5674 = vadd.f32 %v5233, %v5666
    %v5675 = vadd.f32 %v5238, %v5671
    %5676 = vrot.lane.b32.xlu0 %v4369, 72
    %v5677 = vpop.permute.xlu0 %5676
    %5678 = vrot.lane.b32.xlu0 %v4369, 104
    %v5679 = vpop.permute.xlu0 %5678
    %v5680 = vsel %vm183, %v5677, 0
    %v5682 = vsel %vm183, %v5679, 0
    %5684 = vmatprep.subr.mxu0 0.0
    %5685 = vmatpush1.xpose.msra.mxu0 %v5682
    %5686 = vmatprep.subr.mxu0 0.0
    %5687 = vmatpush1.xpose.msra.mxu0 0.0
    %5688 = vmatprep.subr.mxu0 0.0
    %5689 = vmatpush1.xpose.msra.mxu0 0.0
    %5690 = vmatprep.subr.mxu0 0.0
    %5691 = vmatpush1.xpose.msra.mxu0 0.0
    %5692 = vmatprep.subr.mxu0 0.0
    %5693 = vmatpush1.xpose.msra.mxu0 0.0
    %5694 = vmatprep.subr.mxu0 0.0
    %5695 = vmatpush1.xpose.msra.mxu0 0.0
    %5696 = vmatprep.subr.mxu0 0.0
    %5697 = vmatpush1.xpose.msra.mxu0 0.0
    %5698 = vmatprep.subr.mxu0 0.0
    %5699 = vmatpush1.xpose.msra.mxu0 0.0
    %5700 = vmatprep.subr.mxu0 0.0
    %5701 = vmatpush1.xpose.msra.mxu0 0.0
    %5702 = vmatprep.subr.mxu0 0.0
    %5703 = vmatpush1.xpose.msra.mxu0 0.0
    %5704 = vmatprep.subr.mxu0 0.0
    %5705 = vmatpush1.xpose.msra.mxu0 0.0
    %5706 = vmatprep.subr.mxu0 0.0
    %5707 = vmatpush1.xpose.msra.mxu0 0.0
    %5708 = vmatprep.subr.mxu0 0.0
    %5709 = vmatpush1.xpose.msra.mxu0 0.0
    %5710 = vmatprep.subr.mxu0 0.0
    %5711 = vmatpush1.xpose.msra.mxu0 0.0
    %5712 = vmatprep.subr.mxu0 0.0
    %5713 = vmatpush1.xpose.msra.mxu0 0.0
    %5714 = vmatprep.subr.mxu0 0.0
    %5715 = vmatpush1.xpose.msra.mxu0 0.0
    %5716 = vmatprep.subr.mxu0 0.0
    %5717 = vmatpush1.xpose.msra.mxu0 0.0
    %5718 = vmatprep.subr.mxu0 0.0
    %5719 = vmatpush1.xpose.msra.mxu0 0.0
    %5720 = vmatprep.subr.mxu0 0.0
    %5721 = vmatpush1.xpose.msra.mxu0 0.0
    %5722 = vmatprep.subr.mxu0 0.0
    %5723 = vmatpush1.xpose.msra.mxu0 0.0
    %5724 = vmatprep.subr.mxu0 0.0
    %5725 = vmatpush1.xpose.msra.mxu0 0.0
    %5726 = vmatprep.subr.mxu0 0.0
    %5727 = vmatpush1.xpose.msra.mxu0 0.0
    %5728 = vmatprep.subr.mxu0 0.0
    %5729 = vmatpush1.xpose.msra.mxu0 0.0
    %5730 = vmatprep.subr.mxu0 0.0
    %5731 = vmatpush1.xpose.msra.mxu0 0.0
    %5732 = vmatprep.subr.mxu0 0.0
    %5733 = vmatpush1.xpose.msra.mxu0 0.0
    %5734 = vmatprep.subr.mxu0 0.0
    %5735 = vmatpush1.xpose.msra.mxu0 0.0
    %5736 = vmatprep.subr.mxu0 0.0
    %5737 = vmatpush1.xpose.msra.mxu0 0.0
    %5738 = vmatprep.subr.mxu0 0.0
    %5739 = vmatpush1.xpose.msra.mxu0 0.0
    %5740 = vmatprep.subr.mxu0 0.0
    %5741 = vmatpush1.xpose.msra.mxu0 0.0
    %5742 = vmatprep.subr.mxu0 0.0
    %5743 = vmatpush1.xpose.msra.mxu0 0.0
    %5744 = vmatprep.subr.mxu0 0.0
    %5745 = vmatpush1.xpose.msra.mxu0 0.0
    %5746 = vmatprep.subr.mxu0 0.0
    %5747 = vmatpush1.xpose.msra.mxu0 0.0
    %5748 = vmatprep.mubr.f32.mxu0 0.0
    %5749 = vmatmul.mubr.f32.gmra.mrb[0].mxu0 %v5680
    %v5750 = vpop.f32.mrb[0].mxu0
    %v5751 = vadd.f32 0.0, %v5750
    %v5752 = vpop.f32.mrb[0].mxu0
    %5753 = vdwg.mxu0
    %5754 = vrot.lane.b32.xlu0 %v4374, 72
    %v5755 = vpop.permute.xlu0 %5754
    %5756 = vrot.lane.b32.xlu0 %v4374, 104
    %v5757 = vpop.permute.xlu0 %5756
    %v5758 = vsel %vm183, %v5755, 0
    %v5760 = vsel %vm183, %v5757, 0
    %5762 = vmatprep.subr.mxu0 0.0
    %5763 = vmatpush1.xpose.msra.mxu0 %v5760
    %5764 = vmatprep.subr.mxu0 0.0
    %5765 = vmatpush1.xpose.msra.mxu0 0.0
    %5766 = vmatprep.subr.mxu0 0.0
    %5767 = vmatpush1.xpose.msra.mxu0 0.0
    %5768 = vmatprep.subr.mxu0 0.0
    %5769 = vmatpush1.xpose.msra.mxu0 0.0
    %5770 = vmatprep.subr.mxu0 0.0
    %5771 = vmatpush1.xpose.msra.mxu0 0.0
    %5772 = vmatprep.subr.mxu0 0.0
    %5773 = vmatpush1.xpose.msra.mxu0 0.0
    %5774 = vmatprep.subr.mxu0 0.0
    %5775 = vmatpush1.xpose.msra.mxu0 0.0
    %5776 = vmatprep.subr.mxu0 0.0
    %5777 = vmatpush1.xpose.msra.mxu0 0.0
    %5778 = vmatprep.subr.mxu0 0.0
    %5779 = vmatpush1.xpose.msra.mxu0 0.0
    %5780 = vmatprep.subr.mxu0 0.0
    %5781 = vmatpush1.xpose.msra.mxu0 0.0
    %5782 = vmatprep.subr.mxu0 0.0
    %5783 = vmatpush1.xpose.msra.mxu0 0.0
    %5784 = vmatprep.subr.mxu0 0.0
    %5785 = vmatpush1.xpose.msra.mxu0 0.0
    %5786 = vmatprep.subr.mxu0 0.0
    %5787 = vmatpush1.xpose.msra.mxu0 0.0
    %5788 = vmatprep.subr.mxu0 0.0
    %5789 = vmatpush1.xpose.msra.mxu0 0.0
    %5790 = vmatprep.subr.mxu0 0.0
    %5791 = vmatpush1.xpose.msra.mxu0 0.0
    %5792 = vmatprep.subr.mxu0 0.0
    %5793 = vmatpush1.xpose.msra.mxu0 0.0
    %5794 = vmatprep.subr.mxu0 0.0
    %5795 = vmatpush1.xpose.msra.mxu0 0.0
    %5796 = vmatprep.subr.mxu0 0.0
    %5797 = vmatpush1.xpose.msra.mxu0 0.0
    %5798 = vmatprep.subr.mxu0 0.0
    %5799 = vmatpush1.xpose.msra.mxu0 0.0
    %5800 = vmatprep.subr.mxu0 0.0
    %5801 = vmatpush1.xpose.msra.mxu0 0.0
    %5802 = vmatprep.subr.mxu0 0.0
    %5803 = vmatpush1.xpose.msra.mxu0 0.0
    %5804 = vmatprep.subr.mxu0 0.0
    %5805 = vmatpush1.xpose.msra.mxu0 0.0
    %5806 = vmatprep.subr.mxu0 0.0
    %5807 = vmatpush1.xpose.msra.mxu0 0.0
    %5808 = vmatprep.subr.mxu0 0.0
    %5809 = vmatpush1.xpose.msra.mxu0 0.0
    %5810 = vmatprep.subr.mxu0 0.0
    %5811 = vmatpush1.xpose.msra.mxu0 0.0
    %5812 = vmatprep.subr.mxu0 0.0
    %5813 = vmatpush1.xpose.msra.mxu0 0.0
    %5814 = vmatprep.subr.mxu0 0.0
    %5815 = vmatpush1.xpose.msra.mxu0 0.0
    %5816 = vmatprep.subr.mxu0 0.0
    %5817 = vmatpush1.xpose.msra.mxu0 0.0
    %5818 = vmatprep.subr.mxu0 0.0
    %5819 = vmatpush1.xpose.msra.mxu0 0.0
    %5820 = vmatprep.subr.mxu0 0.0
    %5821 = vmatpush1.xpose.msra.mxu0 0.0
    %5822 = vmatprep.subr.mxu0 0.0
    %5823 = vmatpush1.xpose.msra.mxu0 0.0
    %5824 = vmatprep.subr.mxu0 0.0
    %5825 = vmatpush1.xpose.msra.mxu0 0.0
    %5826 = vmatprep.mubr.f32.mxu0 0.0
    %5827 = vmatmul.mubr.f32.gmra.mrb[0].mxu0 %v5758
    %v5828 = vpop.f32.mrb[0].mxu0
    %v5829 = vadd.f32 0.0, %v5828
    %v5830 = vpop.f32.mrb[0].mxu0
    %5831 = vdwg.mxu0
    %v5832 = vsel %vm336, %v5751, -inf
    %v5833 = vsel %vm336, %v5829, -inf
    %v5834 = vsel %vm183, %v5832, -inf
    %v5835 = vrot.slane %v5834, 4
    %v5836 = vmax.f32 %v5834, %v5835
    %v5837 = vrot.slane %v5836, 2
    %v5838 = vmax.f32 %v5836, %v5837
    %v5839 = vrot.slane %v5838, 1
    %v5840 = vmax.f32 %v5838, %v5839
    %v5841 = vsel %vm183, %v5833, -inf
    %v5842 = vrot.slane %v5841, 4
    %v5843 = vmax.f32 %v5841, %v5842
    %v5844 = vrot.slane %v5843, 2
    %v5845 = vmax.f32 %v5843, %v5844
    %v5846 = vrot.slane %v5845, 1
    %v5847 = vmax.f32 %v5845, %v5846
    %v5848 = vsub.f32 %v5832, %v5840
    %v5849 = vsub.f32 %v5833, %v5847
    %v5850 = vmul.f32 %v5848, 1.442695
    %v5851 = vpow.pop %v5850
    %v5852 = vmul.f32 %v5849, 1.442695
    %v5853 = vpow.pop %v5852
    %v5854 = vsel %vm183, %v5851, 0.0
    %v5855 = vrot.slane %v5854, 4
    %v5856 = vadd.f32 %v5854, %v5855
    %v5857 = vrot.slane %v5856, 2
    %v5858 = vadd.f32 %v5856, %v5857
    %v5859 = vrot.slane %v5858, 1
    %v5860 = vadd.f32 %v5858, %v5859
    %v5861 = vsel %vm183, %v5853, 0.0
    %v5862 = vrot.slane %v5861, 4
    %v5863 = vadd.f32 %v5861, %v5862
    %v5864 = vrot.slane %v5863, 2
    %v5865 = vadd.f32 %v5863, %v5864
    %v5866 = vrot.slane %v5865, 1
    %v5867 = vadd.f32 %v5865, %v5866
    %v5868 = vrcp.pop %v5860
    %v5869 = vrcp.pop %v5867
    %v5870 = vmul.f32 %v5851, %v5868
    %v5871 = vmul.f32 %v5853, %v5869
    %5872 = vrot.lane.b32.xlu0 %v4369, 40
    %v5873 = vpop.permute.xlu0 %5872
    %v5876 = vsel %vm183, %v5870, 0
    %5878 = vmatprep.subr.mxu0 0.0
    %5879 = vmatpush1.msra.mxu0 %v5873
    %5880 = vmatprep.subr.mxu0 0.0
    %5881 = vmatpush1.msra.mxu0 0.0
    %5882 = vmatprep.subr.mxu0 0.0
    %5883 = vmatpush1.msra.mxu0 0.0
    %5884 = vmatprep.subr.mxu0 0.0
    %5885 = vmatpush1.msra.mxu0 0.0
    %5886 = vmatprep.subr.mxu0 0.0
    %5887 = vmatpush1.msra.mxu0 0.0
    %5888 = vmatprep.subr.mxu0 0.0
    %5889 = vmatpush1.msra.mxu0 0.0
    %5890 = vmatprep.subr.mxu0 0.0
    %5891 = vmatpush1.msra.mxu0 0.0
    %5892 = vmatprep.subr.mxu0 0.0
    %5893 = vmatpush1.msra.mxu0 0.0
    %5894 = vmatprep.subr.mxu0 0.0
    %5895 = vmatpush1.msra.mxu0 0.0
    %5896 = vmatprep.subr.mxu0 0.0
    %5897 = vmatpush1.msra.mxu0 0.0
    %5898 = vmatprep.subr.mxu0 0.0
    %5899 = vmatpush1.msra.mxu0 0.0
    %5900 = vmatprep.subr.mxu0 0.0
    %5901 = vmatpush1.msra.mxu0 0.0
    %5902 = vmatprep.subr.mxu0 0.0
    %5903 = vmatpush1.msra.mxu0 0.0
    %5904 = vmatprep.subr.mxu0 0.0
    %5905 = vmatpush1.msra.mxu0 0.0
    %5906 = vmatprep.subr.mxu0 0.0
    %5907 = vmatpush1.msra.mxu0 0.0
    %5908 = vmatprep.subr.mxu0 0.0
    %5909 = vmatpush1.msra.mxu0 0.0
    %5910 = vmatprep.subr.mxu0 0.0
    %5911 = vmatpush1.msra.mxu0 0.0
    %5912 = vmatprep.subr.mxu0 0.0
    %5913 = vmatpush1.msra.mxu0 0.0
    %5914 = vmatprep.subr.mxu0 0.0
    %5915 = vmatpush1.msra.mxu0 0.0
    %5916 = vmatprep.subr.mxu0 0.0
    %5917 = vmatpush1.msra.mxu0 0.0
    %5918 = vmatprep.subr.mxu0 0.0
    %5919 = vmatpush1.msra.mxu0 0.0
    %5920 = vmatprep.subr.mxu0 0.0
    %5921 = vmatpush1.msra.mxu0 0.0
    %5922 = vmatprep.subr.mxu0 0.0
    %5923 = vmatpush1.msra.mxu0 0.0
    %5924 = vmatprep.subr.mxu0 0.0
    %5925 = vmatpush1.msra.mxu0 0.0
    %5926 = vmatprep.subr.mxu0 0.0
    %5927 = vmatpush1.msra.mxu0 0.0
    %5928 = vmatprep.subr.mxu0 0.0
    %5929 = vmatpush1.msra.mxu0 0.0
    %5930 = vmatprep.subr.mxu0 0.0
    %5931 = vmatpush1.msra.mxu0 0.0
    %5932 = vmatprep.subr.mxu0 0.0
    %5933 = vmatpush1.msra.mxu0 0.0
    %5934 = vmatprep.subr.mxu0 0.0
    %5935 = vmatpush1.msra.mxu0 0.0
    %5936 = vmatprep.subr.mxu0 0.0
    %5937 = vmatpush1.msra.mxu0 0.0
    %5938 = vmatprep.subr.mxu0 0.0
    %5939 = vmatpush1.msra.mxu0 0.0
    %5940 = vmatprep.subr.mxu0 0.0
    %5941 = vmatpush1.msra.mxu0 0.0
    %5942 = vmatprep.mubr.f32.mxu0 0.0
    %5943 = vmatmul.mubr.f32.gmra.mrb[0].mxu0 %v5876
    %v5944 = vpop.f32.mrb[0].mxu0
    %v5945 = vadd.f32 0.0, %v5944
    %v5946 = vpop.f32.mrb[0].mxu0
    %5947 = vdwg.mxu0
    %5948 = vrot.lane.b32.xlu0 %v4374, 40
    %v5949 = vpop.permute.xlu0 %5948
    %v5952 = vsel %vm183, %v5871, 0
    %5954 = vmatprep.subr.mxu0 0.0
    %5955 = vmatpush1.msra.mxu0 %v5949
    %5956 = vmatprep.subr.mxu0 0.0
    %5957 = vmatpush1.msra.mxu0 0.0
    %5958 = vmatprep.subr.mxu0 0.0
    %5959 = vmatpush1.msra.mxu0 0.0
    %5960 = vmatprep.subr.mxu0 0.0
    %5961 = vmatpush1.msra.mxu0 0.0
    %5962 = vmatprep.subr.mxu0 0.0
    %5963 = vmatpush1.msra.mxu0 0.0
    %5964 = vmatprep.subr.mxu0 0.0
    %5965 = vmatpush1.msra.mxu0 0.0
    %5966 = vmatprep.subr.mxu0 0.0
    %5967 = vmatpush1.msra.mxu0 0.0
    %5968 = vmatprep.subr.mxu0 0.0
    %5969 = vmatpush1.msra.mxu0 0.0
    %5970 = vmatprep.subr.mxu0 0.0
    %5971 = vmatpush1.msra.mxu0 0.0
    %5972 = vmatprep.subr.mxu0 0.0
    %5973 = vmatpush1.msra.mxu0 0.0
    %5974 = vmatprep.subr.mxu0 0.0
    %5975 = vmatpush1.msra.mxu0 0.0
    %5976 = vmatprep.subr.mxu0 0.0
    %5977 = vmatpush1.msra.mxu0 0.0
    %5978 = vmatprep.subr.mxu0 0.0
    %5979 = vmatpush1.msra.mxu0 0.0
    %5980 = vmatprep.subr.mxu0 0.0
    %5981 = vmatpush1.msra.mxu0 0.0
    %5982 = vmatprep.subr.mxu0 0.0
    %5983 = vmatpush1.msra.mxu0 0.0
    %5984 = vmatprep.subr.mxu0 0.0
    %5985 = vmatpush1.msra.mxu0 0.0
    %5986 = vmatprep.subr.mxu0 0.0
    %5987 = vmatpush1.msra.mxu0 0.0
    %5988 = vmatprep.subr.mxu0 0.0
    %5989 = vmatpush1.msra.mxu0 0.0
    %5990 = vmatprep.subr.mxu0 0.0
    %5991 = vmatpush1.msra.mxu0 0.0
    %5992 = vmatprep.subr.mxu0 0.0
    %5993 = vmatpush1.msra.mxu0 0.0
    %5994 = vmatprep.subr.mxu0 0.0
    %5995 = vmatpush1.msra.mxu0 0.0
    %5996 = vmatprep.subr.mxu0 0.0
    %5997 = vmatpush1.msra.mxu0 0.0
    %5998 = vmatprep.subr.mxu0 0.0
    %5999 = vmatpush1.msra.mxu0 0.0
    %6000 = vmatprep.subr.mxu0 0.0
    %6001 = vmatpush1.msra.mxu0 0.0
    %6002 = vmatprep.subr.mxu0 0.0
    %6003 = vmatpush1.msra.mxu0 0.0
    %6004 = vmatprep.subr.mxu0 0.0
    %6005 = vmatpush1.msra.mxu0 0.0
    %6006 = vmatprep.subr.mxu0 0.0
    %6007 = vmatpush1.msra.mxu0 0.0
    %6008 = vmatprep.subr.mxu0 0.0
    %6009 = vmatpush1.msra.mxu0 0.0
    %6010 = vmatprep.subr.mxu0 0.0
    %6011 = vmatpush1.msra.mxu0 0.0
    %6012 = vmatprep.subr.mxu0 0.0
    %6013 = vmatpush1.msra.mxu0 0.0
    %6014 = vmatprep.subr.mxu0 0.0
    %6015 = vmatpush1.msra.mxu0 0.0
    %6016 = vmatprep.subr.mxu0 0.0
    %6017 = vmatpush1.msra.mxu0 0.0
    %6018 = vmatprep.mubr.f32.mxu0 0.0
    %6019 = vmatmul.mubr.f32.gmra.mrb[0].mxu0 %v5952
    %v6020 = vpop.f32.mrb[0].mxu0
    %v6021 = vadd.f32 0.0, %v6020
    %v6022 = vpop.f32.mrb[0].mxu0
    %6023 = vdwg.mxu0
    %6025 = vrot.lane.b32.xlu0 %v4237, 32
    %v6026 = vpop.permute.xlu0 %6025
    %v6029 = vsel %vm183, %v5945, 0
    %v6032 = vsel %vm183, %v6021, 0
    %6034 = vmatprep.subr.mxu0 0.0
    %6035 = vmatpush1.msra.mxu0 %v6026
    %6036 = vmatprep.subr.mxu0 0.0
    %6037 = vmatpush1.msra.mxu0 0.0
    %6038 = vmatprep.subr.mxu0 0.0
    %6039 = vmatpush1.msra.mxu0 0.0
    %6040 = vmatprep.subr.mxu0 0.0
    %6041 = vmatpush1.msra.mxu0 0.0
    %6042 = vmatprep.subr.mxu0 0.0
    %6043 = vmatpush1.msra.mxu0 0.0
    %6044 = vmatprep.subr.mxu0 0.0
    %6045 = vmatpush1.msra.mxu0 0.0
    %6046 = vmatprep.subr.mxu0 0.0
    %6047 = vmatpush1.msra.mxu0 0.0
    %6048 = vmatprep.subr.mxu0 0.0
    %6049 = vmatpush1.msra.mxu0 0.0
    %6050 = vmatprep.subr.mxu0 0.0
    %6051 = vmatpush1.msra.mxu0 0.0
    %6052 = vmatprep.subr.mxu0 0.0
    %6053 = vmatpush1.msra.mxu0 0.0
    %6054 = vmatprep.subr.mxu0 0.0
    %6055 = vmatpush1.msra.mxu0 0.0
    %6056 = vmatprep.subr.mxu0 0.0
    %6057 = vmatpush1.msra.mxu0 0.0
    %6058 = vmatprep.subr.mxu0 0.0
    %6059 = vmatpush1.msra.mxu0 0.0
    %6060 = vmatprep.subr.mxu0 0.0
    %6061 = vmatpush1.msra.mxu0 0.0
    %6062 = vmatprep.subr.mxu0 0.0
    %6063 = vmatpush1.msra.mxu0 0.0
    %6064 = vmatprep.subr.mxu0 0.0
    %6065 = vmatpush1.msra.mxu0 0.0
    %6066 = vmatprep.subr.mxu0 0.0
    %6067 = vmatpush1.msra.mxu0 0.0
    %6068 = vmatprep.subr.mxu0 0.0
    %6069 = vmatpush1.msra.mxu0 0.0
    %6070 = vmatprep.subr.mxu0 0.0
    %6071 = vmatpush1.msra.mxu0 0.0
    %6072 = vmatprep.subr.mxu0 0.0
    %6073 = vmatpush1.msra.mxu0 0.0
    %6074 = vmatprep.subr.mxu0 0.0
    %6075 = vmatpush1.msra.mxu0 0.0
    %6076 = vmatprep.subr.mxu0 0.0
    %6077 = vmatpush1.msra.mxu0 0.0
    %6078 = vmatprep.subr.mxu0 0.0
    %6079 = vmatpush1.msra.mxu0 0.0
    %6080 = vmatprep.subr.mxu0 0.0
    %6081 = vmatpush1.msra.mxu0 0.0
    %6082 = vmatprep.subr.mxu0 0.0
    %6083 = vmatpush1.msra.mxu0 0.0
    %6084 = vmatprep.subr.mxu0 0.0
    %6085 = vmatpush1.msra.mxu0 0.0
    %6086 = vmatprep.subr.mxu0 0.0
    %6087 = vmatpush1.msra.mxu0 0.0
    %6088 = vmatprep.subr.mxu0 0.0
    %6089 = vmatpush1.msra.mxu0 0.0
    %6090 = vmatprep.subr.mxu0 0.0
    %6091 = vmatpush1.msra.mxu0 0.0
    %6092 = vmatprep.subr.mxu0 0.0
    %6093 = vmatpush1.msra.mxu0 0.0
    %6094 = vmatprep.subr.mxu0 0.0
    %6095 = vmatpush1.msra.mxu0 0.0
    %6096 = vmatprep.subr.mxu0 0.0
    %6097 = vmatpush1.msra.mxu0 0.0
    %6098 = vmatprep.mubr.f32.mxu0 0.0
    %6099 = vmatmul.mubr.f32.gmra.mrb[0].mxu0 %v6029
    %v6100 = vpop.f32.mrb[0].mxu0
    %v6101 = vadd.f32 0.0, %v6100
    %v6102 = vpop.f32.mrb[0].mxu0
    %6103 = vmatprep.mubr.f32.mxu0 0.0
    %6104 = vmatmul.mubr.f32.gmra.mrb[0].mxu0 %v6032
    %v6105 = vpop.f32.mrb[0].mxu0
    %v6106 = vadd.f32 0.0, %v6105
    %v6107 = vpop.f32.mrb[0].mxu0
    %6108 = vdwg.mxu0
    %v6109 = vadd.f32 %v5674, %v6101
    %v6110 = vadd.f32 %v5675, %v6106
    %v6111 = vadd.f32 %v4228, %v6109
    %v6112 = vadd.f32 %v4229, %v6110
    %v6113 = vlaneseq
    %v6114 = vshrl.u32 %v6113, 7
    %v6115 = vsub.s32 4, %v6114
    %v6116 = vrot.slane %v4257, %v6115
    %v6117 = vadd.f32 %v6111, %v6116
    %v6118 = vadd.f32 %v6112, %v6116
    %v6119 = vsel %vm59, %v6117, 0.0
    %6120 = vadd.xlane.f32.xlu0 %v6119
    %v6121 = vpop.xlane.xlu0 %6120
    %v6122 = vsel %vm59, %v6118, 0.0
    %6123 = vadd.xlane.f32.xlu0 %v6122
    %v6124 = vpop.xlane.xlu0 %6123
    %v6125 = vmul.f32 %v6121, %v66
    %v6126 = vmul.f32 %v6124, %v66
    %v6127 = vsub.f32 %v6117, %v6125
    %v6128 = vsub.f32 %v6118, %v6126
    %v6129 = vmul.f32 %v6127, %v6127
    %v6130 = vmul.f32 %v6128, %v6128
    %v6131 = vsel %vm59, %v6129, 0.0
    %6132 = vadd.xlane.f32.xlu0 %v6131
    %v6133 = vpop.xlane.xlu0 %6132
    %v6134 = vsel %vm59, %v6130, 0.0
    %6135 = vadd.xlane.f32.xlu0 %v6134
    %v6136 = vpop.xlane.xlu0 %6135
    %v6137 = vmul.f32 %v6133, %v66
    %v6138 = vmul.f32 %v6136, %v66
    %v6139 = vadd.f32 %v6137, 1e-05
    %v6140 = vadd.f32 %v6138, 1e-05
    %v6141 = vrsqrt.pop %v6139
    %v6142 = vrsqrt.pop %v6140
    %v6143 = vmul.f32 %v6127, %v6141
    %v6144 = vmul.f32 %v6128, %v6142
    %v6145 = vlaneseq
    %v6146 = vshrl.u32 %v6145, 7
    %v6147 = vsub.s32 2, %v6146
    %v6148 = vrot.slane %v4257, %v6147
    %v6149 = vmul.f32 %v6143, %v6148
    %v6150 = vmul.f32 %v6144, %v6148
    %v6151 = vlaneseq
    %v6152 = vshrl.u32 %v6151, 7
    %v6153 = vsub.s32 3, %v6152
    %v6154 = vrot.slane %v4257, %v6153
    %v6155 = vadd.f32 %v6149, %v6154
    %v6156 = vadd.f32 %v6150, %v6154
    %v6157 = vlaneseq
    %v6158 = vshrl.u32 %v6157, 7
    %v6159 = vsub.s32 6, %v6158
    %v6160 = vrot.slane %v4257, %v6159
    %v6162 = vsel %vm59, %v6155, 0
    %v6165 = vsel %vm59, %v6156, 0
    %6167 = vmatprep.subr.mxu0 0.0
    %6168 = vmatpush1.msra.mxu0 %v4232
    %6169 = vmatprep.subr.mxu0 0.0
    %6170 = vmatpush1.msra.mxu0 %v4234
    %6171 = vmatprep.subr.mxu0 0.0
    %6172 = vmatpush1.msra.mxu0 %v4236
    %6173 = vmatprep.subr.mxu0 0.0
    %6174 = vmatpush1.msra.mxu0 %v4238
    %6175 = vmatprep.subr.mxu0 0.0
    %6176 = vmatpush1.msra.mxu0 0.0
    %6177 = vmatprep.subr.mxu0 0.0
    %6178 = vmatpush1.msra.mxu0 0.0
    %6179 = vmatprep.subr.mxu0 0.0
    %6180 = vmatpush1.msra.mxu0 0.0
    %6181 = vmatprep.subr.mxu0 0.0
    %6182 = vmatpush1.msra.mxu0 0.0
    %6183 = vmatprep.subr.mxu0 0.0
    %6184 = vmatpush1.msra.mxu0 0.0
    %6185 = vmatprep.subr.mxu0 0.0
    %6186 = vmatpush1.msra.mxu0 0.0
    %6187 = vmatprep.subr.mxu0 0.0
    %6188 = vmatpush1.msra.mxu0 0.0
    %6189 = vmatprep.subr.mxu0 0.0
    %6190 = vmatpush1.msra.mxu0 0.0
    %6191 = vmatprep.subr.mxu0 0.0
    %6192 = vmatpush1.msra.mxu0 0.0
    %6193 = vmatprep.subr.mxu0 0.0
    %6194 = vmatpush1.msra.mxu0 0.0
    %6195 = vmatprep.subr.mxu0 0.0
    %6196 = vmatpush1.msra.mxu0 0.0
    %6197 = vmatprep.subr.mxu0 0.0
    %6198 = vmatpush1.msra.mxu0 0.0
    %6199 = vmatprep.subr.mxu0 0.0
    %6200 = vmatpush1.msra.mxu0 0.0
    %6201 = vmatprep.subr.mxu0 0.0
    %6202 = vmatpush1.msra.mxu0 0.0
    %6203 = vmatprep.subr.mxu0 0.0
    %6204 = vmatpush1.msra.mxu0 0.0
    %6205 = vmatprep.subr.mxu0 0.0
    %6206 = vmatpush1.msra.mxu0 0.0
    %6207 = vmatprep.subr.mxu0 0.0
    %6208 = vmatpush1.msra.mxu0 0.0
    %6209 = vmatprep.subr.mxu0 0.0
    %6210 = vmatpush1.msra.mxu0 0.0
    %6211 = vmatprep.subr.mxu0 0.0
    %6212 = vmatpush1.msra.mxu0 0.0
    %6213 = vmatprep.subr.mxu0 0.0
    %6214 = vmatpush1.msra.mxu0 0.0
    %6215 = vmatprep.subr.mxu0 0.0
    %6216 = vmatpush1.msra.mxu0 0.0
    %6217 = vmatprep.subr.mxu0 0.0
    %6218 = vmatpush1.msra.mxu0 0.0
    %6219 = vmatprep.subr.mxu0 0.0
    %6220 = vmatpush1.msra.mxu0 0.0
    %6221 = vmatprep.subr.mxu0 0.0
    %6222 = vmatpush1.msra.mxu0 0.0
    %6223 = vmatprep.subr.mxu0 0.0
    %6224 = vmatpush1.msra.mxu0 0.0
    %6225 = vmatprep.subr.mxu0 0.0
    %6226 = vmatpush1.msra.mxu0 0.0
    %6227 = vmatprep.subr.mxu0 0.0
    %6228 = vmatpush1.msra.mxu0 0.0
    %6229 = vmatprep.subr.mxu0 0.0
    %6230 = vmatpush1.msra.mxu0 0.0
    %6231 = vmatprep.mubr.f32.mxu0 0.0
    %6232 = vmatmul.mubr.f32.gmra.mrb[0].mxu0 %v6162
    %v6233 = vpop.f32.mrb[0].mxu0
    %v6234 = vadd.f32 %v6160, %v6233
    %v6235 = vpop.f32.mrb[0].mxu0
    %6236 = vmatprep.mubr.f32.mxu0 0.0
    %6237 = vmatmul.mubr.f32.gmra.mrb[0].mxu0 %v6165
    %v6238 = vpop.f32.mrb[0].mxu0
    %v6239 = vadd.f32 %v6160, %v6238
    %v6240 = vpop.f32.mrb[0].mxu0
    %6241 = vdwg.mxu0
    %v6242 = vmax.f32 %v6234, 0.0
    %v6243 = vmax.f32 %v6239, 0.0
    %6244 = vmatprep.subr.mxu0 0.0
    %6245 = vmatpush1.msra.mxu0 %v4240
    %6246 = vmatprep.subr.mxu0 0.0
    %6247 = vmatpush1.msra.mxu0 %v4241
    %6248 = vmatprep.subr.mxu0 0.0
    %6249 = vmatpush1.msra.mxu0 %v4242
    %6250 = vmatprep.subr.mxu0 0.0
    %6251 = vmatpush1.msra.mxu0 %v4243
    %6252 = vmatprep.subr.mxu0 0.0
    %6253 = vmatpush1.msra.mxu0 %v4244
    %6254 = vmatprep.subr.mxu0 0.0
    %6255 = vmatpush1.msra.mxu0 %v4245
    %6256 = vmatprep.subr.mxu0 0.0
    %6257 = vmatpush1.msra.mxu0 %v4246
    %6258 = vmatprep.subr.mxu0 0.0
    %6259 = vmatpush1.msra.mxu0 %v4247
    %6260 = vmatprep.subr.mxu0 0.0
    %6261 = vmatpush1.msra.mxu0 %v4248
    %6262 = vmatprep.subr.mxu0 0.0
    %6263 = vmatpush1.msra.mxu0 %v4249
    %6264 = vmatprep.subr.mxu0 0.0
    %6265 = vmatpush1.msra.mxu0 %v4250
    %6266 = vmatprep.subr.mxu0 0.0
    %6267 = vmatpush1.msra.mxu0 %v4251
    %6268 = vmatprep.subr.mxu0 0.0
    %6269 = vmatpush1.msra.mxu0 %v4252
    %6270 = vmatprep.subr.mxu0 0.0
    %6271 = vmatpush1.msra.mxu0 %v4253
    %6272 = vmatprep.subr.mxu0 0.0
    %6273 = vmatpush1.msra.mxu0 %v4254
    %6274 = vmatprep.subr.mxu0 0.0
    %6275 = vmatpush1.msra.mxu0 %v4255
    %6276 = vmatprep.subr.mxu0 0.0
    %6277 = vmatpush1.msra.mxu0 0.0
    %6278 = vmatprep.subr.mxu0 0.0
    %6279 = vmatpush1.msra.mxu0 0.0
    %6280 = vmatprep.subr.mxu0 0.0
    %6281 = vmatpush1.msra.mxu0 0.0
    %6282 = vmatprep.subr.mxu0 0.0
    %6283 = vmatpush1.msra.mxu0 0.0
    %6284 = vmatprep.subr.mxu0 0.0
    %6285 = vmatpush1.msra.mxu0 0.0
    %6286 = vmatprep.subr.mxu0 0.0
    %6287 = vmatpush1.msra.mxu0 0.0
    %6288 = vmatprep.subr.mxu0 0.0
    %6289 = vmatpush1.msra.mxu0 0.0
    %6290 = vmatprep.subr.mxu0 0.0
    %6291 = vmatpush1.msra.mxu0 0.0
    %6292 = vmatprep.subr.mxu0 0.0
    %6293 = vmatpush1.msra.mxu0 0.0
    %6294 = vmatprep.subr.mxu0 0.0
    %6295 = vmatpush1.msra.mxu0 0.0
    %6296 = vmatprep.subr.mxu0 0.0
    %6297 = vmatpush1.msra.mxu0 0.0
    %6298 = vmatprep.subr.mxu0 0.0
    %6299 = vmatpush1.msra.mxu0 0.0
    %6300 = vmatprep.subr.mxu0 0.0
    %6301 = vmatpush1.msra.mxu0 0.0
    %6302 = vmatprep.subr.mxu0 0.0
    %6303 = vmatpush1.msra.mxu0 0.0
    %6304 = vmatprep.subr.mxu0 0.0
    %6305 = vmatpush1.msra.mxu0 0.0
    %6306 = vmatprep.subr.mxu0 0.0
    %6307 = vmatpush1.msra.mxu0 0.0
    %6308 = vmatprep.mubr.f32.mxu0 0.0
    %6309 = vmatmul.mubr.f32.gmra.mrb[0].mxu0 %v6242
    %v6310 = vpop.f32.mrb[0].mxu0
    %v6311 = vadd.f32 0.0, %v6310
    %v6312 = vpop.f32.mrb[0].mxu0
    %6313 = vmatprep.mubr.f32.mxu0 0.0
    %6314 = vmatmul.mubr.f32.gmra.mrb[0].mxu0 %v6243
    %v6315 = vpop.f32.mrb[0].mxu0
    %v6316 = vadd.f32 0.0, %v6315
    %v6317 = vpop.f32.mrb[0].mxu0
    %6318 = vdwg.mxu0
    %v6319 = vadd.f32 %v6117, %v6311
    %v6320 = vadd.f32 %v6118, %v6316
    %v6321 = vlaneseq
    %v6322 = vshrl.u32 %v6321, 7
    %v6323 = vsub.s32 5, %v6322
    %v6324 = vrot.slane %v4257, %v6323
    %v6325 = vadd.f32 %v6319, %v6324
    %v6326 = vadd.f32 %v6320, %v6324
    %v6327 = vld [vmem:[%s6] sm:$0xff]
    %v6328 = vld [vmem:[%s4] sm:$0xff]
    %v6329 = vld [vmem:[%s4 + $0x8] sm:$0xff]
    %v6330 = vld [vmem:[%s4 + $0x10] sm:$0xff]
    %v6331 = vld [vmem:[%s4 + $0x18] sm:$0xff]
    %v6332 = vld [vmem:[%s4 + $0x20] sm:$0xff]
    %v6333 = vld [vmem:[%s4 + $0x28] sm:$0xff]
    %v6334 = vld [vmem:[%s4 + $0x30] sm:$0xff]
    %v6335 = vld [vmem:[%s4 + $0x38] sm:$0xff]
    %v6336 = vld [vmem:[%s5] sm:$0xff]
    %v6337 = vld [vmem:[%s5 + $0x8] sm:$0xff]
    %v6338 = vld [vmem:[%s5 + $0x10] sm:$0xff]
    %v6339 = vld [vmem:[%s5 + $0x18] sm:$0xff]
    %v6340 = vld [vmem:[%s5 + $0x20] sm:$0xff]
    %v6341 = vld [vmem:[%s5 + $0x28] sm:$0xff]
    %v6342 = vld [vmem:[%s5 + $0x30] sm:$0xff]
    %v6343 = vld [vmem:[%s5 + $0x38] sm:$0xff]
    %v6344 = vld [vmem:[%s5 + $0x40] sm:$0xff]
    %v6345 = vld [vmem:[%s5 + $0x48] sm:$0xff]
    %v6346 = vld [vmem:[%s5 + $0x50] sm:$0xff]
    %v6347 = vld [vmem:[%s5 + $0x58] sm:$0xff]
    %v6348 = vld [vmem:[%s5 + $0x60] sm:$0xff]
    %v6349 = vld [vmem:[%s5 + $0x68] sm:$0xff]
    %v6350 = vld [vmem:[%s5 + $0x70] sm:$0xff]
    %v6351 = vld [vmem:[%s5 + $0x78] sm:$0xff]
    %v6352 = vsel %vm59, %v6325, 0.0
    %6353 = vadd.xlane.f32.xlu0 %v6352
    %v6354 = vpop.xlane.xlu0 %6353
    %v6355 = vsel %vm59, %v6326, 0.0
    %6356 = vadd.xlane.f32.xlu0 %v6355
    %v6357 = vpop.xlane.xlu0 %6356
    %v6358 = vmul.f32 %v6354, %v66
    %v6359 = vmul.f32 %v6357, %v66
    %v6360 = vsub.f32 %v6325, %v6358
    %v6361 = vsub.f32 %v6326, %v6359
    %v6362 = vmul.f32 %v6360, %v6360
    %v6363 = vmul.f32 %v6361, %v6361
    %v6364 = vsel %vm59, %v6362, 0.0
    %6365 = vadd.xlane.f32.xlu0 %v6364
    %v6366 = vpop.xlane.xlu0 %6365
    %v6367 = vsel %vm59, %v6363, 0.0
    %6368 = vadd.xlane.f32.xlu0 %v6367
    %v6369 = vpop.xlane.xlu0 %6368
    %v6370 = vmul.f32 %v6366, %v66
    %v6371 = vmul.f32 %v6369, %v66
    %v6372 = vadd.f32 %v6370, 1e-05
    %v6373 = vadd.f32 %v6371, 1e-05
    %v6374 = vrsqrt.pop %v6372
    %v6375 = vrsqrt.pop %v6373
    %v6376 = vmul.f32 %v6360, %v6374
    %v6377 = vmul.f32 %v6361, %v6375
    %v6378 = vlaneseq
    %v6379 = vshrl.u32 %v6378, 7
    %v6380 = vsub.s32 0, %v6379
    %v6381 = vrot.slane %v6327, %v6380
    %v6382 = vmul.f32 %v6376, %v6381
    %v6383 = vmul.f32 %v6377, %v6381
    %v6384 = vlaneseq
    %v6385 = vshrl.u32 %v6384, 7
    %v6386 = vsub.s32 1, %v6385
    %v6387 = vrot.slane %v6327, %v6386
    %v6388 = vadd.f32 %v6382, %v6387
    %v6389 = vadd.f32 %v6383, %v6387
    %v6390 = vlaneseq
    %v6391 = vshrl.u32 %v6390, 7
    %v6392 = vsub.s32 3, %v6391
    %v6393 = vrot.slane %v6327, %v6392
    %v6395 = vsel %vm59, %v6388, 0
    %v6398 = vsel %vm59, %v6389, 0
    %6400 = vmatprep.subr.mxu0 0.0
    %6401 = vmatpush1.msra.mxu0 %v6328
    %6402 = vmatprep.subr.mxu0 0.0
    %6403 = vmatpush1.msra.mxu0 %v6330
    %6404 = vmatprep.subr.mxu0 0.0
    %6405 = vmatpush1.msra.mxu0 %v6332
    %6406 = vmatprep.subr.mxu0 0.0
    %6407 = vmatpush1.msra.mxu0 %v6334
    %6408 = vmatprep.subr.mxu0 0.0
    %6409 = vmatpush1.msra.mxu0 0.0
    %6410 = vmatprep.subr.mxu0 0.0
    %6411 = vmatpush1.msra.mxu0 0.0
    %6412 = vmatprep.subr.mxu0 0.0
    %6413 = vmatpush1.msra.mxu0 0.0
    %6414 = vmatprep.subr.mxu0 0.0
    %6415 = vmatpush1.msra.mxu0 0.0
    %6416 = vmatprep.subr.mxu0 0.0
    %6417 = vmatpush1.msra.mxu0 0.0
    %6418 = vmatprep.subr.mxu0 0.0
    %6419 = vmatpush1.msra.mxu0 0.0
    %6420 = vmatprep.subr.mxu0 0.0
    %6421 = vmatpush1.msra.mxu0 0.0
    %6422 = vmatprep.subr.mxu0 0.0
    %6423 = vmatpush1.msra.mxu0 0.0
    %6424 = vmatprep.subr.mxu0 0.0
    %6425 = vmatpush1.msra.mxu0 0.0
    %6426 = vmatprep.subr.mxu0 0.0
    %6427 = vmatpush1.msra.mxu0 0.0
    %6428 = vmatprep.subr.mxu0 0.0
    %6429 = vmatpush1.msra.mxu0 0.0
    %6430 = vmatprep.subr.mxu0 0.0
    %6431 = vmatpush1.msra.mxu0 0.0
    %6432 = vmatprep.subr.mxu0 0.0
    %6433 = vmatpush1.msra.mxu0 0.0
    %6434 = vmatprep.subr.mxu0 0.0
    %6435 = vmatpush1.msra.mxu0 0.0
    %6436 = vmatprep.subr.mxu0 0.0
    %6437 = vmatpush1.msra.mxu0 0.0
    %6438 = vmatprep.subr.mxu0 0.0
    %6439 = vmatpush1.msra.mxu0 0.0
    %6440 = vmatprep.subr.mxu0 0.0
    %6441 = vmatpush1.msra.mxu0 0.0
    %6442 = vmatprep.subr.mxu0 0.0
    %6443 = vmatpush1.msra.mxu0 0.0
    %6444 = vmatprep.subr.mxu0 0.0
    %6445 = vmatpush1.msra.mxu0 0.0
    %6446 = vmatprep.subr.mxu0 0.0
    %6447 = vmatpush1.msra.mxu0 0.0
    %6448 = vmatprep.subr.mxu0 0.0
    %6449 = vmatpush1.msra.mxu0 0.0
    %6450 = vmatprep.subr.mxu0 0.0
    %6451 = vmatpush1.msra.mxu0 0.0
    %6452 = vmatprep.subr.mxu0 0.0
    %6453 = vmatpush1.msra.mxu0 0.0
    %6454 = vmatprep.subr.mxu0 0.0
    %6455 = vmatpush1.msra.mxu0 0.0
    %6456 = vmatprep.subr.mxu0 0.0
    %6457 = vmatpush1.msra.mxu0 0.0
    %6458 = vmatprep.subr.mxu0 0.0
    %6459 = vmatpush1.msra.mxu0 0.0
    %6460 = vmatprep.subr.mxu0 0.0
    %6461 = vmatpush1.msra.mxu0 0.0
    %6462 = vmatprep.subr.mxu0 0.0
    %6463 = vmatpush1.msra.mxu0 0.0
    %6464 = vmatprep.mubr.f32.mxu0 0.0
    %6465 = vmatmul.mubr.f32.gmra.mrb[0].mxu0 %v6395
    %v6466 = vpop.f32.mrb[0].mxu0
    %v6467 = vadd.f32 %v6393, %v6466
    %v6468 = vpop.f32.mrb[0].mxu0
    %6469 = vmatprep.mubr.f32.mxu0 0.0
    %6470 = vmatmul.mubr.f32.gmra.mrb[0].mxu0 %v6398
    %v6471 = vpop.f32.mrb[0].mxu0
    %v6472 = vadd.f32 %v6393, %v6471
    %v6473 = vpop.f32.mrb[0].mxu0
    %6474 = vdwg.mxu0
    %v6475 = vmax.f32 %v6467, 0.0
    %v6476 = vmax.f32 %v6472, 0.0
    %v6477 = vlaneseq
    %v6478 = vshrl.u32 %v6477, 7
    %v6479 = vsub.s32 2, %v6478
    %v6480 = vrot.slane %v6327, %v6479
    %6481 = vmatprep.subr.mxu0 0.0
    %6482 = vmatpush1.msra.mxu0 %v6336
    %6483 = vmatprep.subr.mxu0 0.0
    %6484 = vmatpush1.msra.mxu0 %v6337
    %6485 = vmatprep.subr.mxu0 0.0
    %6486 = vmatpush1.msra.mxu0 %v6338
    %6487 = vmatprep.subr.mxu0 0.0
    %6488 = vmatpush1.msra.mxu0 %v6339
    %6489 = vmatprep.subr.mxu0 0.0
    %6490 = vmatpush1.msra.mxu0 %v6340
    %6491 = vmatprep.subr.mxu0 0.0
    %6492 = vmatpush1.msra.mxu0 %v6341
    %6493 = vmatprep.subr.mxu0 0.0
    %6494 = vmatpush1.msra.mxu0 %v6342
    %6495 = vmatprep.subr.mxu0 0.0
    %6496 = vmatpush1.msra.mxu0 %v6343
    %6497 = vmatprep.subr.mxu0 0.0
    %6498 = vmatpush1.msra.mxu0 %v6344
    %6499 = vmatprep.subr.mxu0 0.0
    %6500 = vmatpush1.msra.mxu0 %v6345
    %6501 = vmatprep.subr.mxu0 0.0
    %6502 = vmatpush1.msra.mxu0 %v6346
    %6503 = vmatprep.subr.mxu0 0.0
    %6504 = vmatpush1.msra.mxu0 %v6347
    %6505 = vmatprep.subr.mxu0 0.0
    %6506 = vmatpush1.msra.mxu0 %v6348
    %6507 = vmatprep.subr.mxu0 0.0
    %6508 = vmatpush1.msra.mxu0 %v6349
    %6509 = vmatprep.subr.mxu0 0.0
    %6510 = vmatpush1.msra.mxu0 %v6350
    %6511 = vmatprep.subr.mxu0 0.0
    %6512 = vmatpush1.msra.mxu0 %v6351
    %6513 = vmatprep.subr.mxu0 0.0
    %6514 = vmatpush1.msra.mxu0 0.0
    %6515 = vmatprep.subr.mxu0 0.0
    %6516 = vmatpush1.msra.mxu0 0.0
    %6517 = vmatprep.subr.mxu0 0.0
    %6518 = vmatpush1.msra.mxu0 0.0
    %6519 = vmatprep.subr.mxu0 0.0
    %6520 = vmatpush1.msra.mxu0 0.0
    %6521 = vmatprep.subr.mxu0 0.0
    %6522 = vmatpush1.msra.mxu0 0.0
    %6523 = vmatprep.subr.mxu0 0.0
    %6524 = vmatpush1.msra.mxu0 0.0
    %6525 = vmatprep.subr.mxu0 0.0
    %6526 = vmatpush1.msra.mxu0 0.0
    %6527 = vmatprep.subr.mxu0 0.0
    %6528 = vmatpush1.msra.mxu0 0.0
    %6529 = vmatprep.subr.mxu0 0.0
    %6530 = vmatpush1.msra.mxu0 0.0
    %6531 = vmatprep.subr.mxu0 0.0
    %6532 = vmatpush1.msra.mxu0 0.0
    %6533 = vmatprep.subr.mxu0 0.0
    %6534 = vmatpush1.msra.mxu0 0.0
    %6535 = vmatprep.subr.mxu0 0.0
    %6536 = vmatpush1.msra.mxu0 0.0
    %6537 = vmatprep.subr.mxu0 0.0
    %6538 = vmatpush1.msra.mxu0 0.0
    %6539 = vmatprep.subr.mxu0 0.0
    %6540 = vmatpush1.msra.mxu0 0.0
    %6541 = vmatprep.subr.mxu0 0.0
    %6542 = vmatpush1.msra.mxu0 0.0
    %6543 = vmatprep.subr.mxu0 0.0
    %6544 = vmatpush1.msra.mxu0 0.0
    %6545 = vmatprep.mubr.f32.mxu0 0.0
    %6546 = vmatmul.mubr.f32.gmra.mrb[0].mxu0 %v6475
    %v6547 = vpop.f32.mrb[0].mxu0
    %v6548 = vadd.f32 %v6480, %v6547
    %v6549 = vpop.f32.mrb[0].mxu0
    %6550 = vmatprep.mubr.f32.mxu0 0.0
    %6551 = vmatmul.mubr.f32.gmra.mrb[0].mxu0 %v6476
    %v6552 = vpop.f32.mrb[0].mxu0
    %v6553 = vadd.f32 %v6480, %v6552
    %v6554 = vpop.f32.mrb[0].mxu0
    %6555 = vdwg.mxu0
    %v6556 = vlaneseq
    %v6557 = vshrl.u32 %v6556, 7
    %v6558 = vsub.s32 4, %v6557
    %v6559 = vrot.slane %v6327, %v6558
    %v6561 = vsel %vm59, %v6548, 0
    %v6564 = vsel %vm59, %v6553, 0
    %6566 = vmatprep.subr.mxu0 0.0
    %6567 = vmatpush1.msra.mxu0 %v6329
    %6568 = vmatprep.subr.mxu0 0.0
    %6569 = vmatpush1.msra.mxu0 %v6331
    %6570 = vmatprep.subr.mxu0 0.0
    %6571 = vmatpush1.msra.mxu0 %v6333
    %6572 = vmatprep.subr.mxu0 0.0
    %6573 = vmatpush1.msra.mxu0 %v6335
    %6574 = vmatprep.subr.mxu0 0.0
    %6575 = vmatpush1.msra.mxu0 0.0
    %6576 = vmatprep.subr.mxu0 0.0
    %6577 = vmatpush1.msra.mxu0 0.0
    %6578 = vmatprep.subr.mxu0 0.0
    %6579 = vmatpush1.msra.mxu0 0.0
    %6580 = vmatprep.subr.mxu0 0.0
    %6581 = vmatpush1.msra.mxu0 0.0
    %6582 = vmatprep.subr.mxu0 0.0
    %6583 = vmatpush1.msra.mxu0 0.0
    %6584 = vmatprep.subr.mxu0 0.0
    %6585 = vmatpush1.msra.mxu0 0.0
    %6586 = vmatprep.subr.mxu0 0.0
    %6587 = vmatpush1.msra.mxu0 0.0
    %6588 = vmatprep.subr.mxu0 0.0
    %6589 = vmatpush1.msra.mxu0 0.0
    %6590 = vmatprep.subr.mxu0 0.0
    %6591 = vmatpush1.msra.mxu0 0.0
    %6592 = vmatprep.subr.mxu0 0.0
    %6593 = vmatpush1.msra.mxu0 0.0
    %6594 = vmatprep.subr.mxu0 0.0
    %6595 = vmatpush1.msra.mxu0 0.0
    %6596 = vmatprep.subr.mxu0 0.0
    %6597 = vmatpush1.msra.mxu0 0.0
    %6598 = vmatprep.subr.mxu0 0.0
    %6599 = vmatpush1.msra.mxu0 0.0
    %6600 = vmatprep.subr.mxu0 0.0
    %6601 = vmatpush1.msra.mxu0 0.0
    %6602 = vmatprep.subr.mxu0 0.0
    %6603 = vmatpush1.msra.mxu0 0.0
    %6604 = vmatprep.subr.mxu0 0.0
    %6605 = vmatpush1.msra.mxu0 0.0
    %6606 = vmatprep.subr.mxu0 0.0
    %6607 = vmatpush1.msra.mxu0 0.0
    %6608 = vmatprep.subr.mxu0 0.0
    %6609 = vmatpush1.msra.mxu0 0.0
    %6610 = vmatprep.subr.mxu0 0.0
    %6611 = vmatpush1.msra.mxu0 0.0
    %6612 = vmatprep.subr.mxu0 0.0
    %6613 = vmatpush1.msra.mxu0 0.0
    %6614 = vmatprep.subr.mxu0 0.0
    %6615 = vmatpush1.msra.mxu0 0.0
    %6616 = vmatprep.subr.mxu0 0.0
    %6617 = vmatpush1.msra.mxu0 0.0
    %6618 = vmatprep.subr.mxu0 0.0
    %6619 = vmatpush1.msra.mxu0 0.0
    %6620 = vmatprep.subr.mxu0 0.0
    %6621 = vmatpush1.msra.mxu0 0.0
    %6622 = vmatprep.subr.mxu0 0.0
    %6623 = vmatpush1.msra.mxu0 0.0
    %6624 = vmatprep.subr.mxu0 0.0
    %6625 = vmatpush1.msra.mxu0 0.0
    %6626 = vmatprep.subr.mxu0 0.0
    %6627 = vmatpush1.msra.mxu0 0.0
    %6628 = vmatprep.subr.mxu0 0.0
    %6629 = vmatpush1.msra.mxu0 0.0
    %6630 = vmatprep.mubr.f32.mxu0 0.0
    %6631 = vmatmul.mubr.f32.gmra.mrb[0].mxu0 %v6561
    %v6632 = vpop.f32.mrb[0].mxu0
    %v6633 = vadd.f32 %v6559, %v6632
    %v6634 = vpop.f32.mrb[0].mxu0
    %6635 = vmatprep.mubr.f32.mxu0 0.0
    %6636 = vmatmul.mubr.f32.gmra.mrb[0].mxu0 %v6564
    %v6637 = vpop.f32.mrb[0].mxu0
    %v6638 = vadd.f32 %v6559, %v6637
    %v6639 = vpop.f32.mrb[0].mxu0
    %6640 = vdwg.mxu0
    %6641 = vst [vmem:[#allocation2] sm:$0xff] %v6633
    %6642 = vst [vmem:[#allocation2 + $0x8] sm:$0xff] %v6638
    // Predicated region
    $region30: #{tpu_custom_call.1} parent=1 // pred_check
      _
    $region31: #{tpu_custom_call.1} parent=1 // pred_check_branch
      %6644 = sbr.rel (0) target = $region33
    $region32: #{tpu_custom_call.1} parent=1 // pred_region
      %s6646 = ssub.s32 256, 256
      %6647 = vsyncadd [#allocation3], %s6646
      %s6648 = sshll.u32 [#allocation2], 4
      %s6649 = int_to_ptr.vmem [resolvable:$true] %s6648
      %6654 = dma.vmem_to_hbm [thread:$0]  %s6649, 256, %s7, [#allocation3], 128, 128, 8
    $region33: #{tpu_custom_call.1} parent=1 // pred_fallthru
      _
    // Predicated region
    $region34: #{tpu_custom_call.1} parent=1 // pred_check
      _
    $region35: #{tpu_custom_call.1} parent=1 // pred_check_branch
      %6656 = sbr.rel (0) target = $region37
    $region36: #{tpu_custom_call.1} parent=1 // pred_region
      %6657 = dma.done [#allocation3], 256
    $region37: #{tpu_custom_call.1} parent=1 // pred_fallthru
      _
    %6658 = vsyncpa [#allocation3], 1

</llo_original>
